<compile_context>
chip_gen: v7x
topology: tpu7x:2x2x1
jax: 0.10.0
libtpu: 0.0.40
codegen_flags: <defaults>
</compile_context>

<pallas_src>
import functools

import jax
import jax.numpy as jnp
from jax import lax
from jax.experimental import pallas as pl
from jax.experimental.pallas import tpu as pltpu


# ----------------------------------------------------------------------------- kernel
def _subnet_lpv_kernel(
    enc_in_ref, uf_ref,
    eW1_ref, eb1_ref, eW2_ref, eb2_ref, eW3_ref, eWr_ref, ebo_ref,
    sW1_ref, sb1_ref, sW2_ref, sb2_ref, sWp_ref, sbp_ref,
    Wbil_ref, out_ref, *, T, n_sched, nx, nu, ny):
    """Whole SUBNET_LPV rollout in one kernel invocation (everything resident in VMEM)."""
    # MLP dots: default precision (bf16 MXU inputs, f32 accumulation) -> 1 MXU pass.
    dot = lambda a, b: jnp.dot(a, b, preferred_element_type=jnp.float32)
    # The state recurrence x <- A(p)x + B(p)u compounds over T steps; keep the single fused
    # recurrence matmul at full f32 precision (it is one tiny dot per step after fusion).
    dot_hi = lambda a, b: jnp.dot(a, b, precision=lax.Precision.HIGHEST,
                                  preferred_element_type=jnp.float32)
    Bsz = enc_in_ref.shape[0]

    # ---- encoder: x0 = MLP_res_net(upast, ypast)  (residual linear + 2-hidden-layer tanh MLP)
    enc_in = enc_in_ref[...]
    h = jnp.tanh(dot(enc_in, eW1_ref[...]) + eb1_ref[...])
    h = jnp.tanh(dot(h, eW2_ref[...]) + eb2_ref[...])
    x = dot(enc_in, eWr_ref[...]) + dot(h, eW3_ref[...]) + ebo_ref[...]

    # ---- preload rollout weights; pre-broadcast loop biases once (JAX does not CSE broadcasts)
    sW1, sW2, sWp, Wbil = sW1_ref[...], sW2_ref[...], sWp_ref[...], Wbil_ref[...]
    sb1 = jnp.broadcast_to(sb1_ref[...], (Bsz, sb1_ref.shape[-1]))
    sb2 = jnp.broadcast_to(sb2_ref[...], (Bsz, sb2_ref.shape[-1]))
    sbp = jnp.broadcast_to(sbp_ref[...], (Bsz, sbp_ref.shape[-1]))
    uf = uf_ref[...]                                               # (B, T*nu), lane-dense

    ys = []
    for t in range(T):                                             # static, fully unrolled
        u = uf[:, t * nu:(t + 1) * nu]                             # (B, nu)
        xu = jnp.concatenate([x, u], axis=-1)                      # (B, nx+nu)
        # scheduling net p = MLP_res_net([x, u]) — 3 fused dots total
        h1 = jnp.tanh(dot(xu, sW1) + sb1)
        h2 = jnp.tanh(dot(h1, sW2) + sb2)
        p = dot(jnp.concatenate([xu, h2], axis=-1), sWp) + sbp     # (B, n_sched)
        # fused bilinear LPV map (exact): per-row scalars p_s scale xu, then one matmul
        #   [x_next | y_t] = [xu, p_1*xu, ..., p_S*xu] @ [[A0 C0];[B0 D0];[A1 C1];[B1 D1];...]
        w = jnp.concatenate([xu] + [p[:, s:s + 1] * xu for s in range(n_sched)], axis=-1)
        xy = dot_hi(w, Wbil)                                       # (B, nx+ny)
        x = xy[:, :nx]                                             # x_{t+1} = A x + B u
        ys.append(xy[:, nx:nx + ny])                               # y_t     = C x + D u
    # single lane-contiguous store of the whole rollout
    out_ref[...] = jnp.concatenate(ys, axis=-1).astype(out_ref.dtype)


# ----------------------------------------------------------------------------- wrapper
def subnet_lpv_forward(P, upast, ypast, ufuture, *, n_sched):
    """upast (B, nb, nu), ypast (B, na, ny), ufuture (B, T, nu) -> yfuture_sim (B, T, ny)."""
    B, T, nu = ufuture.shape
    nx = P['A0'].shape[0]
    ny = P['C0'].shape[1]

    # glue: encoder-input normalisation + flatten; lane-dense re-layout of ufuture
    enc_in = jnp.concatenate(
        [(upast / P['ustd']).reshape(B, -1),
         (ypast / P['ystd']).reshape(B, -1)], axis=-1).astype(jnp.float32)
    uf_lane = ufuture.reshape(B, T * nu).astype(jnp.float32)       # u_t = uf[:, t*nu:(t+1)*nu]

    # ---- wrapper-side weight fusion (exact reparameterisation, done once per call) ----
    ebo = P['eb3'] + P['ebr']                                      # encoder output bias
    sW1 = jnp.concatenate([P['sW1x'], P['sW1u']], axis=0)          # (nx+nu, H)
    sWp = jnp.concatenate([P['sWrx'], P['sWru'], P['sW3']], axis=0)  # (nx+nu+H, S)
    sbp = P['sbr'] + P['sb3']                                      # (1, S)

    def blk(A, C, Bm, D):                                          # (nx+nu, nx+ny) block
        return jnp.concatenate([jnp.concatenate([A, C], axis=1),
                                jnp.concatenate([Bm, D], axis=1)], axis=0)
    Wbil = jnp.concatenate(
        [blk(P['A0'], P['C0'], P['B0'], P['D0'])]
        + [blk(P['Ap'][s], P['Cp'][s], P['Bp'][s], P['Dp'][s]) for s in range(n_sched)],
        axis=0)                                                     # ((S+1)*(nx+nu), nx+ny)

    args = (enc_in, uf_lane,
            P['eW1'], P['eb1'], P['eW2'], P['eb2'], P['eW3'], P['eWr'], ebo,
            sW1, P['sb1'], P['sW2'], P['sb2'], sWp, sbp, Wbil)
    kern = functools.partial(_subnet_lpv_kernel, T=T, n_sched=n_sched, nx=nx, nu=nu, ny=ny)
    out_lane = pl.pallas_call(
        kern,
        out_shape=jax.ShapeDtypeStruct((B, T * ny), jnp.float32),
        in_specs=[pl.BlockSpec(memory_space=pltpu.MemorySpace.VMEM)] * len(args),
        out_specs=pl.BlockSpec(memory_space=pltpu.MemorySpace.VMEM),
        compiler_params=pltpu.CompilerParams(vmem_limit_bytes=32 * 1024 * 1024),
    )(*args)
    return out_lane.reshape(B, T, ny)                               # (B, T, ny)


# ----------------------------------------------------------------------------- params
def make_params(key, *, nu, ny, nx, n_sched, na, nb, hidden):
    ks = jax.random.split(key, 24)
    it = iter(ks)
    nrm = lambda shape, scale: scale * jax.random.normal(next(it), shape, jnp.float32)

    # normalisation constants (SUBNET_LPV assumes ~zero-mean data, so means are 0)
    ustd = 0.5 + jax.random.uniform(next(it), (nu,), jnp.float32)
    ystd = 0.5 + jax.random.uniform(next(it), (ny,), jnp.float32)

    din, H = nb * nu + na * ny, hidden
    P = {}
    # encoder MLP_res_net (zero biases, weights stored transposed: apply as v @ W)
    P['eW1'] = nrm((din, H), 1.0 / jnp.sqrt(din)); P['eb1'] = jnp.zeros((1, H), jnp.float32)
    P['eW2'] = nrm((H, H), 1.0 / jnp.sqrt(H));     P['eb2'] = jnp.zeros((1, H), jnp.float32)
    P['eW3'] = nrm((H, nx), 1.0 / jnp.sqrt(H));    P['eb3'] = jnp.zeros((1, nx), jnp.float32)
    P['eWr'] = nrm((din, nx), 1.0 / jnp.sqrt(din)); P['ebr'] = jnp.zeros((1, nx), jnp.float32)
    # scheduling net MLP_res_net on [x, u]; u-normalisation (1/ustd) folded into u-columns
    sc = 1.0 / jnp.sqrt(nx + nu)
    P['sW1x'] = nrm((nx, H), sc)
    P['sW1u'] = nrm((nu, H), sc) / ustd[:, None]
    P['sb1'] = jnp.zeros((1, H), jnp.float32)
    P['sW2'] = nrm((H, H), 1.0 / jnp.sqrt(H));  P['sb2'] = jnp.zeros((1, H), jnp.float32)
    P['sW3'] = nrm((H, n_sched), 1.0 / jnp.sqrt(H)); P['sb3'] = jnp.zeros((1, n_sched), jnp.float32)
    P['sWrx'] = nrm((nx, n_sched), sc)
    P['sWru'] = nrm((nu, n_sched), sc) / ustd[:, None]
    P['sbr'] = jnp.zeros((1, n_sched), jnp.float32)
    # Bilinear A, B, C, D: M(p) = M0 + sum_s p_s M_s ; std_input / std_output scalings
    # of the deepSI Bilinear are folded into the (transposed, (n_in, n_out)) matrices.
    sA, sP = 0.4 / jnp.sqrt(nx), 0.15 / jnp.sqrt(nx)
    P['A0'] = nrm((nx, nx), sA)
    P['Ap'] = nrm((n_sched, nx, nx), sP)
    P['B0'] = nrm((nu, nx), sA) / ustd[:, None]
    P['Bp'] = nrm((n_sched, nu, nx), sP) / ustd[None, :, None]
    P['C0'] = nrm((nx, ny), sA) * ystd[None, :]
    P['Cp'] = nrm((n_sched, nx, ny), sP) * ystd[None, None, :]
    P['D0'] = nrm((nu, ny), sA) * ystd[None, :] / ustd[:, None]
    P['Dp'] = nrm((n_sched, nu, ny), sP) * ystd[None, None, :] / ustd[None, :, None]
    P['ustd'], P['ystd'] = ustd, ystd
    return P


# ----------------------------------------------------------------------------- pure-JAX reference
def reference_forward(P, upast, ypast, ufuture, *, n_sched):
    B = upast.shape[0]
    enc_in = jnp.concatenate(
        [(upast / P['ustd']).reshape(B, -1),
         (ypast / P['ystd']).reshape(B, -1)], axis=-1)
    h = jnp.tanh(enc_in @ P['eW1'] + P['eb1'])
    h = jnp.tanh(h @ P['eW2'] + P['eb2'])
    x0 = enc_in @ P['eWr'] + P['ebr'] + h @ P['eW3'] + P['eb3']

    def step(x, u):
        h1 = jnp.tanh(x @ P['sW1x'] + u @ P['sW1u'] + P['sb1'])
        h2 = jnp.tanh(h1 @ P['sW2'] + P['sb2'])
        p = x @ P['sWrx'] + u @ P['sWru'] + P['sbr'] + h2 @ P['sW3'] + P['sb3']
        Am = P['A0'][None] + jnp.einsum('bs,sij->bij', p, P['Ap'])
        Bm = P['B0'][None] + jnp.einsum('bs,sij->bij', p, P['Bp'])
        Cm = P['C0'][None] + jnp.einsum('bs,sij->bij', p, P['Cp'])
        Dm = P['D0'][None] + jnp.einsum('bs,sij->bij', p, P['Dp'])
        y = jnp.einsum('bi,bij->bj', x, Cm) + jnp.einsum('bi,bij->bj', u, Dm)
        xn = jnp.einsum('bi,bij->bj', x, Am) + jnp.einsum('bi,bij->bj', u, Bm)
        return xn, y

    _, ys = lax.scan(step, x0, jnp.transpose(ufuture, (1, 0, 2)))
    return jnp.transpose(ys, (1, 0, 2))


# ----------------------------------------------------------------------------- main
if __name__ == "__main__":
    nu, ny, nx, n_sched, na, nb, T, B, hidden = 3, 2, 8, 4, 4, 4, 8, 2, 32

    key = jax.random.PRNGKey(0)
    kp, ku, ky, kf = jax.random.split(key, 4)
    P = make_params(kp, nu=nu, ny=ny, nx=nx, n_sched=n_sched, na=na, nb=nb, hidden=hidden)

    upast = jax.random.normal(ku, (B, nb, nu), jnp.float32)
    ypast = jax.random.normal(ky, (B, na, ny), jnp.float32)
    ufuture = jax.random.normal(kf, (B, T, nu), jnp.float32)

    y_sim = jax.block_until_ready(
        subnet_lpv_forward(P, upast, ypast, ufuture, n_sched=n_sched))
    assert y_sim.shape == (B, T, ny), y_sim.shape

    # exact-f32 ground truth, scoped locally (no global precision side effect)
    with jax.default_matmul_precision('highest'):
        y_ref = jax.block_until_ready(
            reference_forward(P, upast, ypast, ufuture, n_sched=n_sched))
    err = float(jnp.max(jnp.abs(y_sim - y_ref)))
    if not (err == err) or err > 5e-2:  # NaN or structural mismatch
        raise AssertionError(f"kernel mismatch, max abs err = {err}")

    print("KERNEL_OK")
</pallas_src>

<mosaic_0001>
module attributes {stable_mosaic.version = 11 : i64} {
  func.func @_subnet_lpv_kernel(%arg0: memref<2x20xf32, #tpu.memory_space<vmem>>, %arg1: memref<2x24xf32, #tpu.memory_space<vmem>>, %arg2: memref<20x32xf32, #tpu.memory_space<vmem>>, %arg3: memref<1x32xf32, #tpu.memory_space<vmem>>, %arg4: memref<32x32xf32, #tpu.memory_space<vmem>>, %arg5: memref<1x32xf32, #tpu.memory_space<vmem>>, %arg6: memref<32x8xf32, #tpu.memory_space<vmem>>, %arg7: memref<20x8xf32, #tpu.memory_space<vmem>>, %arg8: memref<1x8xf32, #tpu.memory_space<vmem>>, %arg9: memref<11x32xf32, #tpu.memory_space<vmem>>, %arg10: memref<1x32xf32, #tpu.memory_space<vmem>>, %arg11: memref<32x32xf32, #tpu.memory_space<vmem>>, %arg12: memref<1x32xf32, #tpu.memory_space<vmem>>, %arg13: memref<43x4xf32, #tpu.memory_space<vmem>>, %arg14: memref<1x4xf32, #tpu.memory_space<vmem>>, %arg15: memref<55x10xf32, #tpu.memory_space<vmem>>, %arg16: memref<2x16xf32, #tpu.memory_space<vmem>>) attributes {dimension_semantics = [], scalar_prefetch = 0 : i64, scratch_operands = 0 : i64, tpu.core_type = #tpu.core_type<tc>} {
    %c0 = arith.constant 0 : index
    %c0_0 = arith.constant 0 : index
    %0 = vector.load %arg0[%c0, %c0_0] : memref<2x20xf32, #tpu.memory_space<vmem>>, vector<2x20xf32>
    %c0_1 = arith.constant 0 : index
    %c0_2 = arith.constant 0 : index
    %1 = vector.load %arg2[%c0_1, %c0_2] : memref<20x32xf32, #tpu.memory_space<vmem>>, vector<20x32xf32>
    %cst = arith.constant dense<0.000000e+00> : vector<2x32xf32>
    %2 = tpu.matmul %0, %1, %cst {dimension_numbers = #tpu.dot_dimension_numbers<[1], [0], [0], [1], [0, 0, 1, 1], [], []>} : vector<2x20xf32>, vector<20x32xf32>, vector<2x32xf32> -> vector<2x32xf32>
    %c0_3 = arith.constant 0 : index
    %c0_4 = arith.constant 0 : index
    %3 = vector.load %arg3[%c0_3, %c0_4] : memref<1x32xf32, #tpu.memory_space<vmem>>, vector<1x32xf32>
    %4 = vector.broadcast %3 : vector<1x32xf32> to vector<2x32xf32>
    %5 = arith.addf %2, %4 : vector<2x32xf32>
    %6 = math.tanh %5 : vector<2x32xf32>
    %c0_5 = arith.constant 0 : index
    %c0_6 = arith.constant 0 : index
    %7 = vector.load %arg4[%c0_5, %c0_6] : memref<32x32xf32, #tpu.memory_space<vmem>>, vector<32x32xf32>
    %cst_7 = arith.constant dense<0.000000e+00> : vector<2x32xf32>
    %8 = tpu.matmul %6, %7, %cst_7 {dimension_numbers = #tpu.dot_dimension_numbers<[1], [0], [0], [1], [0, 0, 1, 1], [], []>} : vector<2x32xf32>, vector<32x32xf32>, vector<2x32xf32> -> vector<2x32xf32>
    %c0_8 = arith.constant 0 : index
    %c0_9 = arith.constant 0 : index
    %9 = vector.load %arg5[%c0_8, %c0_9] : memref<1x32xf32, #tpu.memory_space<vmem>>, vector<1x32xf32>
    %10 = vector.broadcast %9 : vector<1x32xf32> to vector<2x32xf32>
    %11 = arith.addf %8, %10 : vector<2x32xf32>
    %12 = math.tanh %11 : vector<2x32xf32>
    %c0_10 = arith.constant 0 : index
    %c0_11 = arith.constant 0 : index
    %13 = vector.load %arg7[%c0_10, %c0_11] : memref<20x8xf32, #tpu.memory_space<vmem>>, vector<20x8xf32>
    %cst_12 = arith.constant dense<0.000000e+00> : vector<2x8xf32>
    %14 = tpu.matmul %0, %13, %cst_12 {dimension_numbers = #tpu.dot_dimension_numbers<[1], [0], [0], [1], [0, 0, 1, 1], [], []>} : vector<2x20xf32>, vector<20x8xf32>, vector<2x8xf32> -> vector<2x8xf32>
    %c0_13 = arith.constant 0 : index
    %c0_14 = arith.constant 0 : index
    %15 = vector.load %arg6[%c0_13, %c0_14] : memref<32x8xf32, #tpu.memory_space<vmem>>, vector<32x8xf32>
    %cst_15 = arith.constant dense<0.000000e+00> : vector<2x8xf32>
    %16 = tpu.matmul %12, %15, %cst_15 {dimension_numbers = #tpu.dot_dimension_numbers<[1], [0], [0], [1], [0, 0, 1, 1], [], []>} : vector<2x32xf32>, vector<32x8xf32>, vector<2x8xf32> -> vector<2x8xf32>
    %17 = arith.addf %14, %16 : vector<2x8xf32>
    %c0_16 = arith.constant 0 : index
    %c0_17 = arith.constant 0 : index
    %18 = vector.load %arg8[%c0_16, %c0_17] : memref<1x8xf32, #tpu.memory_space<vmem>>, vector<1x8xf32>
    %19 = vector.broadcast %18 : vector<1x8xf32> to vector<2x8xf32>
    %20 = arith.addf %17, %19 : vector<2x8xf32>
    %c0_18 = arith.constant 0 : index
    %c0_19 = arith.constant 0 : index
    %21 = vector.load %arg9[%c0_18, %c0_19] : memref<11x32xf32, #tpu.memory_space<vmem>>, vector<11x32xf32>
    %c0_20 = arith.constant 0 : index
    %c0_21 = arith.constant 0 : index
    %22 = vector.load %arg11[%c0_20, %c0_21] : memref<32x32xf32, #tpu.memory_space<vmem>>, vector<32x32xf32>
    %c0_22 = arith.constant 0 : index
    %c0_23 = arith.constant 0 : index
    %23 = vector.load %arg13[%c0_22, %c0_23] : memref<43x4xf32, #tpu.memory_space<vmem>>, vector<43x4xf32>
    %c0_24 = arith.constant 0 : index
    %c0_25 = arith.constant 0 : index
    %24 = vector.load %arg15[%c0_24, %c0_25] : memref<55x10xf32, #tpu.memory_space<vmem>>, vector<55x10xf32>
    %c0_26 = arith.constant 0 : index
    %c0_27 = arith.constant 0 : index
    %25 = vector.load %arg10[%c0_26, %c0_27] : memref<1x32xf32, #tpu.memory_space<vmem>>, vector<1x32xf32>
    %26 = vector.shape_cast %25 : vector<1x32xf32> to vector<1x32xf32>
    %27 = vector.broadcast %26 : vector<1x32xf32> to vector<2x32xf32>
    %c0_28 = arith.constant 0 : index
    %c0_29 = arith.constant 0 : index
    %28 = vector.load %arg12[%c0_28, %c0_29] : memref<1x32xf32, #tpu.memory_space<vmem>>, vector<1x32xf32>
    %29 = vector.shape_cast %28 : vector<1x32xf32> to vector<1x32xf32>
    %30 = vector.broadcast %29 : vector<1x32xf32> to vector<2x32xf32>
    %c0_30 = arith.constant 0 : index
    %c0_31 = arith.constant 0 : index
    %31 = vector.load %arg14[%c0_30, %c0_31] : memref<1x4xf32, #tpu.memory_space<vmem>>, vector<1x4xf32>
    %32 = vector.shape_cast %31 : vector<1x4xf32> to vector<1x4xf32>
    %33 = vector.broadcast %32 : vector<1x4xf32> to vector<2x4xf32>
    %c0_32 = arith.constant 0 : index
    %c0_33 = arith.constant 0 : index
    %34 = vector.load %arg1[%c0_32, %c0_33] : memref<2x24xf32, #tpu.memory_space<vmem>>, vector<2x24xf32>
    %35 = vector.extract_strided_slice %34 {offsets = [0, 0], sizes = [2, 3], strides = [1, 1]} : vector<2x24xf32> to vector<2x3xf32>
    %36 = tpu.concatenate %20, %35 in 1 : vector<2x8xf32>, vector<2x3xf32> -> vector<2x11xf32>
    %cst_34 = arith.constant dense<0.000000e+00> : vector<2x32xf32>
    %37 = tpu.matmul %36, %21, %cst_34 {dimension_numbers = #tpu.dot_dimension_numbers<[1], [0], [0], [1], [0, 0, 1, 1], [], []>} : vector<2x11xf32>, vector<11x32xf32>, vector<2x32xf32> -> vector<2x32xf32>
    %38 = arith.addf %37, %27 : vector<2x32xf32>
    %39 = math.tanh %38 : vector<2x32xf32>
    %cst_35 = arith.constant dense<0.000000e+00> : vector<2x32xf32>
    %40 = tpu.matmul %39, %22, %cst_35 {dimension_numbers = #tpu.dot_dimension_numbers<[1], [0], [0], [1], [0, 0, 1, 1], [], []>} : vector<2x32xf32>, vector<32x32xf32>, vector<2x32xf32> -> vector<2x32xf32>
    %41 = arith.addf %40, %30 : vector<2x32xf32>
    %42 = math.tanh %41 : vector<2x32xf32>
    %43 = tpu.concatenate %36, %42 in 1 : vector<2x11xf32>, vector<2x32xf32> -> vector<2x43xf32>
    %cst_36 = arith.constant dense<0.000000e+00> : vector<2x4xf32>
    %44 = tpu.matmul %43, %23, %cst_36 {dimension_numbers = #tpu.dot_dimension_numbers<[1], [0], [0], [1], [0, 0, 1, 1], [], []>} : vector<2x43xf32>, vector<43x4xf32>, vector<2x4xf32> -> vector<2x4xf32>
    %45 = arith.addf %44, %33 : vector<2x4xf32>
    %46 = vector.extract_strided_slice %45 {offsets = [0, 0], sizes = [2, 1], strides = [1, 1]} : vector<2x4xf32> to vector<2x1xf32>
    %47 = vector.broadcast %46 : vector<2x1xf32> to vector<2x11xf32>
    %48 = arith.mulf %47, %36 : vector<2x11xf32>
    %49 = vector.extract_strided_slice %45 {offsets = [0, 1], sizes = [2, 1], strides = [1, 1]} : vector<2x4xf32> to vector<2x1xf32>
    %50 = vector.broadcast %49 : vector<2x1xf32> to vector<2x11xf32>
    %51 = arith.mulf %50, %36 : vector<2x11xf32>
    %52 = vector.extract_strided_slice %45 {offsets = [0, 2], sizes = [2, 1], strides = [1, 1]} : vector<2x4xf32> to vector<2x1xf32>
    %53 = vector.broadcast %52 : vector<2x1xf32> to vector<2x11xf32>
    %54 = arith.mulf %53, %36 : vector<2x11xf32>
    %55 = vector.extract_strided_slice %45 {offsets = [0, 3], sizes = [2, 1], strides = [1, 1]} : vector<2x4xf32> to vector<2x1xf32>
    %56 = vector.broadcast %55 : vector<2x1xf32> to vector<2x11xf32>
    %57 = arith.mulf %56, %36 : vector<2x11xf32>
    %58 = tpu.concatenate %36, %48, %51, %54, %57 in 1 : vector<2x11xf32>, vector<2x11xf32>, vector<2x11xf32>, vector<2x11xf32>, vector<2x11xf32> -> vector<2x55xf32>
    %cst_37 = arith.constant dense<0.000000e+00> : vector<2x10xf32>
    %59 = tpu.matmul %58, %24, %cst_37 {dimension_numbers = #tpu.dot_dimension_numbers<[1], [0], [0], [1], [0, 0, 1, 1], [], []>, precision = #tpu.contract_precision<fp32>} : vector<2x55xf32>, vector<55x10xf32>, vector<2x10xf32> -> vector<2x10xf32>
    %60 = vector.extract_strided_slice %59 {offsets = [0, 0], sizes = [2, 8], strides = [1, 1]} : vector<2x10xf32> to vector<2x8xf32>
    %61 = vector.extract_strided_slice %59 {offsets = [0, 8], sizes = [2, 2], strides = [1, 1]} : vector<2x10xf32> to vector<2x2xf32>
    %62 = vector.extract_strided_slice %34 {offsets = [0, 3], sizes = [2, 3], strides = [1, 1]} : vector<2x24xf32> to vector<2x3xf32>
    %63 = tpu.concatenate %60, %62 in 1 : vector<2x8xf32>, vector<2x3xf32> -> vector<2x11xf32>
    %cst_38 = arith.constant dense<0.000000e+00> : vector<2x32xf32>
    %64 = tpu.matmul %63, %21, %cst_38 {dimension_numbers = #tpu.dot_dimension_numbers<[1], [0], [0], [1], [0, 0, 1, 1], [], []>} : vector<2x11xf32>, vector<11x32xf32>, vector<2x32xf32> -> vector<2x32xf32>
    %65 = arith.addf %64, %27 : vector<2x32xf32>
    %66 = math.tanh %65 : vector<2x32xf32>
    %cst_39 = arith.constant dense<0.000000e+00> : vector<2x32xf32>
    %67 = tpu.matmul %66, %22, %cst_39 {dimension_numbers = #tpu.dot_dimension_numbers<[1], [0], [0], [1], [0, 0, 1, 1], [], []>} : vector<2x32xf32>, vector<32x32xf32>, vector<2x32xf32> -> vector<2x32xf32>
    %68 = arith.addf %67, %30 : vector<2x32xf32>
    %69 = math.tanh %68 : vector<2x32xf32>
    %70 = tpu.concatenate %63, %69 in 1 : vector<2x11xf32>, vector<2x32xf32> -> vector<2x43xf32>
    %cst_40 = arith.constant dense<0.000000e+00> : vector<2x4xf32>
    %71 = tpu.matmul %70, %23, %cst_40 {dimension_numbers = #tpu.dot_dimension_numbers<[1], [0], [0], [1], [0, 0, 1, 1], [], []>} : vector<2x43xf32>, vector<43x4xf32>, vector<2x4xf32> -> vector<2x4xf32>
    %72 = arith.addf %71, %33 : vector<2x4xf32>
    %73 = vector.extract_strided_slice %72 {offsets = [0, 0], sizes = [2, 1], strides = [1, 1]} : vector<2x4xf32> to vector<2x1xf32>
    %74 = vector.broadcast %73 : vector<2x1xf32> to vector<2x11xf32>
    %75 = arith.mulf %74, %63 : vector<2x11xf32>
    %76 = vector.extract_strided_slice %72 {offsets = [0, 1], sizes = [2, 1], strides = [1, 1]} : vector<2x4xf32> to vector<2x1xf32>
    %77 = vector.broadcast %76 : vector<2x1xf32> to vector<2x11xf32>
    %78 = arith.mulf %77, %63 : vector<2x11xf32>
    %79 = vector.extract_strided_slice %72 {offsets = [0, 2], sizes = [2, 1], strides = [1, 1]} : vector<2x4xf32> to vector<2x1xf32>
    %80 = vector.broadcast %79 : vector<2x1xf32> to vector<2x11xf32>
    %81 = arith.mulf %80, %63 : vector<2x11xf32>
    %82 = vector.extract_strided_slice %72 {offsets = [0, 3], sizes = [2, 1], strides = [1, 1]} : vector<2x4xf32> to vector<2x1xf32>
    %83 = vector.broadcast %82 : vector<2x1xf32> to vector<2x11xf32>
    %84 = arith.mulf %83, %63 : vector<2x11xf32>
    %85 = tpu.concatenate %63, %75, %78, %81, %84 in 1 : vector<2x11xf32>, vector<2x11xf32>, vector<2x11xf32>, vector<2x11xf32>, vector<2x11xf32> -> vector<2x55xf32>
    %cst_41 = arith.constant dense<0.000000e+00> : vector<2x10xf32>
    %86 = tpu.matmul %85, %24, %cst_41 {dimension_numbers = #tpu.dot_dimension_numbers<[1], [0], [0], [1], [0, 0, 1, 1], [], []>, precision = #tpu.contract_precision<fp32>} : vector<2x55xf32>, vector<55x10xf32>, vector<2x10xf32> -> vector<2x10xf32>
    %87 = vector.extract_strided_slice %86 {offsets = [0, 0], sizes = [2, 8], strides = [1, 1]} : vector<2x10xf32> to vector<2x8xf32>
    %88 = vector.extract_strided_slice %86 {offsets = [0, 8], sizes = [2, 2], strides = [1, 1]} : vector<2x10xf32> to vector<2x2xf32>
    %89 = vector.extract_strided_slice %34 {offsets = [0, 6], sizes = [2, 3], strides = [1, 1]} : vector<2x24xf32> to vector<2x3xf32>
    %90 = tpu.concatenate %87, %89 in 1 : vector<2x8xf32>, vector<2x3xf32> -> vector<2x11xf32>
    %cst_42 = arith.constant dense<0.000000e+00> : vector<2x32xf32>
    %91 = tpu.matmul %90, %21, %cst_42 {dimension_numbers = #tpu.dot_dimension_numbers<[1], [0], [0], [1], [0, 0, 1, 1], [], []>} : vector<2x11xf32>, vector<11x32xf32>, vector<2x32xf32> -> vector<2x32xf32>
    %92 = arith.addf %91, %27 : vector<2x32xf32>
    %93 = math.tanh %92 : vector<2x32xf32>
    %cst_43 = arith.constant dense<0.000000e+00> : vector<2x32xf32>
    %94 = tpu.matmul %93, %22, %cst_43 {dimension_numbers = #tpu.dot_dimension_numbers<[1], [0], [0], [1], [0, 0, 1, 1], [], []>} : vector<2x32xf32>, vector<32x32xf32>, vector<2x32xf32> -> vector<2x32xf32>
    %95 = arith.addf %94, %30 : vector<2x32xf32>
    %96 = math.tanh %95 : vector<2x32xf32>
    %97 = tpu.concatenate %90, %96 in 1 : vector<2x11xf32>, vector<2x32xf32> -> vector<2x43xf32>
    %cst_44 = arith.constant dense<0.000000e+00> : vector<2x4xf32>
    %98 = tpu.matmul %97, %23, %cst_44 {dimension_numbers = #tpu.dot_dimension_numbers<[1], [0], [0], [1], [0, 0, 1, 1], [], []>} : vector<2x43xf32>, vector<43x4xf32>, vector<2x4xf32> -> vector<2x4xf32>
    %99 = arith.addf %98, %33 : vector<2x4xf32>
    %100 = vector.extract_strided_slice %99 {offsets = [0, 0], sizes = [2, 1], strides = [1, 1]} : vector<2x4xf32> to vector<2x1xf32>
    %101 = vector.broadcast %100 : vector<2x1xf32> to vector<2x11xf32>
    %102 = arith.mulf %101, %90 : vector<2x11xf32>
    %103 = vector.extract_strided_slice %99 {offsets = [0, 1], sizes = [2, 1], strides = [1, 1]} : vector<2x4xf32> to vector<2x1xf32>
    %104 = vector.broadcast %103 : vector<2x1xf32> to vector<2x11xf32>
    %105 = arith.mulf %104, %90 : vector<2x11xf32>
    %106 = vector.extract_strided_slice %99 {offsets = [0, 2], sizes = [2, 1], strides = [1, 1]} : vector<2x4xf32> to vector<2x1xf32>
    %107 = vector.broadcast %106 : vector<2x1xf32> to vector<2x11xf32>
    %108 = arith.mulf %107, %90 : vector<2x11xf32>
    %109 = vector.extract_strided_slice %99 {offsets = [0, 3], sizes = [2, 1], strides = [1, 1]} : vector<2x4xf32> to vector<2x1xf32>
    %110 = vector.broadcast %109 : vector<2x1xf32> to vector<2x11xf32>
    %111 = arith.mulf %110, %90 : vector<2x11xf32>
    %112 = tpu.concatenate %90, %102, %105, %108, %111 in 1 : vector<2x11xf32>, vector<2x11xf32>, vector<2x11xf32>, vector<2x11xf32>, vector<2x11xf32> -> vector<2x55xf32>
    %cst_45 = arith.constant dense<0.000000e+00> : vector<2x10xf32>
    %113 = tpu.matmul %112, %24, %cst_45 {dimension_numbers = #tpu.dot_dimension_numbers<[1], [0], [0], [1], [0, 0, 1, 1], [], []>, precision = #tpu.contract_precision<fp32>} : vector<2x55xf32>, vector<55x10xf32>, vector<2x10xf32> -> vector<2x10xf32>
    %114 = vector.extract_strided_slice %113 {offsets = [0, 0], sizes = [2, 8], strides = [1, 1]} : vector<2x10xf32> to vector<2x8xf32>
    %115 = vector.extract_strided_slice %113 {offsets = [0, 8], sizes = [2, 2], strides = [1, 1]} : vector<2x10xf32> to vector<2x2xf32>
    %116 = vector.extract_strided_slice %34 {offsets = [0, 9], sizes = [2, 3], strides = [1, 1]} : vector<2x24xf32> to vector<2x3xf32>
    %117 = tpu.concatenate %114, %116 in 1 : vector<2x8xf32>, vector<2x3xf32> -> vector<2x11xf32>
    %cst_46 = arith.constant dense<0.000000e+00> : vector<2x32xf32>
    %118 = tpu.matmul %117, %21, %cst_46 {dimension_numbers = #tpu.dot_dimension_numbers<[1], [0], [0], [1], [0, 0, 1, 1], [], []>} : vector<2x11xf32>, vector<11x32xf32>, vector<2x32xf32> -> vector<2x32xf32>
    %119 = arith.addf %118, %27 : vector<2x32xf32>
    %120 = math.tanh %119 : vector<2x32xf32>
    %cst_47 = arith.constant dense<0.000000e+00> : vector<2x32xf32>
    %121 = tpu.matmul %120, %22, %cst_47 {dimension_numbers = #tpu.dot_dimension_numbers<[1], [0], [0], [1], [0, 0, 1, 1], [], []>} : vector<2x32xf32>, vector<32x32xf32>, vector<2x32xf32> -> vector<2x32xf32>
    %122 = arith.addf %121, %30 : vector<2x32xf32>
    %123 = math.tanh %122 : vector<2x32xf32>
    %124 = tpu.concatenate %117, %123 in 1 : vector<2x11xf32>, vector<2x32xf32> -> vector<2x43xf32>
    %cst_48 = arith.constant dense<0.000000e+00> : vector<2x4xf32>
    %125 = tpu.matmul %124, %23, %cst_48 {dimension_numbers = #tpu.dot_dimension_numbers<[1], [0], [0], [1], [0, 0, 1, 1], [], []>} : vector<2x43xf32>, vector<43x4xf32>, vector<2x4xf32> -> vector<2x4xf32>
    %126 = arith.addf %125, %33 : vector<2x4xf32>
    %127 = vector.extract_strided_slice %126 {offsets = [0, 0], sizes = [2, 1], strides = [1, 1]} : vector<2x4xf32> to vector<2x1xf32>
    %128 = vector.broadcast %127 : vector<2x1xf32> to vector<2x11xf32>
    %129 = arith.mulf %128, %117 : vector<2x11xf32>
    %130 = vector.extract_strided_slice %126 {offsets = [0, 1], sizes = [2, 1], strides = [1, 1]} : vector<2x4xf32> to vector<2x1xf32>
    %131 = vector.broadcast %130 : vector<2x1xf32> to vector<2x11xf32>
    %132 = arith.mulf %131, %117 : vector<2x11xf32>
    %133 = vector.extract_strided_slice %126 {offsets = [0, 2], sizes = [2, 1], strides = [1, 1]} : vector<2x4xf32> to vector<2x1xf32>
    %134 = vector.broadcast %133 : vector<2x1xf32> to vector<2x11xf32>
    %135 = arith.mulf %134, %117 : vector<2x11xf32>
    %136 = vector.extract_strided_slice %126 {offsets = [0, 3], sizes = [2, 1], strides = [1, 1]} : vector<2x4xf32> to vector<2x1xf32>
    %137 = vector.broadcast %136 : vector<2x1xf32> to vector<2x11xf32>
    %138 = arith.mulf %137, %117 : vector<2x11xf32>
    %139 = tpu.concatenate %117, %129, %132, %135, %138 in 1 : vector<2x11xf32>, vector<2x11xf32>, vector<2x11xf32>, vector<2x11xf32>, vector<2x11xf32> -> vector<2x55xf32>
    %cst_49 = arith.constant dense<0.000000e+00> : vector<2x10xf32>
    %140 = tpu.matmul %139, %24, %cst_49 {dimension_numbers = #tpu.dot_dimension_numbers<[1], [0], [0], [1], [0, 0, 1, 1], [], []>, precision = #tpu.contract_precision<fp32>} : vector<2x55xf32>, vector<55x10xf32>, vector<2x10xf32> -> vector<2x10xf32>
    %141 = vector.extract_strided_slice %140 {offsets = [0, 0], sizes = [2, 8], strides = [1, 1]} : vector<2x10xf32> to vector<2x8xf32>
    %142 = vector.extract_strided_slice %140 {offsets = [0, 8], sizes = [2, 2], strides = [1, 1]} : vector<2x10xf32> to vector<2x2xf32>
    %143 = vector.extract_strided_slice %34 {offsets = [0, 12], sizes = [2, 3], strides = [1, 1]} : vector<2x24xf32> to vector<2x3xf32>
    %144 = tpu.concatenate %141, %143 in 1 : vector<2x8xf32>, vector<2x3xf32> -> vector<2x11xf32>
    %cst_50 = arith.constant dense<0.000000e+00> : vector<2x32xf32>
    %145 = tpu.matmul %144, %21, %cst_50 {dimension_numbers = #tpu.dot_dimension_numbers<[1], [0], [0], [1], [0, 0, 1, 1], [], []>} : vector<2x11xf32>, vector<11x32xf32>, vector<2x32xf32> -> vector<2x32xf32>
    %146 = arith.addf %145, %27 : vector<2x32xf32>
    %147 = math.tanh %146 : vector<2x32xf32>
    %cst_51 = arith.constant dense<0.000000e+00> : vector<2x32xf32>
    %148 = tpu.matmul %147, %22, %cst_51 {dimension_numbers = #tpu.dot_dimension_numbers<[1], [0], [0], [1], [0, 0, 1, 1], [], []>} : vector<2x32xf32>, vector<32x32xf32>, vector<2x32xf32> -> vector<2x32xf32>
    %149 = arith.addf %148, %30 : vector<2x32xf32>
    %150 = math.tanh %149 : vector<2x32xf32>
    %151 = tpu.concatenate %144, %150 in 1 : vector<2x11xf32>, vector<2x32xf32> -> vector<2x43xf32>
    %cst_52 = arith.constant dense<0.000000e+00> : vector<2x4xf32>
    %152 = tpu.matmul %151, %23, %cst_52 {dimension_numbers = #tpu.dot_dimension_numbers<[1], [0], [0], [1], [0, 0, 1, 1], [], []>} : vector<2x43xf32>, vector<43x4xf32>, vector<2x4xf32> -> vector<2x4xf32>
    %153 = arith.addf %152, %33 : vector<2x4xf32>
    %154 = vector.extract_strided_slice %153 {offsets = [0, 0], sizes = [2, 1], strides = [1, 1]} : vector<2x4xf32> to vector<2x1xf32>
    %155 = vector.broadcast %154 : vector<2x1xf32> to vector<2x11xf32>
    %156 = arith.mulf %155, %144 : vector<2x11xf32>
    %157 = vector.extract_strided_slice %153 {offsets = [0, 1], sizes = [2, 1], strides = [1, 1]} : vector<2x4xf32> to vector<2x1xf32>
    %158 = vector.broadcast %157 : vector<2x1xf32> to vector<2x11xf32>
    %159 = arith.mulf %158, %144 : vector<2x11xf32>
    %160 = vector.extract_strided_slice %153 {offsets = [0, 2], sizes = [2, 1], strides = [1, 1]} : vector<2x4xf32> to vector<2x1xf32>
    %161 = vector.broadcast %160 : vector<2x1xf32> to vector<2x11xf32>
    %162 = arith.mulf %161, %144 : vector<2x11xf32>
    %163 = vector.extract_strided_slice %153 {offsets = [0, 3], sizes = [2, 1], strides = [1, 1]} : vector<2x4xf32> to vector<2x1xf32>
    %164 = vector.broadcast %163 : vector<2x1xf32> to vector<2x11xf32>
    %165 = arith.mulf %164, %144 : vector<2x11xf32>
    %166 = tpu.concatenate %144, %156, %159, %162, %165 in 1 : vector<2x11xf32>, vector<2x11xf32>, vector<2x11xf32>, vector<2x11xf32>, vector<2x11xf32> -> vector<2x55xf32>
    %cst_53 = arith.constant dense<0.000000e+00> : vector<2x10xf32>
    %167 = tpu.matmul %166, %24, %cst_53 {dimension_numbers = #tpu.dot_dimension_numbers<[1], [0], [0], [1], [0, 0, 1, 1], [], []>, precision = #tpu.contract_precision<fp32>} : vector<2x55xf32>, vector<55x10xf32>, vector<2x10xf32> -> vector<2x10xf32>
    %168 = vector.extract_strided_slice %167 {offsets = [0, 0], sizes = [2, 8], strides = [1, 1]} : vector<2x10xf32> to vector<2x8xf32>
    %169 = vector.extract_strided_slice %167 {offsets = [0, 8], sizes = [2, 2], strides = [1, 1]} : vector<2x10xf32> to vector<2x2xf32>
    %170 = vector.extract_strided_slice %34 {offsets = [0, 15], sizes = [2, 3], strides = [1, 1]} : vector<2x24xf32> to vector<2x3xf32>
    %171 = tpu.concatenate %168, %170 in 1 : vector<2x8xf32>, vector<2x3xf32> -> vector<2x11xf32>
    %cst_54 = arith.constant dense<0.000000e+00> : vector<2x32xf32>
    %172 = tpu.matmul %171, %21, %cst_54 {dimension_numbers = #tpu.dot_dimension_numbers<[1], [0], [0], [1], [0, 0, 1, 1], [], []>} : vector<2x11xf32>, vector<11x32xf32>, vector<2x32xf32> -> vector<2x32xf32>
    %173 = arith.addf %172, %27 : vector<2x32xf32>
    %174 = math.tanh %173 : vector<2x32xf32>
    %cst_55 = arith.constant dense<0.000000e+00> : vector<2x32xf32>
    %175 = tpu.matmul %174, %22, %cst_55 {dimension_numbers = #tpu.dot_dimension_numbers<[1], [0], [0], [1], [0, 0, 1, 1], [], []>} : vector<2x32xf32>, vector<32x32xf32>, vector<2x32xf32> -> vector<2x32xf32>
    %176 = arith.addf %175, %30 : vector<2x32xf32>
    %177 = math.tanh %176 : vector<2x32xf32>
    %178 = tpu.concatenate %171, %177 in 1 : vector<2x11xf32>, vector<2x32xf32> -> vector<2x43xf32>
    %cst_56 = arith.constant dense<0.000000e+00> : vector<2x4xf32>
    %179 = tpu.matmul %178, %23, %cst_56 {dimension_numbers = #tpu.dot_dimension_numbers<[1], [0], [0], [1], [0, 0, 1, 1], [], []>} : vector<2x43xf32>, vector<43x4xf32>, vector<2x4xf32> -> vector<2x4xf32>
    %180 = arith.addf %179, %33 : vector<2x4xf32>
    %181 = vector.extract_strided_slice %180 {offsets = [0, 0], sizes = [2, 1], strides = [1, 1]} : vector<2x4xf32> to vector<2x1xf32>
    %182 = vector.broadcast %181 : vector<2x1xf32> to vector<2x11xf32>
    %183 = arith.mulf %182, %171 : vector<2x11xf32>
    %184 = vector.extract_strided_slice %180 {offsets = [0, 1], sizes = [2, 1], strides = [1, 1]} : vector<2x4xf32> to vector<2x1xf32>
    %185 = vector.broadcast %184 : vector<2x1xf32> to vector<2x11xf32>
    %186 = arith.mulf %185, %171 : vector<2x11xf32>
    %187 = vector.extract_strided_slice %180 {offsets = [0, 2], sizes = [2, 1], strides = [1, 1]} : vector<2x4xf32> to vector<2x1xf32>
    %188 = vector.broadcast %187 : vector<2x1xf32> to vector<2x11xf32>
    %189 = arith.mulf %188, %171 : vector<2x11xf32>
    %190 = vector.extract_strided_slice %180 {offsets = [0, 3], sizes = [2, 1], strides = [1, 1]} : vector<2x4xf32> to vector<2x1xf32>
    %191 = vector.broadcast %190 : vector<2x1xf32> to vector<2x11xf32>
    %192 = arith.mulf %191, %171 : vector<2x11xf32>
    %193 = tpu.concatenate %171, %183, %186, %189, %192 in 1 : vector<2x11xf32>, vector<2x11xf32>, vector<2x11xf32>, vector<2x11xf32>, vector<2x11xf32> -> vector<2x55xf32>
    %cst_57 = arith.constant dense<0.000000e+00> : vector<2x10xf32>
    %194 = tpu.matmul %193, %24, %cst_57 {dimension_numbers = #tpu.dot_dimension_numbers<[1], [0], [0], [1], [0, 0, 1, 1], [], []>, precision = #tpu.contract_precision<fp32>} : vector<2x55xf32>, vector<55x10xf32>, vector<2x10xf32> -> vector<2x10xf32>
    %195 = vector.extract_strided_slice %194 {offsets = [0, 0], sizes = [2, 8], strides = [1, 1]} : vector<2x10xf32> to vector<2x8xf32>
    %196 = vector.extract_strided_slice %194 {offsets = [0, 8], sizes = [2, 2], strides = [1, 1]} : vector<2x10xf32> to vector<2x2xf32>
    %197 = vector.extract_strided_slice %34 {offsets = [0, 18], sizes = [2, 3], strides = [1, 1]} : vector<2x24xf32> to vector<2x3xf32>
    %198 = tpu.concatenate %195, %197 in 1 : vector<2x8xf32>, vector<2x3xf32> -> vector<2x11xf32>
    %cst_58 = arith.constant dense<0.000000e+00> : vector<2x32xf32>
    %199 = tpu.matmul %198, %21, %cst_58 {dimension_numbers = #tpu.dot_dimension_numbers<[1], [0], [0], [1], [0, 0, 1, 1], [], []>} : vector<2x11xf32>, vector<11x32xf32>, vector<2x32xf32> -> vector<2x32xf32>
    %200 = arith.addf %199, %27 : vector<2x32xf32>
    %201 = math.tanh %200 : vector<2x32xf32>
    %cst_59 = arith.constant dense<0.000000e+00> : vector<2x32xf32>
    %202 = tpu.matmul %201, %22, %cst_59 {dimension_numbers = #tpu.dot_dimension_numbers<[1], [0], [0], [1], [0, 0, 1, 1], [], []>} : vector<2x32xf32>, vector<32x32xf32>, vector<2x32xf32> -> vector<2x32xf32>
    %203 = arith.addf %202, %30 : vector<2x32xf32>
    %204 = math.tanh %203 : vector<2x32xf32>
    %205 = tpu.concatenate %198, %204 in 1 : vector<2x11xf32>, vector<2x32xf32> -> vector<2x43xf32>
    %cst_60 = arith.constant dense<0.000000e+00> : vector<2x4xf32>
    %206 = tpu.matmul %205, %23, %cst_60 {dimension_numbers = #tpu.dot_dimension_numbers<[1], [0], [0], [1], [0, 0, 1, 1], [], []>} : vector<2x43xf32>, vector<43x4xf32>, vector<2x4xf32> -> vector<2x4xf32>
    %207 = arith.addf %206, %33 : vector<2x4xf32>
    %208 = vector.extract_strided_slice %207 {offsets = [0, 0], sizes = [2, 1], strides = [1, 1]} : vector<2x4xf32> to vector<2x1xf32>
    %209 = vector.broadcast %208 : vector<2x1xf32> to vector<2x11xf32>
    %210 = arith.mulf %209, %198 : vector<2x11xf32>
    %211 = vector.extract_strided_slice %207 {offsets = [0, 1], sizes = [2, 1], strides = [1, 1]} : vector<2x4xf32> to vector<2x1xf32>
    %212 = vector.broadcast %211 : vector<2x1xf32> to vector<2x11xf32>
    %213 = arith.mulf %212, %198 : vector<2x11xf32>
    %214 = vector.extract_strided_slice %207 {offsets = [0, 2], sizes = [2, 1], strides = [1, 1]} : vector<2x4xf32> to vector<2x1xf32>
    %215 = vector.broadcast %214 : vector<2x1xf32> to vector<2x11xf32>
    %216 = arith.mulf %215, %198 : vector<2x11xf32>
    %217 = vector.extract_strided_slice %207 {offsets = [0, 3], sizes = [2, 1], strides = [1, 1]} : vector<2x4xf32> to vector<2x1xf32>
    %218 = vector.broadcast %217 : vector<2x1xf32> to vector<2x11xf32>
    %219 = arith.mulf %218, %198 : vector<2x11xf32>
    %220 = tpu.concatenate %198, %210, %213, %216, %219 in 1 : vector<2x11xf32>, vector<2x11xf32>, vector<2x11xf32>, vector<2x11xf32>, vector<2x11xf32> -> vector<2x55xf32>
    %cst_61 = arith.constant dense<0.000000e+00> : vector<2x10xf32>
    %221 = tpu.matmul %220, %24, %cst_61 {dimension_numbers = #tpu.dot_dimension_numbers<[1], [0], [0], [1], [0, 0, 1, 1], [], []>, precision = #tpu.contract_precision<fp32>} : vector<2x55xf32>, vector<55x10xf32>, vector<2x10xf32> -> vector<2x10xf32>
    %222 = vector.extract_strided_slice %221 {offsets = [0, 0], sizes = [2, 8], strides = [1, 1]} : vector<2x10xf32> to vector<2x8xf32>
    %223 = vector.extract_strided_slice %221 {offsets = [0, 8], sizes = [2, 2], strides = [1, 1]} : vector<2x10xf32> to vector<2x2xf32>
    %224 = vector.extract_strided_slice %34 {offsets = [0, 21], sizes = [2, 3], strides = [1, 1]} : vector<2x24xf32> to vector<2x3xf32>
    %225 = tpu.concatenate %222, %224 in 1 : vector<2x8xf32>, vector<2x3xf32> -> vector<2x11xf32>
    %cst_62 = arith.constant dense<0.000000e+00> : vector<2x32xf32>
    %226 = tpu.matmul %225, %21, %cst_62 {dimension_numbers = #tpu.dot_dimension_numbers<[1], [0], [0], [1], [0, 0, 1, 1], [], []>} : vector<2x11xf32>, vector<11x32xf32>, vector<2x32xf32> -> vector<2x32xf32>
    %227 = arith.addf %226, %27 : vector<2x32xf32>
    %228 = math.tanh %227 : vector<2x32xf32>
    %cst_63 = arith.constant dense<0.000000e+00> : vector<2x32xf32>
    %229 = tpu.matmul %228, %22, %cst_63 {dimension_numbers = #tpu.dot_dimension_numbers<[1], [0], [0], [1], [0, 0, 1, 1], [], []>} : vector<2x32xf32>, vector<32x32xf32>, vector<2x32xf32> -> vector<2x32xf32>
    %230 = arith.addf %229, %30 : vector<2x32xf32>
    %231 = math.tanh %230 : vector<2x32xf32>
    %232 = tpu.concatenate %225, %231 in 1 : vector<2x11xf32>, vector<2x32xf32> -> vector<2x43xf32>
    %cst_64 = arith.constant dense<0.000000e+00> : vector<2x4xf32>
    %233 = tpu.matmul %232, %23, %cst_64 {dimension_numbers = #tpu.dot_dimension_numbers<[1], [0], [0], [1], [0, 0, 1, 1], [], []>} : vector<2x43xf32>, vector<43x4xf32>, vector<2x4xf32> -> vector<2x4xf32>
    %234 = arith.addf %233, %33 : vector<2x4xf32>
    %235 = vector.extract_strided_slice %234 {offsets = [0, 0], sizes = [2, 1], strides = [1, 1]} : vector<2x4xf32> to vector<2x1xf32>
    %236 = vector.broadcast %235 : vector<2x1xf32> to vector<2x11xf32>
    %237 = arith.mulf %236, %225 : vector<2x11xf32>
    %238 = vector.extract_strided_slice %234 {offsets = [0, 1], sizes = [2, 1], strides = [1, 1]} : vector<2x4xf32> to vector<2x1xf32>
    %239 = vector.broadcast %238 : vector<2x1xf32> to vector<2x11xf32>
    %240 = arith.mulf %239, %225 : vector<2x11xf32>
    %241 = vector.extract_strided_slice %234 {offsets = [0, 2], sizes = [2, 1], strides = [1, 1]} : vector<2x4xf32> to vector<2x1xf32>
    %242 = vector.broadcast %241 : vector<2x1xf32> to vector<2x11xf32>
    %243 = arith.mulf %242, %225 : vector<2x11xf32>
    %244 = vector.extract_strided_slice %234 {offsets = [0, 3], sizes = [2, 1], strides = [1, 1]} : vector<2x4xf32> to vector<2x1xf32>
    %245 = vector.broadcast %244 : vector<2x1xf32> to vector<2x11xf32>
    %246 = arith.mulf %245, %225 : vector<2x11xf32>
    %247 = tpu.concatenate %225, %237, %240, %243, %246 in 1 : vector<2x11xf32>, vector<2x11xf32>, vector<2x11xf32>, vector<2x11xf32>, vector<2x11xf32> -> vector<2x55xf32>
    %cst_65 = arith.constant dense<0.000000e+00> : vector<2x10xf32>
    %248 = tpu.matmul %247, %24, %cst_65 {dimension_numbers = #tpu.dot_dimension_numbers<[1], [0], [0], [1], [0, 0, 1, 1], [], []>, precision = #tpu.contract_precision<fp32>} : vector<2x55xf32>, vector<55x10xf32>, vector<2x10xf32> -> vector<2x10xf32>
    %249 = vector.extract_strided_slice %248 {offsets = [0, 8], sizes = [2, 2], strides = [1, 1]} : vector<2x10xf32> to vector<2x2xf32>
    %250 = tpu.concatenate %61, %88, %115, %142, %169, %196, %223, %249 in 1 : vector<2x2xf32>, vector<2x2xf32>, vector<2x2xf32>, vector<2x2xf32>, vector<2x2xf32>, vector<2x2xf32>, vector<2x2xf32>, vector<2x2xf32> -> vector<2x16xf32>
    %c0_66 = arith.constant 0 : index
    %c0_67 = arith.constant 0 : index
    %251 = vector.load %arg16[%c0_66, %c0_67] : memref<2x16xf32, #tpu.memory_space<vmem>>, vector<2x16xf32>
    tpu.vector_store %arg16[%c0_66, %c0_67], %250 {strides = array<i32>} : memref<2x16xf32, #tpu.memory_space<vmem>>, vector<2x16xf32>,
    return
  }
}

</mosaic_0001>

<llo_original>
// kernel: tpu_custom_call.1
$region0: #{tpu_custom_call.1}
  #allocation0 [shape = 'u32[]', space=smem, size = 0x4, offset = 0x4, fixed_abs, tag = 'smem constant byte address 0x4 - core index']
  #allocation1 [shape = 'u32[144,128]{1,0:T(1,128)}', space=vmem, size = 0x12000, scoped, tag = 'internal scratch']
  %s0 = inlined_call_operand.vmem [shape: f32[2,20], index: 0, kind: input, shape index: {}]
  %s1 = inlined_call_operand.vmem [shape: f32[2,24], index: 1, kind: input, shape index: {}]
  %s2 = inlined_call_operand.vmem [shape: f32[20,32], index: 2, kind: input, shape index: {}]
  %s3 = inlined_call_operand.vmem [shape: f32[1,32], index: 3, kind: input, shape index: {}]
  %s4 = inlined_call_operand.vmem [shape: f32[32,32], index: 4, kind: input, shape index: {}]
  %s5 = inlined_call_operand.vmem [shape: f32[1,32], index: 5, kind: input, shape index: {}]
  %s6 = inlined_call_operand.vmem [shape: f32[32,8], index: 6, kind: input, shape index: {}]
  %s7 = inlined_call_operand.vmem [shape: f32[20,8], index: 7, kind: input, shape index: {}]
  %s8 = inlined_call_operand.vmem [shape: f32[1,8], index: 8, kind: input, shape index: {}]
  %s9 = inlined_call_operand.vmem [shape: f32[11,32], index: 9, kind: input, shape index: {}]
  %s10 = inlined_call_operand.vmem [shape: f32[1,32], index: 10, kind: input, shape index: {}]
  %s11 = inlined_call_operand.vmem [shape: f32[32,32], index: 11, kind: input, shape index: {}]
  %s12 = inlined_call_operand.vmem [shape: f32[1,32], index: 12, kind: input, shape index: {}]
  %s13 = inlined_call_operand.vmem [shape: f32[43,4], index: 13, kind: input, shape index: {}]
  %s14 = inlined_call_operand.vmem [shape: f32[1,4], index: 14, kind: input, shape index: {}]
  %s15 = inlined_call_operand.vmem [shape: f32[55,10], index: 15, kind: input, shape index: {}]
  %s16 = inlined_call_operand.hbm [shape: f32[2,16], index: 16, kind: output, shape index: {}]
  %s17 = sld [smem:[#allocation0]]
  $region74: #{tpu_custom_call.1} parent=0
    _
  %s19 = ssub.s32 1, %s17
  %s20 = scalar_select 0, %s19, %s17
  $region1: #{tpu_custom_call.1} parent=0
    #allocation2 [shape = 'u8[1024]{0}', space=vmem, size = 0x400, scoped, tag = 'output window, operand 0, single buffered']
    #allocation3 [shape = 's32[1]{0}', space=sflag, size = 0x4, scoped, tag = 'scoped memory for tpu_custom_call.1']
    %21 = vsyncpa [#allocation3], 0
    // Predicated region
    $region2: #{tpu_custom_call.1} parent=1 // pred_check
      _
    $region3: #{tpu_custom_call.1} parent=1 // pred_check_branch
      %23 = sbr.rel (0) target = $region5
    $region4: #{tpu_custom_call.1} parent=1 // pred_region
      _
    $region5: #{tpu_custom_call.1} parent=1 // pred_fallthru
      _
    // Predicated region
    $region6: #{tpu_custom_call.1} parent=1 // pred_check
      _
    $region7: #{tpu_custom_call.1} parent=1 // pred_check_branch
      %25 = sbr.rel (0) target = $region9
    $region8: #{tpu_custom_call.1} parent=1 // pred_region
      _
    $region9: #{tpu_custom_call.1} parent=1 // pred_fallthru
      _
    // Predicated region
    $region10: #{tpu_custom_call.1} parent=1 // pred_check
      _
    $region11: #{tpu_custom_call.1} parent=1 // pred_check_branch
      %27 = sbr.rel (0) target = $region13
    $region12: #{tpu_custom_call.1} parent=1 // pred_region
      _
    $region13: #{tpu_custom_call.1} parent=1 // pred_fallthru
      _
    // Predicated region
    $region14: #{tpu_custom_call.1} parent=1 // pred_check
      _
    $region15: #{tpu_custom_call.1} parent=1 // pred_check_branch
      %29 = sbr.rel (0) target = $region17
    $region16: #{tpu_custom_call.1} parent=1 // pred_region
      _
    $region17: #{tpu_custom_call.1} parent=1 // pred_fallthru
      _
    // Predicated region
    $region18: #{tpu_custom_call.1} parent=1 // pred_check
      _
    $region19: #{tpu_custom_call.1} parent=1 // pred_check_branch
      %31 = sbr.rel (0) target = $region21
    $region20: #{tpu_custom_call.1} parent=1 // pred_region
      _
    $region21: #{tpu_custom_call.1} parent=1 // pred_fallthru
      _
    // Predicated region
    $region22: #{tpu_custom_call.1} parent=1 // pred_check
      _
    $region23: #{tpu_custom_call.1} parent=1 // pred_check_branch
      %33 = sbr.rel (0) target = $region25
    $region24: #{tpu_custom_call.1} parent=1 // pred_region
      _
    $region25: #{tpu_custom_call.1} parent=1 // pred_fallthru
      _
    // Predicated region
    $region26: #{tpu_custom_call.1} parent=1 // pred_check
      _
    $region27: #{tpu_custom_call.1} parent=1 // pred_check_branch
      %35 = sbr.rel (0) target = $region29
    $region28: #{tpu_custom_call.1} parent=1 // pred_region
      _
    $region29: #{tpu_custom_call.1} parent=1 // pred_fallthru
      _
    // Predicated region
    $region30: #{tpu_custom_call.1} parent=1 // pred_check
      _
    $region31: #{tpu_custom_call.1} parent=1 // pred_check_branch
      %37 = sbr.rel (0) target = $region33
    $region32: #{tpu_custom_call.1} parent=1 // pred_region
      _
    $region33: #{tpu_custom_call.1} parent=1 // pred_fallthru
      _
    // Predicated region
    $region34: #{tpu_custom_call.1} parent=1 // pred_check
      _
    $region35: #{tpu_custom_call.1} parent=1 // pred_check_branch
      %39 = sbr.rel (0) target = $region37
    $region36: #{tpu_custom_call.1} parent=1 // pred_region
      _
    $region37: #{tpu_custom_call.1} parent=1 // pred_fallthru
      _
    // Predicated region
    $region38: #{tpu_custom_call.1} parent=1 // pred_check
      _
    $region39: #{tpu_custom_call.1} parent=1 // pred_check_branch
      %41 = sbr.rel (0) target = $region41
    $region40: #{tpu_custom_call.1} parent=1 // pred_region
      _
    $region41: #{tpu_custom_call.1} parent=1 // pred_fallthru
      _
    // Predicated region
    $region42: #{tpu_custom_call.1} parent=1 // pred_check
      _
    $region43: #{tpu_custom_call.1} parent=1 // pred_check_branch
      %43 = sbr.rel (0) target = $region45
    $region44: #{tpu_custom_call.1} parent=1 // pred_region
      _
    $region45: #{tpu_custom_call.1} parent=1 // pred_fallthru
      _
    // Predicated region
    $region46: #{tpu_custom_call.1} parent=1 // pred_check
      _
    $region47: #{tpu_custom_call.1} parent=1 // pred_check_branch
      %45 = sbr.rel (0) target = $region49
    $region48: #{tpu_custom_call.1} parent=1 // pred_region
      _
    $region49: #{tpu_custom_call.1} parent=1 // pred_fallthru
      _
    // Predicated region
    $region50: #{tpu_custom_call.1} parent=1 // pred_check
      _
    $region51: #{tpu_custom_call.1} parent=1 // pred_check_branch
      %47 = sbr.rel (0) target = $region53
    $region52: #{tpu_custom_call.1} parent=1 // pred_region
      _
    $region53: #{tpu_custom_call.1} parent=1 // pred_fallthru
      _
    // Predicated region
    $region54: #{tpu_custom_call.1} parent=1 // pred_check
      _
    $region55: #{tpu_custom_call.1} parent=1 // pred_check_branch
      %49 = sbr.rel (0) target = $region57
    $region56: #{tpu_custom_call.1} parent=1 // pred_region
      _
    $region57: #{tpu_custom_call.1} parent=1 // pred_fallthru
      _
    // Predicated region
    $region58: #{tpu_custom_call.1} parent=1 // pred_check
      _
    $region59: #{tpu_custom_call.1} parent=1 // pred_check_branch
      %51 = sbr.rel (0) target = $region61
    $region60: #{tpu_custom_call.1} parent=1 // pred_region
      _
    $region61: #{tpu_custom_call.1} parent=1 // pred_fallthru
      _
    // Predicated region
    $region62: #{tpu_custom_call.1} parent=1 // pred_check
      _
    $region63: #{tpu_custom_call.1} parent=1 // pred_check_branch
      %53 = sbr.rel (0) target = $region65
    $region64: #{tpu_custom_call.1} parent=1 // pred_region
      _
    $region65: #{tpu_custom_call.1} parent=1 // pred_fallthru
      _
    %v54 = vld [vmem:[%s0] sm:$0x3]
    %v55 = vld [vmem:[%s2] sm:$0xff]
    %v56 = vld [vmem:[%s2 + $0x8] sm:$0xff]
    %v57 = vld [vmem:[%s2 + $0x10] sm:$0xf]
    %v58 = vld [vmem:[%s3] sm:$0x1]
    %v60 = vlaneseq
    %v61 = vshrl.u32 %v60, 7
    %v62 = vsub.s32 0, %v61
    %v63 = vrot.slane %v58, %v62
    %vm65 = vcmask 162816
    %v67 = vsel %vm65, %v54, 0
    %vm69 = vcmask 1043456
    %v71 = vsel %vm69, %v57, 0
    %73 = vmatprep.subr.mxu0 0.0
    %74 = vmatpush1.msra.mxu0 %v55
    %75 = vmatprep.subr.mxu0 0.0
    %76 = vmatpush1.msra.mxu0 %v56
    %77 = vmatprep.subr.mxu0 0.0
    %78 = vmatpush1.msra.mxu0 %v71
    %79 = vmatprep.subr.mxu0 0.0
    %80 = vmatpush1.msra.mxu0 0.0
    %81 = vmatprep.subr.mxu0 0.0
    %82 = vmatpush1.msra.mxu0 0.0
    %83 = vmatprep.subr.mxu0 0.0
    %84 = vmatpush1.msra.mxu0 0.0
    %85 = vmatprep.subr.mxu0 0.0
    %86 = vmatpush1.msra.mxu0 0.0
    %87 = vmatprep.subr.mxu0 0.0
    %88 = vmatpush1.msra.mxu0 0.0
    %89 = vmatprep.subr.mxu0 0.0
    %90 = vmatpush1.msra.mxu0 0.0
    %91 = vmatprep.subr.mxu0 0.0
    %92 = vmatpush1.msra.mxu0 0.0
    %93 = vmatprep.subr.mxu0 0.0
    %94 = vmatpush1.msra.mxu0 0.0
    %95 = vmatprep.subr.mxu0 0.0
    %96 = vmatpush1.msra.mxu0 0.0
    %97 = vmatprep.subr.mxu0 0.0
    %98 = vmatpush1.msra.mxu0 0.0
    %99 = vmatprep.subr.mxu0 0.0
    %100 = vmatpush1.msra.mxu0 0.0
    %101 = vmatprep.subr.mxu0 0.0
    %102 = vmatpush1.msra.mxu0 0.0
    %103 = vmatprep.subr.mxu0 0.0
    %104 = vmatpush1.msra.mxu0 0.0
    %105 = vmatprep.subr.mxu0 0.0
    %106 = vmatpush1.msra.mxu0 0.0
    %107 = vmatprep.subr.mxu0 0.0
    %108 = vmatpush1.msra.mxu0 0.0
    %109 = vmatprep.subr.mxu0 0.0
    %110 = vmatpush1.msra.mxu0 0.0
    %111 = vmatprep.subr.mxu0 0.0
    %112 = vmatpush1.msra.mxu0 0.0
    %113 = vmatprep.subr.mxu0 0.0
    %114 = vmatpush1.msra.mxu0 0.0
    %115 = vmatprep.subr.mxu0 0.0
    %116 = vmatpush1.msra.mxu0 0.0
    %117 = vmatprep.subr.mxu0 0.0
    %118 = vmatpush1.msra.mxu0 0.0
    %119 = vmatprep.subr.mxu0 0.0
    %120 = vmatpush1.msra.mxu0 0.0
    %121 = vmatprep.subr.mxu0 0.0
    %122 = vmatpush1.msra.mxu0 0.0
    %123 = vmatprep.subr.mxu0 0.0
    %124 = vmatpush1.msra.mxu0 0.0
    %125 = vmatprep.subr.mxu0 0.0
    %126 = vmatpush1.msra.mxu0 0.0
    %127 = vmatprep.subr.mxu0 0.0
    %128 = vmatpush1.msra.mxu0 0.0
    %129 = vmatprep.subr.mxu0 0.0
    %130 = vmatpush1.msra.mxu0 0.0
    %131 = vmatprep.subr.mxu0 0.0
    %132 = vmatpush1.msra.mxu0 0.0
    %133 = vmatprep.subr.mxu0 0.0
    %134 = vmatpush1.msra.mxu0 0.0
    %135 = vmatprep.subr.mxu0 0.0
    %136 = vmatpush1.msra.mxu0 0.0
    %137 = vmatprep.mubr.f32.mxu0 0.0
    %138 = vmatmul.mubr.f32.gmra.mrb[0].mxu0 %v67
    %v139 = vpop.f32.mrb[0].mxu0
    %v140 = vadd.f32 %v63, %v139
    %v141 = vpop.f32.mrb[0].mxu0
    %142 = vdwg.mxu0
    %v143 = vtanh.pop %v140
    %v144 = vld [vmem:[%s4] sm:$0xff]
    %v145 = vld [vmem:[%s4 + $0x8] sm:$0xff]
    %v146 = vld [vmem:[%s4 + $0x10] sm:$0xff]
    %v147 = vld [vmem:[%s4 + $0x18] sm:$0xff]
    %v148 = vld [vmem:[%s5] sm:$0x1]
    %v150 = vlaneseq
    %v151 = vshrl.u32 %v150, 7
    %v152 = vsub.s32 0, %v151
    %v153 = vrot.slane %v148, %v152
    %vm155 = vcmask 261120
    %v157 = vsel %vm155, %v143, 0
    %159 = vmatprep.subr.mxu0 0.0
    %160 = vmatpush1.msra.mxu0 %v144
    %161 = vmatprep.subr.mxu0 0.0
    %162 = vmatpush1.msra.mxu0 %v145
    %163 = vmatprep.subr.mxu0 0.0
    %164 = vmatpush1.msra.mxu0 %v146
    %165 = vmatprep.subr.mxu0 0.0
    %166 = vmatpush1.msra.mxu0 %v147
    %167 = vmatprep.subr.mxu0 0.0
    %168 = vmatpush1.msra.mxu0 0.0
    %169 = vmatprep.subr.mxu0 0.0
    %170 = vmatpush1.msra.mxu0 0.0
    %171 = vmatprep.subr.mxu0 0.0
    %172 = vmatpush1.msra.mxu0 0.0
    %173 = vmatprep.subr.mxu0 0.0
    %174 = vmatpush1.msra.mxu0 0.0
    %175 = vmatprep.subr.mxu0 0.0
    %176 = vmatpush1.msra.mxu0 0.0
    %177 = vmatprep.subr.mxu0 0.0
    %178 = vmatpush1.msra.mxu0 0.0
    %179 = vmatprep.subr.mxu0 0.0
    %180 = vmatpush1.msra.mxu0 0.0
    %181 = vmatprep.subr.mxu0 0.0
    %182 = vmatpush1.msra.mxu0 0.0
    %183 = vmatprep.subr.mxu0 0.0
    %184 = vmatpush1.msra.mxu0 0.0
    %185 = vmatprep.subr.mxu0 0.0
    %186 = vmatpush1.msra.mxu0 0.0
    %187 = vmatprep.subr.mxu0 0.0
    %188 = vmatpush1.msra.mxu0 0.0
    %189 = vmatprep.subr.mxu0 0.0
    %190 = vmatpush1.msra.mxu0 0.0
    %191 = vmatprep.subr.mxu0 0.0
    %192 = vmatpush1.msra.mxu0 0.0
    %193 = vmatprep.subr.mxu0 0.0
    %194 = vmatpush1.msra.mxu0 0.0
    %195 = vmatprep.subr.mxu0 0.0
    %196 = vmatpush1.msra.mxu0 0.0
    %197 = vmatprep.subr.mxu0 0.0
    %198 = vmatpush1.msra.mxu0 0.0
    %199 = vmatprep.subr.mxu0 0.0
    %200 = vmatpush1.msra.mxu0 0.0
    %201 = vmatprep.subr.mxu0 0.0
    %202 = vmatpush1.msra.mxu0 0.0
    %203 = vmatprep.subr.mxu0 0.0
    %204 = vmatpush1.msra.mxu0 0.0
    %205 = vmatprep.subr.mxu0 0.0
    %206 = vmatpush1.msra.mxu0 0.0
    %207 = vmatprep.subr.mxu0 0.0
    %208 = vmatpush1.msra.mxu0 0.0
    %209 = vmatprep.subr.mxu0 0.0
    %210 = vmatpush1.msra.mxu0 0.0
    %211 = vmatprep.subr.mxu0 0.0
    %212 = vmatpush1.msra.mxu0 0.0
    %213 = vmatprep.subr.mxu0 0.0
    %214 = vmatpush1.msra.mxu0 0.0
    %215 = vmatprep.subr.mxu0 0.0
    %216 = vmatpush1.msra.mxu0 0.0
    %217 = vmatprep.subr.mxu0 0.0
    %218 = vmatpush1.msra.mxu0 0.0
    %219 = vmatprep.subr.mxu0 0.0
    %220 = vmatpush1.msra.mxu0 0.0
    %221 = vmatprep.subr.mxu0 0.0
    %222 = vmatpush1.msra.mxu0 0.0
    %223 = vmatprep.mubr.f32.mxu0 0.0
    %224 = vmatmul.mubr.f32.gmra.mrb[0].mxu0 %v157
    %v225 = vpop.f32.mrb[0].mxu0
    %v226 = vadd.f32 %v153, %v225
    %v227 = vpop.f32.mrb[0].mxu0
    %228 = vdwg.mxu0
    %v229 = vtanh.pop %v226
    %v230 = vld [vmem:[%s7] sm:$0xff]
    %v231 = vld [vmem:[%s7 + $0x8] sm:$0xff]
    %v232 = vld [vmem:[%s7 + $0x10] sm:$0xf]
    %v233 = vld [vmem:[%s6] sm:$0xff]
    %v234 = vld [vmem:[%s6 + $0x8] sm:$0xff]
    %v235 = vld [vmem:[%s6 + $0x10] sm:$0xff]
    %v236 = vld [vmem:[%s6 + $0x18] sm:$0xff]
    %v238 = vsel %vm155, %v229, 0
    %240 = vmatprep.subr.mxu0 0.0
    %241 = vmatpush1.msra.mxu0 %v233
    %242 = vmatprep.subr.mxu0 0.0
    %243 = vmatpush1.msra.mxu0 %v234
    %244 = vmatprep.subr.mxu0 0.0
    %245 = vmatpush1.msra.mxu0 %v235
    %246 = vmatprep.subr.mxu0 0.0
    %247 = vmatpush1.msra.mxu0 %v236
    %248 = vmatprep.subr.mxu0 0.0
    %249 = vmatpush1.msra.mxu0 0.0
    %250 = vmatprep.subr.mxu0 0.0
    %251 = vmatpush1.msra.mxu0 0.0
    %252 = vmatprep.subr.mxu0 0.0
    %253 = vmatpush1.msra.mxu0 0.0
    %254 = vmatprep.subr.mxu0 0.0
    %255 = vmatpush1.msra.mxu0 0.0
    %256 = vmatprep.subr.mxu0 0.0
    %257 = vmatpush1.msra.mxu0 0.0
    %258 = vmatprep.subr.mxu0 0.0
    %259 = vmatpush1.msra.mxu0 0.0
    %260 = vmatprep.subr.mxu0 0.0
    %261 = vmatpush1.msra.mxu0 0.0
    %262 = vmatprep.subr.mxu0 0.0
    %263 = vmatpush1.msra.mxu0 0.0
    %264 = vmatprep.subr.mxu0 0.0
    %265 = vmatpush1.msra.mxu0 0.0
    %266 = vmatprep.subr.mxu0 0.0
    %267 = vmatpush1.msra.mxu0 0.0
    %268 = vmatprep.subr.mxu0 0.0
    %269 = vmatpush1.msra.mxu0 0.0
    %270 = vmatprep.subr.mxu0 0.0
    %271 = vmatpush1.msra.mxu0 0.0
    %272 = vmatprep.subr.mxu0 0.0
    %273 = vmatpush1.msra.mxu0 0.0
    %274 = vmatprep.subr.mxu0 0.0
    %275 = vmatpush1.msra.mxu0 0.0
    %276 = vmatprep.subr.mxu0 0.0
    %277 = vmatpush1.msra.mxu0 0.0
    %278 = vmatprep.subr.mxu0 0.0
    %279 = vmatpush1.msra.mxu0 0.0
    %280 = vmatprep.subr.mxu0 0.0
    %281 = vmatpush1.msra.mxu0 0.0
    %282 = vmatprep.subr.mxu0 0.0
    %283 = vmatpush1.msra.mxu0 0.0
    %284 = vmatprep.subr.mxu0 0.0
    %285 = vmatpush1.msra.mxu0 0.0
    %286 = vmatprep.subr.mxu0 0.0
    %287 = vmatpush1.msra.mxu0 0.0
    %288 = vmatprep.subr.mxu0 0.0
    %289 = vmatpush1.msra.mxu0 0.0
    %290 = vmatprep.subr.mxu0 0.0
    %291 = vmatpush1.msra.mxu0 0.0
    %292 = vmatprep.subr.mxu0 0.0
    %293 = vmatpush1.msra.mxu0 0.0
    %294 = vmatprep.subr.mxu0 0.0
    %295 = vmatpush1.msra.mxu0 0.0
    %296 = vmatprep.subr.mxu0 0.0
    %297 = vmatpush1.msra.mxu0 0.0
    %298 = vmatprep.subr.mxu0 0.0
    %299 = vmatpush1.msra.mxu0 0.0
    %300 = vmatprep.subr.mxu0 0.0
    %301 = vmatpush1.msra.mxu0 0.0
    %302 = vmatprep.subr.mxu0 0.0
    %303 = vmatpush1.msra.mxu0 0.0
    %304 = vmatprep.mubr.f32.mxu0 0.0
    %305 = vmatmul.mubr.f32.gmra.mrb[0].mxu0 %v238
    %v306 = vpop.f32.mrb[0].mxu0
    %v307 = vadd.f32 0.0, %v306
    %v308 = vpop.f32.mrb[0].mxu0
    %309 = vdwg.mxu0
    %v311 = vsel %vm69, %v232, 0
    %313 = vmatprep.subr.mxu0 0.0
    %314 = vmatpush1.msra.mxu0 %v230
    %315 = vmatprep.subr.mxu0 0.0
    %316 = vmatpush1.msra.mxu0 %v231
    %317 = vmatprep.subr.mxu0 0.0
    %318 = vmatpush1.msra.mxu0 %v311
    %319 = vmatprep.subr.mxu0 0.0
    %320 = vmatpush1.msra.mxu0 0.0
    %321 = vmatprep.subr.mxu0 0.0
    %322 = vmatpush1.msra.mxu0 0.0
    %323 = vmatprep.subr.mxu0 0.0
    %324 = vmatpush1.msra.mxu0 0.0
    %325 = vmatprep.subr.mxu0 0.0
    %326 = vmatpush1.msra.mxu0 0.0
    %327 = vmatprep.subr.mxu0 0.0
    %328 = vmatpush1.msra.mxu0 0.0
    %329 = vmatprep.subr.mxu0 0.0
    %330 = vmatpush1.msra.mxu0 0.0
    %331 = vmatprep.subr.mxu0 0.0
    %332 = vmatpush1.msra.mxu0 0.0
    %333 = vmatprep.subr.mxu0 0.0
    %334 = vmatpush1.msra.mxu0 0.0
    %335 = vmatprep.subr.mxu0 0.0
    %336 = vmatpush1.msra.mxu0 0.0
    %337 = vmatprep.subr.mxu0 0.0
    %338 = vmatpush1.msra.mxu0 0.0
    %339 = vmatprep.subr.mxu0 0.0
    %340 = vmatpush1.msra.mxu0 0.0
    %341 = vmatprep.subr.mxu0 0.0
    %342 = vmatpush1.msra.mxu0 0.0
    %343 = vmatprep.subr.mxu0 0.0
    %344 = vmatpush1.msra.mxu0 0.0
    %345 = vmatprep.subr.mxu0 0.0
    %346 = vmatpush1.msra.mxu0 0.0
    %347 = vmatprep.subr.mxu0 0.0
    %348 = vmatpush1.msra.mxu0 0.0
    %349 = vmatprep.subr.mxu0 0.0
    %350 = vmatpush1.msra.mxu0 0.0
    %351 = vmatprep.subr.mxu0 0.0
    %352 = vmatpush1.msra.mxu0 0.0
    %353 = vmatprep.subr.mxu0 0.0
    %354 = vmatpush1.msra.mxu0 0.0
    %355 = vmatprep.subr.mxu0 0.0
    %356 = vmatpush1.msra.mxu0 0.0
    %357 = vmatprep.subr.mxu0 0.0
    %358 = vmatpush1.msra.mxu0 0.0
    %359 = vmatprep.subr.mxu0 0.0
    %360 = vmatpush1.msra.mxu0 0.0
    %361 = vmatprep.subr.mxu0 0.0
    %362 = vmatpush1.msra.mxu0 0.0
    %363 = vmatprep.subr.mxu0 0.0
    %364 = vmatpush1.msra.mxu0 0.0
    %365 = vmatprep.subr.mxu0 0.0
    %366 = vmatpush1.msra.mxu0 0.0
    %367 = vmatprep.subr.mxu0 0.0
    %368 = vmatpush1.msra.mxu0 0.0
    %369 = vmatprep.subr.mxu0 0.0
    %370 = vmatpush1.msra.mxu0 0.0
    %371 = vmatprep.subr.mxu0 0.0
    %372 = vmatpush1.msra.mxu0 0.0
    %373 = vmatprep.subr.mxu0 0.0
    %374 = vmatpush1.msra.mxu0 0.0
    %375 = vmatprep.subr.mxu0 0.0
    %376 = vmatpush1.msra.mxu0 0.0
    %377 = vmatprep.mubr.f32.mxu0 0.0
    %378 = vmatmul.mubr.f32.gmra.mrb[0].mxu0 %v67
    %v379 = vpop.f32.mrb[0].mxu0
    %v380 = vadd.f32 %v307, %v379
    %v381 = vpop.f32.mrb[0].mxu0
    %382 = vdwg.mxu0
    %v383 = vld [vmem:[%s8] sm:$0x1]
    %v385 = vlaneseq
    %v386 = vshrl.u32 %v385, 7
    %v387 = vsub.s32 0, %v386
    %v388 = vrot.slane %v383, %v387
    %v390 = vadd.f32 %v380, %v388
    %v391 = vld [vmem:[%s9] sm:$0xff]
    %v392 = vld [vmem:[%s9 + $0x8] sm:$0x7]
    %v393 = vld [vmem:[%s11] sm:$0xff]
    %v394 = vld [vmem:[%s11 + $0x8] sm:$0xff]
    %v395 = vld [vmem:[%s11 + $0x10] sm:$0xff]
    %v396 = vld [vmem:[%s11 + $0x18] sm:$0xff]
    %v397 = vld [vmem:[%s13] sm:$0xff]
    %v398 = vld [vmem:[%s13 + $0x8] sm:$0xff]
    %v399 = vld [vmem:[%s13 + $0x10] sm:$0xff]
    %v400 = vld [vmem:[%s13 + $0x18] sm:$0xff]
    %v401 = vld [vmem:[%s13 + $0x20] sm:$0xff]
    %v402 = vld [vmem:[%s13 + $0x28] sm:$0x7]
    %v403 = vld [vmem:[%s15] sm:$0xff]
    %v404 = vld [vmem:[%s15 + $0x8] sm:$0xff]
    %v405 = vld [vmem:[%s15 + $0x10] sm:$0xff]
    %v406 = vld [vmem:[%s15 + $0x18] sm:$0xff]
    %v407 = vld [vmem:[%s15 + $0x20] sm:$0xff]
    %v408 = vld [vmem:[%s15 + $0x28] sm:$0xff]
    %v409 = vld [vmem:[%s15 + $0x30] sm:$0x7f]
    %v410 = vld [vmem:[%s10] sm:$0x1]
    %v412 = vlaneseq
    %v413 = vshrl.u32 %v412, 7
    %v414 = vsub.s32 0, %v413
    %v415 = vrot.slane %v410, %v414
    %v417 = vld [vmem:[%s12] sm:$0x1]
    %v419 = vlaneseq
    %v420 = vshrl.u32 %v419, 7
    %v421 = vsub.s32 0, %v420
    %v422 = vrot.slane %v417, %v421
    %v424 = vld [vmem:[%s14] sm:$0x1]
    %v426 = vlaneseq
    %v427 = vshrl.u32 %v426, 7
    %v428 = vsub.s32 0, %v427
    %v429 = vrot.slane %v424, %v428
    %v431 = vld [vmem:[%s1] sm:$0x3]
    %433 = vrot.lane.b32.xlu0 %v431, 8
    %v434 = vpop.permute.xlu0 %433
    %vm436 = vcmask 64512
    %v437 = vsel %vm436, %v390, %v434
    %vm438 = vcmask 89088
    %v440 = vsel %vm438, %v437, 0
    %vm442 = vcmask 1042432
    %v444 = vsel %vm442, %v392, 0
    %446 = vmatprep.subr.mxu0 0.0
    %447 = vmatpush1.msra.mxu0 %v391
    %448 = vmatprep.subr.mxu0 0.0
    %449 = vmatpush1.msra.mxu0 %v444
    %450 = vmatprep.subr.mxu0 0.0
    %451 = vmatpush1.msra.mxu0 0.0
    %452 = vmatprep.subr.mxu0 0.0
    %453 = vmatpush1.msra.mxu0 0.0
    %454 = vmatprep.subr.mxu0 0.0
    %455 = vmatpush1.msra.mxu0 0.0
    %456 = vmatprep.subr.mxu0 0.0
    %457 = vmatpush1.msra.mxu0 0.0
    %458 = vmatprep.subr.mxu0 0.0
    %459 = vmatpush1.msra.mxu0 0.0
    %460 = vmatprep.subr.mxu0 0.0
    %461 = vmatpush1.msra.mxu0 0.0
    %462 = vmatprep.subr.mxu0 0.0
    %463 = vmatpush1.msra.mxu0 0.0
    %464 = vmatprep.subr.mxu0 0.0
    %465 = vmatpush1.msra.mxu0 0.0
    %466 = vmatprep.subr.mxu0 0.0
    %467 = vmatpush1.msra.mxu0 0.0
    %468 = vmatprep.subr.mxu0 0.0
    %469 = vmatpush1.msra.mxu0 0.0
    %470 = vmatprep.subr.mxu0 0.0
    %471 = vmatpush1.msra.mxu0 0.0
    %472 = vmatprep.subr.mxu0 0.0
    %473 = vmatpush1.msra.mxu0 0.0
    %474 = vmatprep.subr.mxu0 0.0
    %475 = vmatpush1.msra.mxu0 0.0
    %476 = vmatprep.subr.mxu0 0.0
    %477 = vmatpush1.msra.mxu0 0.0
    %478 = vmatprep.subr.mxu0 0.0
    %479 = vmatpush1.msra.mxu0 0.0
    %480 = vmatprep.subr.mxu0 0.0
    %481 = vmatpush1.msra.mxu0 0.0
    %482 = vmatprep.subr.mxu0 0.0
    %483 = vmatpush1.msra.mxu0 0.0
    %484 = vmatprep.subr.mxu0 0.0
    %485 = vmatpush1.msra.mxu0 0.0
    %486 = vmatprep.subr.mxu0 0.0
    %487 = vmatpush1.msra.mxu0 0.0
    %488 = vmatprep.subr.mxu0 0.0
    %489 = vmatpush1.msra.mxu0 0.0
    %490 = vmatprep.subr.mxu0 0.0
    %491 = vmatpush1.msra.mxu0 0.0
    %492 = vmatprep.subr.mxu0 0.0
    %493 = vmatpush1.msra.mxu0 0.0
    %494 = vmatprep.subr.mxu0 0.0
    %495 = vmatpush1.msra.mxu0 0.0
    %496 = vmatprep.subr.mxu0 0.0
    %497 = vmatpush1.msra.mxu0 0.0
    %498 = vmatprep.subr.mxu0 0.0
    %499 = vmatpush1.msra.mxu0 0.0
    %500 = vmatprep.subr.mxu0 0.0
    %501 = vmatpush1.msra.mxu0 0.0
    %502 = vmatprep.subr.mxu0 0.0
    %503 = vmatpush1.msra.mxu0 0.0
    %504 = vmatprep.subr.mxu0 0.0
    %505 = vmatpush1.msra.mxu0 0.0
    %506 = vmatprep.subr.mxu0 0.0
    %507 = vmatpush1.msra.mxu0 0.0
    %508 = vmatprep.subr.mxu0 0.0
    %509 = vmatpush1.msra.mxu0 0.0
    %510 = vmatprep.mubr.f32.mxu0 0.0
    %511 = vmatmul.mubr.f32.gmra.mrb[0].mxu0 %v440
    %v512 = vpop.f32.mrb[0].mxu0
    %v513 = vadd.f32 %v415, %v512
    %v514 = vpop.f32.mrb[0].mxu0
    %515 = vdwg.mxu0
    %v516 = vtanh.pop %v513
    %v518 = vsel %vm155, %v516, 0
    %520 = vmatprep.subr.mxu0 0.0
    %521 = vmatpush1.msra.mxu0 %v393
    %522 = vmatprep.subr.mxu0 0.0
    %523 = vmatpush1.msra.mxu0 %v394
    %524 = vmatprep.subr.mxu0 0.0
    %525 = vmatpush1.msra.mxu0 %v395
    %526 = vmatprep.subr.mxu0 0.0
    %527 = vmatpush1.msra.mxu0 %v396
    %528 = vmatprep.subr.mxu0 0.0
    %529 = vmatpush1.msra.mxu0 0.0
    %530 = vmatprep.subr.mxu0 0.0
    %531 = vmatpush1.msra.mxu0 0.0
    %532 = vmatprep.subr.mxu0 0.0
    %533 = vmatpush1.msra.mxu0 0.0
    %534 = vmatprep.subr.mxu0 0.0
    %535 = vmatpush1.msra.mxu0 0.0
    %536 = vmatprep.subr.mxu0 0.0
    %537 = vmatpush1.msra.mxu0 0.0
    %538 = vmatprep.subr.mxu0 0.0
    %539 = vmatpush1.msra.mxu0 0.0
    %540 = vmatprep.subr.mxu0 0.0
    %541 = vmatpush1.msra.mxu0 0.0
    %542 = vmatprep.subr.mxu0 0.0
    %543 = vmatpush1.msra.mxu0 0.0
    %544 = vmatprep.subr.mxu0 0.0
    %545 = vmatpush1.msra.mxu0 0.0
    %546 = vmatprep.subr.mxu0 0.0
    %547 = vmatpush1.msra.mxu0 0.0
    %548 = vmatprep.subr.mxu0 0.0
    %549 = vmatpush1.msra.mxu0 0.0
    %550 = vmatprep.subr.mxu0 0.0
    %551 = vmatpush1.msra.mxu0 0.0
    %552 = vmatprep.subr.mxu0 0.0
    %553 = vmatpush1.msra.mxu0 0.0
    %554 = vmatprep.subr.mxu0 0.0
    %555 = vmatpush1.msra.mxu0 0.0
    %556 = vmatprep.subr.mxu0 0.0
    %557 = vmatpush1.msra.mxu0 0.0
    %558 = vmatprep.subr.mxu0 0.0
    %559 = vmatpush1.msra.mxu0 0.0
    %560 = vmatprep.subr.mxu0 0.0
    %561 = vmatpush1.msra.mxu0 0.0
    %562 = vmatprep.subr.mxu0 0.0
    %563 = vmatpush1.msra.mxu0 0.0
    %564 = vmatprep.subr.mxu0 0.0
    %565 = vmatpush1.msra.mxu0 0.0
    %566 = vmatprep.subr.mxu0 0.0
    %567 = vmatpush1.msra.mxu0 0.0
    %568 = vmatprep.subr.mxu0 0.0
    %569 = vmatpush1.msra.mxu0 0.0
    %570 = vmatprep.subr.mxu0 0.0
    %571 = vmatpush1.msra.mxu0 0.0
    %572 = vmatprep.subr.mxu0 0.0
    %573 = vmatpush1.msra.mxu0 0.0
    %574 = vmatprep.subr.mxu0 0.0
    %575 = vmatpush1.msra.mxu0 0.0
    %576 = vmatprep.subr.mxu0 0.0
    %577 = vmatpush1.msra.mxu0 0.0
    %578 = vmatprep.subr.mxu0 0.0
    %579 = vmatpush1.msra.mxu0 0.0
    %580 = vmatprep.subr.mxu0 0.0
    %581 = vmatpush1.msra.mxu0 0.0
    %582 = vmatprep.subr.mxu0 0.0
    %583 = vmatpush1.msra.mxu0 0.0
    %584 = vmatprep.mubr.f32.mxu0 0.0
    %585 = vmatmul.mubr.f32.gmra.mrb[0].mxu0 %v518
    %v586 = vpop.f32.mrb[0].mxu0
    %v587 = vadd.f32 %v422, %v586
    %v588 = vpop.f32.mrb[0].mxu0
    %589 = vdwg.mxu0
    %v590 = vtanh.pop %v587
    %592 = vrot.lane.b32.xlu0 %v590, 11
    %v593 = vpop.permute.xlu0 %592
    %v595 = vsel %vm438, %v437, %v593
    %vm596 = vcmask 351232
    %v598 = vsel %vm596, %v595, 0
    %v601 = vsel %vm442, %v402, 0
    %603 = vmatprep.subr.mxu0 0.0
    %604 = vmatpush1.msra.mxu0 %v397
    %605 = vmatprep.subr.mxu0 0.0
    %606 = vmatpush1.msra.mxu0 %v398
    %607 = vmatprep.subr.mxu0 0.0
    %608 = vmatpush1.msra.mxu0 %v399
    %609 = vmatprep.subr.mxu0 0.0
    %610 = vmatpush1.msra.mxu0 %v400
    %611 = vmatprep.subr.mxu0 0.0
    %612 = vmatpush1.msra.mxu0 %v401
    %613 = vmatprep.subr.mxu0 0.0
    %614 = vmatpush1.msra.mxu0 %v601
    %615 = vmatprep.subr.mxu0 0.0
    %616 = vmatpush1.msra.mxu0 0.0
    %617 = vmatprep.subr.mxu0 0.0
    %618 = vmatpush1.msra.mxu0 0.0
    %619 = vmatprep.subr.mxu0 0.0
    %620 = vmatpush1.msra.mxu0 0.0
    %621 = vmatprep.subr.mxu0 0.0
    %622 = vmatpush1.msra.mxu0 0.0
    %623 = vmatprep.subr.mxu0 0.0
    %624 = vmatpush1.msra.mxu0 0.0
    %625 = vmatprep.subr.mxu0 0.0
    %626 = vmatpush1.msra.mxu0 0.0
    %627 = vmatprep.subr.mxu0 0.0
    %628 = vmatpush1.msra.mxu0 0.0
    %629 = vmatprep.subr.mxu0 0.0
    %630 = vmatpush1.msra.mxu0 0.0
    %631 = vmatprep.subr.mxu0 0.0
    %632 = vmatpush1.msra.mxu0 0.0
    %633 = vmatprep.subr.mxu0 0.0
    %634 = vmatpush1.msra.mxu0 0.0
    %635 = vmatprep.subr.mxu0 0.0
    %636 = vmatpush1.msra.mxu0 0.0
    %637 = vmatprep.subr.mxu0 0.0
    %638 = vmatpush1.msra.mxu0 0.0
    %639 = vmatprep.subr.mxu0 0.0
    %640 = vmatpush1.msra.mxu0 0.0
    %641 = vmatprep.subr.mxu0 0.0
    %642 = vmatpush1.msra.mxu0 0.0
    %643 = vmatprep.subr.mxu0 0.0
    %644 = vmatpush1.msra.mxu0 0.0
    %645 = vmatprep.subr.mxu0 0.0
    %646 = vmatpush1.msra.mxu0 0.0
    %647 = vmatprep.subr.mxu0 0.0
    %648 = vmatpush1.msra.mxu0 0.0
    %649 = vmatprep.subr.mxu0 0.0
    %650 = vmatpush1.msra.mxu0 0.0
    %651 = vmatprep.subr.mxu0 0.0
    %652 = vmatpush1.msra.mxu0 0.0
    %653 = vmatprep.subr.mxu0 0.0
    %654 = vmatpush1.msra.mxu0 0.0
    %655 = vmatprep.subr.mxu0 0.0
    %656 = vmatpush1.msra.mxu0 0.0
    %657 = vmatprep.subr.mxu0 0.0
    %658 = vmatpush1.msra.mxu0 0.0
    %659 = vmatprep.subr.mxu0 0.0
    %660 = vmatpush1.msra.mxu0 0.0
    %661 = vmatprep.subr.mxu0 0.0
    %662 = vmatpush1.msra.mxu0 0.0
    %663 = vmatprep.subr.mxu0 0.0
    %664 = vmatpush1.msra.mxu0 0.0
    %665 = vmatprep.subr.mxu0 0.0
    %666 = vmatpush1.msra.mxu0 0.0
    %667 = vmatprep.mubr.f32.mxu0 0.0
    %668 = vmatmul.mubr.f32.gmra.mrb[0].mxu0 %v598
    %v669 = vpop.f32.mrb[0].mxu0
    %v670 = vadd.f32 %v429, %v669
    %v671 = vpop.f32.mrb[0].mxu0
    %672 = vdwg.mxu0
    %674 = vset.pattern.permute.xlu0 0
    %675 = vperm.xlu0 %674, %v670
    %v676 = vpop.permute.xlu0 %675
    %v678 = vmul.f32 %v676, %v437
    %679 = vset.pattern.permute.xlu0 1
    %680 = vperm.xlu0 %679, %v670
    %v681 = vpop.permute.xlu0 %680
    %v683 = vmul.f32 %v681, %v437
    %684 = vset.pattern.permute.xlu0 2
    %685 = vperm.xlu0 %684, %v670
    %v686 = vpop.permute.xlu0 %685
    %v688 = vmul.f32 %v686, %v437
    %689 = vset.pattern.permute.xlu0 3
    %690 = vperm.xlu0 %689, %v670
    %v691 = vpop.permute.xlu0 %690
    %v693 = vmul.f32 %v691, %v437
    %695 = vrot.lane.b32.xlu0 %v678, 11
    %v696 = vpop.permute.xlu0 %695
    %699 = vrot.lane.b32.xlu0 %v683, 22
    %v700 = vpop.permute.xlu0 %699
    %703 = vrot.lane.b32.xlu0 %v688, 33
    %v704 = vpop.permute.xlu0 %703
    %707 = vrot.lane.b32.xlu0 %v693, 44
    %v708 = vpop.permute.xlu0 %707
    %v710 = vsel %vm438, %v437, %v696
    %vm711 = vcmask 179200
    %v712 = vsel %vm711, %v710, %v700
    %vm713 = vcmask 269312
    %v714 = vsel %vm713, %v712, %v704
    %vm715 = vcmask 359424
    %v716 = vsel %vm715, %v714, %v708
    %vm717 = vcmask 449536
    %v719 = vsel %vm717, %v716, 0
    %vm721 = vcmask 1046528
    %v723 = vsel %vm721, %v409, 0
    %725 = vmatprep.subr.mxu0 0.0
    %v726 = vand.u32 %v403, 4294901760
    %727 = vmatpush1.msra.mxu0 %v726
    %728 = vmatprep.subr.mxu0 0.0
    %v729 = vand.u32 %v404, 4294901760
    %730 = vmatpush1.msra.mxu0 %v729
    %731 = vmatprep.subr.mxu0 0.0
    %v732 = vand.u32 %v405, 4294901760
    %733 = vmatpush1.msra.mxu0 %v732
    %734 = vmatprep.subr.mxu0 0.0
    %v735 = vand.u32 %v406, 4294901760
    %736 = vmatpush1.msra.mxu0 %v735
    %737 = vmatprep.subr.mxu0 0.0
    %v738 = vand.u32 %v407, 4294901760
    %739 = vmatpush1.msra.mxu0 %v738
    %740 = vmatprep.subr.mxu0 0.0
    %v741 = vand.u32 %v408, 4294901760
    %742 = vmatpush1.msra.mxu0 %v741
    %743 = vmatprep.subr.mxu0 0.0
    %v744 = vand.u32 %v723, 4294901760
    %745 = vmatpush1.msra.mxu0 %v744
    %746 = vmatprep.subr.mxu0 0.0
    %747 = vmatpush1.msra.mxu0 0.0
    %748 = vmatprep.subr.mxu0 0.0
    %749 = vmatpush1.msra.mxu0 0.0
    %750 = vmatprep.subr.mxu0 0.0
    %751 = vmatpush1.msra.mxu0 0.0
    %752 = vmatprep.subr.mxu0 0.0
    %753 = vmatpush1.msra.mxu0 0.0
    %754 = vmatprep.subr.mxu0 0.0
    %755 = vmatpush1.msra.mxu0 0.0
    %756 = vmatprep.subr.mxu0 0.0
    %757 = vmatpush1.msra.mxu0 0.0
    %758 = vmatprep.subr.mxu0 0.0
    %759 = vmatpush1.msra.mxu0 0.0
    %760 = vmatprep.subr.mxu0 0.0
    %761 = vmatpush1.msra.mxu0 0.0
    %762 = vmatprep.subr.mxu0 0.0
    %763 = vmatpush1.msra.mxu0 0.0
    %764 = vmatprep.subr.mxu0 0.0
    %765 = vmatpush1.msra.mxu0 0.0
    %766 = vmatprep.subr.mxu0 0.0
    %767 = vmatpush1.msra.mxu0 0.0
    %768 = vmatprep.subr.mxu0 0.0
    %769 = vmatpush1.msra.mxu0 0.0
    %770 = vmatprep.subr.mxu0 0.0
    %771 = vmatpush1.msra.mxu0 0.0
    %772 = vmatprep.subr.mxu0 0.0
    %773 = vmatpush1.msra.mxu0 0.0
    %774 = vmatprep.subr.mxu0 0.0
    %775 = vmatpush1.msra.mxu0 0.0
    %776 = vmatprep.subr.mxu0 0.0
    %777 = vmatpush1.msra.mxu0 0.0
    %778 = vmatprep.subr.mxu0 0.0
    %779 = vmatpush1.msra.mxu0 0.0
    %780 = vmatprep.subr.mxu0 0.0
    %781 = vmatpush1.msra.mxu0 0.0
    %782 = vmatprep.subr.mxu0 0.0
    %783 = vmatpush1.msra.mxu0 0.0
    %784 = vmatprep.subr.mxu0 0.0
    %785 = vmatpush1.msra.mxu0 0.0
    %786 = vmatprep.subr.mxu0 0.0
    %787 = vmatpush1.msra.mxu0 0.0
    %788 = vmatprep.subr.mxu0 0.0
    %789 = vmatpush1.msra.mxu0 0.0
    %790 = vmatprep.subr.mxu0 0.0
    %791 = vmatpush1.msra.mxu0 0.0
    %792 = vmatprep.subr.mxu0 0.0
    %793 = vmatpush1.msra.mxu0 0.0
    %794 = vmatprep.subr.mxu0 0.0
    %795 = vmatpush1.msra.mxu0 0.0
    %796 = vmatprep.mubr.f32.mxu0 0.0
    %v797 = vand.u32 %v719, 4294901760
    %v798 = vsub.f32 %v719, %v797
    %v799 = vand.u32 %v798, 4294901760
    %v800 = vsub.f32 %v798, %v799
    %v801 = vand.u32 %v800, 4294901760
    %802 = vmatmul.mubr.f32.gmra.mrb[0].mxu0 %v801
    %v803 = vpop.f32.mrb[0].mxu0
    %v804 = vadd.f32 0.0, %v803
    %v805 = vpop.f32.mrb[0].mxu0
    %806 = vdwg.mxu0
    %807 = vmatprep.subr.mxu0 0.0
    %v808 = vand.u32 %v403, 4294901760
    %v809 = vsub.f32 %v403, %v808
    %v810 = vand.u32 %v809, 4294901760
    %v811 = vsub.f32 %v809, %v810
    %v812 = vand.u32 %v811, 4294901760
    %813 = vmatpush1.msra.mxu0 %v812
    %814 = vmatprep.subr.mxu0 0.0
    %v815 = vand.u32 %v404, 4294901760
    %v816 = vsub.f32 %v404, %v815
    %v817 = vand.u32 %v816, 4294901760
    %v818 = vsub.f32 %v816, %v817
    %v819 = vand.u32 %v818, 4294901760
    %820 = vmatpush1.msra.mxu0 %v819
    %821 = vmatprep.subr.mxu0 0.0
    %v822 = vand.u32 %v405, 4294901760
    %v823 = vsub.f32 %v405, %v822
    %v824 = vand.u32 %v823, 4294901760
    %v825 = vsub.f32 %v823, %v824
    %v826 = vand.u32 %v825, 4294901760
    %827 = vmatpush1.msra.mxu0 %v826
    %828 = vmatprep.subr.mxu0 0.0
    %v829 = vand.u32 %v406, 4294901760
    %v830 = vsub.f32 %v406, %v829
    %v831 = vand.u32 %v830, 4294901760
    %v832 = vsub.f32 %v830, %v831
    %v833 = vand.u32 %v832, 4294901760
    %834 = vmatpush1.msra.mxu0 %v833
    %835 = vmatprep.subr.mxu0 0.0
    %v836 = vand.u32 %v407, 4294901760
    %v837 = vsub.f32 %v407, %v836
    %v838 = vand.u32 %v837, 4294901760
    %v839 = vsub.f32 %v837, %v838
    %v840 = vand.u32 %v839, 4294901760
    %841 = vmatpush1.msra.mxu0 %v840
    %842 = vmatprep.subr.mxu0 0.0
    %v843 = vand.u32 %v408, 4294901760
    %v844 = vsub.f32 %v408, %v843
    %v845 = vand.u32 %v844, 4294901760
    %v846 = vsub.f32 %v844, %v845
    %v847 = vand.u32 %v846, 4294901760
    %848 = vmatpush1.msra.mxu0 %v847
    %849 = vmatprep.subr.mxu0 0.0
    %v850 = vand.u32 %v723, 4294901760
    %v851 = vsub.f32 %v723, %v850
    %v852 = vand.u32 %v851, 4294901760
    %v853 = vsub.f32 %v851, %v852
    %v854 = vand.u32 %v853, 4294901760
    %855 = vmatpush1.msra.mxu0 %v854
    %856 = vmatprep.subr.mxu0 0.0
    %857 = vmatpush1.msra.mxu0 0.0
    %858 = vmatprep.subr.mxu0 0.0
    %859 = vmatpush1.msra.mxu0 0.0
    %860 = vmatprep.subr.mxu0 0.0
    %861 = vmatpush1.msra.mxu0 0.0
    %862 = vmatprep.subr.mxu0 0.0
    %863 = vmatpush1.msra.mxu0 0.0
    %864 = vmatprep.subr.mxu0 0.0
    %865 = vmatpush1.msra.mxu0 0.0
    %866 = vmatprep.subr.mxu0 0.0
    %867 = vmatpush1.msra.mxu0 0.0
    %868 = vmatprep.subr.mxu0 0.0
    %869 = vmatpush1.msra.mxu0 0.0
    %870 = vmatprep.subr.mxu0 0.0
    %871 = vmatpush1.msra.mxu0 0.0
    %872 = vmatprep.subr.mxu0 0.0
    %873 = vmatpush1.msra.mxu0 0.0
    %874 = vmatprep.subr.mxu0 0.0
    %875 = vmatpush1.msra.mxu0 0.0
    %876 = vmatprep.subr.mxu0 0.0
    %877 = vmatpush1.msra.mxu0 0.0
    %878 = vmatprep.subr.mxu0 0.0
    %879 = vmatpush1.msra.mxu0 0.0
    %880 = vmatprep.subr.mxu0 0.0
    %881 = vmatpush1.msra.mxu0 0.0
    %882 = vmatprep.subr.mxu0 0.0
    %883 = vmatpush1.msra.mxu0 0.0
    %884 = vmatprep.subr.mxu0 0.0
    %885 = vmatpush1.msra.mxu0 0.0
    %886 = vmatprep.subr.mxu0 0.0
    %887 = vmatpush1.msra.mxu0 0.0
    %888 = vmatprep.subr.mxu0 0.0
    %889 = vmatpush1.msra.mxu0 0.0
    %890 = vmatprep.subr.mxu0 0.0
    %891 = vmatpush1.msra.mxu0 0.0
    %892 = vmatprep.subr.mxu0 0.0
    %893 = vmatpush1.msra.mxu0 0.0
    %894 = vmatprep.subr.mxu0 0.0
    %895 = vmatpush1.msra.mxu0 0.0
    %896 = vmatprep.subr.mxu0 0.0
    %897 = vmatpush1.msra.mxu0 0.0
    %898 = vmatprep.subr.mxu0 0.0
    %899 = vmatpush1.msra.mxu0 0.0
    %900 = vmatprep.subr.mxu0 0.0
    %901 = vmatpush1.msra.mxu0 0.0
    %902 = vmatprep.subr.mxu0 0.0
    %903 = vmatpush1.msra.mxu0 0.0
    %904 = vmatprep.subr.mxu0 0.0
    %905 = vmatpush1.msra.mxu0 0.0
    %906 = vmatprep.mubr.f32.mxu0 0.0
    %v907 = vand.u32 %v719, 4294901760
    %908 = vmatmul.mubr.f32.gmra.mrb[0].mxu0 %v907
    %v909 = vpop.f32.mrb[0].mxu0
    %v910 = vadd.f32 %v804, %v909
    %v911 = vpop.f32.mrb[0].mxu0
    %912 = vdwg.mxu0
    %913 = vmatprep.subr.mxu0 0.0
    %v914 = vand.u32 %v403, 4294901760
    %v915 = vsub.f32 %v403, %v914
    %916 = vmatpush1.msra.mxu0 %v915
    %917 = vmatprep.subr.mxu0 0.0
    %v918 = vand.u32 %v404, 4294901760
    %v919 = vsub.f32 %v404, %v918
    %920 = vmatpush1.msra.mxu0 %v919
    %921 = vmatprep.subr.mxu0 0.0
    %v922 = vand.u32 %v405, 4294901760
    %v923 = vsub.f32 %v405, %v922
    %924 = vmatpush1.msra.mxu0 %v923
    %925 = vmatprep.subr.mxu0 0.0
    %v926 = vand.u32 %v406, 4294901760
    %v927 = vsub.f32 %v406, %v926
    %928 = vmatpush1.msra.mxu0 %v927
    %929 = vmatprep.subr.mxu0 0.0
    %v930 = vand.u32 %v407, 4294901760
    %v931 = vsub.f32 %v407, %v930
    %932 = vmatpush1.msra.mxu0 %v931
    %933 = vmatprep.subr.mxu0 0.0
    %v934 = vand.u32 %v408, 4294901760
    %v935 = vsub.f32 %v408, %v934
    %936 = vmatpush1.msra.mxu0 %v935
    %937 = vmatprep.subr.mxu0 0.0
    %v938 = vand.u32 %v723, 4294901760
    %v939 = vsub.f32 %v723, %v938
    %940 = vmatpush1.msra.mxu0 %v939
    %941 = vmatprep.subr.mxu0 0.0
    %942 = vmatpush1.msra.mxu0 0.0
    %943 = vmatprep.subr.mxu0 0.0
    %944 = vmatpush1.msra.mxu0 0.0
    %945 = vmatprep.subr.mxu0 0.0
    %946 = vmatpush1.msra.mxu0 0.0
    %947 = vmatprep.subr.mxu0 0.0
    %948 = vmatpush1.msra.mxu0 0.0
    %949 = vmatprep.subr.mxu0 0.0
    %950 = vmatpush1.msra.mxu0 0.0
    %951 = vmatprep.subr.mxu0 0.0
    %952 = vmatpush1.msra.mxu0 0.0
    %953 = vmatprep.subr.mxu0 0.0
    %954 = vmatpush1.msra.mxu0 0.0
    %955 = vmatprep.subr.mxu0 0.0
    %956 = vmatpush1.msra.mxu0 0.0
    %957 = vmatprep.subr.mxu0 0.0
    %958 = vmatpush1.msra.mxu0 0.0
    %959 = vmatprep.subr.mxu0 0.0
    %960 = vmatpush1.msra.mxu0 0.0
    %961 = vmatprep.subr.mxu0 0.0
    %962 = vmatpush1.msra.mxu0 0.0
    %963 = vmatprep.subr.mxu0 0.0
    %964 = vmatpush1.msra.mxu0 0.0
    %965 = vmatprep.subr.mxu0 0.0
    %966 = vmatpush1.msra.mxu0 0.0
    %967 = vmatprep.subr.mxu0 0.0
    %968 = vmatpush1.msra.mxu0 0.0
    %969 = vmatprep.subr.mxu0 0.0
    %970 = vmatpush1.msra.mxu0 0.0
    %971 = vmatprep.subr.mxu0 0.0
    %972 = vmatpush1.msra.mxu0 0.0
    %973 = vmatprep.subr.mxu0 0.0
    %974 = vmatpush1.msra.mxu0 0.0
    %975 = vmatprep.subr.mxu0 0.0
    %976 = vmatpush1.msra.mxu0 0.0
    %977 = vmatprep.subr.mxu0 0.0
    %978 = vmatpush1.msra.mxu0 0.0
    %979 = vmatprep.subr.mxu0 0.0
    %980 = vmatpush1.msra.mxu0 0.0
    %981 = vmatprep.subr.mxu0 0.0
    %982 = vmatpush1.msra.mxu0 0.0
    %983 = vmatprep.subr.mxu0 0.0
    %984 = vmatpush1.msra.mxu0 0.0
    %985 = vmatprep.subr.mxu0 0.0
    %986 = vmatpush1.msra.mxu0 0.0
    %987 = vmatprep.subr.mxu0 0.0
    %988 = vmatpush1.msra.mxu0 0.0
    %989 = vmatprep.subr.mxu0 0.0
    %990 = vmatpush1.msra.mxu0 0.0
    %991 = vmatprep.mubr.f32.mxu0 0.0
    %v992 = vand.u32 %v719, 4294901760
    %v993 = vsub.f32 %v719, %v992
    %994 = vmatmul.mubr.f32.gmra.mrb[0].mxu0 %v993
    %v995 = vpop.f32.mrb[0].mxu0
    %v996 = vadd.f32 %v910, %v995
    %v997 = vpop.f32.mrb[0].mxu0
    %998 = vdwg.mxu0
    %999 = vmatprep.subr.mxu0 0.0
    %v1000 = vand.u32 %v403, 4294901760
    %1001 = vmatpush1.msra.mxu0 %v1000
    %1002 = vmatprep.subr.mxu0 0.0
    %v1003 = vand.u32 %v404, 4294901760
    %1004 = vmatpush1.msra.mxu0 %v1003
    %1005 = vmatprep.subr.mxu0 0.0
    %v1006 = vand.u32 %v405, 4294901760
    %1007 = vmatpush1.msra.mxu0 %v1006
    %1008 = vmatprep.subr.mxu0 0.0
    %v1009 = vand.u32 %v406, 4294901760
    %1010 = vmatpush1.msra.mxu0 %v1009
    %1011 = vmatprep.subr.mxu0 0.0
    %v1012 = vand.u32 %v407, 4294901760
    %1013 = vmatpush1.msra.mxu0 %v1012
    %1014 = vmatprep.subr.mxu0 0.0
    %v1015 = vand.u32 %v408, 4294901760
    %1016 = vmatpush1.msra.mxu0 %v1015
    %1017 = vmatprep.subr.mxu0 0.0
    %v1018 = vand.u32 %v723, 4294901760
    %1019 = vmatpush1.msra.mxu0 %v1018
    %1020 = vmatprep.subr.mxu0 0.0
    %1021 = vmatpush1.msra.mxu0 0.0
    %1022 = vmatprep.subr.mxu0 0.0
    %1023 = vmatpush1.msra.mxu0 0.0
    %1024 = vmatprep.subr.mxu0 0.0
    %1025 = vmatpush1.msra.mxu0 0.0
    %1026 = vmatprep.subr.mxu0 0.0
    %1027 = vmatpush1.msra.mxu0 0.0
    %1028 = vmatprep.subr.mxu0 0.0
    %1029 = vmatpush1.msra.mxu0 0.0
    %1030 = vmatprep.subr.mxu0 0.0
    %1031 = vmatpush1.msra.mxu0 0.0
    %1032 = vmatprep.subr.mxu0 0.0
    %1033 = vmatpush1.msra.mxu0 0.0
    %1034 = vmatprep.subr.mxu0 0.0
    %1035 = vmatpush1.msra.mxu0 0.0
    %1036 = vmatprep.subr.mxu0 0.0
    %1037 = vmatpush1.msra.mxu0 0.0
    %1038 = vmatprep.subr.mxu0 0.0
    %1039 = vmatpush1.msra.mxu0 0.0
    %1040 = vmatprep.subr.mxu0 0.0
    %1041 = vmatpush1.msra.mxu0 0.0
    %1042 = vmatprep.subr.mxu0 0.0
    %1043 = vmatpush1.msra.mxu0 0.0
    %1044 = vmatprep.subr.mxu0 0.0
    %1045 = vmatpush1.msra.mxu0 0.0
    %1046 = vmatprep.subr.mxu0 0.0
    %1047 = vmatpush1.msra.mxu0 0.0
    %1048 = vmatprep.subr.mxu0 0.0
    %1049 = vmatpush1.msra.mxu0 0.0
    %1050 = vmatprep.subr.mxu0 0.0
    %1051 = vmatpush1.msra.mxu0 0.0
    %1052 = vmatprep.subr.mxu0 0.0
    %1053 = vmatpush1.msra.mxu0 0.0
    %1054 = vmatprep.subr.mxu0 0.0
    %1055 = vmatpush1.msra.mxu0 0.0
    %1056 = vmatprep.subr.mxu0 0.0
    %1057 = vmatpush1.msra.mxu0 0.0
    %1058 = vmatprep.subr.mxu0 0.0
    %1059 = vmatpush1.msra.mxu0 0.0
    %1060 = vmatprep.subr.mxu0 0.0
    %1061 = vmatpush1.msra.mxu0 0.0
    %1062 = vmatprep.subr.mxu0 0.0
    %1063 = vmatpush1.msra.mxu0 0.0
    %1064 = vmatprep.subr.mxu0 0.0
    %1065 = vmatpush1.msra.mxu0 0.0
    %1066 = vmatprep.subr.mxu0 0.0
    %1067 = vmatpush1.msra.mxu0 0.0
    %1068 = vmatprep.subr.mxu0 0.0
    %1069 = vmatpush1.msra.mxu0 0.0
    %1070 = vmatprep.mubr.f32.mxu0 0.0
    %v1071 = vand.u32 %v719, 4294901760
    %v1072 = vsub.f32 %v719, %v1071
    %v1073 = vand.u32 %v1072, 4294901760
    %1074 = vmatmul.mubr.f32.gmra.mrb[0].mxu0 %v1073
    %v1075 = vpop.f32.mrb[0].mxu0
    %v1076 = vadd.f32 %v996, %v1075
    %v1077 = vpop.f32.mrb[0].mxu0
    %1078 = vdwg.mxu0
    %1079 = vmatprep.subr.mxu0 0.0
    %v1080 = vand.u32 %v403, 4294901760
    %v1081 = vsub.f32 %v403, %v1080
    %v1082 = vand.u32 %v1081, 4294901760
    %1083 = vmatpush1.msra.mxu0 %v1082
    %1084 = vmatprep.subr.mxu0 0.0
    %v1085 = vand.u32 %v404, 4294901760
    %v1086 = vsub.f32 %v404, %v1085
    %v1087 = vand.u32 %v1086, 4294901760
    %1088 = vmatpush1.msra.mxu0 %v1087
    %1089 = vmatprep.subr.mxu0 0.0
    %v1090 = vand.u32 %v405, 4294901760
    %v1091 = vsub.f32 %v405, %v1090
    %v1092 = vand.u32 %v1091, 4294901760
    %1093 = vmatpush1.msra.mxu0 %v1092
    %1094 = vmatprep.subr.mxu0 0.0
    %v1095 = vand.u32 %v406, 4294901760
    %v1096 = vsub.f32 %v406, %v1095
    %v1097 = vand.u32 %v1096, 4294901760
    %1098 = vmatpush1.msra.mxu0 %v1097
    %1099 = vmatprep.subr.mxu0 0.0
    %v1100 = vand.u32 %v407, 4294901760
    %v1101 = vsub.f32 %v407, %v1100
    %v1102 = vand.u32 %v1101, 4294901760
    %1103 = vmatpush1.msra.mxu0 %v1102
    %1104 = vmatprep.subr.mxu0 0.0
    %v1105 = vand.u32 %v408, 4294901760
    %v1106 = vsub.f32 %v408, %v1105
    %v1107 = vand.u32 %v1106, 4294901760
    %1108 = vmatpush1.msra.mxu0 %v1107
    %1109 = vmatprep.subr.mxu0 0.0
    %v1110 = vand.u32 %v723, 4294901760
    %v1111 = vsub.f32 %v723, %v1110
    %v1112 = vand.u32 %v1111, 4294901760
    %1113 = vmatpush1.msra.mxu0 %v1112
    %1114 = vmatprep.subr.mxu0 0.0
    %1115 = vmatpush1.msra.mxu0 0.0
    %1116 = vmatprep.subr.mxu0 0.0
    %1117 = vmatpush1.msra.mxu0 0.0
    %1118 = vmatprep.subr.mxu0 0.0
    %1119 = vmatpush1.msra.mxu0 0.0
    %1120 = vmatprep.subr.mxu0 0.0
    %1121 = vmatpush1.msra.mxu0 0.0
    %1122 = vmatprep.subr.mxu0 0.0
    %1123 = vmatpush1.msra.mxu0 0.0
    %1124 = vmatprep.subr.mxu0 0.0
    %1125 = vmatpush1.msra.mxu0 0.0
    %1126 = vmatprep.subr.mxu0 0.0
    %1127 = vmatpush1.msra.mxu0 0.0
    %1128 = vmatprep.subr.mxu0 0.0
    %1129 = vmatpush1.msra.mxu0 0.0
    %1130 = vmatprep.subr.mxu0 0.0
    %1131 = vmatpush1.msra.mxu0 0.0
    %1132 = vmatprep.subr.mxu0 0.0
    %1133 = vmatpush1.msra.mxu0 0.0
    %1134 = vmatprep.subr.mxu0 0.0
    %1135 = vmatpush1.msra.mxu0 0.0
    %1136 = vmatprep.subr.mxu0 0.0
    %1137 = vmatpush1.msra.mxu0 0.0
    %1138 = vmatprep.subr.mxu0 0.0
    %1139 = vmatpush1.msra.mxu0 0.0
    %1140 = vmatprep.subr.mxu0 0.0
    %1141 = vmatpush1.msra.mxu0 0.0
    %1142 = vmatprep.subr.mxu0 0.0
    %1143 = vmatpush1.msra.mxu0 0.0
    %1144 = vmatprep.subr.mxu0 0.0
    %1145 = vmatpush1.msra.mxu0 0.0
    %1146 = vmatprep.subr.mxu0 0.0
    %1147 = vmatpush1.msra.mxu0 0.0
    %1148 = vmatprep.subr.mxu0 0.0
    %1149 = vmatpush1.msra.mxu0 0.0
    %1150 = vmatprep.subr.mxu0 0.0
    %1151 = vmatpush1.msra.mxu0 0.0
    %1152 = vmatprep.subr.mxu0 0.0
    %1153 = vmatpush1.msra.mxu0 0.0
    %1154 = vmatprep.subr.mxu0 0.0
    %1155 = vmatpush1.msra.mxu0 0.0
    %1156 = vmatprep.subr.mxu0 0.0
    %1157 = vmatpush1.msra.mxu0 0.0
    %1158 = vmatprep.subr.mxu0 0.0
    %1159 = vmatpush1.msra.mxu0 0.0
    %1160 = vmatprep.subr.mxu0 0.0
    %1161 = vmatpush1.msra.mxu0 0.0
    %1162 = vmatprep.subr.mxu0 0.0
    %1163 = vmatpush1.msra.mxu0 0.0
    %1164 = vmatprep.mubr.f32.mxu0 0.0
    %v1165 = vand.u32 %v719, 4294901760
    %1166 = vmatmul.mubr.f32.gmra.mrb[0].mxu0 %v1165
    %v1167 = vpop.f32.mrb[0].mxu0
    %v1168 = vadd.f32 %v1076, %v1167
    %v1169 = vpop.f32.mrb[0].mxu0
    %1170 = vdwg.mxu0
    %1171 = vmatprep.subr.mxu0 0.0
    %v1172 = vand.u32 %v403, 4294901760
    %1173 = vmatpush1.msra.mxu0 %v1172
    %1174 = vmatprep.subr.mxu0 0.0
    %v1175 = vand.u32 %v404, 4294901760
    %1176 = vmatpush1.msra.mxu0 %v1175
    %1177 = vmatprep.subr.mxu0 0.0
    %v1178 = vand.u32 %v405, 4294901760
    %1179 = vmatpush1.msra.mxu0 %v1178
    %1180 = vmatprep.subr.mxu0 0.0
    %v1181 = vand.u32 %v406, 4294901760
    %1182 = vmatpush1.msra.mxu0 %v1181
    %1183 = vmatprep.subr.mxu0 0.0
    %v1184 = vand.u32 %v407, 4294901760
    %1185 = vmatpush1.msra.mxu0 %v1184
    %1186 = vmatprep.subr.mxu0 0.0
    %v1187 = vand.u32 %v408, 4294901760
    %1188 = vmatpush1.msra.mxu0 %v1187
    %1189 = vmatprep.subr.mxu0 0.0
    %v1190 = vand.u32 %v723, 4294901760
    %1191 = vmatpush1.msra.mxu0 %v1190
    %1192 = vmatprep.subr.mxu0 0.0
    %1193 = vmatpush1.msra.mxu0 0.0
    %1194 = vmatprep.subr.mxu0 0.0
    %1195 = vmatpush1.msra.mxu0 0.0
    %1196 = vmatprep.subr.mxu0 0.0
    %1197 = vmatpush1.msra.mxu0 0.0
    %1198 = vmatprep.subr.mxu0 0.0
    %1199 = vmatpush1.msra.mxu0 0.0
    %1200 = vmatprep.subr.mxu0 0.0
    %1201 = vmatpush1.msra.mxu0 0.0
    %1202 = vmatprep.subr.mxu0 0.0
    %1203 = vmatpush1.msra.mxu0 0.0
    %1204 = vmatprep.subr.mxu0 0.0
    %1205 = vmatpush1.msra.mxu0 0.0
    %1206 = vmatprep.subr.mxu0 0.0
    %1207 = vmatpush1.msra.mxu0 0.0
    %1208 = vmatprep.subr.mxu0 0.0
    %1209 = vmatpush1.msra.mxu0 0.0
    %1210 = vmatprep.subr.mxu0 0.0
    %1211 = vmatpush1.msra.mxu0 0.0
    %1212 = vmatprep.subr.mxu0 0.0
    %1213 = vmatpush1.msra.mxu0 0.0
    %1214 = vmatprep.subr.mxu0 0.0
    %1215 = vmatpush1.msra.mxu0 0.0
    %1216 = vmatprep.subr.mxu0 0.0
    %1217 = vmatpush1.msra.mxu0 0.0
    %1218 = vmatprep.subr.mxu0 0.0
    %1219 = vmatpush1.msra.mxu0 0.0
    %1220 = vmatprep.subr.mxu0 0.0
    %1221 = vmatpush1.msra.mxu0 0.0
    %1222 = vmatprep.subr.mxu0 0.0
    %1223 = vmatpush1.msra.mxu0 0.0
    %1224 = vmatprep.subr.mxu0 0.0
    %1225 = vmatpush1.msra.mxu0 0.0
    %1226 = vmatprep.subr.mxu0 0.0
    %1227 = vmatpush1.msra.mxu0 0.0
    %1228 = vmatprep.subr.mxu0 0.0
    %1229 = vmatpush1.msra.mxu0 0.0
    %1230 = vmatprep.subr.mxu0 0.0
    %1231 = vmatpush1.msra.mxu0 0.0
    %1232 = vmatprep.subr.mxu0 0.0
    %1233 = vmatpush1.msra.mxu0 0.0
    %1234 = vmatprep.subr.mxu0 0.0
    %1235 = vmatpush1.msra.mxu0 0.0
    %1236 = vmatprep.subr.mxu0 0.0
    %1237 = vmatpush1.msra.mxu0 0.0
    %1238 = vmatprep.subr.mxu0 0.0
    %1239 = vmatpush1.msra.mxu0 0.0
    %1240 = vmatprep.subr.mxu0 0.0
    %1241 = vmatpush1.msra.mxu0 0.0
    %1242 = vmatprep.mubr.f32.mxu0 0.0
    %v1243 = vand.u32 %v719, 4294901760
    %1244 = vmatmul.mubr.f32.gmra.mrb[0].mxu0 %v1243
    %v1245 = vpop.f32.mrb[0].mxu0
    %v1246 = vadd.f32 %v1168, %v1245
    %v1247 = vpop.f32.mrb[0].mxu0
    %1248 = vdwg.mxu0
    %1249 = vrot.lane.b32.xlu0 %v431, 5
    %v1250 = vpop.permute.xlu0 %1249
    %v1252 = vsel %vm436, %v1246, %v1250
    %v1254 = vsel %vm438, %v1252, 0
    %1256 = vmatprep.subr.mxu0 0.0
    %1257 = vmatpush1.msra.mxu0 %v391
    %1258 = vmatprep.subr.mxu0 0.0
    %1259 = vmatpush1.msra.mxu0 %v444
    %1260 = vmatprep.subr.mxu0 0.0
    %1261 = vmatpush1.msra.mxu0 0.0
    %1262 = vmatprep.subr.mxu0 0.0
    %1263 = vmatpush1.msra.mxu0 0.0
    %1264 = vmatprep.subr.mxu0 0.0
    %1265 = vmatpush1.msra.mxu0 0.0
    %1266 = vmatprep.subr.mxu0 0.0
    %1267 = vmatpush1.msra.mxu0 0.0
    %1268 = vmatprep.subr.mxu0 0.0
    %1269 = vmatpush1.msra.mxu0 0.0
    %1270 = vmatprep.subr.mxu0 0.0
    %1271 = vmatpush1.msra.mxu0 0.0
    %1272 = vmatprep.subr.mxu0 0.0
    %1273 = vmatpush1.msra.mxu0 0.0
    %1274 = vmatprep.subr.mxu0 0.0
    %1275 = vmatpush1.msra.mxu0 0.0
    %1276 = vmatprep.subr.mxu0 0.0
    %1277 = vmatpush1.msra.mxu0 0.0
    %1278 = vmatprep.subr.mxu0 0.0
    %1279 = vmatpush1.msra.mxu0 0.0
    %1280 = vmatprep.subr.mxu0 0.0
    %1281 = vmatpush1.msra.mxu0 0.0
    %1282 = vmatprep.subr.mxu0 0.0
    %1283 = vmatpush1.msra.mxu0 0.0
    %1284 = vmatprep.subr.mxu0 0.0
    %1285 = vmatpush1.msra.mxu0 0.0
    %1286 = vmatprep.subr.mxu0 0.0
    %1287 = vmatpush1.msra.mxu0 0.0
    %1288 = vmatprep.subr.mxu0 0.0
    %1289 = vmatpush1.msra.mxu0 0.0
    %1290 = vmatprep.subr.mxu0 0.0
    %1291 = vmatpush1.msra.mxu0 0.0
    %1292 = vmatprep.subr.mxu0 0.0
    %1293 = vmatpush1.msra.mxu0 0.0
    %1294 = vmatprep.subr.mxu0 0.0
    %1295 = vmatpush1.msra.mxu0 0.0
    %1296 = vmatprep.subr.mxu0 0.0
    %1297 = vmatpush1.msra.mxu0 0.0
    %1298 = vmatprep.subr.mxu0 0.0
    %1299 = vmatpush1.msra.mxu0 0.0
    %1300 = vmatprep.subr.mxu0 0.0
    %1301 = vmatpush1.msra.mxu0 0.0
    %1302 = vmatprep.subr.mxu0 0.0
    %1303 = vmatpush1.msra.mxu0 0.0
    %1304 = vmatprep.subr.mxu0 0.0
    %1305 = vmatpush1.msra.mxu0 0.0
    %1306 = vmatprep.subr.mxu0 0.0
    %1307 = vmatpush1.msra.mxu0 0.0
    %1308 = vmatprep.subr.mxu0 0.0
    %1309 = vmatpush1.msra.mxu0 0.0
    %1310 = vmatprep.subr.mxu0 0.0
    %1311 = vmatpush1.msra.mxu0 0.0
    %1312 = vmatprep.subr.mxu0 0.0
    %1313 = vmatpush1.msra.mxu0 0.0
    %1314 = vmatprep.subr.mxu0 0.0
    %1315 = vmatpush1.msra.mxu0 0.0
    %1316 = vmatprep.subr.mxu0 0.0
    %1317 = vmatpush1.msra.mxu0 0.0
    %1318 = vmatprep.subr.mxu0 0.0
    %1319 = vmatpush1.msra.mxu0 0.0
    %1320 = vmatprep.mubr.f32.mxu0 0.0
    %1321 = vmatmul.mubr.f32.gmra.mrb[0].mxu0 %v1254
    %v1322 = vpop.f32.mrb[0].mxu0
    %v1323 = vadd.f32 %v415, %v1322
    %v1324 = vpop.f32.mrb[0].mxu0
    %1325 = vdwg.mxu0
    %v1326 = vtanh.pop %v1323
    %v1328 = vsel %vm155, %v1326, 0
    %1330 = vmatprep.subr.mxu0 0.0
    %1331 = vmatpush1.msra.mxu0 %v393
    %1332 = vmatprep.subr.mxu0 0.0
    %1333 = vmatpush1.msra.mxu0 %v394
    %1334 = vmatprep.subr.mxu0 0.0
    %1335 = vmatpush1.msra.mxu0 %v395
    %1336 = vmatprep.subr.mxu0 0.0
    %1337 = vmatpush1.msra.mxu0 %v396
    %1338 = vmatprep.subr.mxu0 0.0
    %1339 = vmatpush1.msra.mxu0 0.0
    %1340 = vmatprep.subr.mxu0 0.0
    %1341 = vmatpush1.msra.mxu0 0.0
    %1342 = vmatprep.subr.mxu0 0.0
    %1343 = vmatpush1.msra.mxu0 0.0
    %1344 = vmatprep.subr.mxu0 0.0
    %1345 = vmatpush1.msra.mxu0 0.0
    %1346 = vmatprep.subr.mxu0 0.0
    %1347 = vmatpush1.msra.mxu0 0.0
    %1348 = vmatprep.subr.mxu0 0.0
    %1349 = vmatpush1.msra.mxu0 0.0
    %1350 = vmatprep.subr.mxu0 0.0
    %1351 = vmatpush1.msra.mxu0 0.0
    %1352 = vmatprep.subr.mxu0 0.0
    %1353 = vmatpush1.msra.mxu0 0.0
    %1354 = vmatprep.subr.mxu0 0.0
    %1355 = vmatpush1.msra.mxu0 0.0
    %1356 = vmatprep.subr.mxu0 0.0
    %1357 = vmatpush1.msra.mxu0 0.0
    %1358 = vmatprep.subr.mxu0 0.0
    %1359 = vmatpush1.msra.mxu0 0.0
    %1360 = vmatprep.subr.mxu0 0.0
    %1361 = vmatpush1.msra.mxu0 0.0
    %1362 = vmatprep.subr.mxu0 0.0
    %1363 = vmatpush1.msra.mxu0 0.0
    %1364 = vmatprep.subr.mxu0 0.0
    %1365 = vmatpush1.msra.mxu0 0.0
    %1366 = vmatprep.subr.mxu0 0.0
    %1367 = vmatpush1.msra.mxu0 0.0
    %1368 = vmatprep.subr.mxu0 0.0
    %1369 = vmatpush1.msra.mxu0 0.0
    %1370 = vmatprep.subr.mxu0 0.0
    %1371 = vmatpush1.msra.mxu0 0.0
    %1372 = vmatprep.subr.mxu0 0.0
    %1373 = vmatpush1.msra.mxu0 0.0
    %1374 = vmatprep.subr.mxu0 0.0
    %1375 = vmatpush1.msra.mxu0 0.0
    %1376 = vmatprep.subr.mxu0 0.0
    %1377 = vmatpush1.msra.mxu0 0.0
    %1378 = vmatprep.subr.mxu0 0.0
    %1379 = vmatpush1.msra.mxu0 0.0
    %1380 = vmatprep.subr.mxu0 0.0
    %1381 = vmatpush1.msra.mxu0 0.0
    %1382 = vmatprep.subr.mxu0 0.0
    %1383 = vmatpush1.msra.mxu0 0.0
    %1384 = vmatprep.subr.mxu0 0.0
    %1385 = vmatpush1.msra.mxu0 0.0
    %1386 = vmatprep.subr.mxu0 0.0
    %1387 = vmatpush1.msra.mxu0 0.0
    %1388 = vmatprep.subr.mxu0 0.0
    %1389 = vmatpush1.msra.mxu0 0.0
    %1390 = vmatprep.subr.mxu0 0.0
    %1391 = vmatpush1.msra.mxu0 0.0
    %1392 = vmatprep.subr.mxu0 0.0
    %1393 = vmatpush1.msra.mxu0 0.0
    %1394 = vmatprep.mubr.f32.mxu0 0.0
    %1395 = vmatmul.mubr.f32.gmra.mrb[0].mxu0 %v1328
    %v1396 = vpop.f32.mrb[0].mxu0
    %v1397 = vadd.f32 %v422, %v1396
    %v1398 = vpop.f32.mrb[0].mxu0
    %1399 = vdwg.mxu0
    %v1400 = vtanh.pop %v1397
    %1402 = vrot.lane.b32.xlu0 %v1400, 11
    %v1403 = vpop.permute.xlu0 %1402
    %v1405 = vsel %vm438, %v1252, %v1403
    %v1407 = vsel %vm596, %v1405, 0
    %1409 = vmatprep.subr.mxu0 0.0
    %1410 = vmatpush1.msra.mxu0 %v397
    %1411 = vmatprep.subr.mxu0 0.0
    %1412 = vmatpush1.msra.mxu0 %v398
    %1413 = vmatprep.subr.mxu0 0.0
    %1414 = vmatpush1.msra.mxu0 %v399
    %1415 = vmatprep.subr.mxu0 0.0
    %1416 = vmatpush1.msra.mxu0 %v400
    %1417 = vmatprep.subr.mxu0 0.0
    %1418 = vmatpush1.msra.mxu0 %v401
    %1419 = vmatprep.subr.mxu0 0.0
    %1420 = vmatpush1.msra.mxu0 %v601
    %1421 = vmatprep.subr.mxu0 0.0
    %1422 = vmatpush1.msra.mxu0 0.0
    %1423 = vmatprep.subr.mxu0 0.0
    %1424 = vmatpush1.msra.mxu0 0.0
    %1425 = vmatprep.subr.mxu0 0.0
    %1426 = vmatpush1.msra.mxu0 0.0
    %1427 = vmatprep.subr.mxu0 0.0
    %1428 = vmatpush1.msra.mxu0 0.0
    %1429 = vmatprep.subr.mxu0 0.0
    %1430 = vmatpush1.msra.mxu0 0.0
    %1431 = vmatprep.subr.mxu0 0.0
    %1432 = vmatpush1.msra.mxu0 0.0
    %1433 = vmatprep.subr.mxu0 0.0
    %1434 = vmatpush1.msra.mxu0 0.0
    %1435 = vmatprep.subr.mxu0 0.0
    %1436 = vmatpush1.msra.mxu0 0.0
    %1437 = vmatprep.subr.mxu0 0.0
    %1438 = vmatpush1.msra.mxu0 0.0
    %1439 = vmatprep.subr.mxu0 0.0
    %1440 = vmatpush1.msra.mxu0 0.0
    %1441 = vmatprep.subr.mxu0 0.0
    %1442 = vmatpush1.msra.mxu0 0.0
    %1443 = vmatprep.subr.mxu0 0.0
    %1444 = vmatpush1.msra.mxu0 0.0
    %1445 = vmatprep.subr.mxu0 0.0
    %1446 = vmatpush1.msra.mxu0 0.0
    %1447 = vmatprep.subr.mxu0 0.0
    %1448 = vmatpush1.msra.mxu0 0.0
    %1449 = vmatprep.subr.mxu0 0.0
    %1450 = vmatpush1.msra.mxu0 0.0
    %1451 = vmatprep.subr.mxu0 0.0
    %1452 = vmatpush1.msra.mxu0 0.0
    %1453 = vmatprep.subr.mxu0 0.0
    %1454 = vmatpush1.msra.mxu0 0.0
    %1455 = vmatprep.subr.mxu0 0.0
    %1456 = vmatpush1.msra.mxu0 0.0
    %1457 = vmatprep.subr.mxu0 0.0
    %1458 = vmatpush1.msra.mxu0 0.0
    %1459 = vmatprep.subr.mxu0 0.0
    %1460 = vmatpush1.msra.mxu0 0.0
    %1461 = vmatprep.subr.mxu0 0.0
    %1462 = vmatpush1.msra.mxu0 0.0
    %1463 = vmatprep.subr.mxu0 0.0
    %1464 = vmatpush1.msra.mxu0 0.0
    %1465 = vmatprep.subr.mxu0 0.0
    %1466 = vmatpush1.msra.mxu0 0.0
    %1467 = vmatprep.subr.mxu0 0.0
    %1468 = vmatpush1.msra.mxu0 0.0
    %1469 = vmatprep.subr.mxu0 0.0
    %1470 = vmatpush1.msra.mxu0 0.0
    %1471 = vmatprep.subr.mxu0 0.0
    %1472 = vmatpush1.msra.mxu0 0.0
    %1473 = vmatprep.mubr.f32.mxu0 0.0
    %1474 = vmatmul.mubr.f32.gmra.mrb[0].mxu0 %v1407
    %v1475 = vpop.f32.mrb[0].mxu0
    %v1476 = vadd.f32 %v429, %v1475
    %v1477 = vpop.f32.mrb[0].mxu0
    %1478 = vdwg.mxu0
    %1480 = vset.pattern.permute.xlu0 0
    %1481 = vperm.xlu0 %1480, %v1476
    %v1482 = vpop.permute.xlu0 %1481
    %v1484 = vmul.f32 %v1482, %v1252
    %1485 = vset.pattern.permute.xlu0 1
    %1486 = vperm.xlu0 %1485, %v1476
    %v1487 = vpop.permute.xlu0 %1486
    %v1489 = vmul.f32 %v1487, %v1252
    %1490 = vset.pattern.permute.xlu0 2
    %1491 = vperm.xlu0 %1490, %v1476
    %v1492 = vpop.permute.xlu0 %1491
    %v1494 = vmul.f32 %v1492, %v1252
    %1495 = vset.pattern.permute.xlu0 3
    %1496 = vperm.xlu0 %1495, %v1476
    %v1497 = vpop.permute.xlu0 %1496
    %v1499 = vmul.f32 %v1497, %v1252
    %1501 = vrot.lane.b32.xlu0 %v1484, 11
    %v1502 = vpop.permute.xlu0 %1501
    %1505 = vrot.lane.b32.xlu0 %v1489, 22
    %v1506 = vpop.permute.xlu0 %1505
    %1509 = vrot.lane.b32.xlu0 %v1494, 33
    %v1510 = vpop.permute.xlu0 %1509
    %1513 = vrot.lane.b32.xlu0 %v1499, 44
    %v1514 = vpop.permute.xlu0 %1513
    %v1516 = vsel %vm438, %v1252, %v1502
    %v1517 = vsel %vm711, %v1516, %v1506
    %v1518 = vsel %vm713, %v1517, %v1510
    %v1519 = vsel %vm715, %v1518, %v1514
    %v1521 = vsel %vm717, %v1519, 0
    %1523 = vmatprep.subr.mxu0 0.0
    %v1524 = vand.u32 %v403, 4294901760
    %1525 = vmatpush1.msra.mxu0 %v1524
    %1526 = vmatprep.subr.mxu0 0.0
    %v1527 = vand.u32 %v404, 4294901760
    %1528 = vmatpush1.msra.mxu0 %v1527
    %1529 = vmatprep.subr.mxu0 0.0
    %v1530 = vand.u32 %v405, 4294901760
    %1531 = vmatpush1.msra.mxu0 %v1530
    %1532 = vmatprep.subr.mxu0 0.0
    %v1533 = vand.u32 %v406, 4294901760
    %1534 = vmatpush1.msra.mxu0 %v1533
    %1535 = vmatprep.subr.mxu0 0.0
    %v1536 = vand.u32 %v407, 4294901760
    %1537 = vmatpush1.msra.mxu0 %v1536
    %1538 = vmatprep.subr.mxu0 0.0
    %v1539 = vand.u32 %v408, 4294901760
    %1540 = vmatpush1.msra.mxu0 %v1539
    %1541 = vmatprep.subr.mxu0 0.0
    %v1542 = vand.u32 %v723, 4294901760
    %1543 = vmatpush1.msra.mxu0 %v1542
    %1544 = vmatprep.subr.mxu0 0.0
    %1545 = vmatpush1.msra.mxu0 0.0
    %1546 = vmatprep.subr.mxu0 0.0
    %1547 = vmatpush1.msra.mxu0 0.0
    %1548 = vmatprep.subr.mxu0 0.0
    %1549 = vmatpush1.msra.mxu0 0.0
    %1550 = vmatprep.subr.mxu0 0.0
    %1551 = vmatpush1.msra.mxu0 0.0
    %1552 = vmatprep.subr.mxu0 0.0
    %1553 = vmatpush1.msra.mxu0 0.0
    %1554 = vmatprep.subr.mxu0 0.0
    %1555 = vmatpush1.msra.mxu0 0.0
    %1556 = vmatprep.subr.mxu0 0.0
    %1557 = vmatpush1.msra.mxu0 0.0
    %1558 = vmatprep.subr.mxu0 0.0
    %1559 = vmatpush1.msra.mxu0 0.0
    %1560 = vmatprep.subr.mxu0 0.0
    %1561 = vmatpush1.msra.mxu0 0.0
    %1562 = vmatprep.subr.mxu0 0.0
    %1563 = vmatpush1.msra.mxu0 0.0
    %1564 = vmatprep.subr.mxu0 0.0
    %1565 = vmatpush1.msra.mxu0 0.0
    %1566 = vmatprep.subr.mxu0 0.0
    %1567 = vmatpush1.msra.mxu0 0.0
    %1568 = vmatprep.subr.mxu0 0.0
    %1569 = vmatpush1.msra.mxu0 0.0
    %1570 = vmatprep.subr.mxu0 0.0
    %1571 = vmatpush1.msra.mxu0 0.0
    %1572 = vmatprep.subr.mxu0 0.0
    %1573 = vmatpush1.msra.mxu0 0.0
    %1574 = vmatprep.subr.mxu0 0.0
    %1575 = vmatpush1.msra.mxu0 0.0
    %1576 = vmatprep.subr.mxu0 0.0
    %1577 = vmatpush1.msra.mxu0 0.0
    %1578 = vmatprep.subr.mxu0 0.0
    %1579 = vmatpush1.msra.mxu0 0.0
    %1580 = vmatprep.subr.mxu0 0.0
    %1581 = vmatpush1.msra.mxu0 0.0
    %1582 = vmatprep.subr.mxu0 0.0
    %1583 = vmatpush1.msra.mxu0 0.0
    %1584 = vmatprep.subr.mxu0 0.0
    %1585 = vmatpush1.msra.mxu0 0.0
    %1586 = vmatprep.subr.mxu0 0.0
    %1587 = vmatpush1.msra.mxu0 0.0
    %1588 = vmatprep.subr.mxu0 0.0
    %1589 = vmatpush1.msra.mxu0 0.0
    %1590 = vmatprep.subr.mxu0 0.0
    %1591 = vmatpush1.msra.mxu0 0.0
    %1592 = vmatprep.subr.mxu0 0.0
    %1593 = vmatpush1.msra.mxu0 0.0
    %1594 = vmatprep.mubr.f32.mxu0 0.0
    %v1595 = vand.u32 %v1521, 4294901760
    %v1596 = vsub.f32 %v1521, %v1595
    %v1597 = vand.u32 %v1596, 4294901760
    %v1598 = vsub.f32 %v1596, %v1597
    %v1599 = vand.u32 %v1598, 4294901760
    %1600 = vmatmul.mubr.f32.gmra.mrb[0].mxu0 %v1599
    %v1601 = vpop.f32.mrb[0].mxu0
    %v1602 = vadd.f32 0.0, %v1601
    %v1603 = vpop.f32.mrb[0].mxu0
    %1604 = vdwg.mxu0
    %1605 = vmatprep.subr.mxu0 0.0
    %v1606 = vand.u32 %v403, 4294901760
    %v1607 = vsub.f32 %v403, %v1606
    %v1608 = vand.u32 %v1607, 4294901760
    %v1609 = vsub.f32 %v1607, %v1608
    %v1610 = vand.u32 %v1609, 4294901760
    %1611 = vmatpush1.msra.mxu0 %v1610
    %1612 = vmatprep.subr.mxu0 0.0
    %v1613 = vand.u32 %v404, 4294901760
    %v1614 = vsub.f32 %v404, %v1613
    %v1615 = vand.u32 %v1614, 4294901760
    %v1616 = vsub.f32 %v1614, %v1615
    %v1617 = vand.u32 %v1616, 4294901760
    %1618 = vmatpush1.msra.mxu0 %v1617
    %1619 = vmatprep.subr.mxu0 0.0
    %v1620 = vand.u32 %v405, 4294901760
    %v1621 = vsub.f32 %v405, %v1620
    %v1622 = vand.u32 %v1621, 4294901760
    %v1623 = vsub.f32 %v1621, %v1622
    %v1624 = vand.u32 %v1623, 4294901760
    %1625 = vmatpush1.msra.mxu0 %v1624
    %1626 = vmatprep.subr.mxu0 0.0
    %v1627 = vand.u32 %v406, 4294901760
    %v1628 = vsub.f32 %v406, %v1627
    %v1629 = vand.u32 %v1628, 4294901760
    %v1630 = vsub.f32 %v1628, %v1629
    %v1631 = vand.u32 %v1630, 4294901760
    %1632 = vmatpush1.msra.mxu0 %v1631
    %1633 = vmatprep.subr.mxu0 0.0
    %v1634 = vand.u32 %v407, 4294901760
    %v1635 = vsub.f32 %v407, %v1634
    %v1636 = vand.u32 %v1635, 4294901760
    %v1637 = vsub.f32 %v1635, %v1636
    %v1638 = vand.u32 %v1637, 4294901760
    %1639 = vmatpush1.msra.mxu0 %v1638
    %1640 = vmatprep.subr.mxu0 0.0
    %v1641 = vand.u32 %v408, 4294901760
    %v1642 = vsub.f32 %v408, %v1641
    %v1643 = vand.u32 %v1642, 4294901760
    %v1644 = vsub.f32 %v1642, %v1643
    %v1645 = vand.u32 %v1644, 4294901760
    %1646 = vmatpush1.msra.mxu0 %v1645
    %1647 = vmatprep.subr.mxu0 0.0
    %v1648 = vand.u32 %v723, 4294901760
    %v1649 = vsub.f32 %v723, %v1648
    %v1650 = vand.u32 %v1649, 4294901760
    %v1651 = vsub.f32 %v1649, %v1650
    %v1652 = vand.u32 %v1651, 4294901760
    %1653 = vmatpush1.msra.mxu0 %v1652
    %1654 = vmatprep.subr.mxu0 0.0
    %1655 = vmatpush1.msra.mxu0 0.0
    %1656 = vmatprep.subr.mxu0 0.0
    %1657 = vmatpush1.msra.mxu0 0.0
    %1658 = vmatprep.subr.mxu0 0.0
    %1659 = vmatpush1.msra.mxu0 0.0
    %1660 = vmatprep.subr.mxu0 0.0
    %1661 = vmatpush1.msra.mxu0 0.0
    %1662 = vmatprep.subr.mxu0 0.0
    %1663 = vmatpush1.msra.mxu0 0.0
    %1664 = vmatprep.subr.mxu0 0.0
    %1665 = vmatpush1.msra.mxu0 0.0
    %1666 = vmatprep.subr.mxu0 0.0
    %1667 = vmatpush1.msra.mxu0 0.0
    %1668 = vmatprep.subr.mxu0 0.0
    %1669 = vmatpush1.msra.mxu0 0.0
    %1670 = vmatprep.subr.mxu0 0.0
    %1671 = vmatpush1.msra.mxu0 0.0
    %1672 = vmatprep.subr.mxu0 0.0
    %1673 = vmatpush1.msra.mxu0 0.0
    %1674 = vmatprep.subr.mxu0 0.0
    %1675 = vmatpush1.msra.mxu0 0.0
    %1676 = vmatprep.subr.mxu0 0.0
    %1677 = vmatpush1.msra.mxu0 0.0
    %1678 = vmatprep.subr.mxu0 0.0
    %1679 = vmatpush1.msra.mxu0 0.0
    %1680 = vmatprep.subr.mxu0 0.0
    %1681 = vmatpush1.msra.mxu0 0.0
    %1682 = vmatprep.subr.mxu0 0.0
    %1683 = vmatpush1.msra.mxu0 0.0
    %1684 = vmatprep.subr.mxu0 0.0
    %1685 = vmatpush1.msra.mxu0 0.0
    %1686 = vmatprep.subr.mxu0 0.0
    %1687 = vmatpush1.msra.mxu0 0.0
    %1688 = vmatprep.subr.mxu0 0.0
    %1689 = vmatpush1.msra.mxu0 0.0
    %1690 = vmatprep.subr.mxu0 0.0
    %1691 = vmatpush1.msra.mxu0 0.0
    %1692 = vmatprep.subr.mxu0 0.0
    %1693 = vmatpush1.msra.mxu0 0.0
    %1694 = vmatprep.subr.mxu0 0.0
    %1695 = vmatpush1.msra.mxu0 0.0
    %1696 = vmatprep.subr.mxu0 0.0
    %1697 = vmatpush1.msra.mxu0 0.0
    %1698 = vmatprep.subr.mxu0 0.0
    %1699 = vmatpush1.msra.mxu0 0.0
    %1700 = vmatprep.subr.mxu0 0.0
    %1701 = vmatpush1.msra.mxu0 0.0
    %1702 = vmatprep.subr.mxu0 0.0
    %1703 = vmatpush1.msra.mxu0 0.0
    %1704 = vmatprep.mubr.f32.mxu0 0.0
    %v1705 = vand.u32 %v1521, 4294901760
    %1706 = vmatmul.mubr.f32.gmra.mrb[0].mxu0 %v1705
    %v1707 = vpop.f32.mrb[0].mxu0
    %v1708 = vadd.f32 %v1602, %v1707
    %v1709 = vpop.f32.mrb[0].mxu0
    %1710 = vdwg.mxu0
    %1711 = vmatprep.subr.mxu0 0.0
    %v1712 = vand.u32 %v403, 4294901760
    %v1713 = vsub.f32 %v403, %v1712
    %1714 = vmatpush1.msra.mxu0 %v1713
    %1715 = vmatprep.subr.mxu0 0.0
    %v1716 = vand.u32 %v404, 4294901760
    %v1717 = vsub.f32 %v404, %v1716
    %1718 = vmatpush1.msra.mxu0 %v1717
    %1719 = vmatprep.subr.mxu0 0.0
    %v1720 = vand.u32 %v405, 4294901760
    %v1721 = vsub.f32 %v405, %v1720
    %1722 = vmatpush1.msra.mxu0 %v1721
    %1723 = vmatprep.subr.mxu0 0.0
    %v1724 = vand.u32 %v406, 4294901760
    %v1725 = vsub.f32 %v406, %v1724
    %1726 = vmatpush1.msra.mxu0 %v1725
    %1727 = vmatprep.subr.mxu0 0.0
    %v1728 = vand.u32 %v407, 4294901760
    %v1729 = vsub.f32 %v407, %v1728
    %1730 = vmatpush1.msra.mxu0 %v1729
    %1731 = vmatprep.subr.mxu0 0.0
    %v1732 = vand.u32 %v408, 4294901760
    %v1733 = vsub.f32 %v408, %v1732
    %1734 = vmatpush1.msra.mxu0 %v1733
    %1735 = vmatprep.subr.mxu0 0.0
    %v1736 = vand.u32 %v723, 4294901760
    %v1737 = vsub.f32 %v723, %v1736
    %1738 = vmatpush1.msra.mxu0 %v1737
    %1739 = vmatprep.subr.mxu0 0.0
    %1740 = vmatpush1.msra.mxu0 0.0
    %1741 = vmatprep.subr.mxu0 0.0
    %1742 = vmatpush1.msra.mxu0 0.0
    %1743 = vmatprep.subr.mxu0 0.0
    %1744 = vmatpush1.msra.mxu0 0.0
    %1745 = vmatprep.subr.mxu0 0.0
    %1746 = vmatpush1.msra.mxu0 0.0
    %1747 = vmatprep.subr.mxu0 0.0
    %1748 = vmatpush1.msra.mxu0 0.0
    %1749 = vmatprep.subr.mxu0 0.0
    %1750 = vmatpush1.msra.mxu0 0.0
    %1751 = vmatprep.subr.mxu0 0.0
    %1752 = vmatpush1.msra.mxu0 0.0
    %1753 = vmatprep.subr.mxu0 0.0
    %1754 = vmatpush1.msra.mxu0 0.0
    %1755 = vmatprep.subr.mxu0 0.0
    %1756 = vmatpush1.msra.mxu0 0.0
    %1757 = vmatprep.subr.mxu0 0.0
    %1758 = vmatpush1.msra.mxu0 0.0
    %1759 = vmatprep.subr.mxu0 0.0
    %1760 = vmatpush1.msra.mxu0 0.0
    %1761 = vmatprep.subr.mxu0 0.0
    %1762 = vmatpush1.msra.mxu0 0.0
    %1763 = vmatprep.subr.mxu0 0.0
    %1764 = vmatpush1.msra.mxu0 0.0
    %1765 = vmatprep.subr.mxu0 0.0
    %1766 = vmatpush1.msra.mxu0 0.0
    %1767 = vmatprep.subr.mxu0 0.0
    %1768 = vmatpush1.msra.mxu0 0.0
    %1769 = vmatprep.subr.mxu0 0.0
    %1770 = vmatpush1.msra.mxu0 0.0
    %1771 = vmatprep.subr.mxu0 0.0
    %1772 = vmatpush1.msra.mxu0 0.0
    %1773 = vmatprep.subr.mxu0 0.0
    %1774 = vmatpush1.msra.mxu0 0.0
    %1775 = vmatprep.subr.mxu0 0.0
    %1776 = vmatpush1.msra.mxu0 0.0
    %1777 = vmatprep.subr.mxu0 0.0
    %1778 = vmatpush1.msra.mxu0 0.0
    %1779 = vmatprep.subr.mxu0 0.0
    %1780 = vmatpush1.msra.mxu0 0.0
    %1781 = vmatprep.subr.mxu0 0.0
    %1782 = vmatpush1.msra.mxu0 0.0
    %1783 = vmatprep.subr.mxu0 0.0
    %1784 = vmatpush1.msra.mxu0 0.0
    %1785 = vmatprep.subr.mxu0 0.0
    %1786 = vmatpush1.msra.mxu0 0.0
    %1787 = vmatprep.subr.mxu0 0.0
    %1788 = vmatpush1.msra.mxu0 0.0
    %1789 = vmatprep.mubr.f32.mxu0 0.0
    %v1790 = vand.u32 %v1521, 4294901760
    %v1791 = vsub.f32 %v1521, %v1790
    %1792 = vmatmul.mubr.f32.gmra.mrb[0].mxu0 %v1791
    %v1793 = vpop.f32.mrb[0].mxu0
    %v1794 = vadd.f32 %v1708, %v1793
    %v1795 = vpop.f32.mrb[0].mxu0
    %1796 = vdwg.mxu0
    %1797 = vmatprep.subr.mxu0 0.0
    %v1798 = vand.u32 %v403, 4294901760
    %1799 = vmatpush1.msra.mxu0 %v1798
    %1800 = vmatprep.subr.mxu0 0.0
    %v1801 = vand.u32 %v404, 4294901760
    %1802 = vmatpush1.msra.mxu0 %v1801
    %1803 = vmatprep.subr.mxu0 0.0
    %v1804 = vand.u32 %v405, 4294901760
    %1805 = vmatpush1.msra.mxu0 %v1804
    %1806 = vmatprep.subr.mxu0 0.0
    %v1807 = vand.u32 %v406, 4294901760
    %1808 = vmatpush1.msra.mxu0 %v1807
    %1809 = vmatprep.subr.mxu0 0.0
    %v1810 = vand.u32 %v407, 4294901760
    %1811 = vmatpush1.msra.mxu0 %v1810
    %1812 = vmatprep.subr.mxu0 0.0
    %v1813 = vand.u32 %v408, 4294901760
    %1814 = vmatpush1.msra.mxu0 %v1813
    %1815 = vmatprep.subr.mxu0 0.0
    %v1816 = vand.u32 %v723, 4294901760
    %1817 = vmatpush1.msra.mxu0 %v1816
    %1818 = vmatprep.subr.mxu0 0.0
    %1819 = vmatpush1.msra.mxu0 0.0
    %1820 = vmatprep.subr.mxu0 0.0
    %1821 = vmatpush1.msra.mxu0 0.0
    %1822 = vmatprep.subr.mxu0 0.0
    %1823 = vmatpush1.msra.mxu0 0.0
    %1824 = vmatprep.subr.mxu0 0.0
    %1825 = vmatpush1.msra.mxu0 0.0
    %1826 = vmatprep.subr.mxu0 0.0
    %1827 = vmatpush1.msra.mxu0 0.0
    %1828 = vmatprep.subr.mxu0 0.0
    %1829 = vmatpush1.msra.mxu0 0.0
    %1830 = vmatprep.subr.mxu0 0.0
    %1831 = vmatpush1.msra.mxu0 0.0
    %1832 = vmatprep.subr.mxu0 0.0
    %1833 = vmatpush1.msra.mxu0 0.0
    %1834 = vmatprep.subr.mxu0 0.0
    %1835 = vmatpush1.msra.mxu0 0.0
    %1836 = vmatprep.subr.mxu0 0.0
    %1837 = vmatpush1.msra.mxu0 0.0
    %1838 = vmatprep.subr.mxu0 0.0
    %1839 = vmatpush1.msra.mxu0 0.0
    %1840 = vmatprep.subr.mxu0 0.0
    %1841 = vmatpush1.msra.mxu0 0.0
    %1842 = vmatprep.subr.mxu0 0.0
    %1843 = vmatpush1.msra.mxu0 0.0
    %1844 = vmatprep.subr.mxu0 0.0
    %1845 = vmatpush1.msra.mxu0 0.0
    %1846 = vmatprep.subr.mxu0 0.0
    %1847 = vmatpush1.msra.mxu0 0.0
    %1848 = vmatprep.subr.mxu0 0.0
    %1849 = vmatpush1.msra.mxu0 0.0
    %1850 = vmatprep.subr.mxu0 0.0
    %1851 = vmatpush1.msra.mxu0 0.0
    %1852 = vmatprep.subr.mxu0 0.0
    %1853 = vmatpush1.msra.mxu0 0.0
    %1854 = vmatprep.subr.mxu0 0.0
    %1855 = vmatpush1.msra.mxu0 0.0
    %1856 = vmatprep.subr.mxu0 0.0
    %1857 = vmatpush1.msra.mxu0 0.0
    %1858 = vmatprep.subr.mxu0 0.0
    %1859 = vmatpush1.msra.mxu0 0.0
    %1860 = vmatprep.subr.mxu0 0.0
    %1861 = vmatpush1.msra.mxu0 0.0
    %1862 = vmatprep.subr.mxu0 0.0
    %1863 = vmatpush1.msra.mxu0 0.0
    %1864 = vmatprep.subr.mxu0 0.0
    %1865 = vmatpush1.msra.mxu0 0.0
    %1866 = vmatprep.subr.mxu0 0.0
    %1867 = vmatpush1.msra.mxu0 0.0
    %1868 = vmatprep.mubr.f32.mxu0 0.0
    %v1869 = vand.u32 %v1521, 4294901760
    %v1870 = vsub.f32 %v1521, %v1869
    %v1871 = vand.u32 %v1870, 4294901760
    %1872 = vmatmul.mubr.f32.gmra.mrb[0].mxu0 %v1871
    %v1873 = vpop.f32.mrb[0].mxu0
    %v1874 = vadd.f32 %v1794, %v1873
    %v1875 = vpop.f32.mrb[0].mxu0
    %1876 = vdwg.mxu0
    %1877 = vmatprep.subr.mxu0 0.0
    %v1878 = vand.u32 %v403, 4294901760
    %v1879 = vsub.f32 %v403, %v1878
    %v1880 = vand.u32 %v1879, 4294901760
    %1881 = vmatpush1.msra.mxu0 %v1880
    %1882 = vmatprep.subr.mxu0 0.0
    %v1883 = vand.u32 %v404, 4294901760
    %v1884 = vsub.f32 %v404, %v1883
    %v1885 = vand.u32 %v1884, 4294901760
    %1886 = vmatpush1.msra.mxu0 %v1885
    %1887 = vmatprep.subr.mxu0 0.0
    %v1888 = vand.u32 %v405, 4294901760
    %v1889 = vsub.f32 %v405, %v1888
    %v1890 = vand.u32 %v1889, 4294901760
    %1891 = vmatpush1.msra.mxu0 %v1890
    %1892 = vmatprep.subr.mxu0 0.0
    %v1893 = vand.u32 %v406, 4294901760
    %v1894 = vsub.f32 %v406, %v1893
    %v1895 = vand.u32 %v1894, 4294901760
    %1896 = vmatpush1.msra.mxu0 %v1895
    %1897 = vmatprep.subr.mxu0 0.0
    %v1898 = vand.u32 %v407, 4294901760
    %v1899 = vsub.f32 %v407, %v1898
    %v1900 = vand.u32 %v1899, 4294901760
    %1901 = vmatpush1.msra.mxu0 %v1900
    %1902 = vmatprep.subr.mxu0 0.0
    %v1903 = vand.u32 %v408, 4294901760
    %v1904 = vsub.f32 %v408, %v1903
    %v1905 = vand.u32 %v1904, 4294901760
    %1906 = vmatpush1.msra.mxu0 %v1905
    %1907 = vmatprep.subr.mxu0 0.0
    %v1908 = vand.u32 %v723, 4294901760
    %v1909 = vsub.f32 %v723, %v1908
    %v1910 = vand.u32 %v1909, 4294901760
    %1911 = vmatpush1.msra.mxu0 %v1910
    %1912 = vmatprep.subr.mxu0 0.0
    %1913 = vmatpush1.msra.mxu0 0.0
    %1914 = vmatprep.subr.mxu0 0.0
    %1915 = vmatpush1.msra.mxu0 0.0
    %1916 = vmatprep.subr.mxu0 0.0
    %1917 = vmatpush1.msra.mxu0 0.0
    %1918 = vmatprep.subr.mxu0 0.0
    %1919 = vmatpush1.msra.mxu0 0.0
    %1920 = vmatprep.subr.mxu0 0.0
    %1921 = vmatpush1.msra.mxu0 0.0
    %1922 = vmatprep.subr.mxu0 0.0
    %1923 = vmatpush1.msra.mxu0 0.0
    %1924 = vmatprep.subr.mxu0 0.0
    %1925 = vmatpush1.msra.mxu0 0.0
    %1926 = vmatprep.subr.mxu0 0.0
    %1927 = vmatpush1.msra.mxu0 0.0
    %1928 = vmatprep.subr.mxu0 0.0
    %1929 = vmatpush1.msra.mxu0 0.0
    %1930 = vmatprep.subr.mxu0 0.0
    %1931 = vmatpush1.msra.mxu0 0.0
    %1932 = vmatprep.subr.mxu0 0.0
    %1933 = vmatpush1.msra.mxu0 0.0
    %1934 = vmatprep.subr.mxu0 0.0
    %1935 = vmatpush1.msra.mxu0 0.0
    %1936 = vmatprep.subr.mxu0 0.0
    %1937 = vmatpush1.msra.mxu0 0.0
    %1938 = vmatprep.subr.mxu0 0.0
    %1939 = vmatpush1.msra.mxu0 0.0
    %1940 = vmatprep.subr.mxu0 0.0
    %1941 = vmatpush1.msra.mxu0 0.0
    %1942 = vmatprep.subr.mxu0 0.0
    %1943 = vmatpush1.msra.mxu0 0.0
    %1944 = vmatprep.subr.mxu0 0.0
    %1945 = vmatpush1.msra.mxu0 0.0
    %1946 = vmatprep.subr.mxu0 0.0
    %1947 = vmatpush1.msra.mxu0 0.0
    %1948 = vmatprep.subr.mxu0 0.0
    %1949 = vmatpush1.msra.mxu0 0.0
    %1950 = vmatprep.subr.mxu0 0.0
    %1951 = vmatpush1.msra.mxu0 0.0
    %1952 = vmatprep.subr.mxu0 0.0
    %1953 = vmatpush1.msra.mxu0 0.0
    %1954 = vmatprep.subr.mxu0 0.0
    %1955 = vmatpush1.msra.mxu0 0.0
    %1956 = vmatprep.subr.mxu0 0.0
    %1957 = vmatpush1.msra.mxu0 0.0
    %1958 = vmatprep.subr.mxu0 0.0
    %1959 = vmatpush1.msra.mxu0 0.0
    %1960 = vmatprep.subr.mxu0 0.0
    %1961 = vmatpush1.msra.mxu0 0.0
    %1962 = vmatprep.mubr.f32.mxu0 0.0
    %v1963 = vand.u32 %v1521, 4294901760
    %1964 = vmatmul.mubr.f32.gmra.mrb[0].mxu0 %v1963
    %v1965 = vpop.f32.mrb[0].mxu0
    %v1966 = vadd.f32 %v1874, %v1965
    %v1967 = vpop.f32.mrb[0].mxu0
    %1968 = vdwg.mxu0
    %1969 = vmatprep.subr.mxu0 0.0
    %v1970 = vand.u32 %v403, 4294901760
    %1971 = vmatpush1.msra.mxu0 %v1970
    %1972 = vmatprep.subr.mxu0 0.0
    %v1973 = vand.u32 %v404, 4294901760
    %1974 = vmatpush1.msra.mxu0 %v1973
    %1975 = vmatprep.subr.mxu0 0.0
    %v1976 = vand.u32 %v405, 4294901760
    %1977 = vmatpush1.msra.mxu0 %v1976
    %1978 = vmatprep.subr.mxu0 0.0
    %v1979 = vand.u32 %v406, 4294901760
    %1980 = vmatpush1.msra.mxu0 %v1979
    %1981 = vmatprep.subr.mxu0 0.0
    %v1982 = vand.u32 %v407, 4294901760
    %1983 = vmatpush1.msra.mxu0 %v1982
    %1984 = vmatprep.subr.mxu0 0.0
    %v1985 = vand.u32 %v408, 4294901760
    %1986 = vmatpush1.msra.mxu0 %v1985
    %1987 = vmatprep.subr.mxu0 0.0
    %v1988 = vand.u32 %v723, 4294901760
    %1989 = vmatpush1.msra.mxu0 %v1988
    %1990 = vmatprep.subr.mxu0 0.0
    %1991 = vmatpush1.msra.mxu0 0.0
    %1992 = vmatprep.subr.mxu0 0.0
    %1993 = vmatpush1.msra.mxu0 0.0
    %1994 = vmatprep.subr.mxu0 0.0
    %1995 = vmatpush1.msra.mxu0 0.0
    %1996 = vmatprep.subr.mxu0 0.0
    %1997 = vmatpush1.msra.mxu0 0.0
    %1998 = vmatprep.subr.mxu0 0.0
    %1999 = vmatpush1.msra.mxu0 0.0
    %2000 = vmatprep.subr.mxu0 0.0
    %2001 = vmatpush1.msra.mxu0 0.0
    %2002 = vmatprep.subr.mxu0 0.0
    %2003 = vmatpush1.msra.mxu0 0.0
    %2004 = vmatprep.subr.mxu0 0.0
    %2005 = vmatpush1.msra.mxu0 0.0
    %2006 = vmatprep.subr.mxu0 0.0
    %2007 = vmatpush1.msra.mxu0 0.0
    %2008 = vmatprep.subr.mxu0 0.0
    %2009 = vmatpush1.msra.mxu0 0.0
    %2010 = vmatprep.subr.mxu0 0.0
    %2011 = vmatpush1.msra.mxu0 0.0
    %2012 = vmatprep.subr.mxu0 0.0
    %2013 = vmatpush1.msra.mxu0 0.0
    %2014 = vmatprep.subr.mxu0 0.0
    %2015 = vmatpush1.msra.mxu0 0.0
    %2016 = vmatprep.subr.mxu0 0.0
    %2017 = vmatpush1.msra.mxu0 0.0
    %2018 = vmatprep.subr.mxu0 0.0
    %2019 = vmatpush1.msra.mxu0 0.0
    %2020 = vmatprep.subr.mxu0 0.0
    %2021 = vmatpush1.msra.mxu0 0.0
    %2022 = vmatprep.subr.mxu0 0.0
    %2023 = vmatpush1.msra.mxu0 0.0
    %2024 = vmatprep.subr.mxu0 0.0
    %2025 = vmatpush1.msra.mxu0 0.0
    %2026 = vmatprep.subr.mxu0 0.0
    %2027 = vmatpush1.msra.mxu0 0.0
    %2028 = vmatprep.subr.mxu0 0.0
    %2029 = vmatpush1.msra.mxu0 0.0
    %2030 = vmatprep.subr.mxu0 0.0
    %2031 = vmatpush1.msra.mxu0 0.0
    %2032 = vmatprep.subr.mxu0 0.0
    %2033 = vmatpush1.msra.mxu0 0.0
    %2034 = vmatprep.subr.mxu0 0.0
    %2035 = vmatpush1.msra.mxu0 0.0
    %2036 = vmatprep.subr.mxu0 0.0
    %2037 = vmatpush1.msra.mxu0 0.0
    %2038 = vmatprep.subr.mxu0 0.0
    %2039 = vmatpush1.msra.mxu0 0.0
    %2040 = vmatprep.mubr.f32.mxu0 0.0
    %v2041 = vand.u32 %v1521, 4294901760
    %2042 = vmatmul.mubr.f32.gmra.mrb[0].mxu0 %v2041
    %v2043 = vpop.f32.mrb[0].mxu0
    %v2044 = vadd.f32 %v1966, %v2043
    %v2045 = vpop.f32.mrb[0].mxu0
    %2046 = vdwg.mxu0
    %2047 = vrot.lane.b32.xlu0 %v431, 2
    %v2048 = vpop.permute.xlu0 %2047
    %v2050 = vsel %vm436, %v2044, %v2048
    %v2052 = vsel %vm438, %v2050, 0
    %2054 = vmatprep.subr.mxu0 0.0
    %2055 = vmatpush1.msra.mxu0 %v391
    %2056 = vmatprep.subr.mxu0 0.0
    %2057 = vmatpush1.msra.mxu0 %v444
    %2058 = vmatprep.subr.mxu0 0.0
    %2059 = vmatpush1.msra.mxu0 0.0
    %2060 = vmatprep.subr.mxu0 0.0
    %2061 = vmatpush1.msra.mxu0 0.0
    %2062 = vmatprep.subr.mxu0 0.0
    %2063 = vmatpush1.msra.mxu0 0.0
    %2064 = vmatprep.subr.mxu0 0.0
    %2065 = vmatpush1.msra.mxu0 0.0
    %2066 = vmatprep.subr.mxu0 0.0
    %2067 = vmatpush1.msra.mxu0 0.0
    %2068 = vmatprep.subr.mxu0 0.0
    %2069 = vmatpush1.msra.mxu0 0.0
    %2070 = vmatprep.subr.mxu0 0.0
    %2071 = vmatpush1.msra.mxu0 0.0
    %2072 = vmatprep.subr.mxu0 0.0
    %2073 = vmatpush1.msra.mxu0 0.0
    %2074 = vmatprep.subr.mxu0 0.0
    %2075 = vmatpush1.msra.mxu0 0.0
    %2076 = vmatprep.subr.mxu0 0.0
    %2077 = vmatpush1.msra.mxu0 0.0
    %2078 = vmatprep.subr.mxu0 0.0
    %2079 = vmatpush1.msra.mxu0 0.0
    %2080 = vmatprep.subr.mxu0 0.0
    %2081 = vmatpush1.msra.mxu0 0.0
    %2082 = vmatprep.subr.mxu0 0.0
    %2083 = vmatpush1.msra.mxu0 0.0
    %2084 = vmatprep.subr.mxu0 0.0
    %2085 = vmatpush1.msra.mxu0 0.0
    %2086 = vmatprep.subr.mxu0 0.0
    %2087 = vmatpush1.msra.mxu0 0.0
    %2088 = vmatprep.subr.mxu0 0.0
    %2089 = vmatpush1.msra.mxu0 0.0
    %2090 = vmatprep.subr.mxu0 0.0
    %2091 = vmatpush1.msra.mxu0 0.0
    %2092 = vmatprep.subr.mxu0 0.0
    %2093 = vmatpush1.msra.mxu0 0.0
    %2094 = vmatprep.subr.mxu0 0.0
    %2095 = vmatpush1.msra.mxu0 0.0
    %2096 = vmatprep.subr.mxu0 0.0
    %2097 = vmatpush1.msra.mxu0 0.0
    %2098 = vmatprep.subr.mxu0 0.0
    %2099 = vmatpush1.msra.mxu0 0.0
    %2100 = vmatprep.subr.mxu0 0.0
    %2101 = vmatpush1.msra.mxu0 0.0
    %2102 = vmatprep.subr.mxu0 0.0
    %2103 = vmatpush1.msra.mxu0 0.0
    %2104 = vmatprep.subr.mxu0 0.0
    %2105 = vmatpush1.msra.mxu0 0.0
    %2106 = vmatprep.subr.mxu0 0.0
    %2107 = vmatpush1.msra.mxu0 0.0
    %2108 = vmatprep.subr.mxu0 0.0
    %2109 = vmatpush1.msra.mxu0 0.0
    %2110 = vmatprep.subr.mxu0 0.0
    %2111 = vmatpush1.msra.mxu0 0.0
    %2112 = vmatprep.subr.mxu0 0.0
    %2113 = vmatpush1.msra.mxu0 0.0
    %2114 = vmatprep.subr.mxu0 0.0
    %2115 = vmatpush1.msra.mxu0 0.0
    %2116 = vmatprep.subr.mxu0 0.0
    %2117 = vmatpush1.msra.mxu0 0.0
    %2118 = vmatprep.mubr.f32.mxu0 0.0
    %2119 = vmatmul.mubr.f32.gmra.mrb[0].mxu0 %v2052
    %v2120 = vpop.f32.mrb[0].mxu0
    %v2121 = vadd.f32 %v415, %v2120
    %v2122 = vpop.f32.mrb[0].mxu0
    %2123 = vdwg.mxu0
    %v2124 = vtanh.pop %v2121
    %v2126 = vsel %vm155, %v2124, 0
    %2128 = vmatprep.subr.mxu0 0.0
    %2129 = vmatpush1.msra.mxu0 %v393
    %2130 = vmatprep.subr.mxu0 0.0
    %2131 = vmatpush1.msra.mxu0 %v394
    %2132 = vmatprep.subr.mxu0 0.0
    %2133 = vmatpush1.msra.mxu0 %v395
    %2134 = vmatprep.subr.mxu0 0.0
    %2135 = vmatpush1.msra.mxu0 %v396
    %2136 = vmatprep.subr.mxu0 0.0
    %2137 = vmatpush1.msra.mxu0 0.0
    %2138 = vmatprep.subr.mxu0 0.0
    %2139 = vmatpush1.msra.mxu0 0.0
    %2140 = vmatprep.subr.mxu0 0.0
    %2141 = vmatpush1.msra.mxu0 0.0
    %2142 = vmatprep.subr.mxu0 0.0
    %2143 = vmatpush1.msra.mxu0 0.0
    %2144 = vmatprep.subr.mxu0 0.0
    %2145 = vmatpush1.msra.mxu0 0.0
    %2146 = vmatprep.subr.mxu0 0.0
    %2147 = vmatpush1.msra.mxu0 0.0
    %2148 = vmatprep.subr.mxu0 0.0
    %2149 = vmatpush1.msra.mxu0 0.0
    %2150 = vmatprep.subr.mxu0 0.0
    %2151 = vmatpush1.msra.mxu0 0.0
    %2152 = vmatprep.subr.mxu0 0.0
    %2153 = vmatpush1.msra.mxu0 0.0
    %2154 = vmatprep.subr.mxu0 0.0
    %2155 = vmatpush1.msra.mxu0 0.0
    %2156 = vmatprep.subr.mxu0 0.0
    %2157 = vmatpush1.msra.mxu0 0.0
    %2158 = vmatprep.subr.mxu0 0.0
    %2159 = vmatpush1.msra.mxu0 0.0
    %2160 = vmatprep.subr.mxu0 0.0
    %2161 = vmatpush1.msra.mxu0 0.0
    %2162 = vmatprep.subr.mxu0 0.0
    %2163 = vmatpush1.msra.mxu0 0.0
    %2164 = vmatprep.subr.mxu0 0.0
    %2165 = vmatpush1.msra.mxu0 0.0
    %2166 = vmatprep.subr.mxu0 0.0
    %2167 = vmatpush1.msra.mxu0 0.0
    %2168 = vmatprep.subr.mxu0 0.0
    %2169 = vmatpush1.msra.mxu0 0.0
    %2170 = vmatprep.subr.mxu0 0.0
    %2171 = vmatpush1.msra.mxu0 0.0
    %2172 = vmatprep.subr.mxu0 0.0
    %2173 = vmatpush1.msra.mxu0 0.0
    %2174 = vmatprep.subr.mxu0 0.0
    %2175 = vmatpush1.msra.mxu0 0.0
    %2176 = vmatprep.subr.mxu0 0.0
    %2177 = vmatpush1.msra.mxu0 0.0
    %2178 = vmatprep.subr.mxu0 0.0
    %2179 = vmatpush1.msra.mxu0 0.0
    %2180 = vmatprep.subr.mxu0 0.0
    %2181 = vmatpush1.msra.mxu0 0.0
    %2182 = vmatprep.subr.mxu0 0.0
    %2183 = vmatpush1.msra.mxu0 0.0
    %2184 = vmatprep.subr.mxu0 0.0
    %2185 = vmatpush1.msra.mxu0 0.0
    %2186 = vmatprep.subr.mxu0 0.0
    %2187 = vmatpush1.msra.mxu0 0.0
    %2188 = vmatprep.subr.mxu0 0.0
    %2189 = vmatpush1.msra.mxu0 0.0
    %2190 = vmatprep.subr.mxu0 0.0
    %2191 = vmatpush1.msra.mxu0 0.0
    %2192 = vmatprep.mubr.f32.mxu0 0.0
    %2193 = vmatmul.mubr.f32.gmra.mrb[0].mxu0 %v2126
    %v2194 = vpop.f32.mrb[0].mxu0
    %v2195 = vadd.f32 %v422, %v2194
    %v2196 = vpop.f32.mrb[0].mxu0
    %2197 = vdwg.mxu0
    %v2198 = vtanh.pop %v2195
    %2200 = vrot.lane.b32.xlu0 %v2198, 11
    %v2201 = vpop.permute.xlu0 %2200
    %v2203 = vsel %vm438, %v2050, %v2201
    %v2205 = vsel %vm596, %v2203, 0
    %2207 = vmatprep.subr.mxu0 0.0
    %2208 = vmatpush1.msra.mxu0 %v397
    %2209 = vmatprep.subr.mxu0 0.0
    %2210 = vmatpush1.msra.mxu0 %v398
    %2211 = vmatprep.subr.mxu0 0.0
    %2212 = vmatpush1.msra.mxu0 %v399
    %2213 = vmatprep.subr.mxu0 0.0
    %2214 = vmatpush1.msra.mxu0 %v400
    %2215 = vmatprep.subr.mxu0 0.0
    %2216 = vmatpush1.msra.mxu0 %v401
    %2217 = vmatprep.subr.mxu0 0.0
    %2218 = vmatpush1.msra.mxu0 %v601
    %2219 = vmatprep.subr.mxu0 0.0
    %2220 = vmatpush1.msra.mxu0 0.0
    %2221 = vmatprep.subr.mxu0 0.0
    %2222 = vmatpush1.msra.mxu0 0.0
    %2223 = vmatprep.subr.mxu0 0.0
    %2224 = vmatpush1.msra.mxu0 0.0
    %2225 = vmatprep.subr.mxu0 0.0
    %2226 = vmatpush1.msra.mxu0 0.0
    %2227 = vmatprep.subr.mxu0 0.0
    %2228 = vmatpush1.msra.mxu0 0.0
    %2229 = vmatprep.subr.mxu0 0.0
    %2230 = vmatpush1.msra.mxu0 0.0
    %2231 = vmatprep.subr.mxu0 0.0
    %2232 = vmatpush1.msra.mxu0 0.0
    %2233 = vmatprep.subr.mxu0 0.0
    %2234 = vmatpush1.msra.mxu0 0.0
    %2235 = vmatprep.subr.mxu0 0.0
    %2236 = vmatpush1.msra.mxu0 0.0
    %2237 = vmatprep.subr.mxu0 0.0
    %2238 = vmatpush1.msra.mxu0 0.0
    %2239 = vmatprep.subr.mxu0 0.0
    %2240 = vmatpush1.msra.mxu0 0.0
    %2241 = vmatprep.subr.mxu0 0.0
    %2242 = vmatpush1.msra.mxu0 0.0
    %2243 = vmatprep.subr.mxu0 0.0
    %2244 = vmatpush1.msra.mxu0 0.0
    %2245 = vmatprep.subr.mxu0 0.0
    %2246 = vmatpush1.msra.mxu0 0.0
    %2247 = vmatprep.subr.mxu0 0.0
    %2248 = vmatpush1.msra.mxu0 0.0
    %2249 = vmatprep.subr.mxu0 0.0
    %2250 = vmatpush1.msra.mxu0 0.0
    %2251 = vmatprep.subr.mxu0 0.0
    %2252 = vmatpush1.msra.mxu0 0.0
    %2253 = vmatprep.subr.mxu0 0.0
    %2254 = vmatpush1.msra.mxu0 0.0
    %2255 = vmatprep.subr.mxu0 0.0
    %2256 = vmatpush1.msra.mxu0 0.0
    %2257 = vmatprep.subr.mxu0 0.0
    %2258 = vmatpush1.msra.mxu0 0.0
    %2259 = vmatprep.subr.mxu0 0.0
    %2260 = vmatpush1.msra.mxu0 0.0
    %2261 = vmatprep.subr.mxu0 0.0
    %2262 = vmatpush1.msra.mxu0 0.0
    %2263 = vmatprep.subr.mxu0 0.0
    %2264 = vmatpush1.msra.mxu0 0.0
    %2265 = vmatprep.subr.mxu0 0.0
    %2266 = vmatpush1.msra.mxu0 0.0
    %2267 = vmatprep.subr.mxu0 0.0
    %2268 = vmatpush1.msra.mxu0 0.0
    %2269 = vmatprep.subr.mxu0 0.0
    %2270 = vmatpush1.msra.mxu0 0.0
    %2271 = vmatprep.mubr.f32.mxu0 0.0
    %2272 = vmatmul.mubr.f32.gmra.mrb[0].mxu0 %v2205
    %v2273 = vpop.f32.mrb[0].mxu0
    %v2274 = vadd.f32 %v429, %v2273
    %v2275 = vpop.f32.mrb[0].mxu0
    %2276 = vdwg.mxu0
    %2278 = vset.pattern.permute.xlu0 0
    %2279 = vperm.xlu0 %2278, %v2274
    %v2280 = vpop.permute.xlu0 %2279
    %v2282 = vmul.f32 %v2280, %v2050
    %2283 = vset.pattern.permute.xlu0 1
    %2284 = vperm.xlu0 %2283, %v2274
    %v2285 = vpop.permute.xlu0 %2284
    %v2287 = vmul.f32 %v2285, %v2050
    %2288 = vset.pattern.permute.xlu0 2
    %2289 = vperm.xlu0 %2288, %v2274
    %v2290 = vpop.permute.xlu0 %2289
    %v2292 = vmul.f32 %v2290, %v2050
    %2293 = vset.pattern.permute.xlu0 3
    %2294 = vperm.xlu0 %2293, %v2274
    %v2295 = vpop.permute.xlu0 %2294
    %v2297 = vmul.f32 %v2295, %v2050
    %2299 = vrot.lane.b32.xlu0 %v2282, 11
    %v2300 = vpop.permute.xlu0 %2299
    %2303 = vrot.lane.b32.xlu0 %v2287, 22
    %v2304 = vpop.permute.xlu0 %2303
    %2307 = vrot.lane.b32.xlu0 %v2292, 33
    %v2308 = vpop.permute.xlu0 %2307
    %2311 = vrot.lane.b32.xlu0 %v2297, 44
    %v2312 = vpop.permute.xlu0 %2311
    %v2314 = vsel %vm438, %v2050, %v2300
    %v2315 = vsel %vm711, %v2314, %v2304
    %v2316 = vsel %vm713, %v2315, %v2308
    %v2317 = vsel %vm715, %v2316, %v2312
    %v2319 = vsel %vm717, %v2317, 0
    %2321 = vmatprep.subr.mxu0 0.0
    %v2322 = vand.u32 %v403, 4294901760
    %2323 = vmatpush1.msra.mxu0 %v2322
    %2324 = vmatprep.subr.mxu0 0.0
    %v2325 = vand.u32 %v404, 4294901760
    %2326 = vmatpush1.msra.mxu0 %v2325
    %2327 = vmatprep.subr.mxu0 0.0
    %v2328 = vand.u32 %v405, 4294901760
    %2329 = vmatpush1.msra.mxu0 %v2328
    %2330 = vmatprep.subr.mxu0 0.0
    %v2331 = vand.u32 %v406, 4294901760
    %2332 = vmatpush1.msra.mxu0 %v2331
    %2333 = vmatprep.subr.mxu0 0.0
    %v2334 = vand.u32 %v407, 4294901760
    %2335 = vmatpush1.msra.mxu0 %v2334
    %2336 = vmatprep.subr.mxu0 0.0
    %v2337 = vand.u32 %v408, 4294901760
    %2338 = vmatpush1.msra.mxu0 %v2337
    %2339 = vmatprep.subr.mxu0 0.0
    %v2340 = vand.u32 %v723, 4294901760
    %2341 = vmatpush1.msra.mxu0 %v2340
    %2342 = vmatprep.subr.mxu0 0.0
    %2343 = vmatpush1.msra.mxu0 0.0
    %2344 = vmatprep.subr.mxu0 0.0
    %2345 = vmatpush1.msra.mxu0 0.0
    %2346 = vmatprep.subr.mxu0 0.0
    %2347 = vmatpush1.msra.mxu0 0.0
    %2348 = vmatprep.subr.mxu0 0.0
    %2349 = vmatpush1.msra.mxu0 0.0
    %2350 = vmatprep.subr.mxu0 0.0
    %2351 = vmatpush1.msra.mxu0 0.0
    %2352 = vmatprep.subr.mxu0 0.0
    %2353 = vmatpush1.msra.mxu0 0.0
    %2354 = vmatprep.subr.mxu0 0.0
    %2355 = vmatpush1.msra.mxu0 0.0
    %2356 = vmatprep.subr.mxu0 0.0
    %2357 = vmatpush1.msra.mxu0 0.0
    %2358 = vmatprep.subr.mxu0 0.0
    %2359 = vmatpush1.msra.mxu0 0.0
    %2360 = vmatprep.subr.mxu0 0.0
    %2361 = vmatpush1.msra.mxu0 0.0
    %2362 = vmatprep.subr.mxu0 0.0
    %2363 = vmatpush1.msra.mxu0 0.0
    %2364 = vmatprep.subr.mxu0 0.0
    %2365 = vmatpush1.msra.mxu0 0.0
    %2366 = vmatprep.subr.mxu0 0.0
    %2367 = vmatpush1.msra.mxu0 0.0
    %2368 = vmatprep.subr.mxu0 0.0
    %2369 = vmatpush1.msra.mxu0 0.0
    %2370 = vmatprep.subr.mxu0 0.0
    %2371 = vmatpush1.msra.mxu0 0.0
    %2372 = vmatprep.subr.mxu0 0.0
    %2373 = vmatpush1.msra.mxu0 0.0
    %2374 = vmatprep.subr.mxu0 0.0
    %2375 = vmatpush1.msra.mxu0 0.0
    %2376 = vmatprep.subr.mxu0 0.0
    %2377 = vmatpush1.msra.mxu0 0.0
    %2378 = vmatprep.subr.mxu0 0.0
    %2379 = vmatpush1.msra.mxu0 0.0
    %2380 = vmatprep.subr.mxu0 0.0
    %2381 = vmatpush1.msra.mxu0 0.0
    %2382 = vmatprep.subr.mxu0 0.0
    %2383 = vmatpush1.msra.mxu0 0.0
    %2384 = vmatprep.subr.mxu0 0.0
    %2385 = vmatpush1.msra.mxu0 0.0
    %2386 = vmatprep.subr.mxu0 0.0
    %2387 = vmatpush1.msra.mxu0 0.0
    %2388 = vmatprep.subr.mxu0 0.0
    %2389 = vmatpush1.msra.mxu0 0.0
    %2390 = vmatprep.subr.mxu0 0.0
    %2391 = vmatpush1.msra.mxu0 0.0
    %2392 = vmatprep.mubr.f32.mxu0 0.0
    %v2393 = vand.u32 %v2319, 4294901760
    %v2394 = vsub.f32 %v2319, %v2393
    %v2395 = vand.u32 %v2394, 4294901760
    %v2396 = vsub.f32 %v2394, %v2395
    %v2397 = vand.u32 %v2396, 4294901760
    %2398 = vmatmul.mubr.f32.gmra.mrb[0].mxu0 %v2397
    %v2399 = vpop.f32.mrb[0].mxu0
    %v2400 = vadd.f32 0.0, %v2399
    %v2401 = vpop.f32.mrb[0].mxu0
    %2402 = vdwg.mxu0
    %2403 = vmatprep.subr.mxu0 0.0
    %v2404 = vand.u32 %v403, 4294901760
    %v2405 = vsub.f32 %v403, %v2404
    %v2406 = vand.u32 %v2405, 4294901760
    %v2407 = vsub.f32 %v2405, %v2406
    %v2408 = vand.u32 %v2407, 4294901760
    %2409 = vmatpush1.msra.mxu0 %v2408
    %2410 = vmatprep.subr.mxu0 0.0
    %v2411 = vand.u32 %v404, 4294901760
    %v2412 = vsub.f32 %v404, %v2411
    %v2413 = vand.u32 %v2412, 4294901760
    %v2414 = vsub.f32 %v2412, %v2413
    %v2415 = vand.u32 %v2414, 4294901760
    %2416 = vmatpush1.msra.mxu0 %v2415
    %2417 = vmatprep.subr.mxu0 0.0
    %v2418 = vand.u32 %v405, 4294901760
    %v2419 = vsub.f32 %v405, %v2418
    %v2420 = vand.u32 %v2419, 4294901760
    %v2421 = vsub.f32 %v2419, %v2420
    %v2422 = vand.u32 %v2421, 4294901760
    %2423 = vmatpush1.msra.mxu0 %v2422
    %2424 = vmatprep.subr.mxu0 0.0
    %v2425 = vand.u32 %v406, 4294901760
    %v2426 = vsub.f32 %v406, %v2425
    %v2427 = vand.u32 %v2426, 4294901760
    %v2428 = vsub.f32 %v2426, %v2427
    %v2429 = vand.u32 %v2428, 4294901760
    %2430 = vmatpush1.msra.mxu0 %v2429
    %2431 = vmatprep.subr.mxu0 0.0
    %v2432 = vand.u32 %v407, 4294901760
    %v2433 = vsub.f32 %v407, %v2432
    %v2434 = vand.u32 %v2433, 4294901760
    %v2435 = vsub.f32 %v2433, %v2434
    %v2436 = vand.u32 %v2435, 4294901760
    %2437 = vmatpush1.msra.mxu0 %v2436
    %2438 = vmatprep.subr.mxu0 0.0
    %v2439 = vand.u32 %v408, 4294901760
    %v2440 = vsub.f32 %v408, %v2439
    %v2441 = vand.u32 %v2440, 4294901760
    %v2442 = vsub.f32 %v2440, %v2441
    %v2443 = vand.u32 %v2442, 4294901760
    %2444 = vmatpush1.msra.mxu0 %v2443
    %2445 = vmatprep.subr.mxu0 0.0
    %v2446 = vand.u32 %v723, 4294901760
    %v2447 = vsub.f32 %v723, %v2446
    %v2448 = vand.u32 %v2447, 4294901760
    %v2449 = vsub.f32 %v2447, %v2448
    %v2450 = vand.u32 %v2449, 4294901760
    %2451 = vmatpush1.msra.mxu0 %v2450
    %2452 = vmatprep.subr.mxu0 0.0
    %2453 = vmatpush1.msra.mxu0 0.0
    %2454 = vmatprep.subr.mxu0 0.0
    %2455 = vmatpush1.msra.mxu0 0.0
    %2456 = vmatprep.subr.mxu0 0.0
    %2457 = vmatpush1.msra.mxu0 0.0
    %2458 = vmatprep.subr.mxu0 0.0
    %2459 = vmatpush1.msra.mxu0 0.0
    %2460 = vmatprep.subr.mxu0 0.0
    %2461 = vmatpush1.msra.mxu0 0.0
    %2462 = vmatprep.subr.mxu0 0.0
    %2463 = vmatpush1.msra.mxu0 0.0
    %2464 = vmatprep.subr.mxu0 0.0
    %2465 = vmatpush1.msra.mxu0 0.0
    %2466 = vmatprep.subr.mxu0 0.0
    %2467 = vmatpush1.msra.mxu0 0.0
    %2468 = vmatprep.subr.mxu0 0.0
    %2469 = vmatpush1.msra.mxu0 0.0
    %2470 = vmatprep.subr.mxu0 0.0
    %2471 = vmatpush1.msra.mxu0 0.0
    %2472 = vmatprep.subr.mxu0 0.0
    %2473 = vmatpush1.msra.mxu0 0.0
    %2474 = vmatprep.subr.mxu0 0.0
    %2475 = vmatpush1.msra.mxu0 0.0
    %2476 = vmatprep.subr.mxu0 0.0
    %2477 = vmatpush1.msra.mxu0 0.0
    %2478 = vmatprep.subr.mxu0 0.0
    %2479 = vmatpush1.msra.mxu0 0.0
    %2480 = vmatprep.subr.mxu0 0.0
    %2481 = vmatpush1.msra.mxu0 0.0
    %2482 = vmatprep.subr.mxu0 0.0
    %2483 = vmatpush1.msra.mxu0 0.0
    %2484 = vmatprep.subr.mxu0 0.0
    %2485 = vmatpush1.msra.mxu0 0.0
    %2486 = vmatprep.subr.mxu0 0.0
    %2487 = vmatpush1.msra.mxu0 0.0
    %2488 = vmatprep.subr.mxu0 0.0
    %2489 = vmatpush1.msra.mxu0 0.0
    %2490 = vmatprep.subr.mxu0 0.0
    %2491 = vmatpush1.msra.mxu0 0.0
    %2492 = vmatprep.subr.mxu0 0.0
    %2493 = vmatpush1.msra.mxu0 0.0
    %2494 = vmatprep.subr.mxu0 0.0
    %2495 = vmatpush1.msra.mxu0 0.0
    %2496 = vmatprep.subr.mxu0 0.0
    %2497 = vmatpush1.msra.mxu0 0.0
    %2498 = vmatprep.subr.mxu0 0.0
    %2499 = vmatpush1.msra.mxu0 0.0
    %2500 = vmatprep.subr.mxu0 0.0
    %2501 = vmatpush1.msra.mxu0 0.0
    %2502 = vmatprep.mubr.f32.mxu0 0.0
    %v2503 = vand.u32 %v2319, 4294901760
    %2504 = vmatmul.mubr.f32.gmra.mrb[0].mxu0 %v2503
    %v2505 = vpop.f32.mrb[0].mxu0
    %v2506 = vadd.f32 %v2400, %v2505
    %v2507 = vpop.f32.mrb[0].mxu0
    %2508 = vdwg.mxu0
    %2509 = vmatprep.subr.mxu0 0.0
    %v2510 = vand.u32 %v403, 4294901760
    %v2511 = vsub.f32 %v403, %v2510
    %2512 = vmatpush1.msra.mxu0 %v2511
    %2513 = vmatprep.subr.mxu0 0.0
    %v2514 = vand.u32 %v404, 4294901760
    %v2515 = vsub.f32 %v404, %v2514
    %2516 = vmatpush1.msra.mxu0 %v2515
    %2517 = vmatprep.subr.mxu0 0.0
    %v2518 = vand.u32 %v405, 4294901760
    %v2519 = vsub.f32 %v405, %v2518
    %2520 = vmatpush1.msra.mxu0 %v2519
    %2521 = vmatprep.subr.mxu0 0.0
    %v2522 = vand.u32 %v406, 4294901760
    %v2523 = vsub.f32 %v406, %v2522
    %2524 = vmatpush1.msra.mxu0 %v2523
    %2525 = vmatprep.subr.mxu0 0.0
    %v2526 = vand.u32 %v407, 4294901760
    %v2527 = vsub.f32 %v407, %v2526
    %2528 = vmatpush1.msra.mxu0 %v2527
    %2529 = vmatprep.subr.mxu0 0.0
    %v2530 = vand.u32 %v408, 4294901760
    %v2531 = vsub.f32 %v408, %v2530
    %2532 = vmatpush1.msra.mxu0 %v2531
    %2533 = vmatprep.subr.mxu0 0.0
    %v2534 = vand.u32 %v723, 4294901760
    %v2535 = vsub.f32 %v723, %v2534
    %2536 = vmatpush1.msra.mxu0 %v2535
    %2537 = vmatprep.subr.mxu0 0.0
    %2538 = vmatpush1.msra.mxu0 0.0
    %2539 = vmatprep.subr.mxu0 0.0
    %2540 = vmatpush1.msra.mxu0 0.0
    %2541 = vmatprep.subr.mxu0 0.0
    %2542 = vmatpush1.msra.mxu0 0.0
    %2543 = vmatprep.subr.mxu0 0.0
    %2544 = vmatpush1.msra.mxu0 0.0
    %2545 = vmatprep.subr.mxu0 0.0
    %2546 = vmatpush1.msra.mxu0 0.0
    %2547 = vmatprep.subr.mxu0 0.0
    %2548 = vmatpush1.msra.mxu0 0.0
    %2549 = vmatprep.subr.mxu0 0.0
    %2550 = vmatpush1.msra.mxu0 0.0
    %2551 = vmatprep.subr.mxu0 0.0
    %2552 = vmatpush1.msra.mxu0 0.0
    %2553 = vmatprep.subr.mxu0 0.0
    %2554 = vmatpush1.msra.mxu0 0.0
    %2555 = vmatprep.subr.mxu0 0.0
    %2556 = vmatpush1.msra.mxu0 0.0
    %2557 = vmatprep.subr.mxu0 0.0
    %2558 = vmatpush1.msra.mxu0 0.0
    %2559 = vmatprep.subr.mxu0 0.0
    %2560 = vmatpush1.msra.mxu0 0.0
    %2561 = vmatprep.subr.mxu0 0.0
    %2562 = vmatpush1.msra.mxu0 0.0
    %2563 = vmatprep.subr.mxu0 0.0
    %2564 = vmatpush1.msra.mxu0 0.0
    %2565 = vmatprep.subr.mxu0 0.0
    %2566 = vmatpush1.msra.mxu0 0.0
    %2567 = vmatprep.subr.mxu0 0.0
    %2568 = vmatpush1.msra.mxu0 0.0
    %2569 = vmatprep.subr.mxu0 0.0
    %2570 = vmatpush1.msra.mxu0 0.0
    %2571 = vmatprep.subr.mxu0 0.0
    %2572 = vmatpush1.msra.mxu0 0.0
    %2573 = vmatprep.subr.mxu0 0.0
    %2574 = vmatpush1.msra.mxu0 0.0
    %2575 = vmatprep.subr.mxu0 0.0
    %2576 = vmatpush1.msra.mxu0 0.0
    %2577 = vmatprep.subr.mxu0 0.0
    %2578 = vmatpush1.msra.mxu0 0.0
    %2579 = vmatprep.subr.mxu0 0.0
    %2580 = vmatpush1.msra.mxu0 0.0
    %2581 = vmatprep.subr.mxu0 0.0
    %2582 = vmatpush1.msra.mxu0 0.0
    %2583 = vmatprep.subr.mxu0 0.0
    %2584 = vmatpush1.msra.mxu0 0.0
    %2585 = vmatprep.subr.mxu0 0.0
    %2586 = vmatpush1.msra.mxu0 0.0
    %2587 = vmatprep.mubr.f32.mxu0 0.0
    %v2588 = vand.u32 %v2319, 4294901760
    %v2589 = vsub.f32 %v2319, %v2588
    %2590 = vmatmul.mubr.f32.gmra.mrb[0].mxu0 %v2589
    %v2591 = vpop.f32.mrb[0].mxu0
    %v2592 = vadd.f32 %v2506, %v2591
    %v2593 = vpop.f32.mrb[0].mxu0
    %2594 = vdwg.mxu0
    %2595 = vmatprep.subr.mxu0 0.0
    %v2596 = vand.u32 %v403, 4294901760
    %2597 = vmatpush1.msra.mxu0 %v2596
    %2598 = vmatprep.subr.mxu0 0.0
    %v2599 = vand.u32 %v404, 4294901760
    %2600 = vmatpush1.msra.mxu0 %v2599
    %2601 = vmatprep.subr.mxu0 0.0
    %v2602 = vand.u32 %v405, 4294901760
    %2603 = vmatpush1.msra.mxu0 %v2602
    %2604 = vmatprep.subr.mxu0 0.0
    %v2605 = vand.u32 %v406, 4294901760
    %2606 = vmatpush1.msra.mxu0 %v2605
    %2607 = vmatprep.subr.mxu0 0.0
    %v2608 = vand.u32 %v407, 4294901760
    %2609 = vmatpush1.msra.mxu0 %v2608
    %2610 = vmatprep.subr.mxu0 0.0
    %v2611 = vand.u32 %v408, 4294901760
    %2612 = vmatpush1.msra.mxu0 %v2611
    %2613 = vmatprep.subr.mxu0 0.0
    %v2614 = vand.u32 %v723, 4294901760
    %2615 = vmatpush1.msra.mxu0 %v2614
    %2616 = vmatprep.subr.mxu0 0.0
    %2617 = vmatpush1.msra.mxu0 0.0
    %2618 = vmatprep.subr.mxu0 0.0
    %2619 = vmatpush1.msra.mxu0 0.0
    %2620 = vmatprep.subr.mxu0 0.0
    %2621 = vmatpush1.msra.mxu0 0.0
    %2622 = vmatprep.subr.mxu0 0.0
    %2623 = vmatpush1.msra.mxu0 0.0
    %2624 = vmatprep.subr.mxu0 0.0
    %2625 = vmatpush1.msra.mxu0 0.0
    %2626 = vmatprep.subr.mxu0 0.0
    %2627 = vmatpush1.msra.mxu0 0.0
    %2628 = vmatprep.subr.mxu0 0.0
    %2629 = vmatpush1.msra.mxu0 0.0
    %2630 = vmatprep.subr.mxu0 0.0
    %2631 = vmatpush1.msra.mxu0 0.0
    %2632 = vmatprep.subr.mxu0 0.0
    %2633 = vmatpush1.msra.mxu0 0.0
    %2634 = vmatprep.subr.mxu0 0.0
    %2635 = vmatpush1.msra.mxu0 0.0
    %2636 = vmatprep.subr.mxu0 0.0
    %2637 = vmatpush1.msra.mxu0 0.0
    %2638 = vmatprep.subr.mxu0 0.0
    %2639 = vmatpush1.msra.mxu0 0.0
    %2640 = vmatprep.subr.mxu0 0.0
    %2641 = vmatpush1.msra.mxu0 0.0
    %2642 = vmatprep.subr.mxu0 0.0
    %2643 = vmatpush1.msra.mxu0 0.0
    %2644 = vmatprep.subr.mxu0 0.0
    %2645 = vmatpush1.msra.mxu0 0.0
    %2646 = vmatprep.subr.mxu0 0.0
    %2647 = vmatpush1.msra.mxu0 0.0
    %2648 = vmatprep.subr.mxu0 0.0
    %2649 = vmatpush1.msra.mxu0 0.0
    %2650 = vmatprep.subr.mxu0 0.0
    %2651 = vmatpush1.msra.mxu0 0.0
    %2652 = vmatprep.subr.mxu0 0.0
    %2653 = vmatpush1.msra.mxu0 0.0
    %2654 = vmatprep.subr.mxu0 0.0
    %2655 = vmatpush1.msra.mxu0 0.0
    %2656 = vmatprep.subr.mxu0 0.0
    %2657 = vmatpush1.msra.mxu0 0.0
    %2658 = vmatprep.subr.mxu0 0.0
    %2659 = vmatpush1.msra.mxu0 0.0
    %2660 = vmatprep.subr.mxu0 0.0
    %2661 = vmatpush1.msra.mxu0 0.0
    %2662 = vmatprep.subr.mxu0 0.0
    %2663 = vmatpush1.msra.mxu0 0.0
    %2664 = vmatprep.subr.mxu0 0.0
    %2665 = vmatpush1.msra.mxu0 0.0
    %2666 = vmatprep.mubr.f32.mxu0 0.0
    %v2667 = vand.u32 %v2319, 4294901760
    %v2668 = vsub.f32 %v2319, %v2667
    %v2669 = vand.u32 %v2668, 4294901760
    %2670 = vmatmul.mubr.f32.gmra.mrb[0].mxu0 %v2669
    %v2671 = vpop.f32.mrb[0].mxu0
    %v2672 = vadd.f32 %v2592, %v2671
    %v2673 = vpop.f32.mrb[0].mxu0
    %2674 = vdwg.mxu0
    %2675 = vmatprep.subr.mxu0 0.0
    %v2676 = vand.u32 %v403, 4294901760
    %v2677 = vsub.f32 %v403, %v2676
    %v2678 = vand.u32 %v2677, 4294901760
    %2679 = vmatpush1.msra.mxu0 %v2678
    %2680 = vmatprep.subr.mxu0 0.0
    %v2681 = vand.u32 %v404, 4294901760
    %v2682 = vsub.f32 %v404, %v2681
    %v2683 = vand.u32 %v2682, 4294901760
    %2684 = vmatpush1.msra.mxu0 %v2683
    %2685 = vmatprep.subr.mxu0 0.0
    %v2686 = vand.u32 %v405, 4294901760
    %v2687 = vsub.f32 %v405, %v2686
    %v2688 = vand.u32 %v2687, 4294901760
    %2689 = vmatpush1.msra.mxu0 %v2688
    %2690 = vmatprep.subr.mxu0 0.0
    %v2691 = vand.u32 %v406, 4294901760
    %v2692 = vsub.f32 %v406, %v2691
    %v2693 = vand.u32 %v2692, 4294901760
    %2694 = vmatpush1.msra.mxu0 %v2693
    %2695 = vmatprep.subr.mxu0 0.0
    %v2696 = vand.u32 %v407, 4294901760
    %v2697 = vsub.f32 %v407, %v2696
    %v2698 = vand.u32 %v2697, 4294901760
    %2699 = vmatpush1.msra.mxu0 %v2698
    %2700 = vmatprep.subr.mxu0 0.0
    %v2701 = vand.u32 %v408, 4294901760
    %v2702 = vsub.f32 %v408, %v2701
    %v2703 = vand.u32 %v2702, 4294901760
    %2704 = vmatpush1.msra.mxu0 %v2703
    %2705 = vmatprep.subr.mxu0 0.0
    %v2706 = vand.u32 %v723, 4294901760
    %v2707 = vsub.f32 %v723, %v2706
    %v2708 = vand.u32 %v2707, 4294901760
    %2709 = vmatpush1.msra.mxu0 %v2708
    %2710 = vmatprep.subr.mxu0 0.0
    %2711 = vmatpush1.msra.mxu0 0.0
    %2712 = vmatprep.subr.mxu0 0.0
    %2713 = vmatpush1.msra.mxu0 0.0
    %2714 = vmatprep.subr.mxu0 0.0
    %2715 = vmatpush1.msra.mxu0 0.0
    %2716 = vmatprep.subr.mxu0 0.0
    %2717 = vmatpush1.msra.mxu0 0.0
    %2718 = vmatprep.subr.mxu0 0.0
    %2719 = vmatpush1.msra.mxu0 0.0
    %2720 = vmatprep.subr.mxu0 0.0
    %2721 = vmatpush1.msra.mxu0 0.0
    %2722 = vmatprep.subr.mxu0 0.0
    %2723 = vmatpush1.msra.mxu0 0.0
    %2724 = vmatprep.subr.mxu0 0.0
    %2725 = vmatpush1.msra.mxu0 0.0
    %2726 = vmatprep.subr.mxu0 0.0
    %2727 = vmatpush1.msra.mxu0 0.0
    %2728 = vmatprep.subr.mxu0 0.0
    %2729 = vmatpush1.msra.mxu0 0.0
    %2730 = vmatprep.subr.mxu0 0.0
    %2731 = vmatpush1.msra.mxu0 0.0
    %2732 = vmatprep.subr.mxu0 0.0
    %2733 = vmatpush1.msra.mxu0 0.0
    %2734 = vmatprep.subr.mxu0 0.0
    %2735 = vmatpush1.msra.mxu0 0.0
    %2736 = vmatprep.subr.mxu0 0.0
    %2737 = vmatpush1.msra.mxu0 0.0
    %2738 = vmatprep.subr.mxu0 0.0
    %2739 = vmatpush1.msra.mxu0 0.0
    %2740 = vmatprep.subr.mxu0 0.0
    %2741 = vmatpush1.msra.mxu0 0.0
    %2742 = vmatprep.subr.mxu0 0.0
    %2743 = vmatpush1.msra.mxu0 0.0
    %2744 = vmatprep.subr.mxu0 0.0
    %2745 = vmatpush1.msra.mxu0 0.0
    %2746 = vmatprep.subr.mxu0 0.0
    %2747 = vmatpush1.msra.mxu0 0.0
    %2748 = vmatprep.subr.mxu0 0.0
    %2749 = vmatpush1.msra.mxu0 0.0
    %2750 = vmatprep.subr.mxu0 0.0
    %2751 = vmatpush1.msra.mxu0 0.0
    %2752 = vmatprep.subr.mxu0 0.0
    %2753 = vmatpush1.msra.mxu0 0.0
    %2754 = vmatprep.subr.mxu0 0.0
    %2755 = vmatpush1.msra.mxu0 0.0
    %2756 = vmatprep.subr.mxu0 0.0
    %2757 = vmatpush1.msra.mxu0 0.0
    %2758 = vmatprep.subr.mxu0 0.0
    %2759 = vmatpush1.msra.mxu0 0.0
    %2760 = vmatprep.mubr.f32.mxu0 0.0
    %v2761 = vand.u32 %v2319, 4294901760
    %2762 = vmatmul.mubr.f32.gmra.mrb[0].mxu0 %v2761
    %v2763 = vpop.f32.mrb[0].mxu0
    %v2764 = vadd.f32 %v2672, %v2763
    %v2765 = vpop.f32.mrb[0].mxu0
    %2766 = vdwg.mxu0
    %2767 = vmatprep.subr.mxu0 0.0
    %v2768 = vand.u32 %v403, 4294901760
    %2769 = vmatpush1.msra.mxu0 %v2768
    %2770 = vmatprep.subr.mxu0 0.0
    %v2771 = vand.u32 %v404, 4294901760
    %2772 = vmatpush1.msra.mxu0 %v2771
    %2773 = vmatprep.subr.mxu0 0.0
    %v2774 = vand.u32 %v405, 4294901760
    %2775 = vmatpush1.msra.mxu0 %v2774
    %2776 = vmatprep.subr.mxu0 0.0
    %v2777 = vand.u32 %v406, 4294901760
    %2778 = vmatpush1.msra.mxu0 %v2777
    %2779 = vmatprep.subr.mxu0 0.0
    %v2780 = vand.u32 %v407, 4294901760
    %2781 = vmatpush1.msra.mxu0 %v2780
    %2782 = vmatprep.subr.mxu0 0.0
    %v2783 = vand.u32 %v408, 4294901760
    %2784 = vmatpush1.msra.mxu0 %v2783
    %2785 = vmatprep.subr.mxu0 0.0
    %v2786 = vand.u32 %v723, 4294901760
    %2787 = vmatpush1.msra.mxu0 %v2786
    %2788 = vmatprep.subr.mxu0 0.0
    %2789 = vmatpush1.msra.mxu0 0.0
    %2790 = vmatprep.subr.mxu0 0.0
    %2791 = vmatpush1.msra.mxu0 0.0
    %2792 = vmatprep.subr.mxu0 0.0
    %2793 = vmatpush1.msra.mxu0 0.0
    %2794 = vmatprep.subr.mxu0 0.0
    %2795 = vmatpush1.msra.mxu0 0.0
    %2796 = vmatprep.subr.mxu0 0.0
    %2797 = vmatpush1.msra.mxu0 0.0
    %2798 = vmatprep.subr.mxu0 0.0
    %2799 = vmatpush1.msra.mxu0 0.0
    %2800 = vmatprep.subr.mxu0 0.0
    %2801 = vmatpush1.msra.mxu0 0.0
    %2802 = vmatprep.subr.mxu0 0.0
    %2803 = vmatpush1.msra.mxu0 0.0
    %2804 = vmatprep.subr.mxu0 0.0
    %2805 = vmatpush1.msra.mxu0 0.0
    %2806 = vmatprep.subr.mxu0 0.0
    %2807 = vmatpush1.msra.mxu0 0.0
    %2808 = vmatprep.subr.mxu0 0.0
    %2809 = vmatpush1.msra.mxu0 0.0
    %2810 = vmatprep.subr.mxu0 0.0
    %2811 = vmatpush1.msra.mxu0 0.0
    %2812 = vmatprep.subr.mxu0 0.0
    %2813 = vmatpush1.msra.mxu0 0.0
    %2814 = vmatprep.subr.mxu0 0.0
    %2815 = vmatpush1.msra.mxu0 0.0
    %2816 = vmatprep.subr.mxu0 0.0
    %2817 = vmatpush1.msra.mxu0 0.0
    %2818 = vmatprep.subr.mxu0 0.0
    %2819 = vmatpush1.msra.mxu0 0.0
    %2820 = vmatprep.subr.mxu0 0.0
    %2821 = vmatpush1.msra.mxu0 0.0
    %2822 = vmatprep.subr.mxu0 0.0
    %2823 = vmatpush1.msra.mxu0 0.0
    %2824 = vmatprep.subr.mxu0 0.0
    %2825 = vmatpush1.msra.mxu0 0.0
    %2826 = vmatprep.subr.mxu0 0.0
    %2827 = vmatpush1.msra.mxu0 0.0
    %2828 = vmatprep.subr.mxu0 0.0
    %2829 = vmatpush1.msra.mxu0 0.0
    %2830 = vmatprep.subr.mxu0 0.0
    %2831 = vmatpush1.msra.mxu0 0.0
    %2832 = vmatprep.subr.mxu0 0.0
    %2833 = vmatpush1.msra.mxu0 0.0
    %2834 = vmatprep.subr.mxu0 0.0
    %2835 = vmatpush1.msra.mxu0 0.0
    %2836 = vmatprep.subr.mxu0 0.0
    %2837 = vmatpush1.msra.mxu0 0.0
    %2838 = vmatprep.mubr.f32.mxu0 0.0
    %v2839 = vand.u32 %v2319, 4294901760
    %2840 = vmatmul.mubr.f32.gmra.mrb[0].mxu0 %v2839
    %v2841 = vpop.f32.mrb[0].mxu0
    %v2842 = vadd.f32 %v2764, %v2841
    %v2843 = vpop.f32.mrb[0].mxu0
    %2844 = vdwg.mxu0
    %2845 = vrot.lane.b32.xlu0 %v431, 127
    %v2846 = vpop.permute.xlu0 %2845
    %v2848 = vsel %vm436, %v2842, %v2846
    %v2850 = vsel %vm438, %v2848, 0
    %2852 = vmatprep.subr.mxu0 0.0
    %2853 = vmatpush1.msra.mxu0 %v391
    %2854 = vmatprep.subr.mxu0 0.0
    %2855 = vmatpush1.msra.mxu0 %v444
    %2856 = vmatprep.subr.mxu0 0.0
    %2857 = vmatpush1.msra.mxu0 0.0
    %2858 = vmatprep.subr.mxu0 0.0
    %2859 = vmatpush1.msra.mxu0 0.0
    %2860 = vmatprep.subr.mxu0 0.0
    %2861 = vmatpush1.msra.mxu0 0.0
    %2862 = vmatprep.subr.mxu0 0.0
    %2863 = vmatpush1.msra.mxu0 0.0
    %2864 = vmatprep.subr.mxu0 0.0
    %2865 = vmatpush1.msra.mxu0 0.0
    %2866 = vmatprep.subr.mxu0 0.0
    %2867 = vmatpush1.msra.mxu0 0.0
    %2868 = vmatprep.subr.mxu0 0.0
    %2869 = vmatpush1.msra.mxu0 0.0
    %2870 = vmatprep.subr.mxu0 0.0
    %2871 = vmatpush1.msra.mxu0 0.0
    %2872 = vmatprep.subr.mxu0 0.0
    %2873 = vmatpush1.msra.mxu0 0.0
    %2874 = vmatprep.subr.mxu0 0.0
    %2875 = vmatpush1.msra.mxu0 0.0
    %2876 = vmatprep.subr.mxu0 0.0
    %2877 = vmatpush1.msra.mxu0 0.0
    %2878 = vmatprep.subr.mxu0 0.0
    %2879 = vmatpush1.msra.mxu0 0.0
    %2880 = vmatprep.subr.mxu0 0.0
    %2881 = vmatpush1.msra.mxu0 0.0
    %2882 = vmatprep.subr.mxu0 0.0
    %2883 = vmatpush1.msra.mxu0 0.0
    %2884 = vmatprep.subr.mxu0 0.0
    %2885 = vmatpush1.msra.mxu0 0.0
    %2886 = vmatprep.subr.mxu0 0.0
    %2887 = vmatpush1.msra.mxu0 0.0
    %2888 = vmatprep.subr.mxu0 0.0
    %2889 = vmatpush1.msra.mxu0 0.0
    %2890 = vmatprep.subr.mxu0 0.0
    %2891 = vmatpush1.msra.mxu0 0.0
    %2892 = vmatprep.subr.mxu0 0.0
    %2893 = vmatpush1.msra.mxu0 0.0
    %2894 = vmatprep.subr.mxu0 0.0
    %2895 = vmatpush1.msra.mxu0 0.0
    %2896 = vmatprep.subr.mxu0 0.0
    %2897 = vmatpush1.msra.mxu0 0.0
    %2898 = vmatprep.subr.mxu0 0.0
    %2899 = vmatpush1.msra.mxu0 0.0
    %2900 = vmatprep.subr.mxu0 0.0
    %2901 = vmatpush1.msra.mxu0 0.0
    %2902 = vmatprep.subr.mxu0 0.0
    %2903 = vmatpush1.msra.mxu0 0.0
    %2904 = vmatprep.subr.mxu0 0.0
    %2905 = vmatpush1.msra.mxu0 0.0
    %2906 = vmatprep.subr.mxu0 0.0
    %2907 = vmatpush1.msra.mxu0 0.0
    %2908 = vmatprep.subr.mxu0 0.0
    %2909 = vmatpush1.msra.mxu0 0.0
    %2910 = vmatprep.subr.mxu0 0.0
    %2911 = vmatpush1.msra.mxu0 0.0
    %2912 = vmatprep.subr.mxu0 0.0
    %2913 = vmatpush1.msra.mxu0 0.0
    %2914 = vmatprep.subr.mxu0 0.0
    %2915 = vmatpush1.msra.mxu0 0.0
    %2916 = vmatprep.mubr.f32.mxu0 0.0
    %2917 = vmatmul.mubr.f32.gmra.mrb[0].mxu0 %v2850
    %v2918 = vpop.f32.mrb[0].mxu0
    %v2919 = vadd.f32 %v415, %v2918
    %v2920 = vpop.f32.mrb[0].mxu0
    %2921 = vdwg.mxu0
    %v2922 = vtanh.pop %v2919
    %v2924 = vsel %vm155, %v2922, 0
    %2926 = vmatprep.subr.mxu0 0.0
    %2927 = vmatpush1.msra.mxu0 %v393
    %2928 = vmatprep.subr.mxu0 0.0
    %2929 = vmatpush1.msra.mxu0 %v394
    %2930 = vmatprep.subr.mxu0 0.0
    %2931 = vmatpush1.msra.mxu0 %v395
    %2932 = vmatprep.subr.mxu0 0.0
    %2933 = vmatpush1.msra.mxu0 %v396
    %2934 = vmatprep.subr.mxu0 0.0
    %2935 = vmatpush1.msra.mxu0 0.0
    %2936 = vmatprep.subr.mxu0 0.0
    %2937 = vmatpush1.msra.mxu0 0.0
    %2938 = vmatprep.subr.mxu0 0.0
    %2939 = vmatpush1.msra.mxu0 0.0
    %2940 = vmatprep.subr.mxu0 0.0
    %2941 = vmatpush1.msra.mxu0 0.0
    %2942 = vmatprep.subr.mxu0 0.0
    %2943 = vmatpush1.msra.mxu0 0.0
    %2944 = vmatprep.subr.mxu0 0.0
    %2945 = vmatpush1.msra.mxu0 0.0
    %2946 = vmatprep.subr.mxu0 0.0
    %2947 = vmatpush1.msra.mxu0 0.0
    %2948 = vmatprep.subr.mxu0 0.0
    %2949 = vmatpush1.msra.mxu0 0.0
    %2950 = vmatprep.subr.mxu0 0.0
    %2951 = vmatpush1.msra.mxu0 0.0
    %2952 = vmatprep.subr.mxu0 0.0
    %2953 = vmatpush1.msra.mxu0 0.0
    %2954 = vmatprep.subr.mxu0 0.0
    %2955 = vmatpush1.msra.mxu0 0.0
    %2956 = vmatprep.subr.mxu0 0.0
    %2957 = vmatpush1.msra.mxu0 0.0
    %2958 = vmatprep.subr.mxu0 0.0
    %2959 = vmatpush1.msra.mxu0 0.0
    %2960 = vmatprep.subr.mxu0 0.0
    %2961 = vmatpush1.msra.mxu0 0.0
    %2962 = vmatprep.subr.mxu0 0.0
    %2963 = vmatpush1.msra.mxu0 0.0
    %2964 = vmatprep.subr.mxu0 0.0
    %2965 = vmatpush1.msra.mxu0 0.0
    %2966 = vmatprep.subr.mxu0 0.0
    %2967 = vmatpush1.msra.mxu0 0.0
    %2968 = vmatprep.subr.mxu0 0.0
    %2969 = vmatpush1.msra.mxu0 0.0
    %2970 = vmatprep.subr.mxu0 0.0
    %2971 = vmatpush1.msra.mxu0 0.0
    %2972 = vmatprep.subr.mxu0 0.0
    %2973 = vmatpush1.msra.mxu0 0.0
    %2974 = vmatprep.subr.mxu0 0.0
    %2975 = vmatpush1.msra.mxu0 0.0
    %2976 = vmatprep.subr.mxu0 0.0
    %2977 = vmatpush1.msra.mxu0 0.0
    %2978 = vmatprep.subr.mxu0 0.0
    %2979 = vmatpush1.msra.mxu0 0.0
    %2980 = vmatprep.subr.mxu0 0.0
    %2981 = vmatpush1.msra.mxu0 0.0
    %2982 = vmatprep.subr.mxu0 0.0
    %2983 = vmatpush1.msra.mxu0 0.0
    %2984 = vmatprep.subr.mxu0 0.0
    %2985 = vmatpush1.msra.mxu0 0.0
    %2986 = vmatprep.subr.mxu0 0.0
    %2987 = vmatpush1.msra.mxu0 0.0
    %2988 = vmatprep.subr.mxu0 0.0
    %2989 = vmatpush1.msra.mxu0 0.0
    %2990 = vmatprep.mubr.f32.mxu0 0.0
    %2991 = vmatmul.mubr.f32.gmra.mrb[0].mxu0 %v2924
    %v2992 = vpop.f32.mrb[0].mxu0
    %v2993 = vadd.f32 %v422, %v2992
    %v2994 = vpop.f32.mrb[0].mxu0
    %2995 = vdwg.mxu0
    %v2996 = vtanh.pop %v2993
    %2998 = vrot.lane.b32.xlu0 %v2996, 11
    %v2999 = vpop.permute.xlu0 %2998
    %v3001 = vsel %vm438, %v2848, %v2999
    %v3003 = vsel %vm596, %v3001, 0
    %3005 = vmatprep.subr.mxu0 0.0
    %3006 = vmatpush1.msra.mxu0 %v397
    %3007 = vmatprep.subr.mxu0 0.0
    %3008 = vmatpush1.msra.mxu0 %v398
    %3009 = vmatprep.subr.mxu0 0.0
    %3010 = vmatpush1.msra.mxu0 %v399
    %3011 = vmatprep.subr.mxu0 0.0
    %3012 = vmatpush1.msra.mxu0 %v400
    %3013 = vmatprep.subr.mxu0 0.0
    %3014 = vmatpush1.msra.mxu0 %v401
    %3015 = vmatprep.subr.mxu0 0.0
    %3016 = vmatpush1.msra.mxu0 %v601
    %3017 = vmatprep.subr.mxu0 0.0
    %3018 = vmatpush1.msra.mxu0 0.0
    %3019 = vmatprep.subr.mxu0 0.0
    %3020 = vmatpush1.msra.mxu0 0.0
    %3021 = vmatprep.subr.mxu0 0.0
    %3022 = vmatpush1.msra.mxu0 0.0
    %3023 = vmatprep.subr.mxu0 0.0
    %3024 = vmatpush1.msra.mxu0 0.0
    %3025 = vmatprep.subr.mxu0 0.0
    %3026 = vmatpush1.msra.mxu0 0.0
    %3027 = vmatprep.subr.mxu0 0.0
    %3028 = vmatpush1.msra.mxu0 0.0
    %3029 = vmatprep.subr.mxu0 0.0
    %3030 = vmatpush1.msra.mxu0 0.0
    %3031 = vmatprep.subr.mxu0 0.0
    %3032 = vmatpush1.msra.mxu0 0.0
    %3033 = vmatprep.subr.mxu0 0.0
    %3034 = vmatpush1.msra.mxu0 0.0
    %3035 = vmatprep.subr.mxu0 0.0
    %3036 = vmatpush1.msra.mxu0 0.0
    %3037 = vmatprep.subr.mxu0 0.0
    %3038 = vmatpush1.msra.mxu0 0.0
    %3039 = vmatprep.subr.mxu0 0.0
    %3040 = vmatpush1.msra.mxu0 0.0
    %3041 = vmatprep.subr.mxu0 0.0
    %3042 = vmatpush1.msra.mxu0 0.0
    %3043 = vmatprep.subr.mxu0 0.0
    %3044 = vmatpush1.msra.mxu0 0.0
    %3045 = vmatprep.subr.mxu0 0.0
    %3046 = vmatpush1.msra.mxu0 0.0
    %3047 = vmatprep.subr.mxu0 0.0
    %3048 = vmatpush1.msra.mxu0 0.0
    %3049 = vmatprep.subr.mxu0 0.0
    %3050 = vmatpush1.msra.mxu0 0.0
    %3051 = vmatprep.subr.mxu0 0.0
    %3052 = vmatpush1.msra.mxu0 0.0
    %3053 = vmatprep.subr.mxu0 0.0
    %3054 = vmatpush1.msra.mxu0 0.0
    %3055 = vmatprep.subr.mxu0 0.0
    %3056 = vmatpush1.msra.mxu0 0.0
    %3057 = vmatprep.subr.mxu0 0.0
    %3058 = vmatpush1.msra.mxu0 0.0
    %3059 = vmatprep.subr.mxu0 0.0
    %3060 = vmatpush1.msra.mxu0 0.0
    %3061 = vmatprep.subr.mxu0 0.0
    %3062 = vmatpush1.msra.mxu0 0.0
    %3063 = vmatprep.subr.mxu0 0.0
    %3064 = vmatpush1.msra.mxu0 0.0
    %3065 = vmatprep.subr.mxu0 0.0
    %3066 = vmatpush1.msra.mxu0 0.0
    %3067 = vmatprep.subr.mxu0 0.0
    %3068 = vmatpush1.msra.mxu0 0.0
    %3069 = vmatprep.mubr.f32.mxu0 0.0
    %3070 = vmatmul.mubr.f32.gmra.mrb[0].mxu0 %v3003
    %v3071 = vpop.f32.mrb[0].mxu0
    %v3072 = vadd.f32 %v429, %v3071
    %v3073 = vpop.f32.mrb[0].mxu0
    %3074 = vdwg.mxu0
    %3076 = vset.pattern.permute.xlu0 0
    %3077 = vperm.xlu0 %3076, %v3072
    %v3078 = vpop.permute.xlu0 %3077
    %v3080 = vmul.f32 %v3078, %v2848
    %3081 = vset.pattern.permute.xlu0 1
    %3082 = vperm.xlu0 %3081, %v3072
    %v3083 = vpop.permute.xlu0 %3082
    %v3085 = vmul.f32 %v3083, %v2848
    %3086 = vset.pattern.permute.xlu0 2
    %3087 = vperm.xlu0 %3086, %v3072
    %v3088 = vpop.permute.xlu0 %3087
    %v3090 = vmul.f32 %v3088, %v2848
    %3091 = vset.pattern.permute.xlu0 3
    %3092 = vperm.xlu0 %3091, %v3072
    %v3093 = vpop.permute.xlu0 %3092
    %v3095 = vmul.f32 %v3093, %v2848
    %3097 = vrot.lane.b32.xlu0 %v3080, 11
    %v3098 = vpop.permute.xlu0 %3097
    %3101 = vrot.lane.b32.xlu0 %v3085, 22
    %v3102 = vpop.permute.xlu0 %3101
    %3105 = vrot.lane.b32.xlu0 %v3090, 33
    %v3106 = vpop.permute.xlu0 %3105
    %3109 = vrot.lane.b32.xlu0 %v3095, 44
    %v3110 = vpop.permute.xlu0 %3109
    %v3112 = vsel %vm438, %v2848, %v3098
    %v3113 = vsel %vm711, %v3112, %v3102
    %v3114 = vsel %vm713, %v3113, %v3106
    %v3115 = vsel %vm715, %v3114, %v3110
    %v3117 = vsel %vm717, %v3115, 0
    %3119 = vmatprep.subr.mxu0 0.0
    %v3120 = vand.u32 %v403, 4294901760
    %3121 = vmatpush1.msra.mxu0 %v3120
    %3122 = vmatprep.subr.mxu0 0.0
    %v3123 = vand.u32 %v404, 4294901760
    %3124 = vmatpush1.msra.mxu0 %v3123
    %3125 = vmatprep.subr.mxu0 0.0
    %v3126 = vand.u32 %v405, 4294901760
    %3127 = vmatpush1.msra.mxu0 %v3126
    %3128 = vmatprep.subr.mxu0 0.0
    %v3129 = vand.u32 %v406, 4294901760
    %3130 = vmatpush1.msra.mxu0 %v3129
    %3131 = vmatprep.subr.mxu0 0.0
    %v3132 = vand.u32 %v407, 4294901760
    %3133 = vmatpush1.msra.mxu0 %v3132
    %3134 = vmatprep.subr.mxu0 0.0
    %v3135 = vand.u32 %v408, 4294901760
    %3136 = vmatpush1.msra.mxu0 %v3135
    %3137 = vmatprep.subr.mxu0 0.0
    %v3138 = vand.u32 %v723, 4294901760
    %3139 = vmatpush1.msra.mxu0 %v3138
    %3140 = vmatprep.subr.mxu0 0.0
    %3141 = vmatpush1.msra.mxu0 0.0
    %3142 = vmatprep.subr.mxu0 0.0
    %3143 = vmatpush1.msra.mxu0 0.0
    %3144 = vmatprep.subr.mxu0 0.0
    %3145 = vmatpush1.msra.mxu0 0.0
    %3146 = vmatprep.subr.mxu0 0.0
    %3147 = vmatpush1.msra.mxu0 0.0
    %3148 = vmatprep.subr.mxu0 0.0
    %3149 = vmatpush1.msra.mxu0 0.0
    %3150 = vmatprep.subr.mxu0 0.0
    %3151 = vmatpush1.msra.mxu0 0.0
    %3152 = vmatprep.subr.mxu0 0.0
    %3153 = vmatpush1.msra.mxu0 0.0
    %3154 = vmatprep.subr.mxu0 0.0
    %3155 = vmatpush1.msra.mxu0 0.0
    %3156 = vmatprep.subr.mxu0 0.0
    %3157 = vmatpush1.msra.mxu0 0.0
    %3158 = vmatprep.subr.mxu0 0.0
    %3159 = vmatpush1.msra.mxu0 0.0
    %3160 = vmatprep.subr.mxu0 0.0
    %3161 = vmatpush1.msra.mxu0 0.0
    %3162 = vmatprep.subr.mxu0 0.0
    %3163 = vmatpush1.msra.mxu0 0.0
    %3164 = vmatprep.subr.mxu0 0.0
    %3165 = vmatpush1.msra.mxu0 0.0
    %3166 = vmatprep.subr.mxu0 0.0
    %3167 = vmatpush1.msra.mxu0 0.0
    %3168 = vmatprep.subr.mxu0 0.0
    %3169 = vmatpush1.msra.mxu0 0.0
    %3170 = vmatprep.subr.mxu0 0.0
    %3171 = vmatpush1.msra.mxu0 0.0
    %3172 = vmatprep.subr.mxu0 0.0
    %3173 = vmatpush1.msra.mxu0 0.0
    %3174 = vmatprep.subr.mxu0 0.0
    %3175 = vmatpush1.msra.mxu0 0.0
    %3176 = vmatprep.subr.mxu0 0.0
    %3177 = vmatpush1.msra.mxu0 0.0
    %3178 = vmatprep.subr.mxu0 0.0
    %3179 = vmatpush1.msra.mxu0 0.0
    %3180 = vmatprep.subr.mxu0 0.0
    %3181 = vmatpush1.msra.mxu0 0.0
    %3182 = vmatprep.subr.mxu0 0.0
    %3183 = vmatpush1.msra.mxu0 0.0
    %3184 = vmatprep.subr.mxu0 0.0
    %3185 = vmatpush1.msra.mxu0 0.0
    %3186 = vmatprep.subr.mxu0 0.0
    %3187 = vmatpush1.msra.mxu0 0.0
    %3188 = vmatprep.subr.mxu0 0.0
    %3189 = vmatpush1.msra.mxu0 0.0
    %3190 = vmatprep.mubr.f32.mxu0 0.0
    %v3191 = vand.u32 %v3117, 4294901760
    %v3192 = vsub.f32 %v3117, %v3191
    %v3193 = vand.u32 %v3192, 4294901760
    %v3194 = vsub.f32 %v3192, %v3193
    %v3195 = vand.u32 %v3194, 4294901760
    %3196 = vmatmul.mubr.f32.gmra.mrb[0].mxu0 %v3195
    %v3197 = vpop.f32.mrb[0].mxu0
    %v3198 = vadd.f32 0.0, %v3197
    %v3199 = vpop.f32.mrb[0].mxu0
    %3200 = vdwg.mxu0
    %3201 = vmatprep.subr.mxu0 0.0
    %v3202 = vand.u32 %v403, 4294901760
    %v3203 = vsub.f32 %v403, %v3202
    %v3204 = vand.u32 %v3203, 4294901760
    %v3205 = vsub.f32 %v3203, %v3204
    %v3206 = vand.u32 %v3205, 4294901760
    %3207 = vmatpush1.msra.mxu0 %v3206
    %3208 = vmatprep.subr.mxu0 0.0
    %v3209 = vand.u32 %v404, 4294901760
    %v3210 = vsub.f32 %v404, %v3209
    %v3211 = vand.u32 %v3210, 4294901760
    %v3212 = vsub.f32 %v3210, %v3211
    %v3213 = vand.u32 %v3212, 4294901760
    %3214 = vmatpush1.msra.mxu0 %v3213
    %3215 = vmatprep.subr.mxu0 0.0
    %v3216 = vand.u32 %v405, 4294901760
    %v3217 = vsub.f32 %v405, %v3216
    %v3218 = vand.u32 %v3217, 4294901760
    %v3219 = vsub.f32 %v3217, %v3218
    %v3220 = vand.u32 %v3219, 4294901760
    %3221 = vmatpush1.msra.mxu0 %v3220
    %3222 = vmatprep.subr.mxu0 0.0
    %v3223 = vand.u32 %v406, 4294901760
    %v3224 = vsub.f32 %v406, %v3223
    %v3225 = vand.u32 %v3224, 4294901760
    %v3226 = vsub.f32 %v3224, %v3225
    %v3227 = vand.u32 %v3226, 4294901760
    %3228 = vmatpush1.msra.mxu0 %v3227
    %3229 = vmatprep.subr.mxu0 0.0
    %v3230 = vand.u32 %v407, 4294901760
    %v3231 = vsub.f32 %v407, %v3230
    %v3232 = vand.u32 %v3231, 4294901760
    %v3233 = vsub.f32 %v3231, %v3232
    %v3234 = vand.u32 %v3233, 4294901760
    %3235 = vmatpush1.msra.mxu0 %v3234
    %3236 = vmatprep.subr.mxu0 0.0
    %v3237 = vand.u32 %v408, 4294901760
    %v3238 = vsub.f32 %v408, %v3237
    %v3239 = vand.u32 %v3238, 4294901760
    %v3240 = vsub.f32 %v3238, %v3239
    %v3241 = vand.u32 %v3240, 4294901760
    %3242 = vmatpush1.msra.mxu0 %v3241
    %3243 = vmatprep.subr.mxu0 0.0
    %v3244 = vand.u32 %v723, 4294901760
    %v3245 = vsub.f32 %v723, %v3244
    %v3246 = vand.u32 %v3245, 4294901760
    %v3247 = vsub.f32 %v3245, %v3246
    %v3248 = vand.u32 %v3247, 4294901760
    %3249 = vmatpush1.msra.mxu0 %v3248
    %3250 = vmatprep.subr.mxu0 0.0
    %3251 = vmatpush1.msra.mxu0 0.0
    %3252 = vmatprep.subr.mxu0 0.0
    %3253 = vmatpush1.msra.mxu0 0.0
    %3254 = vmatprep.subr.mxu0 0.0
    %3255 = vmatpush1.msra.mxu0 0.0
    %3256 = vmatprep.subr.mxu0 0.0
    %3257 = vmatpush1.msra.mxu0 0.0
    %3258 = vmatprep.subr.mxu0 0.0
    %3259 = vmatpush1.msra.mxu0 0.0
    %3260 = vmatprep.subr.mxu0 0.0
    %3261 = vmatpush1.msra.mxu0 0.0
    %3262 = vmatprep.subr.mxu0 0.0
    %3263 = vmatpush1.msra.mxu0 0.0
    %3264 = vmatprep.subr.mxu0 0.0
    %3265 = vmatpush1.msra.mxu0 0.0
    %3266 = vmatprep.subr.mxu0 0.0
    %3267 = vmatpush1.msra.mxu0 0.0
    %3268 = vmatprep.subr.mxu0 0.0
    %3269 = vmatpush1.msra.mxu0 0.0
    %3270 = vmatprep.subr.mxu0 0.0
    %3271 = vmatpush1.msra.mxu0 0.0
    %3272 = vmatprep.subr.mxu0 0.0
    %3273 = vmatpush1.msra.mxu0 0.0
    %3274 = vmatprep.subr.mxu0 0.0
    %3275 = vmatpush1.msra.mxu0 0.0
    %3276 = vmatprep.subr.mxu0 0.0
    %3277 = vmatpush1.msra.mxu0 0.0
    %3278 = vmatprep.subr.mxu0 0.0
    %3279 = vmatpush1.msra.mxu0 0.0
    %3280 = vmatprep.subr.mxu0 0.0
    %3281 = vmatpush1.msra.mxu0 0.0
    %3282 = vmatprep.subr.mxu0 0.0
    %3283 = vmatpush1.msra.mxu0 0.0
    %3284 = vmatprep.subr.mxu0 0.0
    %3285 = vmatpush1.msra.mxu0 0.0
    %3286 = vmatprep.subr.mxu0 0.0
    %3287 = vmatpush1.msra.mxu0 0.0
    %3288 = vmatprep.subr.mxu0 0.0
    %3289 = vmatpush1.msra.mxu0 0.0
    %3290 = vmatprep.subr.mxu0 0.0
    %3291 = vmatpush1.msra.mxu0 0.0
    %3292 = vmatprep.subr.mxu0 0.0
    %3293 = vmatpush1.msra.mxu0 0.0
    %3294 = vmatprep.subr.mxu0 0.0
    %3295 = vmatpush1.msra.mxu0 0.0
    %3296 = vmatprep.subr.mxu0 0.0
    %3297 = vmatpush1.msra.mxu0 0.0
    %3298 = vmatprep.subr.mxu0 0.0
    %3299 = vmatpush1.msra.mxu0 0.0
    %3300 = vmatprep.mubr.f32.mxu0 0.0
    %v3301 = vand.u32 %v3117, 4294901760
    %3302 = vmatmul.mubr.f32.gmra.mrb[0].mxu0 %v3301
    %v3303 = vpop.f32.mrb[0].mxu0
    %v3304 = vadd.f32 %v3198, %v3303
    %v3305 = vpop.f32.mrb[0].mxu0
    %3306 = vdwg.mxu0
    %3307 = vmatprep.subr.mxu0 0.0
    %v3308 = vand.u32 %v403, 4294901760
    %v3309 = vsub.f32 %v403, %v3308
    %3310 = vmatpush1.msra.mxu0 %v3309
    %3311 = vmatprep.subr.mxu0 0.0
    %v3312 = vand.u32 %v404, 4294901760
    %v3313 = vsub.f32 %v404, %v3312
    %3314 = vmatpush1.msra.mxu0 %v3313
    %3315 = vmatprep.subr.mxu0 0.0
    %v3316 = vand.u32 %v405, 4294901760
    %v3317 = vsub.f32 %v405, %v3316
    %3318 = vmatpush1.msra.mxu0 %v3317
    %3319 = vmatprep.subr.mxu0 0.0
    %v3320 = vand.u32 %v406, 4294901760
    %v3321 = vsub.f32 %v406, %v3320
    %3322 = vmatpush1.msra.mxu0 %v3321
    %3323 = vmatprep.subr.mxu0 0.0
    %v3324 = vand.u32 %v407, 4294901760
    %v3325 = vsub.f32 %v407, %v3324
    %3326 = vmatpush1.msra.mxu0 %v3325
    %3327 = vmatprep.subr.mxu0 0.0
    %v3328 = vand.u32 %v408, 4294901760
    %v3329 = vsub.f32 %v408, %v3328
    %3330 = vmatpush1.msra.mxu0 %v3329
    %3331 = vmatprep.subr.mxu0 0.0
    %v3332 = vand.u32 %v723, 4294901760
    %v3333 = vsub.f32 %v723, %v3332
    %3334 = vmatpush1.msra.mxu0 %v3333
    %3335 = vmatprep.subr.mxu0 0.0
    %3336 = vmatpush1.msra.mxu0 0.0
    %3337 = vmatprep.subr.mxu0 0.0
    %3338 = vmatpush1.msra.mxu0 0.0
    %3339 = vmatprep.subr.mxu0 0.0
    %3340 = vmatpush1.msra.mxu0 0.0
    %3341 = vmatprep.subr.mxu0 0.0
    %3342 = vmatpush1.msra.mxu0 0.0
    %3343 = vmatprep.subr.mxu0 0.0
    %3344 = vmatpush1.msra.mxu0 0.0
    %3345 = vmatprep.subr.mxu0 0.0
    %3346 = vmatpush1.msra.mxu0 0.0
    %3347 = vmatprep.subr.mxu0 0.0
    %3348 = vmatpush1.msra.mxu0 0.0
    %3349 = vmatprep.subr.mxu0 0.0
    %3350 = vmatpush1.msra.mxu0 0.0
    %3351 = vmatprep.subr.mxu0 0.0
    %3352 = vmatpush1.msra.mxu0 0.0
    %3353 = vmatprep.subr.mxu0 0.0
    %3354 = vmatpush1.msra.mxu0 0.0
    %3355 = vmatprep.subr.mxu0 0.0
    %3356 = vmatpush1.msra.mxu0 0.0
    %3357 = vmatprep.subr.mxu0 0.0
    %3358 = vmatpush1.msra.mxu0 0.0
    %3359 = vmatprep.subr.mxu0 0.0
    %3360 = vmatpush1.msra.mxu0 0.0
    %3361 = vmatprep.subr.mxu0 0.0
    %3362 = vmatpush1.msra.mxu0 0.0
    %3363 = vmatprep.subr.mxu0 0.0
    %3364 = vmatpush1.msra.mxu0 0.0
    %3365 = vmatprep.subr.mxu0 0.0
    %3366 = vmatpush1.msra.mxu0 0.0
    %3367 = vmatprep.subr.mxu0 0.0
    %3368 = vmatpush1.msra.mxu0 0.0
    %3369 = vmatprep.subr.mxu0 0.0
    %3370 = vmatpush1.msra.mxu0 0.0
    %3371 = vmatprep.subr.mxu0 0.0
    %3372 = vmatpush1.msra.mxu0 0.0
    %3373 = vmatprep.subr.mxu0 0.0
    %3374 = vmatpush1.msra.mxu0 0.0
    %3375 = vmatprep.subr.mxu0 0.0
    %3376 = vmatpush1.msra.mxu0 0.0
    %3377 = vmatprep.subr.mxu0 0.0
    %3378 = vmatpush1.msra.mxu0 0.0
    %3379 = vmatprep.subr.mxu0 0.0
    %3380 = vmatpush1.msra.mxu0 0.0
    %3381 = vmatprep.subr.mxu0 0.0
    %3382 = vmatpush1.msra.mxu0 0.0
    %3383 = vmatprep.subr.mxu0 0.0
    %3384 = vmatpush1.msra.mxu0 0.0
    %3385 = vmatprep.mubr.f32.mxu0 0.0
    %v3386 = vand.u32 %v3117, 4294901760
    %v3387 = vsub.f32 %v3117, %v3386
    %3388 = vmatmul.mubr.f32.gmra.mrb[0].mxu0 %v3387
    %v3389 = vpop.f32.mrb[0].mxu0
    %v3390 = vadd.f32 %v3304, %v3389
    %v3391 = vpop.f32.mrb[0].mxu0
    %3392 = vdwg.mxu0
    %3393 = vmatprep.subr.mxu0 0.0
    %v3394 = vand.u32 %v403, 4294901760
    %3395 = vmatpush1.msra.mxu0 %v3394
    %3396 = vmatprep.subr.mxu0 0.0
    %v3397 = vand.u32 %v404, 4294901760
    %3398 = vmatpush1.msra.mxu0 %v3397
    %3399 = vmatprep.subr.mxu0 0.0
    %v3400 = vand.u32 %v405, 4294901760
    %3401 = vmatpush1.msra.mxu0 %v3400
    %3402 = vmatprep.subr.mxu0 0.0
    %v3403 = vand.u32 %v406, 4294901760
    %3404 = vmatpush1.msra.mxu0 %v3403
    %3405 = vmatprep.subr.mxu0 0.0
    %v3406 = vand.u32 %v407, 4294901760
    %3407 = vmatpush1.msra.mxu0 %v3406
    %3408 = vmatprep.subr.mxu0 0.0
    %v3409 = vand.u32 %v408, 4294901760
    %3410 = vmatpush1.msra.mxu0 %v3409
    %3411 = vmatprep.subr.mxu0 0.0
    %v3412 = vand.u32 %v723, 4294901760
    %3413 = vmatpush1.msra.mxu0 %v3412
    %3414 = vmatprep.subr.mxu0 0.0
    %3415 = vmatpush1.msra.mxu0 0.0
    %3416 = vmatprep.subr.mxu0 0.0
    %3417 = vmatpush1.msra.mxu0 0.0
    %3418 = vmatprep.subr.mxu0 0.0
    %3419 = vmatpush1.msra.mxu0 0.0
    %3420 = vmatprep.subr.mxu0 0.0
    %3421 = vmatpush1.msra.mxu0 0.0
    %3422 = vmatprep.subr.mxu0 0.0
    %3423 = vmatpush1.msra.mxu0 0.0
    %3424 = vmatprep.subr.mxu0 0.0
    %3425 = vmatpush1.msra.mxu0 0.0
    %3426 = vmatprep.subr.mxu0 0.0
    %3427 = vmatpush1.msra.mxu0 0.0
    %3428 = vmatprep.subr.mxu0 0.0
    %3429 = vmatpush1.msra.mxu0 0.0
    %3430 = vmatprep.subr.mxu0 0.0
    %3431 = vmatpush1.msra.mxu0 0.0
    %3432 = vmatprep.subr.mxu0 0.0
    %3433 = vmatpush1.msra.mxu0 0.0
    %3434 = vmatprep.subr.mxu0 0.0
    %3435 = vmatpush1.msra.mxu0 0.0
    %3436 = vmatprep.subr.mxu0 0.0
    %3437 = vmatpush1.msra.mxu0 0.0
    %3438 = vmatprep.subr.mxu0 0.0
    %3439 = vmatpush1.msra.mxu0 0.0
    %3440 = vmatprep.subr.mxu0 0.0
    %3441 = vmatpush1.msra.mxu0 0.0
    %3442 = vmatprep.subr.mxu0 0.0
    %3443 = vmatpush1.msra.mxu0 0.0
    %3444 = vmatprep.subr.mxu0 0.0
    %3445 = vmatpush1.msra.mxu0 0.0
    %3446 = vmatprep.subr.mxu0 0.0
    %3447 = vmatpush1.msra.mxu0 0.0
    %3448 = vmatprep.subr.mxu0 0.0
    %3449 = vmatpush1.msra.mxu0 0.0
    %3450 = vmatprep.subr.mxu0 0.0
    %3451 = vmatpush1.msra.mxu0 0.0
    %3452 = vmatprep.subr.mxu0 0.0
    %3453 = vmatpush1.msra.mxu0 0.0
    %3454 = vmatprep.subr.mxu0 0.0
    %3455 = vmatpush1.msra.mxu0 0.0
    %3456 = vmatprep.subr.mxu0 0.0
    %3457 = vmatpush1.msra.mxu0 0.0
    %3458 = vmatprep.subr.mxu0 0.0
    %3459 = vmatpush1.msra.mxu0 0.0
    %3460 = vmatprep.subr.mxu0 0.0
    %3461 = vmatpush1.msra.mxu0 0.0
    %3462 = vmatprep.subr.mxu0 0.0
    %3463 = vmatpush1.msra.mxu0 0.0
    %3464 = vmatprep.mubr.f32.mxu0 0.0
    %v3465 = vand.u32 %v3117, 4294901760
    %v3466 = vsub.f32 %v3117, %v3465
    %v3467 = vand.u32 %v3466, 4294901760
    %3468 = vmatmul.mubr.f32.gmra.mrb[0].mxu0 %v3467
    %v3469 = vpop.f32.mrb[0].mxu0
    %v3470 = vadd.f32 %v3390, %v3469
    %v3471 = vpop.f32.mrb[0].mxu0
    %3472 = vdwg.mxu0
    %3473 = vmatprep.subr.mxu0 0.0
    %v3474 = vand.u32 %v403, 4294901760
    %v3475 = vsub.f32 %v403, %v3474
    %v3476 = vand.u32 %v3475, 4294901760
    %3477 = vmatpush1.msra.mxu0 %v3476
    %3478 = vmatprep.subr.mxu0 0.0
    %v3479 = vand.u32 %v404, 4294901760
    %v3480 = vsub.f32 %v404, %v3479
    %v3481 = vand.u32 %v3480, 4294901760
    %3482 = vmatpush1.msra.mxu0 %v3481
    %3483 = vmatprep.subr.mxu0 0.0
    %v3484 = vand.u32 %v405, 4294901760
    %v3485 = vsub.f32 %v405, %v3484
    %v3486 = vand.u32 %v3485, 4294901760
    %3487 = vmatpush1.msra.mxu0 %v3486
    %3488 = vmatprep.subr.mxu0 0.0
    %v3489 = vand.u32 %v406, 4294901760
    %v3490 = vsub.f32 %v406, %v3489
    %v3491 = vand.u32 %v3490, 4294901760
    %3492 = vmatpush1.msra.mxu0 %v3491
    %3493 = vmatprep.subr.mxu0 0.0
    %v3494 = vand.u32 %v407, 4294901760
    %v3495 = vsub.f32 %v407, %v3494
    %v3496 = vand.u32 %v3495, 4294901760
    %3497 = vmatpush1.msra.mxu0 %v3496
    %3498 = vmatprep.subr.mxu0 0.0
    %v3499 = vand.u32 %v408, 4294901760
    %v3500 = vsub.f32 %v408, %v3499
    %v3501 = vand.u32 %v3500, 4294901760
    %3502 = vmatpush1.msra.mxu0 %v3501
    %3503 = vmatprep.subr.mxu0 0.0
    %v3504 = vand.u32 %v723, 4294901760
    %v3505 = vsub.f32 %v723, %v3504
    %v3506 = vand.u32 %v3505, 4294901760
    %3507 = vmatpush1.msra.mxu0 %v3506
    %3508 = vmatprep.subr.mxu0 0.0
    %3509 = vmatpush1.msra.mxu0 0.0
    %3510 = vmatprep.subr.mxu0 0.0
    %3511 = vmatpush1.msra.mxu0 0.0
    %3512 = vmatprep.subr.mxu0 0.0
    %3513 = vmatpush1.msra.mxu0 0.0
    %3514 = vmatprep.subr.mxu0 0.0
    %3515 = vmatpush1.msra.mxu0 0.0
    %3516 = vmatprep.subr.mxu0 0.0
    %3517 = vmatpush1.msra.mxu0 0.0
    %3518 = vmatprep.subr.mxu0 0.0
    %3519 = vmatpush1.msra.mxu0 0.0
    %3520 = vmatprep.subr.mxu0 0.0
    %3521 = vmatpush1.msra.mxu0 0.0
    %3522 = vmatprep.subr.mxu0 0.0
    %3523 = vmatpush1.msra.mxu0 0.0
    %3524 = vmatprep.subr.mxu0 0.0
    %3525 = vmatpush1.msra.mxu0 0.0
    %3526 = vmatprep.subr.mxu0 0.0
    %3527 = vmatpush1.msra.mxu0 0.0
    %3528 = vmatprep.subr.mxu0 0.0
    %3529 = vmatpush1.msra.mxu0 0.0
    %3530 = vmatprep.subr.mxu0 0.0
    %3531 = vmatpush1.msra.mxu0 0.0
    %3532 = vmatprep.subr.mxu0 0.0
    %3533 = vmatpush1.msra.mxu0 0.0
    %3534 = vmatprep.subr.mxu0 0.0
    %3535 = vmatpush1.msra.mxu0 0.0
    %3536 = vmatprep.subr.mxu0 0.0
    %3537 = vmatpush1.msra.mxu0 0.0
    %3538 = vmatprep.subr.mxu0 0.0
    %3539 = vmatpush1.msra.mxu0 0.0
    %3540 = vmatprep.subr.mxu0 0.0
    %3541 = vmatpush1.msra.mxu0 0.0
    %3542 = vmatprep.subr.mxu0 0.0
    %3543 = vmatpush1.msra.mxu0 0.0
    %3544 = vmatprep.subr.mxu0 0.0
    %3545 = vmatpush1.msra.mxu0 0.0
    %3546 = vmatprep.subr.mxu0 0.0
    %3547 = vmatpush1.msra.mxu0 0.0
    %3548 = vmatprep.subr.mxu0 0.0
    %3549 = vmatpush1.msra.mxu0 0.0
    %3550 = vmatprep.subr.mxu0 0.0
    %3551 = vmatpush1.msra.mxu0 0.0
    %3552 = vmatprep.subr.mxu0 0.0
    %3553 = vmatpush1.msra.mxu0 0.0
    %3554 = vmatprep.subr.mxu0 0.0
    %3555 = vmatpush1.msra.mxu0 0.0
    %3556 = vmatprep.subr.mxu0 0.0
    %3557 = vmatpush1.msra.mxu0 0.0
    %3558 = vmatprep.mubr.f32.mxu0 0.0
    %v3559 = vand.u32 %v3117, 4294901760
    %3560 = vmatmul.mubr.f32.gmra.mrb[0].mxu0 %v3559
    %v3561 = vpop.f32.mrb[0].mxu0
    %v3562 = vadd.f32 %v3470, %v3561
    %v3563 = vpop.f32.mrb[0].mxu0
    %3564 = vdwg.mxu0
    %3565 = vmatprep.subr.mxu0 0.0
    %v3566 = vand.u32 %v403, 4294901760
    %3567 = vmatpush1.msra.mxu0 %v3566
    %3568 = vmatprep.subr.mxu0 0.0
    %v3569 = vand.u32 %v404, 4294901760
    %3570 = vmatpush1.msra.mxu0 %v3569
    %3571 = vmatprep.subr.mxu0 0.0
    %v3572 = vand.u32 %v405, 4294901760
    %3573 = vmatpush1.msra.mxu0 %v3572
    %3574 = vmatprep.subr.mxu0 0.0
    %v3575 = vand.u32 %v406, 4294901760
    %3576 = vmatpush1.msra.mxu0 %v3575
    %3577 = vmatprep.subr.mxu0 0.0
    %v3578 = vand.u32 %v407, 4294901760
    %3579 = vmatpush1.msra.mxu0 %v3578
    %3580 = vmatprep.subr.mxu0 0.0
    %v3581 = vand.u32 %v408, 4294901760
    %3582 = vmatpush1.msra.mxu0 %v3581
    %3583 = vmatprep.subr.mxu0 0.0
    %v3584 = vand.u32 %v723, 4294901760
    %3585 = vmatpush1.msra.mxu0 %v3584
    %3586 = vmatprep.subr.mxu0 0.0
    %3587 = vmatpush1.msra.mxu0 0.0
    %3588 = vmatprep.subr.mxu0 0.0
    %3589 = vmatpush1.msra.mxu0 0.0
    %3590 = vmatprep.subr.mxu0 0.0
    %3591 = vmatpush1.msra.mxu0 0.0
    %3592 = vmatprep.subr.mxu0 0.0
    %3593 = vmatpush1.msra.mxu0 0.0
    %3594 = vmatprep.subr.mxu0 0.0
    %3595 = vmatpush1.msra.mxu0 0.0
    %3596 = vmatprep.subr.mxu0 0.0
    %3597 = vmatpush1.msra.mxu0 0.0
    %3598 = vmatprep.subr.mxu0 0.0
    %3599 = vmatpush1.msra.mxu0 0.0
    %3600 = vmatprep.subr.mxu0 0.0
    %3601 = vmatpush1.msra.mxu0 0.0
    %3602 = vmatprep.subr.mxu0 0.0
    %3603 = vmatpush1.msra.mxu0 0.0
    %3604 = vmatprep.subr.mxu0 0.0
    %3605 = vmatpush1.msra.mxu0 0.0
    %3606 = vmatprep.subr.mxu0 0.0
    %3607 = vmatpush1.msra.mxu0 0.0
    %3608 = vmatprep.subr.mxu0 0.0
    %3609 = vmatpush1.msra.mxu0 0.0
    %3610 = vmatprep.subr.mxu0 0.0
    %3611 = vmatpush1.msra.mxu0 0.0
    %3612 = vmatprep.subr.mxu0 0.0
    %3613 = vmatpush1.msra.mxu0 0.0
    %3614 = vmatprep.subr.mxu0 0.0
    %3615 = vmatpush1.msra.mxu0 0.0
    %3616 = vmatprep.subr.mxu0 0.0
    %3617 = vmatpush1.msra.mxu0 0.0
    %3618 = vmatprep.subr.mxu0 0.0
    %3619 = vmatpush1.msra.mxu0 0.0
    %3620 = vmatprep.subr.mxu0 0.0
    %3621 = vmatpush1.msra.mxu0 0.0
    %3622 = vmatprep.subr.mxu0 0.0
    %3623 = vmatpush1.msra.mxu0 0.0
    %3624 = vmatprep.subr.mxu0 0.0
    %3625 = vmatpush1.msra.mxu0 0.0
    %3626 = vmatprep.subr.mxu0 0.0
    %3627 = vmatpush1.msra.mxu0 0.0
    %3628 = vmatprep.subr.mxu0 0.0
    %3629 = vmatpush1.msra.mxu0 0.0
    %3630 = vmatprep.subr.mxu0 0.0
    %3631 = vmatpush1.msra.mxu0 0.0
    %3632 = vmatprep.subr.mxu0 0.0
    %3633 = vmatpush1.msra.mxu0 0.0
    %3634 = vmatprep.subr.mxu0 0.0
    %3635 = vmatpush1.msra.mxu0 0.0
    %3636 = vmatprep.mubr.f32.mxu0 0.0
    %v3637 = vand.u32 %v3117, 4294901760
    %3638 = vmatmul.mubr.f32.gmra.mrb[0].mxu0 %v3637
    %v3639 = vpop.f32.mrb[0].mxu0
    %v3640 = vadd.f32 %v3562, %v3639
    %v3641 = vpop.f32.mrb[0].mxu0
    %3642 = vdwg.mxu0
    %3643 = vrot.lane.b32.xlu0 %v431, 124
    %v3644 = vpop.permute.xlu0 %3643
    %v3646 = vsel %vm436, %v3640, %v3644
    %v3648 = vsel %vm438, %v3646, 0
    %3650 = vmatprep.subr.mxu0 0.0
    %3651 = vmatpush1.msra.mxu0 %v391
    %3652 = vmatprep.subr.mxu0 0.0
    %3653 = vmatpush1.msra.mxu0 %v444
    %3654 = vmatprep.subr.mxu0 0.0
    %3655 = vmatpush1.msra.mxu0 0.0
    %3656 = vmatprep.subr.mxu0 0.0
    %3657 = vmatpush1.msra.mxu0 0.0
    %3658 = vmatprep.subr.mxu0 0.0
    %3659 = vmatpush1.msra.mxu0 0.0
    %3660 = vmatprep.subr.mxu0 0.0
    %3661 = vmatpush1.msra.mxu0 0.0
    %3662 = vmatprep.subr.mxu0 0.0
    %3663 = vmatpush1.msra.mxu0 0.0
    %3664 = vmatprep.subr.mxu0 0.0
    %3665 = vmatpush1.msra.mxu0 0.0
    %3666 = vmatprep.subr.mxu0 0.0
    %3667 = vmatpush1.msra.mxu0 0.0
    %3668 = vmatprep.subr.mxu0 0.0
    %3669 = vmatpush1.msra.mxu0 0.0
    %3670 = vmatprep.subr.mxu0 0.0
    %3671 = vmatpush1.msra.mxu0 0.0
    %3672 = vmatprep.subr.mxu0 0.0
    %3673 = vmatpush1.msra.mxu0 0.0
    %3674 = vmatprep.subr.mxu0 0.0
    %3675 = vmatpush1.msra.mxu0 0.0
    %3676 = vmatprep.subr.mxu0 0.0
    %3677 = vmatpush1.msra.mxu0 0.0
    %3678 = vmatprep.subr.mxu0 0.0
    %3679 = vmatpush1.msra.mxu0 0.0
    %3680 = vmatprep.subr.mxu0 0.0
    %3681 = vmatpush1.msra.mxu0 0.0
    %3682 = vmatprep.subr.mxu0 0.0
    %3683 = vmatpush1.msra.mxu0 0.0
    %3684 = vmatprep.subr.mxu0 0.0
    %3685 = vmatpush1.msra.mxu0 0.0
    %3686 = vmatprep.subr.mxu0 0.0
    %3687 = vmatpush1.msra.mxu0 0.0
    %3688 = vmatprep.subr.mxu0 0.0
    %3689 = vmatpush1.msra.mxu0 0.0
    %3690 = vmatprep.subr.mxu0 0.0
    %3691 = vmatpush1.msra.mxu0 0.0
    %3692 = vmatprep.subr.mxu0 0.0
    %3693 = vmatpush1.msra.mxu0 0.0
    %3694 = vmatprep.subr.mxu0 0.0
    %3695 = vmatpush1.msra.mxu0 0.0
    %3696 = vmatprep.subr.mxu0 0.0
    %3697 = vmatpush1.msra.mxu0 0.0
    %3698 = vmatprep.subr.mxu0 0.0
    %3699 = vmatpush1.msra.mxu0 0.0
    %3700 = vmatprep.subr.mxu0 0.0
    %3701 = vmatpush1.msra.mxu0 0.0
    %3702 = vmatprep.subr.mxu0 0.0
    %3703 = vmatpush1.msra.mxu0 0.0
    %3704 = vmatprep.subr.mxu0 0.0
    %3705 = vmatpush1.msra.mxu0 0.0
    %3706 = vmatprep.subr.mxu0 0.0
    %3707 = vmatpush1.msra.mxu0 0.0
    %3708 = vmatprep.subr.mxu0 0.0
    %3709 = vmatpush1.msra.mxu0 0.0
    %3710 = vmatprep.subr.mxu0 0.0
    %3711 = vmatpush1.msra.mxu0 0.0
    %3712 = vmatprep.subr.mxu0 0.0
    %3713 = vmatpush1.msra.mxu0 0.0
    %3714 = vmatprep.mubr.f32.mxu0 0.0
    %3715 = vmatmul.mubr.f32.gmra.mrb[0].mxu0 %v3648
    %v3716 = vpop.f32.mrb[0].mxu0
    %v3717 = vadd.f32 %v415, %v3716
    %v3718 = vpop.f32.mrb[0].mxu0
    %3719 = vdwg.mxu0
    %v3720 = vtanh.pop %v3717
    %v3722 = vsel %vm155, %v3720, 0
    %3724 = vmatprep.subr.mxu0 0.0
    %3725 = vmatpush1.msra.mxu0 %v393
    %3726 = vmatprep.subr.mxu0 0.0
    %3727 = vmatpush1.msra.mxu0 %v394
    %3728 = vmatprep.subr.mxu0 0.0
    %3729 = vmatpush1.msra.mxu0 %v395
    %3730 = vmatprep.subr.mxu0 0.0
    %3731 = vmatpush1.msra.mxu0 %v396
    %3732 = vmatprep.subr.mxu0 0.0
    %3733 = vmatpush1.msra.mxu0 0.0
    %3734 = vmatprep.subr.mxu0 0.0
    %3735 = vmatpush1.msra.mxu0 0.0
    %3736 = vmatprep.subr.mxu0 0.0
    %3737 = vmatpush1.msra.mxu0 0.0
    %3738 = vmatprep.subr.mxu0 0.0
    %3739 = vmatpush1.msra.mxu0 0.0
    %3740 = vmatprep.subr.mxu0 0.0
    %3741 = vmatpush1.msra.mxu0 0.0
    %3742 = vmatprep.subr.mxu0 0.0
    %3743 = vmatpush1.msra.mxu0 0.0
    %3744 = vmatprep.subr.mxu0 0.0
    %3745 = vmatpush1.msra.mxu0 0.0
    %3746 = vmatprep.subr.mxu0 0.0
    %3747 = vmatpush1.msra.mxu0 0.0
    %3748 = vmatprep.subr.mxu0 0.0
    %3749 = vmatpush1.msra.mxu0 0.0
    %3750 = vmatprep.subr.mxu0 0.0
    %3751 = vmatpush1.msra.mxu0 0.0
    %3752 = vmatprep.subr.mxu0 0.0
    %3753 = vmatpush1.msra.mxu0 0.0
    %3754 = vmatprep.subr.mxu0 0.0
    %3755 = vmatpush1.msra.mxu0 0.0
    %3756 = vmatprep.subr.mxu0 0.0
    %3757 = vmatpush1.msra.mxu0 0.0
    %3758 = vmatprep.subr.mxu0 0.0
    %3759 = vmatpush1.msra.mxu0 0.0
    %3760 = vmatprep.subr.mxu0 0.0
    %3761 = vmatpush1.msra.mxu0 0.0
    %3762 = vmatprep.subr.mxu0 0.0
    %3763 = vmatpush1.msra.mxu0 0.0
    %3764 = vmatprep.subr.mxu0 0.0
    %3765 = vmatpush1.msra.mxu0 0.0
    %3766 = vmatprep.subr.mxu0 0.0
    %3767 = vmatpush1.msra.mxu0 0.0
    %3768 = vmatprep.subr.mxu0 0.0
    %3769 = vmatpush1.msra.mxu0 0.0
    %3770 = vmatprep.subr.mxu0 0.0
    %3771 = vmatpush1.msra.mxu0 0.0
    %3772 = vmatprep.subr.mxu0 0.0
    %3773 = vmatpush1.msra.mxu0 0.0
    %3774 = vmatprep.subr.mxu0 0.0
    %3775 = vmatpush1.msra.mxu0 0.0
    %3776 = vmatprep.subr.mxu0 0.0
    %3777 = vmatpush1.msra.mxu0 0.0
    %3778 = vmatprep.subr.mxu0 0.0
    %3779 = vmatpush1.msra.mxu0 0.0
    %3780 = vmatprep.subr.mxu0 0.0
    %3781 = vmatpush1.msra.mxu0 0.0
    %3782 = vmatprep.subr.mxu0 0.0
    %3783 = vmatpush1.msra.mxu0 0.0
    %3784 = vmatprep.subr.mxu0 0.0
    %3785 = vmatpush1.msra.mxu0 0.0
    %3786 = vmatprep.subr.mxu0 0.0
    %3787 = vmatpush1.msra.mxu0 0.0
    %3788 = vmatprep.mubr.f32.mxu0 0.0
    %3789 = vmatmul.mubr.f32.gmra.mrb[0].mxu0 %v3722
    %v3790 = vpop.f32.mrb[0].mxu0
    %v3791 = vadd.f32 %v422, %v3790
    %v3792 = vpop.f32.mrb[0].mxu0
    %3793 = vdwg.mxu0
    %v3794 = vtanh.pop %v3791
    %3796 = vrot.lane.b32.xlu0 %v3794, 11
    %v3797 = vpop.permute.xlu0 %3796
    %v3799 = vsel %vm438, %v3646, %v3797
    %v3801 = vsel %vm596, %v3799, 0
    %3803 = vmatprep.subr.mxu0 0.0
    %3804 = vmatpush1.msra.mxu0 %v397
    %3805 = vmatprep.subr.mxu0 0.0
    %3806 = vmatpush1.msra.mxu0 %v398
    %3807 = vmatprep.subr.mxu0 0.0
    %3808 = vmatpush1.msra.mxu0 %v399
    %3809 = vmatprep.subr.mxu0 0.0
    %3810 = vmatpush1.msra.mxu0 %v400
    %3811 = vmatprep.subr.mxu0 0.0
    %3812 = vmatpush1.msra.mxu0 %v401
    %3813 = vmatprep.subr.mxu0 0.0
    %3814 = vmatpush1.msra.mxu0 %v601
    %3815 = vmatprep.subr.mxu0 0.0
    %3816 = vmatpush1.msra.mxu0 0.0
    %3817 = vmatprep.subr.mxu0 0.0
    %3818 = vmatpush1.msra.mxu0 0.0
    %3819 = vmatprep.subr.mxu0 0.0
    %3820 = vmatpush1.msra.mxu0 0.0
    %3821 = vmatprep.subr.mxu0 0.0
    %3822 = vmatpush1.msra.mxu0 0.0
    %3823 = vmatprep.subr.mxu0 0.0
    %3824 = vmatpush1.msra.mxu0 0.0
    %3825 = vmatprep.subr.mxu0 0.0
    %3826 = vmatpush1.msra.mxu0 0.0
    %3827 = vmatprep.subr.mxu0 0.0
    %3828 = vmatpush1.msra.mxu0 0.0
    %3829 = vmatprep.subr.mxu0 0.0
    %3830 = vmatpush1.msra.mxu0 0.0
    %3831 = vmatprep.subr.mxu0 0.0
    %3832 = vmatpush1.msra.mxu0 0.0
    %3833 = vmatprep.subr.mxu0 0.0
    %3834 = vmatpush1.msra.mxu0 0.0
    %3835 = vmatprep.subr.mxu0 0.0
    %3836 = vmatpush1.msra.mxu0 0.0
    %3837 = vmatprep.subr.mxu0 0.0
    %3838 = vmatpush1.msra.mxu0 0.0
    %3839 = vmatprep.subr.mxu0 0.0
    %3840 = vmatpush1.msra.mxu0 0.0
    %3841 = vmatprep.subr.mxu0 0.0
    %3842 = vmatpush1.msra.mxu0 0.0
    %3843 = vmatprep.subr.mxu0 0.0
    %3844 = vmatpush1.msra.mxu0 0.0
    %3845 = vmatprep.subr.mxu0 0.0
    %3846 = vmatpush1.msra.mxu0 0.0
    %3847 = vmatprep.subr.mxu0 0.0
    %3848 = vmatpush1.msra.mxu0 0.0
    %3849 = vmatprep.subr.mxu0 0.0
    %3850 = vmatpush1.msra.mxu0 0.0
    %3851 = vmatprep.subr.mxu0 0.0
    %3852 = vmatpush1.msra.mxu0 0.0
    %3853 = vmatprep.subr.mxu0 0.0
    %3854 = vmatpush1.msra.mxu0 0.0
    %3855 = vmatprep.subr.mxu0 0.0
    %3856 = vmatpush1.msra.mxu0 0.0
    %3857 = vmatprep.subr.mxu0 0.0
    %3858 = vmatpush1.msra.mxu0 0.0
    %3859 = vmatprep.subr.mxu0 0.0
    %3860 = vmatpush1.msra.mxu0 0.0
    %3861 = vmatprep.subr.mxu0 0.0
    %3862 = vmatpush1.msra.mxu0 0.0
    %3863 = vmatprep.subr.mxu0 0.0
    %3864 = vmatpush1.msra.mxu0 0.0
    %3865 = vmatprep.subr.mxu0 0.0
    %3866 = vmatpush1.msra.mxu0 0.0
    %3867 = vmatprep.mubr.f32.mxu0 0.0
    %3868 = vmatmul.mubr.f32.gmra.mrb[0].mxu0 %v3801
    %v3869 = vpop.f32.mrb[0].mxu0
    %v3870 = vadd.f32 %v429, %v3869
    %v3871 = vpop.f32.mrb[0].mxu0
    %3872 = vdwg.mxu0
    %3874 = vset.pattern.permute.xlu0 0
    %3875 = vperm.xlu0 %3874, %v3870
    %v3876 = vpop.permute.xlu0 %3875
    %v3878 = vmul.f32 %v3876, %v3646
    %3879 = vset.pattern.permute.xlu0 1
    %3880 = vperm.xlu0 %3879, %v3870
    %v3881 = vpop.permute.xlu0 %3880
    %v3883 = vmul.f32 %v3881, %v3646
    %3884 = vset.pattern.permute.xlu0 2
    %3885 = vperm.xlu0 %3884, %v3870
    %v3886 = vpop.permute.xlu0 %3885
    %v3888 = vmul.f32 %v3886, %v3646
    %3889 = vset.pattern.permute.xlu0 3
    %3890 = vperm.xlu0 %3889, %v3870
    %v3891 = vpop.permute.xlu0 %3890
    %v3893 = vmul.f32 %v3891, %v3646
    %3895 = vrot.lane.b32.xlu0 %v3878, 11
    %v3896 = vpop.permute.xlu0 %3895
    %3899 = vrot.lane.b32.xlu0 %v3883, 22
    %v3900 = vpop.permute.xlu0 %3899
    %3903 = vrot.lane.b32.xlu0 %v3888, 33
    %v3904 = vpop.permute.xlu0 %3903
    %3907 = vrot.lane.b32.xlu0 %v3893, 44
    %v3908 = vpop.permute.xlu0 %3907
    %v3910 = vsel %vm438, %v3646, %v3896
    %v3911 = vsel %vm711, %v3910, %v3900
    %v3912 = vsel %vm713, %v3911, %v3904
    %v3913 = vsel %vm715, %v3912, %v3908
    %v3915 = vsel %vm717, %v3913, 0
    %3917 = vmatprep.subr.mxu0 0.0
    %v3918 = vand.u32 %v403, 4294901760
    %3919 = vmatpush1.msra.mxu0 %v3918
    %3920 = vmatprep.subr.mxu0 0.0
    %v3921 = vand.u32 %v404, 4294901760
    %3922 = vmatpush1.msra.mxu0 %v3921
    %3923 = vmatprep.subr.mxu0 0.0
    %v3924 = vand.u32 %v405, 4294901760
    %3925 = vmatpush1.msra.mxu0 %v3924
    %3926 = vmatprep.subr.mxu0 0.0
    %v3927 = vand.u32 %v406, 4294901760
    %3928 = vmatpush1.msra.mxu0 %v3927
    %3929 = vmatprep.subr.mxu0 0.0
    %v3930 = vand.u32 %v407, 4294901760
    %3931 = vmatpush1.msra.mxu0 %v3930
    %3932 = vmatprep.subr.mxu0 0.0
    %v3933 = vand.u32 %v408, 4294901760
    %3934 = vmatpush1.msra.mxu0 %v3933
    %3935 = vmatprep.subr.mxu0 0.0
    %v3936 = vand.u32 %v723, 4294901760
    %3937 = vmatpush1.msra.mxu0 %v3936
    %3938 = vmatprep.subr.mxu0 0.0
    %3939 = vmatpush1.msra.mxu0 0.0
    %3940 = vmatprep.subr.mxu0 0.0
    %3941 = vmatpush1.msra.mxu0 0.0
    %3942 = vmatprep.subr.mxu0 0.0
    %3943 = vmatpush1.msra.mxu0 0.0
    %3944 = vmatprep.subr.mxu0 0.0
    %3945 = vmatpush1.msra.mxu0 0.0
    %3946 = vmatprep.subr.mxu0 0.0
    %3947 = vmatpush1.msra.mxu0 0.0
    %3948 = vmatprep.subr.mxu0 0.0
    %3949 = vmatpush1.msra.mxu0 0.0
    %3950 = vmatprep.subr.mxu0 0.0
    %3951 = vmatpush1.msra.mxu0 0.0
    %3952 = vmatprep.subr.mxu0 0.0
    %3953 = vmatpush1.msra.mxu0 0.0
    %3954 = vmatprep.subr.mxu0 0.0
    %3955 = vmatpush1.msra.mxu0 0.0
    %3956 = vmatprep.subr.mxu0 0.0
    %3957 = vmatpush1.msra.mxu0 0.0
    %3958 = vmatprep.subr.mxu0 0.0
    %3959 = vmatpush1.msra.mxu0 0.0
    %3960 = vmatprep.subr.mxu0 0.0
    %3961 = vmatpush1.msra.mxu0 0.0
    %3962 = vmatprep.subr.mxu0 0.0
    %3963 = vmatpush1.msra.mxu0 0.0
    %3964 = vmatprep.subr.mxu0 0.0
    %3965 = vmatpush1.msra.mxu0 0.0
    %3966 = vmatprep.subr.mxu0 0.0
    %3967 = vmatpush1.msra.mxu0 0.0
    %3968 = vmatprep.subr.mxu0 0.0
    %3969 = vmatpush1.msra.mxu0 0.0
    %3970 = vmatprep.subr.mxu0 0.0
    %3971 = vmatpush1.msra.mxu0 0.0
    %3972 = vmatprep.subr.mxu0 0.0
    %3973 = vmatpush1.msra.mxu0 0.0
    %3974 = vmatprep.subr.mxu0 0.0
    %3975 = vmatpush1.msra.mxu0 0.0
    %3976 = vmatprep.subr.mxu0 0.0
    %3977 = vmatpush1.msra.mxu0 0.0
    %3978 = vmatprep.subr.mxu0 0.0
    %3979 = vmatpush1.msra.mxu0 0.0
    %3980 = vmatprep.subr.mxu0 0.0
    %3981 = vmatpush1.msra.mxu0 0.0
    %3982 = vmatprep.subr.mxu0 0.0
    %3983 = vmatpush1.msra.mxu0 0.0
    %3984 = vmatprep.subr.mxu0 0.0
    %3985 = vmatpush1.msra.mxu0 0.0
    %3986 = vmatprep.subr.mxu0 0.0
    %3987 = vmatpush1.msra.mxu0 0.0
    %3988 = vmatprep.mubr.f32.mxu0 0.0
    %v3989 = vand.u32 %v3915, 4294901760
    %v3990 = vsub.f32 %v3915, %v3989
    %v3991 = vand.u32 %v3990, 4294901760
    %v3992 = vsub.f32 %v3990, %v3991
    %v3993 = vand.u32 %v3992, 4294901760
    %3994 = vmatmul.mubr.f32.gmra.mrb[0].mxu0 %v3993
    %v3995 = vpop.f32.mrb[0].mxu0
    %v3996 = vadd.f32 0.0, %v3995
    %v3997 = vpop.f32.mrb[0].mxu0
    %3998 = vdwg.mxu0
    %3999 = vmatprep.subr.mxu0 0.0
    %v4000 = vand.u32 %v403, 4294901760
    %v4001 = vsub.f32 %v403, %v4000
    %v4002 = vand.u32 %v4001, 4294901760
    %v4003 = vsub.f32 %v4001, %v4002
    %v4004 = vand.u32 %v4003, 4294901760
    %4005 = vmatpush1.msra.mxu0 %v4004
    %4006 = vmatprep.subr.mxu0 0.0
    %v4007 = vand.u32 %v404, 4294901760
    %v4008 = vsub.f32 %v404, %v4007
    %v4009 = vand.u32 %v4008, 4294901760
    %v4010 = vsub.f32 %v4008, %v4009
    %v4011 = vand.u32 %v4010, 4294901760
    %4012 = vmatpush1.msra.mxu0 %v4011
    %4013 = vmatprep.subr.mxu0 0.0
    %v4014 = vand.u32 %v405, 4294901760
    %v4015 = vsub.f32 %v405, %v4014
    %v4016 = vand.u32 %v4015, 4294901760
    %v4017 = vsub.f32 %v4015, %v4016
    %v4018 = vand.u32 %v4017, 4294901760
    %4019 = vmatpush1.msra.mxu0 %v4018
    %4020 = vmatprep.subr.mxu0 0.0
    %v4021 = vand.u32 %v406, 4294901760
    %v4022 = vsub.f32 %v406, %v4021
    %v4023 = vand.u32 %v4022, 4294901760
    %v4024 = vsub.f32 %v4022, %v4023
    %v4025 = vand.u32 %v4024, 4294901760
    %4026 = vmatpush1.msra.mxu0 %v4025
    %4027 = vmatprep.subr.mxu0 0.0
    %v4028 = vand.u32 %v407, 4294901760
    %v4029 = vsub.f32 %v407, %v4028
    %v4030 = vand.u32 %v4029, 4294901760
    %v4031 = vsub.f32 %v4029, %v4030
    %v4032 = vand.u32 %v4031, 4294901760
    %4033 = vmatpush1.msra.mxu0 %v4032
    %4034 = vmatprep.subr.mxu0 0.0
    %v4035 = vand.u32 %v408, 4294901760
    %v4036 = vsub.f32 %v408, %v4035
    %v4037 = vand.u32 %v4036, 4294901760
    %v4038 = vsub.f32 %v4036, %v4037
    %v4039 = vand.u32 %v4038, 4294901760
    %4040 = vmatpush1.msra.mxu0 %v4039
    %4041 = vmatprep.subr.mxu0 0.0
    %v4042 = vand.u32 %v723, 4294901760
    %v4043 = vsub.f32 %v723, %v4042
    %v4044 = vand.u32 %v4043, 4294901760
    %v4045 = vsub.f32 %v4043, %v4044
    %v4046 = vand.u32 %v4045, 4294901760
    %4047 = vmatpush1.msra.mxu0 %v4046
    %4048 = vmatprep.subr.mxu0 0.0
    %4049 = vmatpush1.msra.mxu0 0.0
    %4050 = vmatprep.subr.mxu0 0.0
    %4051 = vmatpush1.msra.mxu0 0.0
    %4052 = vmatprep.subr.mxu0 0.0
    %4053 = vmatpush1.msra.mxu0 0.0
    %4054 = vmatprep.subr.mxu0 0.0
    %4055 = vmatpush1.msra.mxu0 0.0
    %4056 = vmatprep.subr.mxu0 0.0
    %4057 = vmatpush1.msra.mxu0 0.0
    %4058 = vmatprep.subr.mxu0 0.0
    %4059 = vmatpush1.msra.mxu0 0.0
    %4060 = vmatprep.subr.mxu0 0.0
    %4061 = vmatpush1.msra.mxu0 0.0
    %4062 = vmatprep.subr.mxu0 0.0
    %4063 = vmatpush1.msra.mxu0 0.0
    %4064 = vmatprep.subr.mxu0 0.0
    %4065 = vmatpush1.msra.mxu0 0.0
    %4066 = vmatprep.subr.mxu0 0.0
    %4067 = vmatpush1.msra.mxu0 0.0
    %4068 = vmatprep.subr.mxu0 0.0
    %4069 = vmatpush1.msra.mxu0 0.0
    %4070 = vmatprep.subr.mxu0 0.0
    %4071 = vmatpush1.msra.mxu0 0.0
    %4072 = vmatprep.subr.mxu0 0.0
    %4073 = vmatpush1.msra.mxu0 0.0
    %4074 = vmatprep.subr.mxu0 0.0
    %4075 = vmatpush1.msra.mxu0 0.0
    %4076 = vmatprep.subr.mxu0 0.0
    %4077 = vmatpush1.msra.mxu0 0.0
    %4078 = vmatprep.subr.mxu0 0.0
    %4079 = vmatpush1.msra.mxu0 0.0
    %4080 = vmatprep.subr.mxu0 0.0
    %4081 = vmatpush1.msra.mxu0 0.0
    %4082 = vmatprep.subr.mxu0 0.0
    %4083 = vmatpush1.msra.mxu0 0.0
    %4084 = vmatprep.subr.mxu0 0.0
    %4085 = vmatpush1.msra.mxu0 0.0
    %4086 = vmatprep.subr.mxu0 0.0
    %4087 = vmatpush1.msra.mxu0 0.0
    %4088 = vmatprep.subr.mxu0 0.0
    %4089 = vmatpush1.msra.mxu0 0.0
    %4090 = vmatprep.subr.mxu0 0.0
    %4091 = vmatpush1.msra.mxu0 0.0
    %4092 = vmatprep.subr.mxu0 0.0
    %4093 = vmatpush1.msra.mxu0 0.0
    %4094 = vmatprep.subr.mxu0 0.0
    %4095 = vmatpush1.msra.mxu0 0.0
    %4096 = vmatprep.subr.mxu0 0.0
    %4097 = vmatpush1.msra.mxu0 0.0
    %4098 = vmatprep.mubr.f32.mxu0 0.0
    %v4099 = vand.u32 %v3915, 4294901760
    %4100 = vmatmul.mubr.f32.gmra.mrb[0].mxu0 %v4099
    %v4101 = vpop.f32.mrb[0].mxu0
    %v4102 = vadd.f32 %v3996, %v4101
    %v4103 = vpop.f32.mrb[0].mxu0
    %4104 = vdwg.mxu0
    %4105 = vmatprep.subr.mxu0 0.0
    %v4106 = vand.u32 %v403, 4294901760
    %v4107 = vsub.f32 %v403, %v4106
    %4108 = vmatpush1.msra.mxu0 %v4107
    %4109 = vmatprep.subr.mxu0 0.0
    %v4110 = vand.u32 %v404, 4294901760
    %v4111 = vsub.f32 %v404, %v4110
    %4112 = vmatpush1.msra.mxu0 %v4111
    %4113 = vmatprep.subr.mxu0 0.0
    %v4114 = vand.u32 %v405, 4294901760
    %v4115 = vsub.f32 %v405, %v4114
    %4116 = vmatpush1.msra.mxu0 %v4115
    %4117 = vmatprep.subr.mxu0 0.0
    %v4118 = vand.u32 %v406, 4294901760
    %v4119 = vsub.f32 %v406, %v4118
    %4120 = vmatpush1.msra.mxu0 %v4119
    %4121 = vmatprep.subr.mxu0 0.0
    %v4122 = vand.u32 %v407, 4294901760
    %v4123 = vsub.f32 %v407, %v4122
    %4124 = vmatpush1.msra.mxu0 %v4123
    %4125 = vmatprep.subr.mxu0 0.0
    %v4126 = vand.u32 %v408, 4294901760
    %v4127 = vsub.f32 %v408, %v4126
    %4128 = vmatpush1.msra.mxu0 %v4127
    %4129 = vmatprep.subr.mxu0 0.0
    %v4130 = vand.u32 %v723, 4294901760
    %v4131 = vsub.f32 %v723, %v4130
    %4132 = vmatpush1.msra.mxu0 %v4131
    %4133 = vmatprep.subr.mxu0 0.0
    %4134 = vmatpush1.msra.mxu0 0.0
    %4135 = vmatprep.subr.mxu0 0.0
    %4136 = vmatpush1.msra.mxu0 0.0
    %4137 = vmatprep.subr.mxu0 0.0
    %4138 = vmatpush1.msra.mxu0 0.0
    %4139 = vmatprep.subr.mxu0 0.0
    %4140 = vmatpush1.msra.mxu0 0.0
    %4141 = vmatprep.subr.mxu0 0.0
    %4142 = vmatpush1.msra.mxu0 0.0
    %4143 = vmatprep.subr.mxu0 0.0
    %4144 = vmatpush1.msra.mxu0 0.0
    %4145 = vmatprep.subr.mxu0 0.0
    %4146 = vmatpush1.msra.mxu0 0.0
    %4147 = vmatprep.subr.mxu0 0.0
    %4148 = vmatpush1.msra.mxu0 0.0
    %4149 = vmatprep.subr.mxu0 0.0
    %4150 = vmatpush1.msra.mxu0 0.0
    %4151 = vmatprep.subr.mxu0 0.0
    %4152 = vmatpush1.msra.mxu0 0.0
    %4153 = vmatprep.subr.mxu0 0.0
    %4154 = vmatpush1.msra.mxu0 0.0
    %4155 = vmatprep.subr.mxu0 0.0
    %4156 = vmatpush1.msra.mxu0 0.0
    %4157 = vmatprep.subr.mxu0 0.0
    %4158 = vmatpush1.msra.mxu0 0.0
    %4159 = vmatprep.subr.mxu0 0.0
    %4160 = vmatpush1.msra.mxu0 0.0
    %4161 = vmatprep.subr.mxu0 0.0
    %4162 = vmatpush1.msra.mxu0 0.0
    %4163 = vmatprep.subr.mxu0 0.0
    %4164 = vmatpush1.msra.mxu0 0.0
    %4165 = vmatprep.subr.mxu0 0.0
    %4166 = vmatpush1.msra.mxu0 0.0
    %4167 = vmatprep.subr.mxu0 0.0
    %4168 = vmatpush1.msra.mxu0 0.0
    %4169 = vmatprep.subr.mxu0 0.0
    %4170 = vmatpush1.msra.mxu0 0.0
    %4171 = vmatprep.subr.mxu0 0.0
    %4172 = vmatpush1.msra.mxu0 0.0
    %4173 = vmatprep.subr.mxu0 0.0
    %4174 = vmatpush1.msra.mxu0 0.0
    %4175 = vmatprep.subr.mxu0 0.0
    %4176 = vmatpush1.msra.mxu0 0.0
    %4177 = vmatprep.subr.mxu0 0.0
    %4178 = vmatpush1.msra.mxu0 0.0
    %4179 = vmatprep.subr.mxu0 0.0
    %4180 = vmatpush1.msra.mxu0 0.0
    %4181 = vmatprep.subr.mxu0 0.0
    %4182 = vmatpush1.msra.mxu0 0.0
    %4183 = vmatprep.mubr.f32.mxu0 0.0
    %v4184 = vand.u32 %v3915, 4294901760
    %v4185 = vsub.f32 %v3915, %v4184
    %4186 = vmatmul.mubr.f32.gmra.mrb[0].mxu0 %v4185
    %v4187 = vpop.f32.mrb[0].mxu0
    %v4188 = vadd.f32 %v4102, %v4187
    %v4189 = vpop.f32.mrb[0].mxu0
    %4190 = vdwg.mxu0
    %4191 = vmatprep.subr.mxu0 0.0
    %v4192 = vand.u32 %v403, 4294901760
    %4193 = vmatpush1.msra.mxu0 %v4192
    %4194 = vmatprep.subr.mxu0 0.0
    %v4195 = vand.u32 %v404, 4294901760
    %4196 = vmatpush1.msra.mxu0 %v4195
    %4197 = vmatprep.subr.mxu0 0.0
    %v4198 = vand.u32 %v405, 4294901760
    %4199 = vmatpush1.msra.mxu0 %v4198
    %4200 = vmatprep.subr.mxu0 0.0
    %v4201 = vand.u32 %v406, 4294901760
    %4202 = vmatpush1.msra.mxu0 %v4201
    %4203 = vmatprep.subr.mxu0 0.0
    %v4204 = vand.u32 %v407, 4294901760
    %4205 = vmatpush1.msra.mxu0 %v4204
    %4206 = vmatprep.subr.mxu0 0.0
    %v4207 = vand.u32 %v408, 4294901760
    %4208 = vmatpush1.msra.mxu0 %v4207
    %4209 = vmatprep.subr.mxu0 0.0
    %v4210 = vand.u32 %v723, 4294901760
    %4211 = vmatpush1.msra.mxu0 %v4210
    %4212 = vmatprep.subr.mxu0 0.0
    %4213 = vmatpush1.msra.mxu0 0.0
    %4214 = vmatprep.subr.mxu0 0.0
    %4215 = vmatpush1.msra.mxu0 0.0
    %4216 = vmatprep.subr.mxu0 0.0
    %4217 = vmatpush1.msra.mxu0 0.0
    %4218 = vmatprep.subr.mxu0 0.0
    %4219 = vmatpush1.msra.mxu0 0.0
    %4220 = vmatprep.subr.mxu0 0.0
    %4221 = vmatpush1.msra.mxu0 0.0
    %4222 = vmatprep.subr.mxu0 0.0
    %4223 = vmatpush1.msra.mxu0 0.0
    %4224 = vmatprep.subr.mxu0 0.0
    %4225 = vmatpush1.msra.mxu0 0.0
    %4226 = vmatprep.subr.mxu0 0.0
    %4227 = vmatpush1.msra.mxu0 0.0
    %4228 = vmatprep.subr.mxu0 0.0
    %4229 = vmatpush1.msra.mxu0 0.0
    %4230 = vmatprep.subr.mxu0 0.0
    %4231 = vmatpush1.msra.mxu0 0.0
    %4232 = vmatprep.subr.mxu0 0.0
    %4233 = vmatpush1.msra.mxu0 0.0
    %4234 = vmatprep.subr.mxu0 0.0
    %4235 = vmatpush1.msra.mxu0 0.0
    %4236 = vmatprep.subr.mxu0 0.0
    %4237 = vmatpush1.msra.mxu0 0.0
    %4238 = vmatprep.subr.mxu0 0.0
    %4239 = vmatpush1.msra.mxu0 0.0
    %4240 = vmatprep.subr.mxu0 0.0
    %4241 = vmatpush1.msra.mxu0 0.0
    %4242 = vmatprep.subr.mxu0 0.0
    %4243 = vmatpush1.msra.mxu0 0.0
    %4244 = vmatprep.subr.mxu0 0.0
    %4245 = vmatpush1.msra.mxu0 0.0
    %4246 = vmatprep.subr.mxu0 0.0
    %4247 = vmatpush1.msra.mxu0 0.0
    %4248 = vmatprep.subr.mxu0 0.0
    %4249 = vmatpush1.msra.mxu0 0.0
    %4250 = vmatprep.subr.mxu0 0.0
    %4251 = vmatpush1.msra.mxu0 0.0
    %4252 = vmatprep.subr.mxu0 0.0
    %4253 = vmatpush1.msra.mxu0 0.0
    %4254 = vmatprep.subr.mxu0 0.0
    %4255 = vmatpush1.msra.mxu0 0.0
    %4256 = vmatprep.subr.mxu0 0.0
    %4257 = vmatpush1.msra.mxu0 0.0
    %4258 = vmatprep.subr.mxu0 0.0
    %4259 = vmatpush1.msra.mxu0 0.0
    %4260 = vmatprep.subr.mxu0 0.0
    %4261 = vmatpush1.msra.mxu0 0.0
    %4262 = vmatprep.mubr.f32.mxu0 0.0
    %v4263 = vand.u32 %v3915, 4294901760
    %v4264 = vsub.f32 %v3915, %v4263
    %v4265 = vand.u32 %v4264, 4294901760
    %4266 = vmatmul.mubr.f32.gmra.mrb[0].mxu0 %v4265
    %v4267 = vpop.f32.mrb[0].mxu0
    %v4268 = vadd.f32 %v4188, %v4267
    %v4269 = vpop.f32.mrb[0].mxu0
    %4270 = vdwg.mxu0
    %4271 = vmatprep.subr.mxu0 0.0
    %v4272 = vand.u32 %v403, 4294901760
    %v4273 = vsub.f32 %v403, %v4272
    %v4274 = vand.u32 %v4273, 4294901760
    %4275 = vmatpush1.msra.mxu0 %v4274
    %4276 = vmatprep.subr.mxu0 0.0
    %v4277 = vand.u32 %v404, 4294901760
    %v4278 = vsub.f32 %v404, %v4277
    %v4279 = vand.u32 %v4278, 4294901760
    %4280 = vmatpush1.msra.mxu0 %v4279
    %4281 = vmatprep.subr.mxu0 0.0
    %v4282 = vand.u32 %v405, 4294901760
    %v4283 = vsub.f32 %v405, %v4282
    %v4284 = vand.u32 %v4283, 4294901760
    %4285 = vmatpush1.msra.mxu0 %v4284
    %4286 = vmatprep.subr.mxu0 0.0
    %v4287 = vand.u32 %v406, 4294901760
    %v4288 = vsub.f32 %v406, %v4287
    %v4289 = vand.u32 %v4288, 4294901760
    %4290 = vmatpush1.msra.mxu0 %v4289
    %4291 = vmatprep.subr.mxu0 0.0
    %v4292 = vand.u32 %v407, 4294901760
    %v4293 = vsub.f32 %v407, %v4292
    %v4294 = vand.u32 %v4293, 4294901760
    %4295 = vmatpush1.msra.mxu0 %v4294
    %4296 = vmatprep.subr.mxu0 0.0
    %v4297 = vand.u32 %v408, 4294901760
    %v4298 = vsub.f32 %v408, %v4297
    %v4299 = vand.u32 %v4298, 4294901760
    %4300 = vmatpush1.msra.mxu0 %v4299
    %4301 = vmatprep.subr.mxu0 0.0
    %v4302 = vand.u32 %v723, 4294901760
    %v4303 = vsub.f32 %v723, %v4302
    %v4304 = vand.u32 %v4303, 4294901760
    %4305 = vmatpush1.msra.mxu0 %v4304
    %4306 = vmatprep.subr.mxu0 0.0
    %4307 = vmatpush1.msra.mxu0 0.0
    %4308 = vmatprep.subr.mxu0 0.0
    %4309 = vmatpush1.msra.mxu0 0.0
    %4310 = vmatprep.subr.mxu0 0.0
    %4311 = vmatpush1.msra.mxu0 0.0
    %4312 = vmatprep.subr.mxu0 0.0
    %4313 = vmatpush1.msra.mxu0 0.0
    %4314 = vmatprep.subr.mxu0 0.0
    %4315 = vmatpush1.msra.mxu0 0.0
    %4316 = vmatprep.subr.mxu0 0.0
    %4317 = vmatpush1.msra.mxu0 0.0
    %4318 = vmatprep.subr.mxu0 0.0
    %4319 = vmatpush1.msra.mxu0 0.0
    %4320 = vmatprep.subr.mxu0 0.0
    %4321 = vmatpush1.msra.mxu0 0.0
    %4322 = vmatprep.subr.mxu0 0.0
    %4323 = vmatpush1.msra.mxu0 0.0
    %4324 = vmatprep.subr.mxu0 0.0
    %4325 = vmatpush1.msra.mxu0 0.0
    %4326 = vmatprep.subr.mxu0 0.0
    %4327 = vmatpush1.msra.mxu0 0.0
    %4328 = vmatprep.subr.mxu0 0.0
    %4329 = vmatpush1.msra.mxu0 0.0
    %4330 = vmatprep.subr.mxu0 0.0
    %4331 = vmatpush1.msra.mxu0 0.0
    %4332 = vmatprep.subr.mxu0 0.0
    %4333 = vmatpush1.msra.mxu0 0.0
    %4334 = vmatprep.subr.mxu0 0.0
    %4335 = vmatpush1.msra.mxu0 0.0
    %4336 = vmatprep.subr.mxu0 0.0
    %4337 = vmatpush1.msra.mxu0 0.0
    %4338 = vmatprep.subr.mxu0 0.0
    %4339 = vmatpush1.msra.mxu0 0.0
    %4340 = vmatprep.subr.mxu0 0.0
    %4341 = vmatpush1.msra.mxu0 0.0
    %4342 = vmatprep.subr.mxu0 0.0
    %4343 = vmatpush1.msra.mxu0 0.0
    %4344 = vmatprep.subr.mxu0 0.0
    %4345 = vmatpush1.msra.mxu0 0.0
    %4346 = vmatprep.subr.mxu0 0.0
    %4347 = vmatpush1.msra.mxu0 0.0
    %4348 = vmatprep.subr.mxu0 0.0
    %4349 = vmatpush1.msra.mxu0 0.0
    %4350 = vmatprep.subr.mxu0 0.0
    %4351 = vmatpush1.msra.mxu0 0.0
    %4352 = vmatprep.subr.mxu0 0.0
    %4353 = vmatpush1.msra.mxu0 0.0
    %4354 = vmatprep.subr.mxu0 0.0
    %4355 = vmatpush1.msra.mxu0 0.0
    %4356 = vmatprep.mubr.f32.mxu0 0.0
    %v4357 = vand.u32 %v3915, 4294901760
    %4358 = vmatmul.mubr.f32.gmra.mrb[0].mxu0 %v4357
    %v4359 = vpop.f32.mrb[0].mxu0
    %v4360 = vadd.f32 %v4268, %v4359
    %v4361 = vpop.f32.mrb[0].mxu0
    %4362 = vdwg.mxu0
    %4363 = vmatprep.subr.mxu0 0.0
    %v4364 = vand.u32 %v403, 4294901760
    %4365 = vmatpush1.msra.mxu0 %v4364
    %4366 = vmatprep.subr.mxu0 0.0
    %v4367 = vand.u32 %v404, 4294901760
    %4368 = vmatpush1.msra.mxu0 %v4367
    %4369 = vmatprep.subr.mxu0 0.0
    %v4370 = vand.u32 %v405, 4294901760
    %4371 = vmatpush1.msra.mxu0 %v4370
    %4372 = vmatprep.subr.mxu0 0.0
    %v4373 = vand.u32 %v406, 4294901760
    %4374 = vmatpush1.msra.mxu0 %v4373
    %4375 = vmatprep.subr.mxu0 0.0
    %v4376 = vand.u32 %v407, 4294901760
    %4377 = vmatpush1.msra.mxu0 %v4376
    %4378 = vmatprep.subr.mxu0 0.0
    %v4379 = vand.u32 %v408, 4294901760
    %4380 = vmatpush1.msra.mxu0 %v4379
    %4381 = vmatprep.subr.mxu0 0.0
    %v4382 = vand.u32 %v723, 4294901760
    %4383 = vmatpush1.msra.mxu0 %v4382
    %4384 = vmatprep.subr.mxu0 0.0
    %4385 = vmatpush1.msra.mxu0 0.0
    %4386 = vmatprep.subr.mxu0 0.0
    %4387 = vmatpush1.msra.mxu0 0.0
    %4388 = vmatprep.subr.mxu0 0.0
    %4389 = vmatpush1.msra.mxu0 0.0
    %4390 = vmatprep.subr.mxu0 0.0
    %4391 = vmatpush1.msra.mxu0 0.0
    %4392 = vmatprep.subr.mxu0 0.0
    %4393 = vmatpush1.msra.mxu0 0.0
    %4394 = vmatprep.subr.mxu0 0.0
    %4395 = vmatpush1.msra.mxu0 0.0
    %4396 = vmatprep.subr.mxu0 0.0
    %4397 = vmatpush1.msra.mxu0 0.0
    %4398 = vmatprep.subr.mxu0 0.0
    %4399 = vmatpush1.msra.mxu0 0.0
    %4400 = vmatprep.subr.mxu0 0.0
    %4401 = vmatpush1.msra.mxu0 0.0
    %4402 = vmatprep.subr.mxu0 0.0
    %4403 = vmatpush1.msra.mxu0 0.0
    %4404 = vmatprep.subr.mxu0 0.0
    %4405 = vmatpush1.msra.mxu0 0.0
    %4406 = vmatprep.subr.mxu0 0.0
    %4407 = vmatpush1.msra.mxu0 0.0
    %4408 = vmatprep.subr.mxu0 0.0
    %4409 = vmatpush1.msra.mxu0 0.0
    %4410 = vmatprep.subr.mxu0 0.0
    %4411 = vmatpush1.msra.mxu0 0.0
    %4412 = vmatprep.subr.mxu0 0.0
    %4413 = vmatpush1.msra.mxu0 0.0
    %4414 = vmatprep.subr.mxu0 0.0
    %4415 = vmatpush1.msra.mxu0 0.0
    %4416 = vmatprep.subr.mxu0 0.0
    %4417 = vmatpush1.msra.mxu0 0.0
    %4418 = vmatprep.subr.mxu0 0.0
    %4419 = vmatpush1.msra.mxu0 0.0
    %4420 = vmatprep.subr.mxu0 0.0
    %4421 = vmatpush1.msra.mxu0 0.0
    %4422 = vmatprep.subr.mxu0 0.0
    %4423 = vmatpush1.msra.mxu0 0.0
    %4424 = vmatprep.subr.mxu0 0.0
    %4425 = vmatpush1.msra.mxu0 0.0
    %4426 = vmatprep.subr.mxu0 0.0
    %4427 = vmatpush1.msra.mxu0 0.0
    %4428 = vmatprep.subr.mxu0 0.0
    %4429 = vmatpush1.msra.mxu0 0.0
    %4430 = vmatprep.subr.mxu0 0.0
    %4431 = vmatpush1.msra.mxu0 0.0
    %4432 = vmatprep.subr.mxu0 0.0
    %4433 = vmatpush1.msra.mxu0 0.0
    %4434 = vmatprep.mubr.f32.mxu0 0.0
    %v4435 = vand.u32 %v3915, 4294901760
    %4436 = vmatmul.mubr.f32.gmra.mrb[0].mxu0 %v4435
    %v4437 = vpop.f32.mrb[0].mxu0
    %v4438 = vadd.f32 %v4360, %v4437
    %v4439 = vpop.f32.mrb[0].mxu0
    %4440 = vdwg.mxu0
    %4441 = vrot.lane.b32.xlu0 %v431, 121
    %v4442 = vpop.permute.xlu0 %4441
    %v4444 = vsel %vm436, %v4438, %v4442
    %v4446 = vsel %vm438, %v4444, 0
    %4448 = vmatprep.subr.mxu0 0.0
    %4449 = vmatpush1.msra.mxu0 %v391
    %4450 = vmatprep.subr.mxu0 0.0
    %4451 = vmatpush1.msra.mxu0 %v444
    %4452 = vmatprep.subr.mxu0 0.0
    %4453 = vmatpush1.msra.mxu0 0.0
    %4454 = vmatprep.subr.mxu0 0.0
    %4455 = vmatpush1.msra.mxu0 0.0
    %4456 = vmatprep.subr.mxu0 0.0
    %4457 = vmatpush1.msra.mxu0 0.0
    %4458 = vmatprep.subr.mxu0 0.0
    %4459 = vmatpush1.msra.mxu0 0.0
    %4460 = vmatprep.subr.mxu0 0.0
    %4461 = vmatpush1.msra.mxu0 0.0
    %4462 = vmatprep.subr.mxu0 0.0
    %4463 = vmatpush1.msra.mxu0 0.0
    %4464 = vmatprep.subr.mxu0 0.0
    %4465 = vmatpush1.msra.mxu0 0.0
    %4466 = vmatprep.subr.mxu0 0.0
    %4467 = vmatpush1.msra.mxu0 0.0
    %4468 = vmatprep.subr.mxu0 0.0
    %4469 = vmatpush1.msra.mxu0 0.0
    %4470 = vmatprep.subr.mxu0 0.0
    %4471 = vmatpush1.msra.mxu0 0.0
    %4472 = vmatprep.subr.mxu0 0.0
    %4473 = vmatpush1.msra.mxu0 0.0
    %4474 = vmatprep.subr.mxu0 0.0
    %4475 = vmatpush1.msra.mxu0 0.0
    %4476 = vmatprep.subr.mxu0 0.0
    %4477 = vmatpush1.msra.mxu0 0.0
    %4478 = vmatprep.subr.mxu0 0.0
    %4479 = vmatpush1.msra.mxu0 0.0
    %4480 = vmatprep.subr.mxu0 0.0
    %4481 = vmatpush1.msra.mxu0 0.0
    %4482 = vmatprep.subr.mxu0 0.0
    %4483 = vmatpush1.msra.mxu0 0.0
    %4484 = vmatprep.subr.mxu0 0.0
    %4485 = vmatpush1.msra.mxu0 0.0
    %4486 = vmatprep.subr.mxu0 0.0
    %4487 = vmatpush1.msra.mxu0 0.0
    %4488 = vmatprep.subr.mxu0 0.0
    %4489 = vmatpush1.msra.mxu0 0.0
    %4490 = vmatprep.subr.mxu0 0.0
    %4491 = vmatpush1.msra.mxu0 0.0
    %4492 = vmatprep.subr.mxu0 0.0
    %4493 = vmatpush1.msra.mxu0 0.0
    %4494 = vmatprep.subr.mxu0 0.0
    %4495 = vmatpush1.msra.mxu0 0.0
    %4496 = vmatprep.subr.mxu0 0.0
    %4497 = vmatpush1.msra.mxu0 0.0
    %4498 = vmatprep.subr.mxu0 0.0
    %4499 = vmatpush1.msra.mxu0 0.0
    %4500 = vmatprep.subr.mxu0 0.0
    %4501 = vmatpush1.msra.mxu0 0.0
    %4502 = vmatprep.subr.mxu0 0.0
    %4503 = vmatpush1.msra.mxu0 0.0
    %4504 = vmatprep.subr.mxu0 0.0
    %4505 = vmatpush1.msra.mxu0 0.0
    %4506 = vmatprep.subr.mxu0 0.0
    %4507 = vmatpush1.msra.mxu0 0.0
    %4508 = vmatprep.subr.mxu0 0.0
    %4509 = vmatpush1.msra.mxu0 0.0
    %4510 = vmatprep.subr.mxu0 0.0
    %4511 = vmatpush1.msra.mxu0 0.0
    %4512 = vmatprep.mubr.f32.mxu0 0.0
    %4513 = vmatmul.mubr.f32.gmra.mrb[0].mxu0 %v4446
    %v4514 = vpop.f32.mrb[0].mxu0
    %v4515 = vadd.f32 %v415, %v4514
    %v4516 = vpop.f32.mrb[0].mxu0
    %4517 = vdwg.mxu0
    %v4518 = vtanh.pop %v4515
    %v4520 = vsel %vm155, %v4518, 0
    %4522 = vmatprep.subr.mxu0 0.0
    %4523 = vmatpush1.msra.mxu0 %v393
    %4524 = vmatprep.subr.mxu0 0.0
    %4525 = vmatpush1.msra.mxu0 %v394
    %4526 = vmatprep.subr.mxu0 0.0
    %4527 = vmatpush1.msra.mxu0 %v395
    %4528 = vmatprep.subr.mxu0 0.0
    %4529 = vmatpush1.msra.mxu0 %v396
    %4530 = vmatprep.subr.mxu0 0.0
    %4531 = vmatpush1.msra.mxu0 0.0
    %4532 = vmatprep.subr.mxu0 0.0
    %4533 = vmatpush1.msra.mxu0 0.0
    %4534 = vmatprep.subr.mxu0 0.0
    %4535 = vmatpush1.msra.mxu0 0.0
    %4536 = vmatprep.subr.mxu0 0.0
    %4537 = vmatpush1.msra.mxu0 0.0
    %4538 = vmatprep.subr.mxu0 0.0
    %4539 = vmatpush1.msra.mxu0 0.0
    %4540 = vmatprep.subr.mxu0 0.0
    %4541 = vmatpush1.msra.mxu0 0.0
    %4542 = vmatprep.subr.mxu0 0.0
    %4543 = vmatpush1.msra.mxu0 0.0
    %4544 = vmatprep.subr.mxu0 0.0
    %4545 = vmatpush1.msra.mxu0 0.0
    %4546 = vmatprep.subr.mxu0 0.0
    %4547 = vmatpush1.msra.mxu0 0.0
    %4548 = vmatprep.subr.mxu0 0.0
    %4549 = vmatpush1.msra.mxu0 0.0
    %4550 = vmatprep.subr.mxu0 0.0
    %4551 = vmatpush1.msra.mxu0 0.0
    %4552 = vmatprep.subr.mxu0 0.0
    %4553 = vmatpush1.msra.mxu0 0.0
    %4554 = vmatprep.subr.mxu0 0.0
    %4555 = vmatpush1.msra.mxu0 0.0
    %4556 = vmatprep.subr.mxu0 0.0
    %4557 = vmatpush1.msra.mxu0 0.0
    %4558 = vmatprep.subr.mxu0 0.0
    %4559 = vmatpush1.msra.mxu0 0.0
    %4560 = vmatprep.subr.mxu0 0.0
    %4561 = vmatpush1.msra.mxu0 0.0
    %4562 = vmatprep.subr.mxu0 0.0
    %4563 = vmatpush1.msra.mxu0 0.0
    %4564 = vmatprep.subr.mxu0 0.0
    %4565 = vmatpush1.msra.mxu0 0.0
    %4566 = vmatprep.subr.mxu0 0.0
    %4567 = vmatpush1.msra.mxu0 0.0
    %4568 = vmatprep.subr.mxu0 0.0
    %4569 = vmatpush1.msra.mxu0 0.0
    %4570 = vmatprep.subr.mxu0 0.0
    %4571 = vmatpush1.msra.mxu0 0.0
    %4572 = vmatprep.subr.mxu0 0.0
    %4573 = vmatpush1.msra.mxu0 0.0
    %4574 = vmatprep.subr.mxu0 0.0
    %4575 = vmatpush1.msra.mxu0 0.0
    %4576 = vmatprep.subr.mxu0 0.0
    %4577 = vmatpush1.msra.mxu0 0.0
    %4578 = vmatprep.subr.mxu0 0.0
    %4579 = vmatpush1.msra.mxu0 0.0
    %4580 = vmatprep.subr.mxu0 0.0
    %4581 = vmatpush1.msra.mxu0 0.0
    %4582 = vmatprep.subr.mxu0 0.0
    %4583 = vmatpush1.msra.mxu0 0.0
    %4584 = vmatprep.subr.mxu0 0.0
    %4585 = vmatpush1.msra.mxu0 0.0
    %4586 = vmatprep.mubr.f32.mxu0 0.0
    %4587 = vmatmul.mubr.f32.gmra.mrb[0].mxu0 %v4520
    %v4588 = vpop.f32.mrb[0].mxu0
    %v4589 = vadd.f32 %v422, %v4588
    %v4590 = vpop.f32.mrb[0].mxu0
    %4591 = vdwg.mxu0
    %v4592 = vtanh.pop %v4589
    %4594 = vrot.lane.b32.xlu0 %v4592, 11
    %v4595 = vpop.permute.xlu0 %4594
    %v4597 = vsel %vm438, %v4444, %v4595
    %v4599 = vsel %vm596, %v4597, 0
    %4601 = vmatprep.subr.mxu0 0.0
    %4602 = vmatpush1.msra.mxu0 %v397
    %4603 = vmatprep.subr.mxu0 0.0
    %4604 = vmatpush1.msra.mxu0 %v398
    %4605 = vmatprep.subr.mxu0 0.0
    %4606 = vmatpush1.msra.mxu0 %v399
    %4607 = vmatprep.subr.mxu0 0.0
    %4608 = vmatpush1.msra.mxu0 %v400
    %4609 = vmatprep.subr.mxu0 0.0
    %4610 = vmatpush1.msra.mxu0 %v401
    %4611 = vmatprep.subr.mxu0 0.0
    %4612 = vmatpush1.msra.mxu0 %v601
    %4613 = vmatprep.subr.mxu0 0.0
    %4614 = vmatpush1.msra.mxu0 0.0
    %4615 = vmatprep.subr.mxu0 0.0
    %4616 = vmatpush1.msra.mxu0 0.0
    %4617 = vmatprep.subr.mxu0 0.0
    %4618 = vmatpush1.msra.mxu0 0.0
    %4619 = vmatprep.subr.mxu0 0.0
    %4620 = vmatpush1.msra.mxu0 0.0
    %4621 = vmatprep.subr.mxu0 0.0
    %4622 = vmatpush1.msra.mxu0 0.0
    %4623 = vmatprep.subr.mxu0 0.0
    %4624 = vmatpush1.msra.mxu0 0.0
    %4625 = vmatprep.subr.mxu0 0.0
    %4626 = vmatpush1.msra.mxu0 0.0
    %4627 = vmatprep.subr.mxu0 0.0
    %4628 = vmatpush1.msra.mxu0 0.0
    %4629 = vmatprep.subr.mxu0 0.0
    %4630 = vmatpush1.msra.mxu0 0.0
    %4631 = vmatprep.subr.mxu0 0.0
    %4632 = vmatpush1.msra.mxu0 0.0
    %4633 = vmatprep.subr.mxu0 0.0
    %4634 = vmatpush1.msra.mxu0 0.0
    %4635 = vmatprep.subr.mxu0 0.0
    %4636 = vmatpush1.msra.mxu0 0.0
    %4637 = vmatprep.subr.mxu0 0.0
    %4638 = vmatpush1.msra.mxu0 0.0
    %4639 = vmatprep.subr.mxu0 0.0
    %4640 = vmatpush1.msra.mxu0 0.0
    %4641 = vmatprep.subr.mxu0 0.0
    %4642 = vmatpush1.msra.mxu0 0.0
    %4643 = vmatprep.subr.mxu0 0.0
    %4644 = vmatpush1.msra.mxu0 0.0
    %4645 = vmatprep.subr.mxu0 0.0
    %4646 = vmatpush1.msra.mxu0 0.0
    %4647 = vmatprep.subr.mxu0 0.0
    %4648 = vmatpush1.msra.mxu0 0.0
    %4649 = vmatprep.subr.mxu0 0.0
    %4650 = vmatpush1.msra.mxu0 0.0
    %4651 = vmatprep.subr.mxu0 0.0
    %4652 = vmatpush1.msra.mxu0 0.0
    %4653 = vmatprep.subr.mxu0 0.0
    %4654 = vmatpush1.msra.mxu0 0.0
    %4655 = vmatprep.subr.mxu0 0.0
    %4656 = vmatpush1.msra.mxu0 0.0
    %4657 = vmatprep.subr.mxu0 0.0
    %4658 = vmatpush1.msra.mxu0 0.0
    %4659 = vmatprep.subr.mxu0 0.0
    %4660 = vmatpush1.msra.mxu0 0.0
    %4661 = vmatprep.subr.mxu0 0.0
    %4662 = vmatpush1.msra.mxu0 0.0
    %4663 = vmatprep.subr.mxu0 0.0
    %4664 = vmatpush1.msra.mxu0 0.0
    %4665 = vmatprep.mubr.f32.mxu0 0.0
    %4666 = vmatmul.mubr.f32.gmra.mrb[0].mxu0 %v4599
    %v4667 = vpop.f32.mrb[0].mxu0
    %v4668 = vadd.f32 %v429, %v4667
    %v4669 = vpop.f32.mrb[0].mxu0
    %4670 = vdwg.mxu0
    %4672 = vset.pattern.permute.xlu0 0
    %4673 = vperm.xlu0 %4672, %v4668
    %v4674 = vpop.permute.xlu0 %4673
    %v4676 = vmul.f32 %v4674, %v4444
    %4677 = vset.pattern.permute.xlu0 1
    %4678 = vperm.xlu0 %4677, %v4668
    %v4679 = vpop.permute.xlu0 %4678
    %v4681 = vmul.f32 %v4679, %v4444
    %4682 = vset.pattern.permute.xlu0 2
    %4683 = vperm.xlu0 %4682, %v4668
    %v4684 = vpop.permute.xlu0 %4683
    %v4686 = vmul.f32 %v4684, %v4444
    %4687 = vset.pattern.permute.xlu0 3
    %4688 = vperm.xlu0 %4687, %v4668
    %v4689 = vpop.permute.xlu0 %4688
    %v4691 = vmul.f32 %v4689, %v4444
    %4693 = vrot.lane.b32.xlu0 %v4676, 11
    %v4694 = vpop.permute.xlu0 %4693
    %4697 = vrot.lane.b32.xlu0 %v4681, 22
    %v4698 = vpop.permute.xlu0 %4697
    %4701 = vrot.lane.b32.xlu0 %v4686, 33
    %v4702 = vpop.permute.xlu0 %4701
    %4705 = vrot.lane.b32.xlu0 %v4691, 44
    %v4706 = vpop.permute.xlu0 %4705
    %v4708 = vsel %vm438, %v4444, %v4694
    %v4709 = vsel %vm711, %v4708, %v4698
    %v4710 = vsel %vm713, %v4709, %v4702
    %v4711 = vsel %vm715, %v4710, %v4706
    %v4713 = vsel %vm717, %v4711, 0
    %4715 = vmatprep.subr.mxu0 0.0
    %v4716 = vand.u32 %v403, 4294901760
    %4717 = vmatpush1.msra.mxu0 %v4716
    %4718 = vmatprep.subr.mxu0 0.0
    %v4719 = vand.u32 %v404, 4294901760
    %4720 = vmatpush1.msra.mxu0 %v4719
    %4721 = vmatprep.subr.mxu0 0.0
    %v4722 = vand.u32 %v405, 4294901760
    %4723 = vmatpush1.msra.mxu0 %v4722
    %4724 = vmatprep.subr.mxu0 0.0
    %v4725 = vand.u32 %v406, 4294901760
    %4726 = vmatpush1.msra.mxu0 %v4725
    %4727 = vmatprep.subr.mxu0 0.0
    %v4728 = vand.u32 %v407, 4294901760
    %4729 = vmatpush1.msra.mxu0 %v4728
    %4730 = vmatprep.subr.mxu0 0.0
    %v4731 = vand.u32 %v408, 4294901760
    %4732 = vmatpush1.msra.mxu0 %v4731
    %4733 = vmatprep.subr.mxu0 0.0
    %v4734 = vand.u32 %v723, 4294901760
    %4735 = vmatpush1.msra.mxu0 %v4734
    %4736 = vmatprep.subr.mxu0 0.0
    %4737 = vmatpush1.msra.mxu0 0.0
    %4738 = vmatprep.subr.mxu0 0.0
    %4739 = vmatpush1.msra.mxu0 0.0
    %4740 = vmatprep.subr.mxu0 0.0
    %4741 = vmatpush1.msra.mxu0 0.0
    %4742 = vmatprep.subr.mxu0 0.0
    %4743 = vmatpush1.msra.mxu0 0.0
    %4744 = vmatprep.subr.mxu0 0.0
    %4745 = vmatpush1.msra.mxu0 0.0
    %4746 = vmatprep.subr.mxu0 0.0
    %4747 = vmatpush1.msra.mxu0 0.0
    %4748 = vmatprep.subr.mxu0 0.0
    %4749 = vmatpush1.msra.mxu0 0.0
    %4750 = vmatprep.subr.mxu0 0.0
    %4751 = vmatpush1.msra.mxu0 0.0
    %4752 = vmatprep.subr.mxu0 0.0
    %4753 = vmatpush1.msra.mxu0 0.0
    %4754 = vmatprep.subr.mxu0 0.0
    %4755 = vmatpush1.msra.mxu0 0.0
    %4756 = vmatprep.subr.mxu0 0.0
    %4757 = vmatpush1.msra.mxu0 0.0
    %4758 = vmatprep.subr.mxu0 0.0
    %4759 = vmatpush1.msra.mxu0 0.0
    %4760 = vmatprep.subr.mxu0 0.0
    %4761 = vmatpush1.msra.mxu0 0.0
    %4762 = vmatprep.subr.mxu0 0.0
    %4763 = vmatpush1.msra.mxu0 0.0
    %4764 = vmatprep.subr.mxu0 0.0
    %4765 = vmatpush1.msra.mxu0 0.0
    %4766 = vmatprep.subr.mxu0 0.0
    %4767 = vmatpush1.msra.mxu0 0.0
    %4768 = vmatprep.subr.mxu0 0.0
    %4769 = vmatpush1.msra.mxu0 0.0
    %4770 = vmatprep.subr.mxu0 0.0
    %4771 = vmatpush1.msra.mxu0 0.0
    %4772 = vmatprep.subr.mxu0 0.0
    %4773 = vmatpush1.msra.mxu0 0.0
    %4774 = vmatprep.subr.mxu0 0.0
    %4775 = vmatpush1.msra.mxu0 0.0
    %4776 = vmatprep.subr.mxu0 0.0
    %4777 = vmatpush1.msra.mxu0 0.0
    %4778 = vmatprep.subr.mxu0 0.0
    %4779 = vmatpush1.msra.mxu0 0.0
    %4780 = vmatprep.subr.mxu0 0.0
    %4781 = vmatpush1.msra.mxu0 0.0
    %4782 = vmatprep.subr.mxu0 0.0
    %4783 = vmatpush1.msra.mxu0 0.0
    %4784 = vmatprep.subr.mxu0 0.0
    %4785 = vmatpush1.msra.mxu0 0.0
    %4786 = vmatprep.mubr.f32.mxu0 0.0
    %v4787 = vand.u32 %v4713, 4294901760
    %v4788 = vsub.f32 %v4713, %v4787
    %v4789 = vand.u32 %v4788, 4294901760
    %v4790 = vsub.f32 %v4788, %v4789
    %v4791 = vand.u32 %v4790, 4294901760
    %4792 = vmatmul.mubr.f32.gmra.mrb[0].mxu0 %v4791
    %v4793 = vpop.f32.mrb[0].mxu0
    %v4794 = vadd.f32 0.0, %v4793
    %v4795 = vpop.f32.mrb[0].mxu0
    %4796 = vdwg.mxu0
    %4797 = vmatprep.subr.mxu0 0.0
    %v4798 = vand.u32 %v403, 4294901760
    %v4799 = vsub.f32 %v403, %v4798
    %v4800 = vand.u32 %v4799, 4294901760
    %v4801 = vsub.f32 %v4799, %v4800
    %v4802 = vand.u32 %v4801, 4294901760
    %4803 = vmatpush1.msra.mxu0 %v4802
    %4804 = vmatprep.subr.mxu0 0.0
    %v4805 = vand.u32 %v404, 4294901760
    %v4806 = vsub.f32 %v404, %v4805
    %v4807 = vand.u32 %v4806, 4294901760
    %v4808 = vsub.f32 %v4806, %v4807
    %v4809 = vand.u32 %v4808, 4294901760
    %4810 = vmatpush1.msra.mxu0 %v4809
    %4811 = vmatprep.subr.mxu0 0.0
    %v4812 = vand.u32 %v405, 4294901760
    %v4813 = vsub.f32 %v405, %v4812
    %v4814 = vand.u32 %v4813, 4294901760
    %v4815 = vsub.f32 %v4813, %v4814
    %v4816 = vand.u32 %v4815, 4294901760
    %4817 = vmatpush1.msra.mxu0 %v4816
    %4818 = vmatprep.subr.mxu0 0.0
    %v4819 = vand.u32 %v406, 4294901760
    %v4820 = vsub.f32 %v406, %v4819
    %v4821 = vand.u32 %v4820, 4294901760
    %v4822 = vsub.f32 %v4820, %v4821
    %v4823 = vand.u32 %v4822, 4294901760
    %4824 = vmatpush1.msra.mxu0 %v4823
    %4825 = vmatprep.subr.mxu0 0.0
    %v4826 = vand.u32 %v407, 4294901760
    %v4827 = vsub.f32 %v407, %v4826
    %v4828 = vand.u32 %v4827, 4294901760
    %v4829 = vsub.f32 %v4827, %v4828
    %v4830 = vand.u32 %v4829, 4294901760
    %4831 = vmatpush1.msra.mxu0 %v4830
    %4832 = vmatprep.subr.mxu0 0.0
    %v4833 = vand.u32 %v408, 4294901760
    %v4834 = vsub.f32 %v408, %v4833
    %v4835 = vand.u32 %v4834, 4294901760
    %v4836 = vsub.f32 %v4834, %v4835
    %v4837 = vand.u32 %v4836, 4294901760
    %4838 = vmatpush1.msra.mxu0 %v4837
    %4839 = vmatprep.subr.mxu0 0.0
    %v4840 = vand.u32 %v723, 4294901760
    %v4841 = vsub.f32 %v723, %v4840
    %v4842 = vand.u32 %v4841, 4294901760
    %v4843 = vsub.f32 %v4841, %v4842
    %v4844 = vand.u32 %v4843, 4294901760
    %4845 = vmatpush1.msra.mxu0 %v4844
    %4846 = vmatprep.subr.mxu0 0.0
    %4847 = vmatpush1.msra.mxu0 0.0
    %4848 = vmatprep.subr.mxu0 0.0
    %4849 = vmatpush1.msra.mxu0 0.0
    %4850 = vmatprep.subr.mxu0 0.0
    %4851 = vmatpush1.msra.mxu0 0.0
    %4852 = vmatprep.subr.mxu0 0.0
    %4853 = vmatpush1.msra.mxu0 0.0
    %4854 = vmatprep.subr.mxu0 0.0
    %4855 = vmatpush1.msra.mxu0 0.0
    %4856 = vmatprep.subr.mxu0 0.0
    %4857 = vmatpush1.msra.mxu0 0.0
    %4858 = vmatprep.subr.mxu0 0.0
    %4859 = vmatpush1.msra.mxu0 0.0
    %4860 = vmatprep.subr.mxu0 0.0
    %4861 = vmatpush1.msra.mxu0 0.0
    %4862 = vmatprep.subr.mxu0 0.0
    %4863 = vmatpush1.msra.mxu0 0.0
    %4864 = vmatprep.subr.mxu0 0.0
    %4865 = vmatpush1.msra.mxu0 0.0
    %4866 = vmatprep.subr.mxu0 0.0
    %4867 = vmatpush1.msra.mxu0 0.0
    %4868 = vmatprep.subr.mxu0 0.0
    %4869 = vmatpush1.msra.mxu0 0.0
    %4870 = vmatprep.subr.mxu0 0.0
    %4871 = vmatpush1.msra.mxu0 0.0
    %4872 = vmatprep.subr.mxu0 0.0
    %4873 = vmatpush1.msra.mxu0 0.0
    %4874 = vmatprep.subr.mxu0 0.0
    %4875 = vmatpush1.msra.mxu0 0.0
    %4876 = vmatprep.subr.mxu0 0.0
    %4877 = vmatpush1.msra.mxu0 0.0
    %4878 = vmatprep.subr.mxu0 0.0
    %4879 = vmatpush1.msra.mxu0 0.0
    %4880 = vmatprep.subr.mxu0 0.0
    %4881 = vmatpush1.msra.mxu0 0.0
    %4882 = vmatprep.subr.mxu0 0.0
    %4883 = vmatpush1.msra.mxu0 0.0
    %4884 = vmatprep.subr.mxu0 0.0
    %4885 = vmatpush1.msra.mxu0 0.0
    %4886 = vmatprep.subr.mxu0 0.0
    %4887 = vmatpush1.msra.mxu0 0.0
    %4888 = vmatprep.subr.mxu0 0.0
    %4889 = vmatpush1.msra.mxu0 0.0
    %4890 = vmatprep.subr.mxu0 0.0
    %4891 = vmatpush1.msra.mxu0 0.0
    %4892 = vmatprep.subr.mxu0 0.0
    %4893 = vmatpush1.msra.mxu0 0.0
    %4894 = vmatprep.subr.mxu0 0.0
    %4895 = vmatpush1.msra.mxu0 0.0
    %4896 = vmatprep.mubr.f32.mxu0 0.0
    %v4897 = vand.u32 %v4713, 4294901760
    %4898 = vmatmul.mubr.f32.gmra.mrb[0].mxu0 %v4897
    %v4899 = vpop.f32.mrb[0].mxu0
    %v4900 = vadd.f32 %v4794, %v4899
    %v4901 = vpop.f32.mrb[0].mxu0
    %4902 = vdwg.mxu0
    %4903 = vmatprep.subr.mxu0 0.0
    %v4904 = vand.u32 %v403, 4294901760
    %v4905 = vsub.f32 %v403, %v4904
    %4906 = vmatpush1.msra.mxu0 %v4905
    %4907 = vmatprep.subr.mxu0 0.0
    %v4908 = vand.u32 %v404, 4294901760
    %v4909 = vsub.f32 %v404, %v4908
    %4910 = vmatpush1.msra.mxu0 %v4909
    %4911 = vmatprep.subr.mxu0 0.0
    %v4912 = vand.u32 %v405, 4294901760
    %v4913 = vsub.f32 %v405, %v4912
    %4914 = vmatpush1.msra.mxu0 %v4913
    %4915 = vmatprep.subr.mxu0 0.0
    %v4916 = vand.u32 %v406, 4294901760
    %v4917 = vsub.f32 %v406, %v4916
    %4918 = vmatpush1.msra.mxu0 %v4917
    %4919 = vmatprep.subr.mxu0 0.0
    %v4920 = vand.u32 %v407, 4294901760
    %v4921 = vsub.f32 %v407, %v4920
    %4922 = vmatpush1.msra.mxu0 %v4921
    %4923 = vmatprep.subr.mxu0 0.0
    %v4924 = vand.u32 %v408, 4294901760
    %v4925 = vsub.f32 %v408, %v4924
    %4926 = vmatpush1.msra.mxu0 %v4925
    %4927 = vmatprep.subr.mxu0 0.0
    %v4928 = vand.u32 %v723, 4294901760
    %v4929 = vsub.f32 %v723, %v4928
    %4930 = vmatpush1.msra.mxu0 %v4929
    %4931 = vmatprep.subr.mxu0 0.0
    %4932 = vmatpush1.msra.mxu0 0.0
    %4933 = vmatprep.subr.mxu0 0.0
    %4934 = vmatpush1.msra.mxu0 0.0
    %4935 = vmatprep.subr.mxu0 0.0
    %4936 = vmatpush1.msra.mxu0 0.0
    %4937 = vmatprep.subr.mxu0 0.0
    %4938 = vmatpush1.msra.mxu0 0.0
    %4939 = vmatprep.subr.mxu0 0.0
    %4940 = vmatpush1.msra.mxu0 0.0
    %4941 = vmatprep.subr.mxu0 0.0
    %4942 = vmatpush1.msra.mxu0 0.0
    %4943 = vmatprep.subr.mxu0 0.0
    %4944 = vmatpush1.msra.mxu0 0.0
    %4945 = vmatprep.subr.mxu0 0.0
    %4946 = vmatpush1.msra.mxu0 0.0
    %4947 = vmatprep.subr.mxu0 0.0
    %4948 = vmatpush1.msra.mxu0 0.0
    %4949 = vmatprep.subr.mxu0 0.0
    %4950 = vmatpush1.msra.mxu0 0.0
    %4951 = vmatprep.subr.mxu0 0.0
    %4952 = vmatpush1.msra.mxu0 0.0
    %4953 = vmatprep.subr.mxu0 0.0
    %4954 = vmatpush1.msra.mxu0 0.0
    %4955 = vmatprep.subr.mxu0 0.0
    %4956 = vmatpush1.msra.mxu0 0.0
    %4957 = vmatprep.subr.mxu0 0.0
    %4958 = vmatpush1.msra.mxu0 0.0
    %4959 = vmatprep.subr.mxu0 0.0
    %4960 = vmatpush1.msra.mxu0 0.0
    %4961 = vmatprep.subr.mxu0 0.0
    %4962 = vmatpush1.msra.mxu0 0.0
    %4963 = vmatprep.subr.mxu0 0.0
    %4964 = vmatpush1.msra.mxu0 0.0
    %4965 = vmatprep.subr.mxu0 0.0
    %4966 = vmatpush1.msra.mxu0 0.0
    %4967 = vmatprep.subr.mxu0 0.0
    %4968 = vmatpush1.msra.mxu0 0.0
    %4969 = vmatprep.subr.mxu0 0.0
    %4970 = vmatpush1.msra.mxu0 0.0
    %4971 = vmatprep.subr.mxu0 0.0
    %4972 = vmatpush1.msra.mxu0 0.0
    %4973 = vmatprep.subr.mxu0 0.0
    %4974 = vmatpush1.msra.mxu0 0.0
    %4975 = vmatprep.subr.mxu0 0.0
    %4976 = vmatpush1.msra.mxu0 0.0
    %4977 = vmatprep.subr.mxu0 0.0
    %4978 = vmatpush1.msra.mxu0 0.0
    %4979 = vmatprep.subr.mxu0 0.0
    %4980 = vmatpush1.msra.mxu0 0.0
    %4981 = vmatprep.mubr.f32.mxu0 0.0
    %v4982 = vand.u32 %v4713, 4294901760
    %v4983 = vsub.f32 %v4713, %v4982
    %4984 = vmatmul.mubr.f32.gmra.mrb[0].mxu0 %v4983
    %v4985 = vpop.f32.mrb[0].mxu0
    %v4986 = vadd.f32 %v4900, %v4985
    %v4987 = vpop.f32.mrb[0].mxu0
    %4988 = vdwg.mxu0
    %4989 = vmatprep.subr.mxu0 0.0
    %v4990 = vand.u32 %v403, 4294901760
    %4991 = vmatpush1.msra.mxu0 %v4990
    %4992 = vmatprep.subr.mxu0 0.0
    %v4993 = vand.u32 %v404, 4294901760
    %4994 = vmatpush1.msra.mxu0 %v4993
    %4995 = vmatprep.subr.mxu0 0.0
    %v4996 = vand.u32 %v405, 4294901760
    %4997 = vmatpush1.msra.mxu0 %v4996
    %4998 = vmatprep.subr.mxu0 0.0
    %v4999 = vand.u32 %v406, 4294901760
    %5000 = vmatpush1.msra.mxu0 %v4999
    %5001 = vmatprep.subr.mxu0 0.0
    %v5002 = vand.u32 %v407, 4294901760
    %5003 = vmatpush1.msra.mxu0 %v5002
    %5004 = vmatprep.subr.mxu0 0.0
    %v5005 = vand.u32 %v408, 4294901760
    %5006 = vmatpush1.msra.mxu0 %v5005
    %5007 = vmatprep.subr.mxu0 0.0
    %v5008 = vand.u32 %v723, 4294901760
    %5009 = vmatpush1.msra.mxu0 %v5008
    %5010 = vmatprep.subr.mxu0 0.0
    %5011 = vmatpush1.msra.mxu0 0.0
    %5012 = vmatprep.subr.mxu0 0.0
    %5013 = vmatpush1.msra.mxu0 0.0
    %5014 = vmatprep.subr.mxu0 0.0
    %5015 = vmatpush1.msra.mxu0 0.0
    %5016 = vmatprep.subr.mxu0 0.0
    %5017 = vmatpush1.msra.mxu0 0.0
    %5018 = vmatprep.subr.mxu0 0.0
    %5019 = vmatpush1.msra.mxu0 0.0
    %5020 = vmatprep.subr.mxu0 0.0
    %5021 = vmatpush1.msra.mxu0 0.0
    %5022 = vmatprep.subr.mxu0 0.0
    %5023 = vmatpush1.msra.mxu0 0.0
    %5024 = vmatprep.subr.mxu0 0.0
    %5025 = vmatpush1.msra.mxu0 0.0
    %5026 = vmatprep.subr.mxu0 0.0
    %5027 = vmatpush1.msra.mxu0 0.0
    %5028 = vmatprep.subr.mxu0 0.0
    %5029 = vmatpush1.msra.mxu0 0.0
    %5030 = vmatprep.subr.mxu0 0.0
    %5031 = vmatpush1.msra.mxu0 0.0
    %5032 = vmatprep.subr.mxu0 0.0
    %5033 = vmatpush1.msra.mxu0 0.0
    %5034 = vmatprep.subr.mxu0 0.0
    %5035 = vmatpush1.msra.mxu0 0.0
    %5036 = vmatprep.subr.mxu0 0.0
    %5037 = vmatpush1.msra.mxu0 0.0
    %5038 = vmatprep.subr.mxu0 0.0
    %5039 = vmatpush1.msra.mxu0 0.0
    %5040 = vmatprep.subr.mxu0 0.0
    %5041 = vmatpush1.msra.mxu0 0.0
    %5042 = vmatprep.subr.mxu0 0.0
    %5043 = vmatpush1.msra.mxu0 0.0
    %5044 = vmatprep.subr.mxu0 0.0
    %5045 = vmatpush1.msra.mxu0 0.0
    %5046 = vmatprep.subr.mxu0 0.0
    %5047 = vmatpush1.msra.mxu0 0.0
    %5048 = vmatprep.subr.mxu0 0.0
    %5049 = vmatpush1.msra.mxu0 0.0
    %5050 = vmatprep.subr.mxu0 0.0
    %5051 = vmatpush1.msra.mxu0 0.0
    %5052 = vmatprep.subr.mxu0 0.0
    %5053 = vmatpush1.msra.mxu0 0.0
    %5054 = vmatprep.subr.mxu0 0.0
    %5055 = vmatpush1.msra.mxu0 0.0
    %5056 = vmatprep.subr.mxu0 0.0
    %5057 = vmatpush1.msra.mxu0 0.0
    %5058 = vmatprep.subr.mxu0 0.0
    %5059 = vmatpush1.msra.mxu0 0.0
    %5060 = vmatprep.mubr.f32.mxu0 0.0
    %v5061 = vand.u32 %v4713, 4294901760
    %v5062 = vsub.f32 %v4713, %v5061
    %v5063 = vand.u32 %v5062, 4294901760
    %5064 = vmatmul.mubr.f32.gmra.mrb[0].mxu0 %v5063
    %v5065 = vpop.f32.mrb[0].mxu0
    %v5066 = vadd.f32 %v4986, %v5065
    %v5067 = vpop.f32.mrb[0].mxu0
    %5068 = vdwg.mxu0
    %5069 = vmatprep.subr.mxu0 0.0
    %v5070 = vand.u32 %v403, 4294901760
    %v5071 = vsub.f32 %v403, %v5070
    %v5072 = vand.u32 %v5071, 4294901760
    %5073 = vmatpush1.msra.mxu0 %v5072
    %5074 = vmatprep.subr.mxu0 0.0
    %v5075 = vand.u32 %v404, 4294901760
    %v5076 = vsub.f32 %v404, %v5075
    %v5077 = vand.u32 %v5076, 4294901760
    %5078 = vmatpush1.msra.mxu0 %v5077
    %5079 = vmatprep.subr.mxu0 0.0
    %v5080 = vand.u32 %v405, 4294901760
    %v5081 = vsub.f32 %v405, %v5080
    %v5082 = vand.u32 %v5081, 4294901760
    %5083 = vmatpush1.msra.mxu0 %v5082
    %5084 = vmatprep.subr.mxu0 0.0
    %v5085 = vand.u32 %v406, 4294901760
    %v5086 = vsub.f32 %v406, %v5085
    %v5087 = vand.u32 %v5086, 4294901760
    %5088 = vmatpush1.msra.mxu0 %v5087
    %5089 = vmatprep.subr.mxu0 0.0
    %v5090 = vand.u32 %v407, 4294901760
    %v5091 = vsub.f32 %v407, %v5090
    %v5092 = vand.u32 %v5091, 4294901760
    %5093 = vmatpush1.msra.mxu0 %v5092
    %5094 = vmatprep.subr.mxu0 0.0
    %v5095 = vand.u32 %v408, 4294901760
    %v5096 = vsub.f32 %v408, %v5095
    %v5097 = vand.u32 %v5096, 4294901760
    %5098 = vmatpush1.msra.mxu0 %v5097
    %5099 = vmatprep.subr.mxu0 0.0
    %v5100 = vand.u32 %v723, 4294901760
    %v5101 = vsub.f32 %v723, %v5100
    %v5102 = vand.u32 %v5101, 4294901760
    %5103 = vmatpush1.msra.mxu0 %v5102
    %5104 = vmatprep.subr.mxu0 0.0
    %5105 = vmatpush1.msra.mxu0 0.0
    %5106 = vmatprep.subr.mxu0 0.0
    %5107 = vmatpush1.msra.mxu0 0.0
    %5108 = vmatprep.subr.mxu0 0.0
    %5109 = vmatpush1.msra.mxu0 0.0
    %5110 = vmatprep.subr.mxu0 0.0
    %5111 = vmatpush1.msra.mxu0 0.0
    %5112 = vmatprep.subr.mxu0 0.0
    %5113 = vmatpush1.msra.mxu0 0.0
    %5114 = vmatprep.subr.mxu0 0.0
    %5115 = vmatpush1.msra.mxu0 0.0
    %5116 = vmatprep.subr.mxu0 0.0
    %5117 = vmatpush1.msra.mxu0 0.0
    %5118 = vmatprep.subr.mxu0 0.0
    %5119 = vmatpush1.msra.mxu0 0.0
    %5120 = vmatprep.subr.mxu0 0.0
    %5121 = vmatpush1.msra.mxu0 0.0
    %5122 = vmatprep.subr.mxu0 0.0
    %5123 = vmatpush1.msra.mxu0 0.0
    %5124 = vmatprep.subr.mxu0 0.0
    %5125 = vmatpush1.msra.mxu0 0.0
    %5126 = vmatprep.subr.mxu0 0.0
    %5127 = vmatpush1.msra.mxu0 0.0
    %5128 = vmatprep.subr.mxu0 0.0
    %5129 = vmatpush1.msra.mxu0 0.0
    %5130 = vmatprep.subr.mxu0 0.0
    %5131 = vmatpush1.msra.mxu0 0.0
    %5132 = vmatprep.subr.mxu0 0.0
    %5133 = vmatpush1.msra.mxu0 0.0
    %5134 = vmatprep.subr.mxu0 0.0
    %5135 = vmatpush1.msra.mxu0 0.0
    %5136 = vmatprep.subr.mxu0 0.0
    %5137 = vmatpush1.msra.mxu0 0.0
    %5138 = vmatprep.subr.mxu0 0.0
    %5139 = vmatpush1.msra.mxu0 0.0
    %5140 = vmatprep.subr.mxu0 0.0
    %5141 = vmatpush1.msra.mxu0 0.0
    %5142 = vmatprep.subr.mxu0 0.0
    %5143 = vmatpush1.msra.mxu0 0.0
    %5144 = vmatprep.subr.mxu0 0.0
    %5145 = vmatpush1.msra.mxu0 0.0
    %5146 = vmatprep.subr.mxu0 0.0
    %5147 = vmatpush1.msra.mxu0 0.0
    %5148 = vmatprep.subr.mxu0 0.0
    %5149 = vmatpush1.msra.mxu0 0.0
    %5150 = vmatprep.subr.mxu0 0.0
    %5151 = vmatpush1.msra.mxu0 0.0
    %5152 = vmatprep.subr.mxu0 0.0
    %5153 = vmatpush1.msra.mxu0 0.0
    %5154 = vmatprep.mubr.f32.mxu0 0.0
    %v5155 = vand.u32 %v4713, 4294901760
    %5156 = vmatmul.mubr.f32.gmra.mrb[0].mxu0 %v5155
    %v5157 = vpop.f32.mrb[0].mxu0
    %v5158 = vadd.f32 %v5066, %v5157
    %v5159 = vpop.f32.mrb[0].mxu0
    %5160 = vdwg.mxu0
    %5161 = vmatprep.subr.mxu0 0.0
    %v5162 = vand.u32 %v403, 4294901760
    %5163 = vmatpush1.msra.mxu0 %v5162
    %5164 = vmatprep.subr.mxu0 0.0
    %v5165 = vand.u32 %v404, 4294901760
    %5166 = vmatpush1.msra.mxu0 %v5165
    %5167 = vmatprep.subr.mxu0 0.0
    %v5168 = vand.u32 %v405, 4294901760
    %5169 = vmatpush1.msra.mxu0 %v5168
    %5170 = vmatprep.subr.mxu0 0.0
    %v5171 = vand.u32 %v406, 4294901760
    %5172 = vmatpush1.msra.mxu0 %v5171
    %5173 = vmatprep.subr.mxu0 0.0
    %v5174 = vand.u32 %v407, 4294901760
    %5175 = vmatpush1.msra.mxu0 %v5174
    %5176 = vmatprep.subr.mxu0 0.0
    %v5177 = vand.u32 %v408, 4294901760
    %5178 = vmatpush1.msra.mxu0 %v5177
    %5179 = vmatprep.subr.mxu0 0.0
    %v5180 = vand.u32 %v723, 4294901760
    %5181 = vmatpush1.msra.mxu0 %v5180
    %5182 = vmatprep.subr.mxu0 0.0
    %5183 = vmatpush1.msra.mxu0 0.0
    %5184 = vmatprep.subr.mxu0 0.0
    %5185 = vmatpush1.msra.mxu0 0.0
    %5186 = vmatprep.subr.mxu0 0.0
    %5187 = vmatpush1.msra.mxu0 0.0
    %5188 = vmatprep.subr.mxu0 0.0
    %5189 = vmatpush1.msra.mxu0 0.0
    %5190 = vmatprep.subr.mxu0 0.0
    %5191 = vmatpush1.msra.mxu0 0.0
    %5192 = vmatprep.subr.mxu0 0.0
    %5193 = vmatpush1.msra.mxu0 0.0
    %5194 = vmatprep.subr.mxu0 0.0
    %5195 = vmatpush1.msra.mxu0 0.0
    %5196 = vmatprep.subr.mxu0 0.0
    %5197 = vmatpush1.msra.mxu0 0.0
    %5198 = vmatprep.subr.mxu0 0.0
    %5199 = vmatpush1.msra.mxu0 0.0
    %5200 = vmatprep.subr.mxu0 0.0
    %5201 = vmatpush1.msra.mxu0 0.0
    %5202 = vmatprep.subr.mxu0 0.0
    %5203 = vmatpush1.msra.mxu0 0.0
    %5204 = vmatprep.subr.mxu0 0.0
    %5205 = vmatpush1.msra.mxu0 0.0
    %5206 = vmatprep.subr.mxu0 0.0
    %5207 = vmatpush1.msra.mxu0 0.0
    %5208 = vmatprep.subr.mxu0 0.0
    %5209 = vmatpush1.msra.mxu0 0.0
    %5210 = vmatprep.subr.mxu0 0.0
    %5211 = vmatpush1.msra.mxu0 0.0
    %5212 = vmatprep.subr.mxu0 0.0
    %5213 = vmatpush1.msra.mxu0 0.0
    %5214 = vmatprep.subr.mxu0 0.0
    %5215 = vmatpush1.msra.mxu0 0.0
    %5216 = vmatprep.subr.mxu0 0.0
    %5217 = vmatpush1.msra.mxu0 0.0
    %5218 = vmatprep.subr.mxu0 0.0
    %5219 = vmatpush1.msra.mxu0 0.0
    %5220 = vmatprep.subr.mxu0 0.0
    %5221 = vmatpush1.msra.mxu0 0.0
    %5222 = vmatprep.subr.mxu0 0.0
    %5223 = vmatpush1.msra.mxu0 0.0
    %5224 = vmatprep.subr.mxu0 0.0
    %5225 = vmatpush1.msra.mxu0 0.0
    %5226 = vmatprep.subr.mxu0 0.0
    %5227 = vmatpush1.msra.mxu0 0.0
    %5228 = vmatprep.subr.mxu0 0.0
    %5229 = vmatpush1.msra.mxu0 0.0
    %5230 = vmatprep.subr.mxu0 0.0
    %5231 = vmatpush1.msra.mxu0 0.0
    %5232 = vmatprep.mubr.f32.mxu0 0.0
    %v5233 = vand.u32 %v4713, 4294901760
    %5234 = vmatmul.mubr.f32.gmra.mrb[0].mxu0 %v5233
    %v5235 = vpop.f32.mrb[0].mxu0
    %v5236 = vadd.f32 %v5158, %v5235
    %v5237 = vpop.f32.mrb[0].mxu0
    %5238 = vdwg.mxu0
    %5239 = vrot.lane.b32.xlu0 %v431, 118
    %v5240 = vpop.permute.xlu0 %5239
    %v5242 = vsel %vm436, %v5236, %v5240
    %v5244 = vsel %vm438, %v5242, 0
    %5246 = vmatprep.subr.mxu0 0.0
    %5247 = vmatpush1.msra.mxu0 %v391
    %5248 = vmatprep.subr.mxu0 0.0
    %5249 = vmatpush1.msra.mxu0 %v444
    %5250 = vmatprep.subr.mxu0 0.0
    %5251 = vmatpush1.msra.mxu0 0.0
    %5252 = vmatprep.subr.mxu0 0.0
    %5253 = vmatpush1.msra.mxu0 0.0
    %5254 = vmatprep.subr.mxu0 0.0
    %5255 = vmatpush1.msra.mxu0 0.0
    %5256 = vmatprep.subr.mxu0 0.0
    %5257 = vmatpush1.msra.mxu0 0.0
    %5258 = vmatprep.subr.mxu0 0.0
    %5259 = vmatpush1.msra.mxu0 0.0
    %5260 = vmatprep.subr.mxu0 0.0
    %5261 = vmatpush1.msra.mxu0 0.0
    %5262 = vmatprep.subr.mxu0 0.0
    %5263 = vmatpush1.msra.mxu0 0.0
    %5264 = vmatprep.subr.mxu0 0.0
    %5265 = vmatpush1.msra.mxu0 0.0
    %5266 = vmatprep.subr.mxu0 0.0
    %5267 = vmatpush1.msra.mxu0 0.0
    %5268 = vmatprep.subr.mxu0 0.0
    %5269 = vmatpush1.msra.mxu0 0.0
    %5270 = vmatprep.subr.mxu0 0.0
    %5271 = vmatpush1.msra.mxu0 0.0
    %5272 = vmatprep.subr.mxu0 0.0
    %5273 = vmatpush1.msra.mxu0 0.0
    %5274 = vmatprep.subr.mxu0 0.0
    %5275 = vmatpush1.msra.mxu0 0.0
    %5276 = vmatprep.subr.mxu0 0.0
    %5277 = vmatpush1.msra.mxu0 0.0
    %5278 = vmatprep.subr.mxu0 0.0
    %5279 = vmatpush1.msra.mxu0 0.0
    %5280 = vmatprep.subr.mxu0 0.0
    %5281 = vmatpush1.msra.mxu0 0.0
    %5282 = vmatprep.subr.mxu0 0.0
    %5283 = vmatpush1.msra.mxu0 0.0
    %5284 = vmatprep.subr.mxu0 0.0
    %5285 = vmatpush1.msra.mxu0 0.0
    %5286 = vmatprep.subr.mxu0 0.0
    %5287 = vmatpush1.msra.mxu0 0.0
    %5288 = vmatprep.subr.mxu0 0.0
    %5289 = vmatpush1.msra.mxu0 0.0
    %5290 = vmatprep.subr.mxu0 0.0
    %5291 = vmatpush1.msra.mxu0 0.0
    %5292 = vmatprep.subr.mxu0 0.0
    %5293 = vmatpush1.msra.mxu0 0.0
    %5294 = vmatprep.subr.mxu0 0.0
    %5295 = vmatpush1.msra.mxu0 0.0
    %5296 = vmatprep.subr.mxu0 0.0
    %5297 = vmatpush1.msra.mxu0 0.0
    %5298 = vmatprep.subr.mxu0 0.0
    %5299 = vmatpush1.msra.mxu0 0.0
    %5300 = vmatprep.subr.mxu0 0.0
    %5301 = vmatpush1.msra.mxu0 0.0
    %5302 = vmatprep.subr.mxu0 0.0
    %5303 = vmatpush1.msra.mxu0 0.0
    %5304 = vmatprep.subr.mxu0 0.0
    %5305 = vmatpush1.msra.mxu0 0.0
    %5306 = vmatprep.subr.mxu0 0.0
    %5307 = vmatpush1.msra.mxu0 0.0
    %5308 = vmatprep.subr.mxu0 0.0
    %5309 = vmatpush1.msra.mxu0 0.0
    %5310 = vmatprep.mubr.f32.mxu0 0.0
    %5311 = vmatmul.mubr.f32.gmra.mrb[0].mxu0 %v5244
    %v5312 = vpop.f32.mrb[0].mxu0
    %v5313 = vadd.f32 %v415, %v5312
    %v5314 = vpop.f32.mrb[0].mxu0
    %5315 = vdwg.mxu0
    %v5316 = vtanh.pop %v5313
    %v5318 = vsel %vm155, %v5316, 0
    %5320 = vmatprep.subr.mxu0 0.0
    %5321 = vmatpush1.msra.mxu0 %v393
    %5322 = vmatprep.subr.mxu0 0.0
    %5323 = vmatpush1.msra.mxu0 %v394
    %5324 = vmatprep.subr.mxu0 0.0
    %5325 = vmatpush1.msra.mxu0 %v395
    %5326 = vmatprep.subr.mxu0 0.0
    %5327 = vmatpush1.msra.mxu0 %v396
    %5328 = vmatprep.subr.mxu0 0.0
    %5329 = vmatpush1.msra.mxu0 0.0
    %5330 = vmatprep.subr.mxu0 0.0
    %5331 = vmatpush1.msra.mxu0 0.0
    %5332 = vmatprep.subr.mxu0 0.0
    %5333 = vmatpush1.msra.mxu0 0.0
    %5334 = vmatprep.subr.mxu0 0.0
    %5335 = vmatpush1.msra.mxu0 0.0
    %5336 = vmatprep.subr.mxu0 0.0
    %5337 = vmatpush1.msra.mxu0 0.0
    %5338 = vmatprep.subr.mxu0 0.0
    %5339 = vmatpush1.msra.mxu0 0.0
    %5340 = vmatprep.subr.mxu0 0.0
    %5341 = vmatpush1.msra.mxu0 0.0
    %5342 = vmatprep.subr.mxu0 0.0
    %5343 = vmatpush1.msra.mxu0 0.0
    %5344 = vmatprep.subr.mxu0 0.0
    %5345 = vmatpush1.msra.mxu0 0.0
    %5346 = vmatprep.subr.mxu0 0.0
    %5347 = vmatpush1.msra.mxu0 0.0
    %5348 = vmatprep.subr.mxu0 0.0
    %5349 = vmatpush1.msra.mxu0 0.0
    %5350 = vmatprep.subr.mxu0 0.0
    %5351 = vmatpush1.msra.mxu0 0.0
    %5352 = vmatprep.subr.mxu0 0.0
    %5353 = vmatpush1.msra.mxu0 0.0
    %5354 = vmatprep.subr.mxu0 0.0
    %5355 = vmatpush1.msra.mxu0 0.0
    %5356 = vmatprep.subr.mxu0 0.0
    %5357 = vmatpush1.msra.mxu0 0.0
    %5358 = vmatprep.subr.mxu0 0.0
    %5359 = vmatpush1.msra.mxu0 0.0
    %5360 = vmatprep.subr.mxu0 0.0
    %5361 = vmatpush1.msra.mxu0 0.0
    %5362 = vmatprep.subr.mxu0 0.0
    %5363 = vmatpush1.msra.mxu0 0.0
    %5364 = vmatprep.subr.mxu0 0.0
    %5365 = vmatpush1.msra.mxu0 0.0
    %5366 = vmatprep.subr.mxu0 0.0
    %5367 = vmatpush1.msra.mxu0 0.0
    %5368 = vmatprep.subr.mxu0 0.0
    %5369 = vmatpush1.msra.mxu0 0.0
    %5370 = vmatprep.subr.mxu0 0.0
    %5371 = vmatpush1.msra.mxu0 0.0
    %5372 = vmatprep.subr.mxu0 0.0
    %5373 = vmatpush1.msra.mxu0 0.0
    %5374 = vmatprep.subr.mxu0 0.0
    %5375 = vmatpush1.msra.mxu0 0.0
    %5376 = vmatprep.subr.mxu0 0.0
    %5377 = vmatpush1.msra.mxu0 0.0
    %5378 = vmatprep.subr.mxu0 0.0
    %5379 = vmatpush1.msra.mxu0 0.0
    %5380 = vmatprep.subr.mxu0 0.0
    %5381 = vmatpush1.msra.mxu0 0.0
    %5382 = vmatprep.subr.mxu0 0.0
    %5383 = vmatpush1.msra.mxu0 0.0
    %5384 = vmatprep.mubr.f32.mxu0 0.0
    %5385 = vmatmul.mubr.f32.gmra.mrb[0].mxu0 %v5318
    %v5386 = vpop.f32.mrb[0].mxu0
    %v5387 = vadd.f32 %v422, %v5386
    %v5388 = vpop.f32.mrb[0].mxu0
    %5389 = vdwg.mxu0
    %v5390 = vtanh.pop %v5387
    %5392 = vrot.lane.b32.xlu0 %v5390, 11
    %v5393 = vpop.permute.xlu0 %5392
    %v5395 = vsel %vm438, %v5242, %v5393
    %v5397 = vsel %vm596, %v5395, 0
    %5399 = vmatprep.subr.mxu0 0.0
    %5400 = vmatpush1.msra.mxu0 %v397
    %5401 = vmatprep.subr.mxu0 0.0
    %5402 = vmatpush1.msra.mxu0 %v398
    %5403 = vmatprep.subr.mxu0 0.0
    %5404 = vmatpush1.msra.mxu0 %v399
    %5405 = vmatprep.subr.mxu0 0.0
    %5406 = vmatpush1.msra.mxu0 %v400
    %5407 = vmatprep.subr.mxu0 0.0
    %5408 = vmatpush1.msra.mxu0 %v401
    %5409 = vmatprep.subr.mxu0 0.0
    %5410 = vmatpush1.msra.mxu0 %v601
    %5411 = vmatprep.subr.mxu0 0.0
    %5412 = vmatpush1.msra.mxu0 0.0
    %5413 = vmatprep.subr.mxu0 0.0
    %5414 = vmatpush1.msra.mxu0 0.0
    %5415 = vmatprep.subr.mxu0 0.0
    %5416 = vmatpush1.msra.mxu0 0.0
    %5417 = vmatprep.subr.mxu0 0.0
    %5418 = vmatpush1.msra.mxu0 0.0
    %5419 = vmatprep.subr.mxu0 0.0
    %5420 = vmatpush1.msra.mxu0 0.0
    %5421 = vmatprep.subr.mxu0 0.0
    %5422 = vmatpush1.msra.mxu0 0.0
    %5423 = vmatprep.subr.mxu0 0.0
    %5424 = vmatpush1.msra.mxu0 0.0
    %5425 = vmatprep.subr.mxu0 0.0
    %5426 = vmatpush1.msra.mxu0 0.0
    %5427 = vmatprep.subr.mxu0 0.0
    %5428 = vmatpush1.msra.mxu0 0.0
    %5429 = vmatprep.subr.mxu0 0.0
    %5430 = vmatpush1.msra.mxu0 0.0
    %5431 = vmatprep.subr.mxu0 0.0
    %5432 = vmatpush1.msra.mxu0 0.0
    %5433 = vmatprep.subr.mxu0 0.0
    %5434 = vmatpush1.msra.mxu0 0.0
    %5435 = vmatprep.subr.mxu0 0.0
    %5436 = vmatpush1.msra.mxu0 0.0
    %5437 = vmatprep.subr.mxu0 0.0
    %5438 = vmatpush1.msra.mxu0 0.0
    %5439 = vmatprep.subr.mxu0 0.0
    %5440 = vmatpush1.msra.mxu0 0.0
    %5441 = vmatprep.subr.mxu0 0.0
    %5442 = vmatpush1.msra.mxu0 0.0
    %5443 = vmatprep.subr.mxu0 0.0
    %5444 = vmatpush1.msra.mxu0 0.0
    %5445 = vmatprep.subr.mxu0 0.0
    %5446 = vmatpush1.msra.mxu0 0.0
    %5447 = vmatprep.subr.mxu0 0.0
    %5448 = vmatpush1.msra.mxu0 0.0
    %5449 = vmatprep.subr.mxu0 0.0
    %5450 = vmatpush1.msra.mxu0 0.0
    %5451 = vmatprep.subr.mxu0 0.0
    %5452 = vmatpush1.msra.mxu0 0.0
    %5453 = vmatprep.subr.mxu0 0.0
    %5454 = vmatpush1.msra.mxu0 0.0
    %5455 = vmatprep.subr.mxu0 0.0
    %5456 = vmatpush1.msra.mxu0 0.0
    %5457 = vmatprep.subr.mxu0 0.0
    %5458 = vmatpush1.msra.mxu0 0.0
    %5459 = vmatprep.subr.mxu0 0.0
    %5460 = vmatpush1.msra.mxu0 0.0
    %5461 = vmatprep.subr.mxu0 0.0
    %5462 = vmatpush1.msra.mxu0 0.0
    %5463 = vmatprep.mubr.f32.mxu0 0.0
    %5464 = vmatmul.mubr.f32.gmra.mrb[0].mxu0 %v5397
    %v5465 = vpop.f32.mrb[0].mxu0
    %v5466 = vadd.f32 %v429, %v5465
    %v5467 = vpop.f32.mrb[0].mxu0
    %5468 = vdwg.mxu0
    %5470 = vset.pattern.permute.xlu0 0
    %5471 = vperm.xlu0 %5470, %v5466
    %v5472 = vpop.permute.xlu0 %5471
    %v5474 = vmul.f32 %v5472, %v5242
    %5475 = vset.pattern.permute.xlu0 1
    %5476 = vperm.xlu0 %5475, %v5466
    %v5477 = vpop.permute.xlu0 %5476
    %v5479 = vmul.f32 %v5477, %v5242
    %5480 = vset.pattern.permute.xlu0 2
    %5481 = vperm.xlu0 %5480, %v5466
    %v5482 = vpop.permute.xlu0 %5481
    %v5484 = vmul.f32 %v5482, %v5242
    %5485 = vset.pattern.permute.xlu0 3
    %5486 = vperm.xlu0 %5485, %v5466
    %v5487 = vpop.permute.xlu0 %5486
    %v5489 = vmul.f32 %v5487, %v5242
    %5491 = vrot.lane.b32.xlu0 %v5474, 11
    %v5492 = vpop.permute.xlu0 %5491
    %5495 = vrot.lane.b32.xlu0 %v5479, 22
    %v5496 = vpop.permute.xlu0 %5495
    %5499 = vrot.lane.b32.xlu0 %v5484, 33
    %v5500 = vpop.permute.xlu0 %5499
    %5503 = vrot.lane.b32.xlu0 %v5489, 44
    %v5504 = vpop.permute.xlu0 %5503
    %v5506 = vsel %vm438, %v5242, %v5492
    %v5507 = vsel %vm711, %v5506, %v5496
    %v5508 = vsel %vm713, %v5507, %v5500
    %v5509 = vsel %vm715, %v5508, %v5504
    %v5511 = vsel %vm717, %v5509, 0
    %5513 = vmatprep.subr.mxu0 0.0
    %v5514 = vand.u32 %v403, 4294901760
    %5515 = vmatpush1.msra.mxu0 %v5514
    %5516 = vmatprep.subr.mxu0 0.0
    %v5517 = vand.u32 %v404, 4294901760
    %5518 = vmatpush1.msra.mxu0 %v5517
    %5519 = vmatprep.subr.mxu0 0.0
    %v5520 = vand.u32 %v405, 4294901760
    %5521 = vmatpush1.msra.mxu0 %v5520
    %5522 = vmatprep.subr.mxu0 0.0
    %v5523 = vand.u32 %v406, 4294901760
    %5524 = vmatpush1.msra.mxu0 %v5523
    %5525 = vmatprep.subr.mxu0 0.0
    %v5526 = vand.u32 %v407, 4294901760
    %5527 = vmatpush1.msra.mxu0 %v5526
    %5528 = vmatprep.subr.mxu0 0.0
    %v5529 = vand.u32 %v408, 4294901760
    %5530 = vmatpush1.msra.mxu0 %v5529
    %5531 = vmatprep.subr.mxu0 0.0
    %v5532 = vand.u32 %v723, 4294901760
    %5533 = vmatpush1.msra.mxu0 %v5532
    %5534 = vmatprep.subr.mxu0 0.0
    %5535 = vmatpush1.msra.mxu0 0.0
    %5536 = vmatprep.subr.mxu0 0.0
    %5537 = vmatpush1.msra.mxu0 0.0
    %5538 = vmatprep.subr.mxu0 0.0
    %5539 = vmatpush1.msra.mxu0 0.0
    %5540 = vmatprep.subr.mxu0 0.0
    %5541 = vmatpush1.msra.mxu0 0.0
    %5542 = vmatprep.subr.mxu0 0.0
    %5543 = vmatpush1.msra.mxu0 0.0
    %5544 = vmatprep.subr.mxu0 0.0
    %5545 = vmatpush1.msra.mxu0 0.0
    %5546 = vmatprep.subr.mxu0 0.0
    %5547 = vmatpush1.msra.mxu0 0.0
    %5548 = vmatprep.subr.mxu0 0.0
    %5549 = vmatpush1.msra.mxu0 0.0
    %5550 = vmatprep.subr.mxu0 0.0
    %5551 = vmatpush1.msra.mxu0 0.0
    %5552 = vmatprep.subr.mxu0 0.0
    %5553 = vmatpush1.msra.mxu0 0.0
    %5554 = vmatprep.subr.mxu0 0.0
    %5555 = vmatpush1.msra.mxu0 0.0
    %5556 = vmatprep.subr.mxu0 0.0
    %5557 = vmatpush1.msra.mxu0 0.0
    %5558 = vmatprep.subr.mxu0 0.0
    %5559 = vmatpush1.msra.mxu0 0.0
    %5560 = vmatprep.subr.mxu0 0.0
    %5561 = vmatpush1.msra.mxu0 0.0
    %5562 = vmatprep.subr.mxu0 0.0
    %5563 = vmatpush1.msra.mxu0 0.0
    %5564 = vmatprep.subr.mxu0 0.0
    %5565 = vmatpush1.msra.mxu0 0.0
    %5566 = vmatprep.subr.mxu0 0.0
    %5567 = vmatpush1.msra.mxu0 0.0
    %5568 = vmatprep.subr.mxu0 0.0
    %5569 = vmatpush1.msra.mxu0 0.0
    %5570 = vmatprep.subr.mxu0 0.0
    %5571 = vmatpush1.msra.mxu0 0.0
    %5572 = vmatprep.subr.mxu0 0.0
    %5573 = vmatpush1.msra.mxu0 0.0
    %5574 = vmatprep.subr.mxu0 0.0
    %5575 = vmatpush1.msra.mxu0 0.0
    %5576 = vmatprep.subr.mxu0 0.0
    %5577 = vmatpush1.msra.mxu0 0.0
    %5578 = vmatprep.subr.mxu0 0.0
    %5579 = vmatpush1.msra.mxu0 0.0
    %5580 = vmatprep.subr.mxu0 0.0
    %5581 = vmatpush1.msra.mxu0 0.0
    %5582 = vmatprep.subr.mxu0 0.0
    %5583 = vmatpush1.msra.mxu0 0.0
    %5584 = vmatprep.mubr.f32.mxu0 0.0
    %v5585 = vand.u32 %v5511, 4294901760
    %v5586 = vsub.f32 %v5511, %v5585
    %v5587 = vand.u32 %v5586, 4294901760
    %v5588 = vsub.f32 %v5586, %v5587
    %v5589 = vand.u32 %v5588, 4294901760
    %5590 = vmatmul.mubr.f32.gmra.mrb[0].mxu0 %v5589
    %v5591 = vpop.f32.mrb[0].mxu0
    %v5592 = vadd.f32 0.0, %v5591
    %v5593 = vpop.f32.mrb[0].mxu0
    %5594 = vdwg.mxu0
    %5595 = vmatprep.subr.mxu0 0.0
    %v5596 = vand.u32 %v403, 4294901760
    %v5597 = vsub.f32 %v403, %v5596
    %v5598 = vand.u32 %v5597, 4294901760
    %v5599 = vsub.f32 %v5597, %v5598
    %v5600 = vand.u32 %v5599, 4294901760
    %5601 = vmatpush1.msra.mxu0 %v5600
    %5602 = vmatprep.subr.mxu0 0.0
    %v5603 = vand.u32 %v404, 4294901760
    %v5604 = vsub.f32 %v404, %v5603
    %v5605 = vand.u32 %v5604, 4294901760
    %v5606 = vsub.f32 %v5604, %v5605
    %v5607 = vand.u32 %v5606, 4294901760
    %5608 = vmatpush1.msra.mxu0 %v5607
    %5609 = vmatprep.subr.mxu0 0.0
    %v5610 = vand.u32 %v405, 4294901760
    %v5611 = vsub.f32 %v405, %v5610
    %v5612 = vand.u32 %v5611, 4294901760
    %v5613 = vsub.f32 %v5611, %v5612
    %v5614 = vand.u32 %v5613, 4294901760
    %5615 = vmatpush1.msra.mxu0 %v5614
    %5616 = vmatprep.subr.mxu0 0.0
    %v5617 = vand.u32 %v406, 4294901760
    %v5618 = vsub.f32 %v406, %v5617
    %v5619 = vand.u32 %v5618, 4294901760
    %v5620 = vsub.f32 %v5618, %v5619
    %v5621 = vand.u32 %v5620, 4294901760
    %5622 = vmatpush1.msra.mxu0 %v5621
    %5623 = vmatprep.subr.mxu0 0.0
    %v5624 = vand.u32 %v407, 4294901760
    %v5625 = vsub.f32 %v407, %v5624
    %v5626 = vand.u32 %v5625, 4294901760
    %v5627 = vsub.f32 %v5625, %v5626
    %v5628 = vand.u32 %v5627, 4294901760
    %5629 = vmatpush1.msra.mxu0 %v5628
    %5630 = vmatprep.subr.mxu0 0.0
    %v5631 = vand.u32 %v408, 4294901760
    %v5632 = vsub.f32 %v408, %v5631
    %v5633 = vand.u32 %v5632, 4294901760
    %v5634 = vsub.f32 %v5632, %v5633
    %v5635 = vand.u32 %v5634, 4294901760
    %5636 = vmatpush1.msra.mxu0 %v5635
    %5637 = vmatprep.subr.mxu0 0.0
    %v5638 = vand.u32 %v723, 4294901760
    %v5639 = vsub.f32 %v723, %v5638
    %v5640 = vand.u32 %v5639, 4294901760
    %v5641 = vsub.f32 %v5639, %v5640
    %v5642 = vand.u32 %v5641, 4294901760
    %5643 = vmatpush1.msra.mxu0 %v5642
    %5644 = vmatprep.subr.mxu0 0.0
    %5645 = vmatpush1.msra.mxu0 0.0
    %5646 = vmatprep.subr.mxu0 0.0
    %5647 = vmatpush1.msra.mxu0 0.0
    %5648 = vmatprep.subr.mxu0 0.0
    %5649 = vmatpush1.msra.mxu0 0.0
    %5650 = vmatprep.subr.mxu0 0.0
    %5651 = vmatpush1.msra.mxu0 0.0
    %5652 = vmatprep.subr.mxu0 0.0
    %5653 = vmatpush1.msra.mxu0 0.0
    %5654 = vmatprep.subr.mxu0 0.0
    %5655 = vmatpush1.msra.mxu0 0.0
    %5656 = vmatprep.subr.mxu0 0.0
    %5657 = vmatpush1.msra.mxu0 0.0
    %5658 = vmatprep.subr.mxu0 0.0
    %5659 = vmatpush1.msra.mxu0 0.0
    %5660 = vmatprep.subr.mxu0 0.0
    %5661 = vmatpush1.msra.mxu0 0.0
    %5662 = vmatprep.subr.mxu0 0.0
    %5663 = vmatpush1.msra.mxu0 0.0
    %5664 = vmatprep.subr.mxu0 0.0
    %5665 = vmatpush1.msra.mxu0 0.0
    %5666 = vmatprep.subr.mxu0 0.0
    %5667 = vmatpush1.msra.mxu0 0.0
    %5668 = vmatprep.subr.mxu0 0.0
    %5669 = vmatpush1.msra.mxu0 0.0
    %5670 = vmatprep.subr.mxu0 0.0
    %5671 = vmatpush1.msra.mxu0 0.0
    %5672 = vmatprep.subr.mxu0 0.0
    %5673 = vmatpush1.msra.mxu0 0.0
    %5674 = vmatprep.subr.mxu0 0.0
    %5675 = vmatpush1.msra.mxu0 0.0
    %5676 = vmatprep.subr.mxu0 0.0
    %5677 = vmatpush1.msra.mxu0 0.0
    %5678 = vmatprep.subr.mxu0 0.0
    %5679 = vmatpush1.msra.mxu0 0.0
    %5680 = vmatprep.subr.mxu0 0.0
    %5681 = vmatpush1.msra.mxu0 0.0
    %5682 = vmatprep.subr.mxu0 0.0
    %5683 = vmatpush1.msra.mxu0 0.0
    %5684 = vmatprep.subr.mxu0 0.0
    %5685 = vmatpush1.msra.mxu0 0.0
    %5686 = vmatprep.subr.mxu0 0.0
    %5687 = vmatpush1.msra.mxu0 0.0
    %5688 = vmatprep.subr.mxu0 0.0
    %5689 = vmatpush1.msra.mxu0 0.0
    %5690 = vmatprep.subr.mxu0 0.0
    %5691 = vmatpush1.msra.mxu0 0.0
    %5692 = vmatprep.subr.mxu0 0.0
    %5693 = vmatpush1.msra.mxu0 0.0
    %5694 = vmatprep.mubr.f32.mxu0 0.0
    %v5695 = vand.u32 %v5511, 4294901760
    %5696 = vmatmul.mubr.f32.gmra.mrb[0].mxu0 %v5695
    %v5697 = vpop.f32.mrb[0].mxu0
    %v5698 = vadd.f32 %v5592, %v5697
    %v5699 = vpop.f32.mrb[0].mxu0
    %5700 = vdwg.mxu0
    %5701 = vmatprep.subr.mxu0 0.0
    %v5702 = vand.u32 %v403, 4294901760
    %v5703 = vsub.f32 %v403, %v5702
    %5704 = vmatpush1.msra.mxu0 %v5703
    %5705 = vmatprep.subr.mxu0 0.0
    %v5706 = vand.u32 %v404, 4294901760
    %v5707 = vsub.f32 %v404, %v5706
    %5708 = vmatpush1.msra.mxu0 %v5707
    %5709 = vmatprep.subr.mxu0 0.0
    %v5710 = vand.u32 %v405, 4294901760
    %v5711 = vsub.f32 %v405, %v5710
    %5712 = vmatpush1.msra.mxu0 %v5711
    %5713 = vmatprep.subr.mxu0 0.0
    %v5714 = vand.u32 %v406, 4294901760
    %v5715 = vsub.f32 %v406, %v5714
    %5716 = vmatpush1.msra.mxu0 %v5715
    %5717 = vmatprep.subr.mxu0 0.0
    %v5718 = vand.u32 %v407, 4294901760
    %v5719 = vsub.f32 %v407, %v5718
    %5720 = vmatpush1.msra.mxu0 %v5719
    %5721 = vmatprep.subr.mxu0 0.0
    %v5722 = vand.u32 %v408, 4294901760
    %v5723 = vsub.f32 %v408, %v5722
    %5724 = vmatpush1.msra.mxu0 %v5723
    %5725 = vmatprep.subr.mxu0 0.0
    %v5726 = vand.u32 %v723, 4294901760
    %v5727 = vsub.f32 %v723, %v5726
    %5728 = vmatpush1.msra.mxu0 %v5727
    %5729 = vmatprep.subr.mxu0 0.0
    %5730 = vmatpush1.msra.mxu0 0.0
    %5731 = vmatprep.subr.mxu0 0.0
    %5732 = vmatpush1.msra.mxu0 0.0
    %5733 = vmatprep.subr.mxu0 0.0
    %5734 = vmatpush1.msra.mxu0 0.0
    %5735 = vmatprep.subr.mxu0 0.0
    %5736 = vmatpush1.msra.mxu0 0.0
    %5737 = vmatprep.subr.mxu0 0.0
    %5738 = vmatpush1.msra.mxu0 0.0
    %5739 = vmatprep.subr.mxu0 0.0
    %5740 = vmatpush1.msra.mxu0 0.0
    %5741 = vmatprep.subr.mxu0 0.0
    %5742 = vmatpush1.msra.mxu0 0.0
    %5743 = vmatprep.subr.mxu0 0.0
    %5744 = vmatpush1.msra.mxu0 0.0
    %5745 = vmatprep.subr.mxu0 0.0
    %5746 = vmatpush1.msra.mxu0 0.0
    %5747 = vmatprep.subr.mxu0 0.0
    %5748 = vmatpush1.msra.mxu0 0.0
    %5749 = vmatprep.subr.mxu0 0.0
    %5750 = vmatpush1.msra.mxu0 0.0
    %5751 = vmatprep.subr.mxu0 0.0
    %5752 = vmatpush1.msra.mxu0 0.0
    %5753 = vmatprep.subr.mxu0 0.0
    %5754 = vmatpush1.msra.mxu0 0.0
    %5755 = vmatprep.subr.mxu0 0.0
    %5756 = vmatpush1.msra.mxu0 0.0
    %5757 = vmatprep.subr.mxu0 0.0
    %5758 = vmatpush1.msra.mxu0 0.0
    %5759 = vmatprep.subr.mxu0 0.0
    %5760 = vmatpush1.msra.mxu0 0.0
    %5761 = vmatprep.subr.mxu0 0.0
    %5762 = vmatpush1.msra.mxu0 0.0
    %5763 = vmatprep.subr.mxu0 0.0
    %5764 = vmatpush1.msra.mxu0 0.0
    %5765 = vmatprep.subr.mxu0 0.0
    %5766 = vmatpush1.msra.mxu0 0.0
    %5767 = vmatprep.subr.mxu0 0.0
    %5768 = vmatpush1.msra.mxu0 0.0
    %5769 = vmatprep.subr.mxu0 0.0
    %5770 = vmatpush1.msra.mxu0 0.0
    %5771 = vmatprep.subr.mxu0 0.0
    %5772 = vmatpush1.msra.mxu0 0.0
    %5773 = vmatprep.subr.mxu0 0.0
    %5774 = vmatpush1.msra.mxu0 0.0
    %5775 = vmatprep.subr.mxu0 0.0
    %5776 = vmatpush1.msra.mxu0 0.0
    %5777 = vmatprep.subr.mxu0 0.0
    %5778 = vmatpush1.msra.mxu0 0.0
    %5779 = vmatprep.mubr.f32.mxu0 0.0
    %v5780 = vand.u32 %v5511, 4294901760
    %v5781 = vsub.f32 %v5511, %v5780
    %5782 = vmatmul.mubr.f32.gmra.mrb[0].mxu0 %v5781
    %v5783 = vpop.f32.mrb[0].mxu0
    %v5784 = vadd.f32 %v5698, %v5783
    %v5785 = vpop.f32.mrb[0].mxu0
    %5786 = vdwg.mxu0
    %5787 = vmatprep.subr.mxu0 0.0
    %v5788 = vand.u32 %v403, 4294901760
    %5789 = vmatpush1.msra.mxu0 %v5788
    %5790 = vmatprep.subr.mxu0 0.0
    %v5791 = vand.u32 %v404, 4294901760
    %5792 = vmatpush1.msra.mxu0 %v5791
    %5793 = vmatprep.subr.mxu0 0.0
    %v5794 = vand.u32 %v405, 4294901760
    %5795 = vmatpush1.msra.mxu0 %v5794
    %5796 = vmatprep.subr.mxu0 0.0
    %v5797 = vand.u32 %v406, 4294901760
    %5798 = vmatpush1.msra.mxu0 %v5797
    %5799 = vmatprep.subr.mxu0 0.0
    %v5800 = vand.u32 %v407, 4294901760
    %5801 = vmatpush1.msra.mxu0 %v5800
    %5802 = vmatprep.subr.mxu0 0.0
    %v5803 = vand.u32 %v408, 4294901760
    %5804 = vmatpush1.msra.mxu0 %v5803
    %5805 = vmatprep.subr.mxu0 0.0
    %v5806 = vand.u32 %v723, 4294901760
    %5807 = vmatpush1.msra.mxu0 %v5806
    %5808 = vmatprep.subr.mxu0 0.0
    %5809 = vmatpush1.msra.mxu0 0.0
    %5810 = vmatprep.subr.mxu0 0.0
    %5811 = vmatpush1.msra.mxu0 0.0
    %5812 = vmatprep.subr.mxu0 0.0
    %5813 = vmatpush1.msra.mxu0 0.0
    %5814 = vmatprep.subr.mxu0 0.0
    %5815 = vmatpush1.msra.mxu0 0.0
    %5816 = vmatprep.subr.mxu0 0.0
    %5817 = vmatpush1.msra.mxu0 0.0
    %5818 = vmatprep.subr.mxu0 0.0
    %5819 = vmatpush1.msra.mxu0 0.0
    %5820 = vmatprep.subr.mxu0 0.0
    %5821 = vmatpush1.msra.mxu0 0.0
    %5822 = vmatprep.subr.mxu0 0.0
    %5823 = vmatpush1.msra.mxu0 0.0
    %5824 = vmatprep.subr.mxu0 0.0
    %5825 = vmatpush1.msra.mxu0 0.0
    %5826 = vmatprep.subr.mxu0 0.0
    %5827 = vmatpush1.msra.mxu0 0.0
    %5828 = vmatprep.subr.mxu0 0.0
    %5829 = vmatpush1.msra.mxu0 0.0
    %5830 = vmatprep.subr.mxu0 0.0
    %5831 = vmatpush1.msra.mxu0 0.0
    %5832 = vmatprep.subr.mxu0 0.0
    %5833 = vmatpush1.msra.mxu0 0.0
    %5834 = vmatprep.subr.mxu0 0.0
    %5835 = vmatpush1.msra.mxu0 0.0
    %5836 = vmatprep.subr.mxu0 0.0
    %5837 = vmatpush1.msra.mxu0 0.0
    %5838 = vmatprep.subr.mxu0 0.0
    %5839 = vmatpush1.msra.mxu0 0.0
    %5840 = vmatprep.subr.mxu0 0.0
    %5841 = vmatpush1.msra.mxu0 0.0
    %5842 = vmatprep.subr.mxu0 0.0
    %5843 = vmatpush1.msra.mxu0 0.0
    %5844 = vmatprep.subr.mxu0 0.0
    %5845 = vmatpush1.msra.mxu0 0.0
    %5846 = vmatprep.subr.mxu0 0.0
    %5847 = vmatpush1.msra.mxu0 0.0
    %5848 = vmatprep.subr.mxu0 0.0
    %5849 = vmatpush1.msra.mxu0 0.0
    %5850 = vmatprep.subr.mxu0 0.0
    %5851 = vmatpush1.msra.mxu0 0.0
    %5852 = vmatprep.subr.mxu0 0.0
    %5853 = vmatpush1.msra.mxu0 0.0
    %5854 = vmatprep.subr.mxu0 0.0
    %5855 = vmatpush1.msra.mxu0 0.0
    %5856 = vmatprep.subr.mxu0 0.0
    %5857 = vmatpush1.msra.mxu0 0.0
    %5858 = vmatprep.mubr.f32.mxu0 0.0
    %v5859 = vand.u32 %v5511, 4294901760
    %v5860 = vsub.f32 %v5511, %v5859
    %v5861 = vand.u32 %v5860, 4294901760
    %5862 = vmatmul.mubr.f32.gmra.mrb[0].mxu0 %v5861
    %v5863 = vpop.f32.mrb[0].mxu0
    %v5864 = vadd.f32 %v5784, %v5863
    %v5865 = vpop.f32.mrb[0].mxu0
    %5866 = vdwg.mxu0
    %5867 = vmatprep.subr.mxu0 0.0
    %v5868 = vand.u32 %v403, 4294901760
    %v5869 = vsub.f32 %v403, %v5868
    %v5870 = vand.u32 %v5869, 4294901760
    %5871 = vmatpush1.msra.mxu0 %v5870
    %5872 = vmatprep.subr.mxu0 0.0
    %v5873 = vand.u32 %v404, 4294901760
    %v5874 = vsub.f32 %v404, %v5873
    %v5875 = vand.u32 %v5874, 4294901760
    %5876 = vmatpush1.msra.mxu0 %v5875
    %5877 = vmatprep.subr.mxu0 0.0
    %v5878 = vand.u32 %v405, 4294901760
    %v5879 = vsub.f32 %v405, %v5878
    %v5880 = vand.u32 %v5879, 4294901760
    %5881 = vmatpush1.msra.mxu0 %v5880
    %5882 = vmatprep.subr.mxu0 0.0
    %v5883 = vand.u32 %v406, 4294901760
    %v5884 = vsub.f32 %v406, %v5883
    %v5885 = vand.u32 %v5884, 4294901760
    %5886 = vmatpush1.msra.mxu0 %v5885
    %5887 = vmatprep.subr.mxu0 0.0
    %v5888 = vand.u32 %v407, 4294901760
    %v5889 = vsub.f32 %v407, %v5888
    %v5890 = vand.u32 %v5889, 4294901760
    %5891 = vmatpush1.msra.mxu0 %v5890
    %5892 = vmatprep.subr.mxu0 0.0
    %v5893 = vand.u32 %v408, 4294901760
    %v5894 = vsub.f32 %v408, %v5893
    %v5895 = vand.u32 %v5894, 4294901760
    %5896 = vmatpush1.msra.mxu0 %v5895
    %5897 = vmatprep.subr.mxu0 0.0
    %v5898 = vand.u32 %v723, 4294901760
    %v5899 = vsub.f32 %v723, %v5898
    %v5900 = vand.u32 %v5899, 4294901760
    %5901 = vmatpush1.msra.mxu0 %v5900
    %5902 = vmatprep.subr.mxu0 0.0
    %5903 = vmatpush1.msra.mxu0 0.0
    %5904 = vmatprep.subr.mxu0 0.0
    %5905 = vmatpush1.msra.mxu0 0.0
    %5906 = vmatprep.subr.mxu0 0.0
    %5907 = vmatpush1.msra.mxu0 0.0
    %5908 = vmatprep.subr.mxu0 0.0
    %5909 = vmatpush1.msra.mxu0 0.0
    %5910 = vmatprep.subr.mxu0 0.0
    %5911 = vmatpush1.msra.mxu0 0.0
    %5912 = vmatprep.subr.mxu0 0.0
    %5913 = vmatpush1.msra.mxu0 0.0
    %5914 = vmatprep.subr.mxu0 0.0
    %5915 = vmatpush1.msra.mxu0 0.0
    %5916 = vmatprep.subr.mxu0 0.0
    %5917 = vmatpush1.msra.mxu0 0.0
    %5918 = vmatprep.subr.mxu0 0.0
    %5919 = vmatpush1.msra.mxu0 0.0
    %5920 = vmatprep.subr.mxu0 0.0
    %5921 = vmatpush1.msra.mxu0 0.0
    %5922 = vmatprep.subr.mxu0 0.0
    %5923 = vmatpush1.msra.mxu0 0.0
    %5924 = vmatprep.subr.mxu0 0.0
    %5925 = vmatpush1.msra.mxu0 0.0
    %5926 = vmatprep.subr.mxu0 0.0
    %5927 = vmatpush1.msra.mxu0 0.0
    %5928 = vmatprep.subr.mxu0 0.0
    %5929 = vmatpush1.msra.mxu0 0.0
    %5930 = vmatprep.subr.mxu0 0.0
    %5931 = vmatpush1.msra.mxu0 0.0
    %5932 = vmatprep.subr.mxu0 0.0
    %5933 = vmatpush1.msra.mxu0 0.0
    %5934 = vmatprep.subr.mxu0 0.0
    %5935 = vmatpush1.msra.mxu0 0.0
    %5936 = vmatprep.subr.mxu0 0.0
    %5937 = vmatpush1.msra.mxu0 0.0
    %5938 = vmatprep.subr.mxu0 0.0
    %5939 = vmatpush1.msra.mxu0 0.0
    %5940 = vmatprep.subr.mxu0 0.0
    %5941 = vmatpush1.msra.mxu0 0.0
    %5942 = vmatprep.subr.mxu0 0.0
    %5943 = vmatpush1.msra.mxu0 0.0
    %5944 = vmatprep.subr.mxu0 0.0
    %5945 = vmatpush1.msra.mxu0 0.0
    %5946 = vmatprep.subr.mxu0 0.0
    %5947 = vmatpush1.msra.mxu0 0.0
    %5948 = vmatprep.subr.mxu0 0.0
    %5949 = vmatpush1.msra.mxu0 0.0
    %5950 = vmatprep.subr.mxu0 0.0
    %5951 = vmatpush1.msra.mxu0 0.0
    %5952 = vmatprep.mubr.f32.mxu0 0.0
    %v5953 = vand.u32 %v5511, 4294901760
    %5954 = vmatmul.mubr.f32.gmra.mrb[0].mxu0 %v5953
    %v5955 = vpop.f32.mrb[0].mxu0
    %v5956 = vadd.f32 %v5864, %v5955
    %v5957 = vpop.f32.mrb[0].mxu0
    %5958 = vdwg.mxu0
    %5959 = vmatprep.subr.mxu0 0.0
    %v5960 = vand.u32 %v403, 4294901760
    %5961 = vmatpush1.msra.mxu0 %v5960
    %5962 = vmatprep.subr.mxu0 0.0
    %v5963 = vand.u32 %v404, 4294901760
    %5964 = vmatpush1.msra.mxu0 %v5963
    %5965 = vmatprep.subr.mxu0 0.0
    %v5966 = vand.u32 %v405, 4294901760
    %5967 = vmatpush1.msra.mxu0 %v5966
    %5968 = vmatprep.subr.mxu0 0.0
    %v5969 = vand.u32 %v406, 4294901760
    %5970 = vmatpush1.msra.mxu0 %v5969
    %5971 = vmatprep.subr.mxu0 0.0
    %v5972 = vand.u32 %v407, 4294901760
    %5973 = vmatpush1.msra.mxu0 %v5972
    %5974 = vmatprep.subr.mxu0 0.0
    %v5975 = vand.u32 %v408, 4294901760
    %5976 = vmatpush1.msra.mxu0 %v5975
    %5977 = vmatprep.subr.mxu0 0.0
    %v5978 = vand.u32 %v723, 4294901760
    %5979 = vmatpush1.msra.mxu0 %v5978
    %5980 = vmatprep.subr.mxu0 0.0
    %5981 = vmatpush1.msra.mxu0 0.0
    %5982 = vmatprep.subr.mxu0 0.0
    %5983 = vmatpush1.msra.mxu0 0.0
    %5984 = vmatprep.subr.mxu0 0.0
    %5985 = vmatpush1.msra.mxu0 0.0
    %5986 = vmatprep.subr.mxu0 0.0
    %5987 = vmatpush1.msra.mxu0 0.0
    %5988 = vmatprep.subr.mxu0 0.0
    %5989 = vmatpush1.msra.mxu0 0.0
    %5990 = vmatprep.subr.mxu0 0.0
    %5991 = vmatpush1.msra.mxu0 0.0
    %5992 = vmatprep.subr.mxu0 0.0
    %5993 = vmatpush1.msra.mxu0 0.0
    %5994 = vmatprep.subr.mxu0 0.0
    %5995 = vmatpush1.msra.mxu0 0.0
    %5996 = vmatprep.subr.mxu0 0.0
    %5997 = vmatpush1.msra.mxu0 0.0
    %5998 = vmatprep.subr.mxu0 0.0
    %5999 = vmatpush1.msra.mxu0 0.0
    %6000 = vmatprep.subr.mxu0 0.0
    %6001 = vmatpush1.msra.mxu0 0.0
    %6002 = vmatprep.subr.mxu0 0.0
    %6003 = vmatpush1.msra.mxu0 0.0
    %6004 = vmatprep.subr.mxu0 0.0
    %6005 = vmatpush1.msra.mxu0 0.0
    %6006 = vmatprep.subr.mxu0 0.0
    %6007 = vmatpush1.msra.mxu0 0.0
    %6008 = vmatprep.subr.mxu0 0.0
    %6009 = vmatpush1.msra.mxu0 0.0
    %6010 = vmatprep.subr.mxu0 0.0
    %6011 = vmatpush1.msra.mxu0 0.0
    %6012 = vmatprep.subr.mxu0 0.0
    %6013 = vmatpush1.msra.mxu0 0.0
    %6014 = vmatprep.subr.mxu0 0.0
    %6015 = vmatpush1.msra.mxu0 0.0
    %6016 = vmatprep.subr.mxu0 0.0
    %6017 = vmatpush1.msra.mxu0 0.0
    %6018 = vmatprep.subr.mxu0 0.0
    %6019 = vmatpush1.msra.mxu0 0.0
    %6020 = vmatprep.subr.mxu0 0.0
    %6021 = vmatpush1.msra.mxu0 0.0
    %6022 = vmatprep.subr.mxu0 0.0
    %6023 = vmatpush1.msra.mxu0 0.0
    %6024 = vmatprep.subr.mxu0 0.0
    %6025 = vmatpush1.msra.mxu0 0.0
    %6026 = vmatprep.subr.mxu0 0.0
    %6027 = vmatpush1.msra.mxu0 0.0
    %6028 = vmatprep.subr.mxu0 0.0
    %6029 = vmatpush1.msra.mxu0 0.0
    %6030 = vmatprep.mubr.f32.mxu0 0.0
    %v6031 = vand.u32 %v5511, 4294901760
    %6032 = vmatmul.mubr.f32.gmra.mrb[0].mxu0 %v6031
    %v6033 = vpop.f32.mrb[0].mxu0
    %v6034 = vadd.f32 %v5956, %v6033
    %v6035 = vpop.f32.mrb[0].mxu0
    %6036 = vdwg.mxu0
    %6037 = vrot.lane.b32.xlu0 %v431, 115
    %v6038 = vpop.permute.xlu0 %6037
    %v6040 = vsel %vm436, %v6034, %v6038
    %v6042 = vsel %vm438, %v6040, 0
    %6044 = vmatprep.subr.mxu0 0.0
    %6045 = vmatpush1.msra.mxu0 %v391
    %6046 = vmatprep.subr.mxu0 0.0
    %6047 = vmatpush1.msra.mxu0 %v444
    %6048 = vmatprep.subr.mxu0 0.0
    %6049 = vmatpush1.msra.mxu0 0.0
    %6050 = vmatprep.subr.mxu0 0.0
    %6051 = vmatpush1.msra.mxu0 0.0
    %6052 = vmatprep.subr.mxu0 0.0
    %6053 = vmatpush1.msra.mxu0 0.0
    %6054 = vmatprep.subr.mxu0 0.0
    %6055 = vmatpush1.msra.mxu0 0.0
    %6056 = vmatprep.subr.mxu0 0.0
    %6057 = vmatpush1.msra.mxu0 0.0
    %6058 = vmatprep.subr.mxu0 0.0
    %6059 = vmatpush1.msra.mxu0 0.0
    %6060 = vmatprep.subr.mxu0 0.0
    %6061 = vmatpush1.msra.mxu0 0.0
    %6062 = vmatprep.subr.mxu0 0.0
    %6063 = vmatpush1.msra.mxu0 0.0
    %6064 = vmatprep.subr.mxu0 0.0
    %6065 = vmatpush1.msra.mxu0 0.0
    %6066 = vmatprep.subr.mxu0 0.0
    %6067 = vmatpush1.msra.mxu0 0.0
    %6068 = vmatprep.subr.mxu0 0.0
    %6069 = vmatpush1.msra.mxu0 0.0
    %6070 = vmatprep.subr.mxu0 0.0
    %6071 = vmatpush1.msra.mxu0 0.0
    %6072 = vmatprep.subr.mxu0 0.0
    %6073 = vmatpush1.msra.mxu0 0.0
    %6074 = vmatprep.subr.mxu0 0.0
    %6075 = vmatpush1.msra.mxu0 0.0
    %6076 = vmatprep.subr.mxu0 0.0
    %6077 = vmatpush1.msra.mxu0 0.0
    %6078 = vmatprep.subr.mxu0 0.0
    %6079 = vmatpush1.msra.mxu0 0.0
    %6080 = vmatprep.subr.mxu0 0.0
    %6081 = vmatpush1.msra.mxu0 0.0
    %6082 = vmatprep.subr.mxu0 0.0
    %6083 = vmatpush1.msra.mxu0 0.0
    %6084 = vmatprep.subr.mxu0 0.0
    %6085 = vmatpush1.msra.mxu0 0.0
    %6086 = vmatprep.subr.mxu0 0.0
    %6087 = vmatpush1.msra.mxu0 0.0
    %6088 = vmatprep.subr.mxu0 0.0
    %6089 = vmatpush1.msra.mxu0 0.0
    %6090 = vmatprep.subr.mxu0 0.0
    %6091 = vmatpush1.msra.mxu0 0.0
    %6092 = vmatprep.subr.mxu0 0.0
    %6093 = vmatpush1.msra.mxu0 0.0
    %6094 = vmatprep.subr.mxu0 0.0
    %6095 = vmatpush1.msra.mxu0 0.0
    %6096 = vmatprep.subr.mxu0 0.0
    %6097 = vmatpush1.msra.mxu0 0.0
    %6098 = vmatprep.subr.mxu0 0.0
    %6099 = vmatpush1.msra.mxu0 0.0
    %6100 = vmatprep.subr.mxu0 0.0
    %6101 = vmatpush1.msra.mxu0 0.0
    %6102 = vmatprep.subr.mxu0 0.0
    %6103 = vmatpush1.msra.mxu0 0.0
    %6104 = vmatprep.subr.mxu0 0.0
    %6105 = vmatpush1.msra.mxu0 0.0
    %6106 = vmatprep.subr.mxu0 0.0
    %6107 = vmatpush1.msra.mxu0 0.0
    %6108 = vmatprep.mubr.f32.mxu0 0.0
    %6109 = vmatmul.mubr.f32.gmra.mrb[0].mxu0 %v6042
    %v6110 = vpop.f32.mrb[0].mxu0
    %v6111 = vadd.f32 %v415, %v6110
    %v6112 = vpop.f32.mrb[0].mxu0
    %6113 = vdwg.mxu0
    %v6114 = vtanh.pop %v6111
    %v6116 = vsel %vm155, %v6114, 0
    %6118 = vmatprep.subr.mxu0 0.0
    %6119 = vmatpush1.msra.mxu0 %v393
    %6120 = vmatprep.subr.mxu0 0.0
    %6121 = vmatpush1.msra.mxu0 %v394
    %6122 = vmatprep.subr.mxu0 0.0
    %6123 = vmatpush1.msra.mxu0 %v395
    %6124 = vmatprep.subr.mxu0 0.0
    %6125 = vmatpush1.msra.mxu0 %v396
    %6126 = vmatprep.subr.mxu0 0.0
    %6127 = vmatpush1.msra.mxu0 0.0
    %6128 = vmatprep.subr.mxu0 0.0
    %6129 = vmatpush1.msra.mxu0 0.0
    %6130 = vmatprep.subr.mxu0 0.0
    %6131 = vmatpush1.msra.mxu0 0.0
    %6132 = vmatprep.subr.mxu0 0.0
    %6133 = vmatpush1.msra.mxu0 0.0
    %6134 = vmatprep.subr.mxu0 0.0
    %6135 = vmatpush1.msra.mxu0 0.0
    %6136 = vmatprep.subr.mxu0 0.0
    %6137 = vmatpush1.msra.mxu0 0.0
    %6138 = vmatprep.subr.mxu0 0.0
    %6139 = vmatpush1.msra.mxu0 0.0
    %6140 = vmatprep.subr.mxu0 0.0
    %6141 = vmatpush1.msra.mxu0 0.0
    %6142 = vmatprep.subr.mxu0 0.0
    %6143 = vmatpush1.msra.mxu0 0.0
    %6144 = vmatprep.subr.mxu0 0.0
    %6145 = vmatpush1.msra.mxu0 0.0
    %6146 = vmatprep.subr.mxu0 0.0
    %6147 = vmatpush1.msra.mxu0 0.0
    %6148 = vmatprep.subr.mxu0 0.0
    %6149 = vmatpush1.msra.mxu0 0.0
    %6150 = vmatprep.subr.mxu0 0.0
    %6151 = vmatpush1.msra.mxu0 0.0
    %6152 = vmatprep.subr.mxu0 0.0
    %6153 = vmatpush1.msra.mxu0 0.0
    %6154 = vmatprep.subr.mxu0 0.0
    %6155 = vmatpush1.msra.mxu0 0.0
    %6156 = vmatprep.subr.mxu0 0.0
    %6157 = vmatpush1.msra.mxu0 0.0
    %6158 = vmatprep.subr.mxu0 0.0
    %6159 = vmatpush1.msra.mxu0 0.0
    %6160 = vmatprep.subr.mxu0 0.0
    %6161 = vmatpush1.msra.mxu0 0.0
    %6162 = vmatprep.subr.mxu0 0.0
    %6163 = vmatpush1.msra.mxu0 0.0
    %6164 = vmatprep.subr.mxu0 0.0
    %6165 = vmatpush1.msra.mxu0 0.0
    %6166 = vmatprep.subr.mxu0 0.0
    %6167 = vmatpush1.msra.mxu0 0.0
    %6168 = vmatprep.subr.mxu0 0.0
    %6169 = vmatpush1.msra.mxu0 0.0
    %6170 = vmatprep.subr.mxu0 0.0
    %6171 = vmatpush1.msra.mxu0 0.0
    %6172 = vmatprep.subr.mxu0 0.0
    %6173 = vmatpush1.msra.mxu0 0.0
    %6174 = vmatprep.subr.mxu0 0.0
    %6175 = vmatpush1.msra.mxu0 0.0
    %6176 = vmatprep.subr.mxu0 0.0
    %6177 = vmatpush1.msra.mxu0 0.0
    %6178 = vmatprep.subr.mxu0 0.0
    %6179 = vmatpush1.msra.mxu0 0.0
    %6180 = vmatprep.subr.mxu0 0.0
    %6181 = vmatpush1.msra.mxu0 0.0
    %6182 = vmatprep.mubr.f32.mxu0 0.0
    %6183 = vmatmul.mubr.f32.gmra.mrb[0].mxu0 %v6116
    %v6184 = vpop.f32.mrb[0].mxu0
    %v6185 = vadd.f32 %v422, %v6184
    %v6186 = vpop.f32.mrb[0].mxu0
    %6187 = vdwg.mxu0
    %v6188 = vtanh.pop %v6185
    %6190 = vrot.lane.b32.xlu0 %v6188, 11
    %v6191 = vpop.permute.xlu0 %6190
    %v6193 = vsel %vm438, %v6040, %v6191
    %v6195 = vsel %vm596, %v6193, 0
    %6197 = vmatprep.subr.mxu0 0.0
    %6198 = vmatpush1.msra.mxu0 %v397
    %6199 = vmatprep.subr.mxu0 0.0
    %6200 = vmatpush1.msra.mxu0 %v398
    %6201 = vmatprep.subr.mxu0 0.0
    %6202 = vmatpush1.msra.mxu0 %v399
    %6203 = vmatprep.subr.mxu0 0.0
    %6204 = vmatpush1.msra.mxu0 %v400
    %6205 = vmatprep.subr.mxu0 0.0
    %6206 = vmatpush1.msra.mxu0 %v401
    %6207 = vmatprep.subr.mxu0 0.0
    %6208 = vmatpush1.msra.mxu0 %v601
    %6209 = vmatprep.subr.mxu0 0.0
    %6210 = vmatpush1.msra.mxu0 0.0
    %6211 = vmatprep.subr.mxu0 0.0
    %6212 = vmatpush1.msra.mxu0 0.0
    %6213 = vmatprep.subr.mxu0 0.0
    %6214 = vmatpush1.msra.mxu0 0.0
    %6215 = vmatprep.subr.mxu0 0.0
    %6216 = vmatpush1.msra.mxu0 0.0
    %6217 = vmatprep.subr.mxu0 0.0
    %6218 = vmatpush1.msra.mxu0 0.0
    %6219 = vmatprep.subr.mxu0 0.0
    %6220 = vmatpush1.msra.mxu0 0.0
    %6221 = vmatprep.subr.mxu0 0.0
    %6222 = vmatpush1.msra.mxu0 0.0
    %6223 = vmatprep.subr.mxu0 0.0
    %6224 = vmatpush1.msra.mxu0 0.0
    %6225 = vmatprep.subr.mxu0 0.0
    %6226 = vmatpush1.msra.mxu0 0.0
    %6227 = vmatprep.subr.mxu0 0.0
    %6228 = vmatpush1.msra.mxu0 0.0
    %6229 = vmatprep.subr.mxu0 0.0
    %6230 = vmatpush1.msra.mxu0 0.0
    %6231 = vmatprep.subr.mxu0 0.0
    %6232 = vmatpush1.msra.mxu0 0.0
    %6233 = vmatprep.subr.mxu0 0.0
    %6234 = vmatpush1.msra.mxu0 0.0
    %6235 = vmatprep.subr.mxu0 0.0
    %6236 = vmatpush1.msra.mxu0 0.0
    %6237 = vmatprep.subr.mxu0 0.0
    %6238 = vmatpush1.msra.mxu0 0.0
    %6239 = vmatprep.subr.mxu0 0.0
    %6240 = vmatpush1.msra.mxu0 0.0
    %6241 = vmatprep.subr.mxu0 0.0
    %6242 = vmatpush1.msra.mxu0 0.0
    %6243 = vmatprep.subr.mxu0 0.0
    %6244 = vmatpush1.msra.mxu0 0.0
    %6245 = vmatprep.subr.mxu0 0.0
    %6246 = vmatpush1.msra.mxu0 0.0
    %6247 = vmatprep.subr.mxu0 0.0
    %6248 = vmatpush1.msra.mxu0 0.0
    %6249 = vmatprep.subr.mxu0 0.0
    %6250 = vmatpush1.msra.mxu0 0.0
    %6251 = vmatprep.subr.mxu0 0.0
    %6252 = vmatpush1.msra.mxu0 0.0
    %6253 = vmatprep.subr.mxu0 0.0
    %6254 = vmatpush1.msra.mxu0 0.0
    %6255 = vmatprep.subr.mxu0 0.0
    %6256 = vmatpush1.msra.mxu0 0.0
    %6257 = vmatprep.subr.mxu0 0.0
    %6258 = vmatpush1.msra.mxu0 0.0
    %6259 = vmatprep.subr.mxu0 0.0
    %6260 = vmatpush1.msra.mxu0 0.0
    %6261 = vmatprep.mubr.f32.mxu0 0.0
    %6262 = vmatmul.mubr.f32.gmra.mrb[0].mxu0 %v6195
    %v6263 = vpop.f32.mrb[0].mxu0
    %v6264 = vadd.f32 %v429, %v6263
    %v6265 = vpop.f32.mrb[0].mxu0
    %6266 = vdwg.mxu0
    %6268 = vset.pattern.permute.xlu0 0
    %6269 = vperm.xlu0 %6268, %v6264
    %v6270 = vpop.permute.xlu0 %6269
    %v6272 = vmul.f32 %v6270, %v6040
    %6273 = vset.pattern.permute.xlu0 1
    %6274 = vperm.xlu0 %6273, %v6264
    %v6275 = vpop.permute.xlu0 %6274
    %v6277 = vmul.f32 %v6275, %v6040
    %6278 = vset.pattern.permute.xlu0 2
    %6279 = vperm.xlu0 %6278, %v6264
    %v6280 = vpop.permute.xlu0 %6279
    %v6282 = vmul.f32 %v6280, %v6040
    %6283 = vset.pattern.permute.xlu0 3
    %6284 = vperm.xlu0 %6283, %v6264
    %v6285 = vpop.permute.xlu0 %6284
    %v6287 = vmul.f32 %v6285, %v6040
    %6289 = vrot.lane.b32.xlu0 %v6272, 11
    %v6290 = vpop.permute.xlu0 %6289
    %6293 = vrot.lane.b32.xlu0 %v6277, 22
    %v6294 = vpop.permute.xlu0 %6293
    %6297 = vrot.lane.b32.xlu0 %v6282, 33
    %v6298 = vpop.permute.xlu0 %6297
    %6301 = vrot.lane.b32.xlu0 %v6287, 44
    %v6302 = vpop.permute.xlu0 %6301
    %v6304 = vsel %vm438, %v6040, %v6290
    %v6305 = vsel %vm711, %v6304, %v6294
    %v6306 = vsel %vm713, %v6305, %v6298
    %v6307 = vsel %vm715, %v6306, %v6302
    %v6309 = vsel %vm717, %v6307, 0
    %6311 = vmatprep.subr.mxu0 0.0
    %v6312 = vand.u32 %v403, 4294901760
    %6313 = vmatpush1.msra.mxu0 %v6312
    %6314 = vmatprep.subr.mxu0 0.0
    %v6315 = vand.u32 %v404, 4294901760
    %6316 = vmatpush1.msra.mxu0 %v6315
    %6317 = vmatprep.subr.mxu0 0.0
    %v6318 = vand.u32 %v405, 4294901760
    %6319 = vmatpush1.msra.mxu0 %v6318
    %6320 = vmatprep.subr.mxu0 0.0
    %v6321 = vand.u32 %v406, 4294901760
    %6322 = vmatpush1.msra.mxu0 %v6321
    %6323 = vmatprep.subr.mxu0 0.0
    %v6324 = vand.u32 %v407, 4294901760
    %6325 = vmatpush1.msra.mxu0 %v6324
    %6326 = vmatprep.subr.mxu0 0.0
    %v6327 = vand.u32 %v408, 4294901760
    %6328 = vmatpush1.msra.mxu0 %v6327
    %6329 = vmatprep.subr.mxu0 0.0
    %v6330 = vand.u32 %v723, 4294901760
    %6331 = vmatpush1.msra.mxu0 %v6330
    %6332 = vmatprep.subr.mxu0 0.0
    %6333 = vmatpush1.msra.mxu0 0.0
    %6334 = vmatprep.subr.mxu0 0.0
    %6335 = vmatpush1.msra.mxu0 0.0
    %6336 = vmatprep.subr.mxu0 0.0
    %6337 = vmatpush1.msra.mxu0 0.0
    %6338 = vmatprep.subr.mxu0 0.0
    %6339 = vmatpush1.msra.mxu0 0.0
    %6340 = vmatprep.subr.mxu0 0.0
    %6341 = vmatpush1.msra.mxu0 0.0
    %6342 = vmatprep.subr.mxu0 0.0
    %6343 = vmatpush1.msra.mxu0 0.0
    %6344 = vmatprep.subr.mxu0 0.0
    %6345 = vmatpush1.msra.mxu0 0.0
    %6346 = vmatprep.subr.mxu0 0.0
    %6347 = vmatpush1.msra.mxu0 0.0
    %6348 = vmatprep.subr.mxu0 0.0
    %6349 = vmatpush1.msra.mxu0 0.0
    %6350 = vmatprep.subr.mxu0 0.0
    %6351 = vmatpush1.msra.mxu0 0.0
    %6352 = vmatprep.subr.mxu0 0.0
    %6353 = vmatpush1.msra.mxu0 0.0
    %6354 = vmatprep.subr.mxu0 0.0
    %6355 = vmatpush1.msra.mxu0 0.0
    %6356 = vmatprep.subr.mxu0 0.0
    %6357 = vmatpush1.msra.mxu0 0.0
    %6358 = vmatprep.subr.mxu0 0.0
    %6359 = vmatpush1.msra.mxu0 0.0
    %6360 = vmatprep.subr.mxu0 0.0
    %6361 = vmatpush1.msra.mxu0 0.0
    %6362 = vmatprep.subr.mxu0 0.0
    %6363 = vmatpush1.msra.mxu0 0.0
    %6364 = vmatprep.subr.mxu0 0.0
    %6365 = vmatpush1.msra.mxu0 0.0
    %6366 = vmatprep.subr.mxu0 0.0
    %6367 = vmatpush1.msra.mxu0 0.0
    %6368 = vmatprep.subr.mxu0 0.0
    %6369 = vmatpush1.msra.mxu0 0.0
    %6370 = vmatprep.subr.mxu0 0.0
    %6371 = vmatpush1.msra.mxu0 0.0
    %6372 = vmatprep.subr.mxu0 0.0
    %6373 = vmatpush1.msra.mxu0 0.0
    %6374 = vmatprep.subr.mxu0 0.0
    %6375 = vmatpush1.msra.mxu0 0.0
    %6376 = vmatprep.subr.mxu0 0.0
    %6377 = vmatpush1.msra.mxu0 0.0
    %6378 = vmatprep.subr.mxu0 0.0
    %6379 = vmatpush1.msra.mxu0 0.0
    %6380 = vmatprep.subr.mxu0 0.0
    %6381 = vmatpush1.msra.mxu0 0.0
    %6382 = vmatprep.mubr.f32.mxu0 0.0
    %v6383 = vand.u32 %v6309, 4294901760
    %v6384 = vsub.f32 %v6309, %v6383
    %v6385 = vand.u32 %v6384, 4294901760
    %v6386 = vsub.f32 %v6384, %v6385
    %v6387 = vand.u32 %v6386, 4294901760
    %6388 = vmatmul.mubr.f32.gmra.mrb[0].mxu0 %v6387
    %v6389 = vpop.f32.mrb[0].mxu0
    %v6390 = vadd.f32 0.0, %v6389
    %v6391 = vpop.f32.mrb[0].mxu0
    %6392 = vdwg.mxu0
    %6393 = vmatprep.subr.mxu0 0.0
    %v6394 = vand.u32 %v403, 4294901760
    %v6395 = vsub.f32 %v403, %v6394
    %v6396 = vand.u32 %v6395, 4294901760
    %v6397 = vsub.f32 %v6395, %v6396
    %v6398 = vand.u32 %v6397, 4294901760
    %6399 = vmatpush1.msra.mxu0 %v6398
    %6400 = vmatprep.subr.mxu0 0.0
    %v6401 = vand.u32 %v404, 4294901760
    %v6402 = vsub.f32 %v404, %v6401
    %v6403 = vand.u32 %v6402, 4294901760
    %v6404 = vsub.f32 %v6402, %v6403
    %v6405 = vand.u32 %v6404, 4294901760
    %6406 = vmatpush1.msra.mxu0 %v6405
    %6407 = vmatprep.subr.mxu0 0.0
    %v6408 = vand.u32 %v405, 4294901760
    %v6409 = vsub.f32 %v405, %v6408
    %v6410 = vand.u32 %v6409, 4294901760
    %v6411 = vsub.f32 %v6409, %v6410
    %v6412 = vand.u32 %v6411, 4294901760
    %6413 = vmatpush1.msra.mxu0 %v6412
    %6414 = vmatprep.subr.mxu0 0.0
    %v6415 = vand.u32 %v406, 4294901760
    %v6416 = vsub.f32 %v406, %v6415
    %v6417 = vand.u32 %v6416, 4294901760
    %v6418 = vsub.f32 %v6416, %v6417
    %v6419 = vand.u32 %v6418, 4294901760
    %6420 = vmatpush1.msra.mxu0 %v6419
    %6421 = vmatprep.subr.mxu0 0.0
    %v6422 = vand.u32 %v407, 4294901760
    %v6423 = vsub.f32 %v407, %v6422
    %v6424 = vand.u32 %v6423, 4294901760
    %v6425 = vsub.f32 %v6423, %v6424
    %v6426 = vand.u32 %v6425, 4294901760
    %6427 = vmatpush1.msra.mxu0 %v6426
    %6428 = vmatprep.subr.mxu0 0.0
    %v6429 = vand.u32 %v408, 4294901760
    %v6430 = vsub.f32 %v408, %v6429
    %v6431 = vand.u32 %v6430, 4294901760
    %v6432 = vsub.f32 %v6430, %v6431
    %v6433 = vand.u32 %v6432, 4294901760
    %6434 = vmatpush1.msra.mxu0 %v6433
    %6435 = vmatprep.subr.mxu0 0.0
    %v6436 = vand.u32 %v723, 4294901760
    %v6437 = vsub.f32 %v723, %v6436
    %v6438 = vand.u32 %v6437, 4294901760
    %v6439 = vsub.f32 %v6437, %v6438
    %v6440 = vand.u32 %v6439, 4294901760
    %6441 = vmatpush1.msra.mxu0 %v6440
    %6442 = vmatprep.subr.mxu0 0.0
    %6443 = vmatpush1.msra.mxu0 0.0
    %6444 = vmatprep.subr.mxu0 0.0
    %6445 = vmatpush1.msra.mxu0 0.0
    %6446 = vmatprep.subr.mxu0 0.0
    %6447 = vmatpush1.msra.mxu0 0.0
    %6448 = vmatprep.subr.mxu0 0.0
    %6449 = vmatpush1.msra.mxu0 0.0
    %6450 = vmatprep.subr.mxu0 0.0
    %6451 = vmatpush1.msra.mxu0 0.0
    %6452 = vmatprep.subr.mxu0 0.0
    %6453 = vmatpush1.msra.mxu0 0.0
    %6454 = vmatprep.subr.mxu0 0.0
    %6455 = vmatpush1.msra.mxu0 0.0
    %6456 = vmatprep.subr.mxu0 0.0
    %6457 = vmatpush1.msra.mxu0 0.0
    %6458 = vmatprep.subr.mxu0 0.0
    %6459 = vmatpush1.msra.mxu0 0.0
    %6460 = vmatprep.subr.mxu0 0.0
    %6461 = vmatpush1.msra.mxu0 0.0
    %6462 = vmatprep.subr.mxu0 0.0
    %6463 = vmatpush1.msra.mxu0 0.0
    %6464 = vmatprep.subr.mxu0 0.0
    %6465 = vmatpush1.msra.mxu0 0.0
    %6466 = vmatprep.subr.mxu0 0.0
    %6467 = vmatpush1.msra.mxu0 0.0
    %6468 = vmatprep.subr.mxu0 0.0
    %6469 = vmatpush1.msra.mxu0 0.0
    %6470 = vmatprep.subr.mxu0 0.0
    %6471 = vmatpush1.msra.mxu0 0.0
    %6472 = vmatprep.subr.mxu0 0.0
    %6473 = vmatpush1.msra.mxu0 0.0
    %6474 = vmatprep.subr.mxu0 0.0
    %6475 = vmatpush1.msra.mxu0 0.0
    %6476 = vmatprep.subr.mxu0 0.0
    %6477 = vmatpush1.msra.mxu0 0.0
    %6478 = vmatprep.subr.mxu0 0.0
    %6479 = vmatpush1.msra.mxu0 0.0
    %6480 = vmatprep.subr.mxu0 0.0
    %6481 = vmatpush1.msra.mxu0 0.0
    %6482 = vmatprep.subr.mxu0 0.0
    %6483 = vmatpush1.msra.mxu0 0.0
    %6484 = vmatprep.subr.mxu0 0.0
    %6485 = vmatpush1.msra.mxu0 0.0
    %6486 = vmatprep.subr.mxu0 0.0
    %6487 = vmatpush1.msra.mxu0 0.0
    %6488 = vmatprep.subr.mxu0 0.0
    %6489 = vmatpush1.msra.mxu0 0.0
    %6490 = vmatprep.subr.mxu0 0.0
    %6491 = vmatpush1.msra.mxu0 0.0
    %6492 = vmatprep.mubr.f32.mxu0 0.0
    %v6493 = vand.u32 %v6309, 4294901760
    %6494 = vmatmul.mubr.f32.gmra.mrb[0].mxu0 %v6493
    %v6495 = vpop.f32.mrb[0].mxu0
    %v6496 = vadd.f32 %v6390, %v6495
    %v6497 = vpop.f32.mrb[0].mxu0
    %6498 = vdwg.mxu0
    %6499 = vmatprep.subr.mxu0 0.0
    %v6500 = vand.u32 %v403, 4294901760
    %v6501 = vsub.f32 %v403, %v6500
    %6502 = vmatpush1.msra.mxu0 %v6501
    %6503 = vmatprep.subr.mxu0 0.0
    %v6504 = vand.u32 %v404, 4294901760
    %v6505 = vsub.f32 %v404, %v6504
    %6506 = vmatpush1.msra.mxu0 %v6505
    %6507 = vmatprep.subr.mxu0 0.0
    %v6508 = vand.u32 %v405, 4294901760
    %v6509 = vsub.f32 %v405, %v6508
    %6510 = vmatpush1.msra.mxu0 %v6509
    %6511 = vmatprep.subr.mxu0 0.0
    %v6512 = vand.u32 %v406, 4294901760
    %v6513 = vsub.f32 %v406, %v6512
    %6514 = vmatpush1.msra.mxu0 %v6513
    %6515 = vmatprep.subr.mxu0 0.0
    %v6516 = vand.u32 %v407, 4294901760
    %v6517 = vsub.f32 %v407, %v6516
    %6518 = vmatpush1.msra.mxu0 %v6517
    %6519 = vmatprep.subr.mxu0 0.0
    %v6520 = vand.u32 %v408, 4294901760
    %v6521 = vsub.f32 %v408, %v6520
    %6522 = vmatpush1.msra.mxu0 %v6521
    %6523 = vmatprep.subr.mxu0 0.0
    %v6524 = vand.u32 %v723, 4294901760
    %v6525 = vsub.f32 %v723, %v6524
    %6526 = vmatpush1.msra.mxu0 %v6525
    %6527 = vmatprep.subr.mxu0 0.0
    %6528 = vmatpush1.msra.mxu0 0.0
    %6529 = vmatprep.subr.mxu0 0.0
    %6530 = vmatpush1.msra.mxu0 0.0
    %6531 = vmatprep.subr.mxu0 0.0
    %6532 = vmatpush1.msra.mxu0 0.0
    %6533 = vmatprep.subr.mxu0 0.0
    %6534 = vmatpush1.msra.mxu0 0.0
    %6535 = vmatprep.subr.mxu0 0.0
    %6536 = vmatpush1.msra.mxu0 0.0
    %6537 = vmatprep.subr.mxu0 0.0
    %6538 = vmatpush1.msra.mxu0 0.0
    %6539 = vmatprep.subr.mxu0 0.0
    %6540 = vmatpush1.msra.mxu0 0.0
    %6541 = vmatprep.subr.mxu0 0.0
    %6542 = vmatpush1.msra.mxu0 0.0
    %6543 = vmatprep.subr.mxu0 0.0
    %6544 = vmatpush1.msra.mxu0 0.0
    %6545 = vmatprep.subr.mxu0 0.0
    %6546 = vmatpush1.msra.mxu0 0.0
    %6547 = vmatprep.subr.mxu0 0.0
    %6548 = vmatpush1.msra.mxu0 0.0
    %6549 = vmatprep.subr.mxu0 0.0
    %6550 = vmatpush1.msra.mxu0 0.0
    %6551 = vmatprep.subr.mxu0 0.0
    %6552 = vmatpush1.msra.mxu0 0.0
    %6553 = vmatprep.subr.mxu0 0.0
    %6554 = vmatpush1.msra.mxu0 0.0
    %6555 = vmatprep.subr.mxu0 0.0
    %6556 = vmatpush1.msra.mxu0 0.0
    %6557 = vmatprep.subr.mxu0 0.0
    %6558 = vmatpush1.msra.mxu0 0.0
    %6559 = vmatprep.subr.mxu0 0.0
    %6560 = vmatpush1.msra.mxu0 0.0
    %6561 = vmatprep.subr.mxu0 0.0
    %6562 = vmatpush1.msra.mxu0 0.0
    %6563 = vmatprep.subr.mxu0 0.0
    %6564 = vmatpush1.msra.mxu0 0.0
    %6565 = vmatprep.subr.mxu0 0.0
    %6566 = vmatpush1.msra.mxu0 0.0
    %6567 = vmatprep.subr.mxu0 0.0
    %6568 = vmatpush1.msra.mxu0 0.0
    %6569 = vmatprep.subr.mxu0 0.0
    %6570 = vmatpush1.msra.mxu0 0.0
    %6571 = vmatprep.subr.mxu0 0.0
    %6572 = vmatpush1.msra.mxu0 0.0
    %6573 = vmatprep.subr.mxu0 0.0
    %6574 = vmatpush1.msra.mxu0 0.0
    %6575 = vmatprep.subr.mxu0 0.0
    %6576 = vmatpush1.msra.mxu0 0.0
    %6577 = vmatprep.mubr.f32.mxu0 0.0
    %v6578 = vand.u32 %v6309, 4294901760
    %v6579 = vsub.f32 %v6309, %v6578
    %6580 = vmatmul.mubr.f32.gmra.mrb[0].mxu0 %v6579
    %v6581 = vpop.f32.mrb[0].mxu0
    %v6582 = vadd.f32 %v6496, %v6581
    %v6583 = vpop.f32.mrb[0].mxu0
    %6584 = vdwg.mxu0
    %6585 = vmatprep.subr.mxu0 0.0
    %v6586 = vand.u32 %v403, 4294901760
    %6587 = vmatpush1.msra.mxu0 %v6586
    %6588 = vmatprep.subr.mxu0 0.0
    %v6589 = vand.u32 %v404, 4294901760
    %6590 = vmatpush1.msra.mxu0 %v6589
    %6591 = vmatprep.subr.mxu0 0.0
    %v6592 = vand.u32 %v405, 4294901760
    %6593 = vmatpush1.msra.mxu0 %v6592
    %6594 = vmatprep.subr.mxu0 0.0
    %v6595 = vand.u32 %v406, 4294901760
    %6596 = vmatpush1.msra.mxu0 %v6595
    %6597 = vmatprep.subr.mxu0 0.0
    %v6598 = vand.u32 %v407, 4294901760
    %6599 = vmatpush1.msra.mxu0 %v6598
    %6600 = vmatprep.subr.mxu0 0.0
    %v6601 = vand.u32 %v408, 4294901760
    %6602 = vmatpush1.msra.mxu0 %v6601
    %6603 = vmatprep.subr.mxu0 0.0
    %v6604 = vand.u32 %v723, 4294901760
    %6605 = vmatpush1.msra.mxu0 %v6604
    %6606 = vmatprep.subr.mxu0 0.0
    %6607 = vmatpush1.msra.mxu0 0.0
    %6608 = vmatprep.subr.mxu0 0.0
    %6609 = vmatpush1.msra.mxu0 0.0
    %6610 = vmatprep.subr.mxu0 0.0
    %6611 = vmatpush1.msra.mxu0 0.0
    %6612 = vmatprep.subr.mxu0 0.0
    %6613 = vmatpush1.msra.mxu0 0.0
    %6614 = vmatprep.subr.mxu0 0.0
    %6615 = vmatpush1.msra.mxu0 0.0
    %6616 = vmatprep.subr.mxu0 0.0
    %6617 = vmatpush1.msra.mxu0 0.0
    %6618 = vmatprep.subr.mxu0 0.0
    %6619 = vmatpush1.msra.mxu0 0.0
    %6620 = vmatprep.subr.mxu0 0.0
    %6621 = vmatpush1.msra.mxu0 0.0
    %6622 = vmatprep.subr.mxu0 0.0
    %6623 = vmatpush1.msra.mxu0 0.0
    %6624 = vmatprep.subr.mxu0 0.0
    %6625 = vmatpush1.msra.mxu0 0.0
    %6626 = vmatprep.subr.mxu0 0.0
    %6627 = vmatpush1.msra.mxu0 0.0
    %6628 = vmatprep.subr.mxu0 0.0
    %6629 = vmatpush1.msra.mxu0 0.0
    %6630 = vmatprep.subr.mxu0 0.0
    %6631 = vmatpush1.msra.mxu0 0.0
    %6632 = vmatprep.subr.mxu0 0.0
    %6633 = vmatpush1.msra.mxu0 0.0
    %6634 = vmatprep.subr.mxu0 0.0
    %6635 = vmatpush1.msra.mxu0 0.0
    %6636 = vmatprep.subr.mxu0 0.0
    %6637 = vmatpush1.msra.mxu0 0.0
    %6638 = vmatprep.subr.mxu0 0.0
    %6639 = vmatpush1.msra.mxu0 0.0
    %6640 = vmatprep.subr.mxu0 0.0
    %6641 = vmatpush1.msra.mxu0 0.0
    %6642 = vmatprep.subr.mxu0 0.0
    %6643 = vmatpush1.msra.mxu0 0.0
    %6644 = vmatprep.subr.mxu0 0.0
    %6645 = vmatpush1.msra.mxu0 0.0
    %6646 = vmatprep.subr.mxu0 0.0
    %6647 = vmatpush1.msra.mxu0 0.0
    %6648 = vmatprep.subr.mxu0 0.0
    %6649 = vmatpush1.msra.mxu0 0.0
    %6650 = vmatprep.subr.mxu0 0.0
    %6651 = vmatpush1.msra.mxu0 0.0
    %6652 = vmatprep.subr.mxu0 0.0
    %6653 = vmatpush1.msra.mxu0 0.0
    %6654 = vmatprep.subr.mxu0 0.0
    %6655 = vmatpush1.msra.mxu0 0.0
    %6656 = vmatprep.mubr.f32.mxu0 0.0
    %v6657 = vand.u32 %v6309, 4294901760
    %v6658 = vsub.f32 %v6309, %v6657
    %v6659 = vand.u32 %v6658, 4294901760
    %6660 = vmatmul.mubr.f32.gmra.mrb[0].mxu0 %v6659
    %v6661 = vpop.f32.mrb[0].mxu0
    %v6662 = vadd.f32 %v6582, %v6661
    %v6663 = vpop.f32.mrb[0].mxu0
    %6664 = vdwg.mxu0
    %6665 = vmatprep.subr.mxu0 0.0
    %v6666 = vand.u32 %v403, 4294901760
    %v6667 = vsub.f32 %v403, %v6666
    %v6668 = vand.u32 %v6667, 4294901760
    %6669 = vmatpush1.msra.mxu0 %v6668
    %6670 = vmatprep.subr.mxu0 0.0
    %v6671 = vand.u32 %v404, 4294901760
    %v6672 = vsub.f32 %v404, %v6671
    %v6673 = vand.u32 %v6672, 4294901760
    %6674 = vmatpush1.msra.mxu0 %v6673
    %6675 = vmatprep.subr.mxu0 0.0
    %v6676 = vand.u32 %v405, 4294901760
    %v6677 = vsub.f32 %v405, %v6676
    %v6678 = vand.u32 %v6677, 4294901760
    %6679 = vmatpush1.msra.mxu0 %v6678
    %6680 = vmatprep.subr.mxu0 0.0
    %v6681 = vand.u32 %v406, 4294901760
    %v6682 = vsub.f32 %v406, %v6681
    %v6683 = vand.u32 %v6682, 4294901760
    %6684 = vmatpush1.msra.mxu0 %v6683
    %6685 = vmatprep.subr.mxu0 0.0
    %v6686 = vand.u32 %v407, 4294901760
    %v6687 = vsub.f32 %v407, %v6686
    %v6688 = vand.u32 %v6687, 4294901760
    %6689 = vmatpush1.msra.mxu0 %v6688
    %6690 = vmatprep.subr.mxu0 0.0
    %v6691 = vand.u32 %v408, 4294901760
    %v6692 = vsub.f32 %v408, %v6691
    %v6693 = vand.u32 %v6692, 4294901760
    %6694 = vmatpush1.msra.mxu0 %v6693
    %6695 = vmatprep.subr.mxu0 0.0
    %v6696 = vand.u32 %v723, 4294901760
    %v6697 = vsub.f32 %v723, %v6696
    %v6698 = vand.u32 %v6697, 4294901760
    %6699 = vmatpush1.msra.mxu0 %v6698
    %6700 = vmatprep.subr.mxu0 0.0
    %6701 = vmatpush1.msra.mxu0 0.0
    %6702 = vmatprep.subr.mxu0 0.0
    %6703 = vmatpush1.msra.mxu0 0.0
    %6704 = vmatprep.subr.mxu0 0.0
    %6705 = vmatpush1.msra.mxu0 0.0
    %6706 = vmatprep.subr.mxu0 0.0
    %6707 = vmatpush1.msra.mxu0 0.0
    %6708 = vmatprep.subr.mxu0 0.0
    %6709 = vmatpush1.msra.mxu0 0.0
    %6710 = vmatprep.subr.mxu0 0.0
    %6711 = vmatpush1.msra.mxu0 0.0
    %6712 = vmatprep.subr.mxu0 0.0
    %6713 = vmatpush1.msra.mxu0 0.0
    %6714 = vmatprep.subr.mxu0 0.0
    %6715 = vmatpush1.msra.mxu0 0.0
    %6716 = vmatprep.subr.mxu0 0.0
    %6717 = vmatpush1.msra.mxu0 0.0
    %6718 = vmatprep.subr.mxu0 0.0
    %6719 = vmatpush1.msra.mxu0 0.0
    %6720 = vmatprep.subr.mxu0 0.0
    %6721 = vmatpush1.msra.mxu0 0.0
    %6722 = vmatprep.subr.mxu0 0.0
    %6723 = vmatpush1.msra.mxu0 0.0
    %6724 = vmatprep.subr.mxu0 0.0
    %6725 = vmatpush1.msra.mxu0 0.0
    %6726 = vmatprep.subr.mxu0 0.0
    %6727 = vmatpush1.msra.mxu0 0.0
    %6728 = vmatprep.subr.mxu0 0.0
    %6729 = vmatpush1.msra.mxu0 0.0
    %6730 = vmatprep.subr.mxu0 0.0
    %6731 = vmatpush1.msra.mxu0 0.0
    %6732 = vmatprep.subr.mxu0 0.0
    %6733 = vmatpush1.msra.mxu0 0.0
    %6734 = vmatprep.subr.mxu0 0.0
    %6735 = vmatpush1.msra.mxu0 0.0
    %6736 = vmatprep.subr.mxu0 0.0
    %6737 = vmatpush1.msra.mxu0 0.0
    %6738 = vmatprep.subr.mxu0 0.0
    %6739 = vmatpush1.msra.mxu0 0.0
    %6740 = vmatprep.subr.mxu0 0.0
    %6741 = vmatpush1.msra.mxu0 0.0
    %6742 = vmatprep.subr.mxu0 0.0
    %6743 = vmatpush1.msra.mxu0 0.0
    %6744 = vmatprep.subr.mxu0 0.0
    %6745 = vmatpush1.msra.mxu0 0.0
    %6746 = vmatprep.subr.mxu0 0.0
    %6747 = vmatpush1.msra.mxu0 0.0
    %6748 = vmatprep.subr.mxu0 0.0
    %6749 = vmatpush1.msra.mxu0 0.0
    %6750 = vmatprep.mubr.f32.mxu0 0.0
    %v6751 = vand.u32 %v6309, 4294901760
    %6752 = vmatmul.mubr.f32.gmra.mrb[0].mxu0 %v6751
    %v6753 = vpop.f32.mrb[0].mxu0
    %v6754 = vadd.f32 %v6662, %v6753
    %v6755 = vpop.f32.mrb[0].mxu0
    %6756 = vdwg.mxu0
    %6757 = vmatprep.subr.mxu0 0.0
    %v6758 = vand.u32 %v403, 4294901760
    %6759 = vmatpush1.msra.mxu0 %v6758
    %6760 = vmatprep.subr.mxu0 0.0
    %v6761 = vand.u32 %v404, 4294901760
    %6762 = vmatpush1.msra.mxu0 %v6761
    %6763 = vmatprep.subr.mxu0 0.0
    %v6764 = vand.u32 %v405, 4294901760
    %6765 = vmatpush1.msra.mxu0 %v6764
    %6766 = vmatprep.subr.mxu0 0.0
    %v6767 = vand.u32 %v406, 4294901760
    %6768 = vmatpush1.msra.mxu0 %v6767
    %6769 = vmatprep.subr.mxu0 0.0
    %v6770 = vand.u32 %v407, 4294901760
    %6771 = vmatpush1.msra.mxu0 %v6770
    %6772 = vmatprep.subr.mxu0 0.0
    %v6773 = vand.u32 %v408, 4294901760
    %6774 = vmatpush1.msra.mxu0 %v6773
    %6775 = vmatprep.subr.mxu0 0.0
    %v6776 = vand.u32 %v723, 4294901760
    %6777 = vmatpush1.msra.mxu0 %v6776
    %6778 = vmatprep.subr.mxu0 0.0
    %6779 = vmatpush1.msra.mxu0 0.0
    %6780 = vmatprep.subr.mxu0 0.0
    %6781 = vmatpush1.msra.mxu0 0.0
    %6782 = vmatprep.subr.mxu0 0.0
    %6783 = vmatpush1.msra.mxu0 0.0
    %6784 = vmatprep.subr.mxu0 0.0
    %6785 = vmatpush1.msra.mxu0 0.0
    %6786 = vmatprep.subr.mxu0 0.0
    %6787 = vmatpush1.msra.mxu0 0.0
    %6788 = vmatprep.subr.mxu0 0.0
    %6789 = vmatpush1.msra.mxu0 0.0
    %6790 = vmatprep.subr.mxu0 0.0
    %6791 = vmatpush1.msra.mxu0 0.0
    %6792 = vmatprep.subr.mxu0 0.0
    %6793 = vmatpush1.msra.mxu0 0.0
    %6794 = vmatprep.subr.mxu0 0.0
    %6795 = vmatpush1.msra.mxu0 0.0
    %6796 = vmatprep.subr.mxu0 0.0
    %6797 = vmatpush1.msra.mxu0 0.0
    %6798 = vmatprep.subr.mxu0 0.0
    %6799 = vmatpush1.msra.mxu0 0.0
    %6800 = vmatprep.subr.mxu0 0.0
    %6801 = vmatpush1.msra.mxu0 0.0
    %6802 = vmatprep.subr.mxu0 0.0
    %6803 = vmatpush1.msra.mxu0 0.0
    %6804 = vmatprep.subr.mxu0 0.0
    %6805 = vmatpush1.msra.mxu0 0.0
    %6806 = vmatprep.subr.mxu0 0.0
    %6807 = vmatpush1.msra.mxu0 0.0
    %6808 = vmatprep.subr.mxu0 0.0
    %6809 = vmatpush1.msra.mxu0 0.0
    %6810 = vmatprep.subr.mxu0 0.0
    %6811 = vmatpush1.msra.mxu0 0.0
    %6812 = vmatprep.subr.mxu0 0.0
    %6813 = vmatpush1.msra.mxu0 0.0
    %6814 = vmatprep.subr.mxu0 0.0
    %6815 = vmatpush1.msra.mxu0 0.0
    %6816 = vmatprep.subr.mxu0 0.0
    %6817 = vmatpush1.msra.mxu0 0.0
    %6818 = vmatprep.subr.mxu0 0.0
    %6819 = vmatpush1.msra.mxu0 0.0
    %6820 = vmatprep.subr.mxu0 0.0
    %6821 = vmatpush1.msra.mxu0 0.0
    %6822 = vmatprep.subr.mxu0 0.0
    %6823 = vmatpush1.msra.mxu0 0.0
    %6824 = vmatprep.subr.mxu0 0.0
    %6825 = vmatpush1.msra.mxu0 0.0
    %6826 = vmatprep.subr.mxu0 0.0
    %6827 = vmatpush1.msra.mxu0 0.0
    %6828 = vmatprep.mubr.f32.mxu0 0.0
    %v6829 = vand.u32 %v6309, 4294901760
    %6830 = vmatmul.mubr.f32.gmra.mrb[0].mxu0 %v6829
    %v6831 = vpop.f32.mrb[0].mxu0
    %v6832 = vadd.f32 %v6754, %v6831
    %v6833 = vpop.f32.mrb[0].mxu0
    %6834 = vdwg.mxu0
    %6836 = vrot.lane.b32.xlu0 %v1246, 120
    %v6837 = vpop.permute.xlu0 %6836
    %6840 = vrot.lane.b32.xlu0 %v2044, 122
    %v6841 = vpop.permute.xlu0 %6840
    %6844 = vrot.lane.b32.xlu0 %v2842, 124
    %v6845 = vpop.permute.xlu0 %6844
    %6848 = vrot.lane.b32.xlu0 %v3640, 126
    %v6849 = vpop.permute.xlu0 %6848
    %6852 = vrot.lane.b32.xlu0 %v5236, 2
    %v6853 = vpop.permute.xlu0 %6852
    %6856 = vrot.lane.b32.xlu0 %v6034, 4
    %v6857 = vpop.permute.xlu0 %6856
    %6860 = vrot.lane.b32.xlu0 %v6832, 6
    %v6861 = vpop.permute.xlu0 %6860
    %vm6863 = vcmask 15360
    %v6864 = vsel %vm6863, %v6837, %v6841
    %vm6865 = vcmask 31744
    %v6866 = vsel %vm6865, %v6864, %v6845
    %vm6867 = vcmask 48128
    %v6868 = vsel %vm6867, %v6866, %v6849
    %v6869 = vsel %vm436, %v6868, %v4438
    %vm6870 = vcmask 80896
    %v6871 = vsel %vm6870, %v6869, %v6853
    %vm6872 = vcmask 97280
    %v6873 = vsel %vm6872, %v6871, %v6857
    %vm6874 = vcmask 113664
    %v6875 = vsel %vm6874, %v6873, %v6861
    %vm6876 = vcmask 123904
    %6877 = vst.msk [vmem:[#allocation2] sm:$0x3] %vm6876, %v6875
    // Predicated region
    $region66: #{tpu_custom_call.1} parent=1 // pred_check
      _
    $region67: #{tpu_custom_call.1} parent=1 // pred_check_branch
      %6879 = sbr.rel (0) target = $region69
    $region68: #{tpu_custom_call.1} parent=1 // pred_region
      %s6881 = ssub.s32 32, 32
      %6882 = vsyncadd [#allocation3], %s6881
      %s6884 = sshll.u32 [#allocation2], 4
      %s6885 = int_to_ptr.vmem [resolvable:$true] %s6884
      %6887 = dma.vmem_to_hbm [thread:$0]  %s6885, 32, %s16, [#allocation3]
    $region69: #{tpu_custom_call.1} parent=1 // pred_fallthru
      _
    // Predicated region
    $region70: #{tpu_custom_call.1} parent=1 // pred_check
      _
    $region71: #{tpu_custom_call.1} parent=1 // pred_check_branch
      %6889 = sbr.rel (0) target = $region73
    $region72: #{tpu_custom_call.1} parent=1 // pred_region
      %6890 = dma.done [#allocation3], 32
    $region73: #{tpu_custom_call.1} parent=1 // pred_fallthru
      _
    %6891 = vsyncpa [#allocation3], 1

</llo_original>
